<compile_context>
chip_gen: v7x
topology: tpu7x:2x2x1
jax: 0.10.0
libtpu: 0.0.40
codegen_flags: <defaults>
</compile_context>

<pallas_src>
import jax
import jax.numpy as jnp
from jax.experimental import pallas as pl
from jax.experimental.pallas import tpu as pltpu

BN_EPS = 1e-5
B_BLK = 8      # images per batch grid step (also f32 output sublane alignment)
HW_BLK = 128   # spatial rows per reduction step (multiple of 16 for bf16 packing)


def _round_up(x, m):
    return (x + m - 1) // m * m


def _make_classify_kernel(hw_true, hw_pad):
    n_pad = hw_pad - hw_true
    inv_hw = 1.0 / float(hw_true)

    def kernel(x_ref, wc_ref, bias_ref, wl_ref, bl_ref, out_ref, acc_ref):
        # x_ref:    (B_BLK, hw_blk, C1) bf16, channels-last, zero-padded
        # wc_ref:   (C1, C_)   bf16, BN scale already folded in
        # bias_ref: (1, C_)    f32, folded BN bias
        # wl_ref:   (C_, C2p)  bf16, zero-padded columns
        # bl_ref:   (1, C2p)   f32, padded columns = -1e30
        # out_ref:  (B_BLK, C2p) f32 softmax probabilities
        # acc_ref:  (B_BLK, C_) f32 pooled-sum accumulator (VMEM scratch)
        h = pl.program_id(1)
        b_blk, hw_blk, c1 = x_ref.shape
        c_out = wc_ref.shape[1]
        bias = bias_ref[...]                                  # (1, C_) f32

        @pl.when(h == 0)
        def _():
            acc_ref[...] = jnp.zeros_like(acc_ref)

        # 1x1 conv for this spatial chunk of the whole batch block:
        # (B_BLK*hw_blk, C1) @ (C1, C_) on the MXU with f32 accumulation.
        x = x_ref[...].reshape(b_blk * hw_blk, c1)
        z = jnp.dot(x, wc_ref[...], preferred_element_type=jnp.float32)
        z = z + bias                                          # folded BN bias
        z = z * jax.nn.sigmoid(z)                             # SiLU

        # Partial AdaptiveAvgPool2d(1): accumulate per-image spatial sums.
        acc_ref[...] += jnp.sum(z.reshape(b_blk, hw_blk, c_out), axis=1)

        @pl.when(h == pl.num_programs(1) - 1)
        def _():
            pooled = acc_ref[...]
            # Zero-padded spatial rows contribute exactly silu(bias) each;
            # subtract analytically, then divide by the true HW.
            if n_pad:
                pooled = pooled - n_pad * (bias * jax.nn.sigmoid(bias))
            pooled = pooled * inv_hw

            # Dropout is identity in eval mode.
            # Linear head: one (B_BLK, C_) @ (C_, C2p) matmul for the block.
            logits = jnp.dot(pooled.astype(wl_ref.dtype), wl_ref[...],
                             preferred_element_type=jnp.float32)
            logits = logits + bl_ref[...]                     # padded cols -> -1e30

            # softmax over classes (padded columns -> exp == 0)
            m = jnp.max(logits, axis=-1, keepdims=True)
            e = jnp.exp(logits - m)
            out_ref[...] = (e / jnp.sum(e, axis=-1, keepdims=True)).astype(out_ref.dtype)

    return kernel


def classify_forward(x_nchw, params):
    """x_nchw: (B, C1, H, W) float32.  Returns (B, C2) softmax probabilities."""
    B, C1, H, W = x_nchw.shape
    HW = H * W
    Bp = _round_up(max(B, B_BLK), B_BLK)

    # Spatial chunking: one reduction step of hw_blk rows per grid iteration.
    HWp16 = _round_up(HW, 16)             # bf16 sublane packing
    if HWp16 <= HW_BLK:
        hw_blk = HWp16
        HWp = HWp16
    else:
        hw_blk = HW_BLK
        HWp = _round_up(HW, hw_blk)

    C_ = params["conv_w"].shape[1]
    C2 = params["lin_w"].shape[1]
    C2p = _round_up(C2, 128)

    # Fold BN scale into the conv weight in f32, then cast matmul operands to
    # bf16 (accumulation stays f32 inside the kernel).
    wc = (params["conv_w"] * params["bn_scale"]).astype(jnp.bfloat16)       # (C1, C_)
    bias = params["bn_bias"].astype(jnp.float32).reshape(1, C_)             # (1, C_)
    wl = jnp.zeros((C_, C2p), jnp.bfloat16).at[:, :C2].set(
        params["lin_w"].astype(jnp.bfloat16))                               # (C_, C2p)
    bl = jnp.full((1, C2p), -1e30, jnp.float32).at[0, :C2].set(
        params["lin_b"].reshape(-1).astype(jnp.float32))                    # (1, C2p)

    # NCHW -> channels-last (B, HW, C1) in bf16, then zero-pad spatial + batch.
    x = jnp.transpose(x_nchw.astype(jnp.bfloat16), (0, 2, 3, 1)).reshape(B, HW, C1)
    x = jnp.pad(x, ((0, Bp - B), (0, HWp - HW), (0, 0)))

    kernel = _make_classify_kernel(HW, HWp)
    out = pl.pallas_call(
        kernel,
        out_shape=jax.ShapeDtypeStruct((Bp, C2p), jnp.float32),
        grid_spec=pltpu.PrefetchScalarGridSpec(
            num_scalar_prefetch=0,
            grid=(Bp // B_BLK, HWp // hw_blk),
            in_specs=[
                pl.BlockSpec((B_BLK, hw_blk, C1), lambda b, h: (b, h, 0)),
                # Constant-index weight/bias blocks (never re-DMA'd).
                # TODO(synk): single-buffer them (pipeline_mode=pl.Buffered(1))
                # once that kwarg is verified on the target jax build; halves
                # their VMEM footprint on v7x's 64 MiB VMEM.
                pl.BlockSpec((C1, C_), lambda b, h: (0, 0)),
                pl.BlockSpec((1, C_), lambda b, h: (0, 0)),
                pl.BlockSpec((C_, C2p), lambda b, h: (0, 0)),
                pl.BlockSpec((1, C2p), lambda b, h: (0, 0)),
            ],
            out_specs=pl.BlockSpec((B_BLK, C2p), lambda b, h: (b, 0)),
            scratch_shapes=[pltpu.VMEM((B_BLK, C_), jnp.float32)],
        ),
        compiler_params=pltpu.CompilerParams(
            dimension_semantics=("parallel", "arbitrary"),
            vmem_limit_bytes=64 * 1024 * 1024,
        ),
    )(x, wc, bias, wl, bl)

    return out[:B, :C2]


def init_params(key, c1, c2, c_=1280):
    """Deterministic synthetic parameters matching the PyTorch module shapes."""
    ks = jax.random.split(key, 6)
    # Conv2d(c1, c_, 1, bias=False): weight (c_, c1, 1, 1) -> fold to (c1, c_)
    conv_w_oihw = jax.random.normal(ks[0], (c_, c1, 1, 1), jnp.float32) * 0.05
    conv_w = conv_w_oihw.reshape(c_, c1).T  # (c1, c_)
    # BatchNorm2d(c_) eval-mode params
    gamma = 1.0 + 0.1 * jax.random.normal(ks[1], (c_,), jnp.float32)
    beta = 0.1 * jax.random.normal(ks[2], (c_,), jnp.float32)
    run_mean = 0.1 * jax.random.normal(ks[3], (c_,), jnp.float32)
    run_var = jnp.abs(1.0 + 0.1 * jax.random.normal(ks[4], (c_,), jnp.float32))
    bn_scale = gamma / jnp.sqrt(run_var + BN_EPS)
    bn_bias = beta - run_mean * bn_scale
    # Linear(c_, c2): weight (c2, c_), bias (c2,)
    lin_w = jax.random.normal(ks[5], (c2, c_), jnp.float32) * 0.02
    lin_b = jnp.linspace(-0.1, 0.1, c2, dtype=jnp.float32)
    return {
        "conv_w": conv_w.astype(jnp.float32),
        "bn_scale": bn_scale.reshape(1, c_),
        "bn_bias": bn_bias.reshape(1, c_),
        "lin_w": lin_w.T,            # (c_, c2)
        "lin_b": lin_b.reshape(1, c2),
    }


def classify_ref(x_nchw, params, matmul_dtype=jnp.float32):
    """Pure-JAX reference mirroring the PyTorch module (eval mode).

    matmul_dtype=bfloat16 mirrors the kernel's precision (folded bf16 weights,
    f32 accumulation) for a tight numerical check.
    """
    B, C1, H, W = x_nchw.shape
    x = jnp.transpose(x_nchw, (0, 2, 3, 1)).reshape(B, H * W, C1)
    if matmul_dtype == jnp.bfloat16:
        wc = (params["conv_w"] * params["bn_scale"]).astype(jnp.bfloat16)
        z = jnp.einsum("bpc,cd->bpd", x.astype(jnp.bfloat16), wc,
                       preferred_element_type=jnp.float32)
        z = z + params["bn_bias"][None]
    else:
        z = jnp.einsum("bpc,cd->bpd", x, params["conv_w"])
        z = z * params["bn_scale"][None] + params["bn_bias"][None]
    z = z * jax.nn.sigmoid(z)
    pooled = jnp.mean(z, axis=1)                       # (B, C_)
    if matmul_dtype == jnp.bfloat16:
        logits = jnp.dot(pooled.astype(jnp.bfloat16),
                         params["lin_w"].astype(jnp.bfloat16),
                         preferred_element_type=jnp.float32) + params["lin_b"]
    else:
        logits = pooled @ params["lin_w"] + params["lin_b"]
    return jax.nn.softmax(logits, axis=1)


def _check(x, params, B, C2):
    out = jax.block_until_ready(classify_forward(x, params))
    ref16 = classify_ref(x, params, matmul_dtype=jnp.bfloat16)  # kernel-matched precision
    ref32 = classify_ref(x, params, matmul_dtype=jnp.float32)   # exact module math
    assert out.shape == (B, C2)
    assert jnp.allclose(jnp.sum(out, axis=1), 1.0, atol=1e-5), "softmax rows must sum to 1"
    assert jnp.allclose(out, ref16, atol=1e-4, rtol=1e-4), "mismatch vs bf16-matched reference"
    assert jnp.allclose(out, ref32, atol=1e-2, rtol=1e-2), "mismatch vs f32 reference"


if __name__ == "__main__":
    key = jax.random.PRNGKey(0)
    k_x, k_p, k_x2 = jax.random.split(key, 3)

    # Small shapes consistent with the module (single spatial chunk path).
    B, C1, H, W, C2 = 2, 16, 8, 8, 8
    params = init_params(k_p, C1, C2)
    x = jax.random.normal(k_x, (B, C1, H, W), jnp.float32)
    _check(x, params, B, C2)

    # Second case exercises the multi-chunk spatial reduction + pad correction.
    H2 = W2 = 12  # HW=144 -> two 128-row chunks with 112 padded zero rows
    x2 = jax.random.normal(k_x2, (B, C1, H2, W2), jnp.float32)
    _check(x2, params, B, C2)

    print("KERNEL_OK")
</pallas_src>

<mosaic_0001>
module attributes {stable_mosaic.version = 11 : i64} {
  func.func @kernel(%arg0: i32, %arg1: i32, %arg2: memref<8x64x16xbf16, #tpu.memory_space<vmem>>, %arg3: memref<16x1280xbf16, #tpu.memory_space<vmem>>, %arg4: memref<1x1280xf32, #tpu.memory_space<vmem>>, %arg5: memref<1280x128xbf16, #tpu.memory_space<vmem>>, %arg6: memref<1x128xf32, #tpu.memory_space<vmem>>, %arg7: memref<8x128xf32, #tpu.memory_space<vmem>>, %arg8: memref<8x1280xf32, #tpu.memory_space<vmem>>) attributes {dimension_semantics = [#tpu.dimension_semantics<parallel>, #tpu.dimension_semantics<arbitrary>], iteration_bounds = array<i64: 1, 1>, scalar_prefetch = 0 : i64, scratch_operands = 1 : i64, tpu.core_type = #tpu.core_type<tc>, window_params = [{transform_indices = @transform_0, window_bounds = array<i64: 8, 64, 16>}, {pipeline_mode = #tpu.pipeline_mode<synchronous>, transform_indices = @transform_1, window_bounds = array<i64: 16, 1280>}, {pipeline_mode = #tpu.pipeline_mode<synchronous>, transform_indices = @transform_2, window_bounds = array<i64: 1, 1280>}, {pipeline_mode = #tpu.pipeline_mode<synchronous>, transform_indices = @transform_3, window_bounds = array<i64: 1280, 128>}, {pipeline_mode = #tpu.pipeline_mode<synchronous>, transform_indices = @transform_4, window_bounds = array<i64: 1, 128>}, {transform_indices = @transform_5, window_bounds = array<i64: 8, 128>}]} {
    %c0 = arith.constant 0 : index
    %c0_0 = arith.constant 0 : index
    %0 = vector.load %arg4[%c0, %c0_0] : memref<1x1280xf32, #tpu.memory_space<vmem>>, vector<1x1280xf32>
    %c0_i32 = arith.constant 0 : i32
    %1 = arith.cmpi eq, %arg1, %c0_i32 : i32
    %2 = arith.extui %1 : i1 to i32
    %c0_i32_1 = arith.constant 0 : i32
    %3 = arith.cmpi ne, %2, %c0_i32_1 : i32
    scf.if %3 {
      %cst_15 = arith.constant 0.000000e+00 : f32
      %24 = vector.broadcast %cst_15 : f32 to vector<8x1280xf32>
      %c0_16 = arith.constant 0 : index
      %c0_17 = arith.constant 0 : index
      %25 = vector.load %arg8[%c0_16, %c0_17] : memref<8x1280xf32, #tpu.memory_space<vmem>>, vector<8x1280xf32>
      tpu.vector_store %arg8[%c0_16, %c0_17], %24 {strides = array<i32>} : memref<8x1280xf32, #tpu.memory_space<vmem>>, vector<8x1280xf32>,
    } else {
    }
    %c0_2 = arith.constant 0 : index
    %c0_3 = arith.constant 0 : index
    %c0_4 = arith.constant 0 : index
    %4 = vector.load %arg2[%c0_2, %c0_3, %c0_4] : memref<8x64x16xbf16, #tpu.memory_space<vmem>>, vector<8x64x16xbf16>
    %5 = vector.shape_cast %4 : vector<8x64x16xbf16> to vector<512x16xbf16>
    %c0_5 = arith.constant 0 : index
    %c0_6 = arith.constant 0 : index
    %6 = vector.load %arg3[%c0_5, %c0_6] : memref<16x1280xbf16, #tpu.memory_space<vmem>>, vector<16x1280xbf16>
    %cst = arith.constant dense<0.000000e+00> : vector<512x1280xf32>
    %7 = tpu.matmul %5, %6, %cst {dimension_numbers = #tpu.dot_dimension_numbers<[1], [0], [0], [1], [0, 0, 1, 1], [], []>} : vector<512x16xbf16>, vector<16x1280xbf16>, vector<512x1280xf32> -> vector<512x1280xf32>
    %8 = vector.broadcast %0 : vector<1x1280xf32> to vector<512x1280xf32>
    %9 = arith.addf %7, %8 : vector<512x1280xf32>
    %10 = arith.negf %9 : vector<512x1280xf32>
    %11 = math.exp %10 : vector<512x1280xf32>
    %cst_7 = arith.constant 1.000000e+00 : f32
    %12 = vector.broadcast %cst_7 : f32 to vector<512x1280xf32>
    %13 = arith.addf %12, %11 : vector<512x1280xf32>
    %14 = arith.divf %12, %13 : vector<512x1280xf32>
    %15 = arith.mulf %9, %14 : vector<512x1280xf32>
    %c0_8 = arith.constant 0 : index
    %c0_9 = arith.constant 0 : index
    %16 = vector.load %arg8[%c0_8, %c0_9] : memref<8x1280xf32, #tpu.memory_space<vmem>>, vector<8x1280xf32>
    %17 = vector.shape_cast %15 : vector<512x1280xf32> to vector<8x64x1280xf32>
    %cst_10 = arith.constant dense<0.000000e+00> : vector<8x1280xf32>
    %18 = vector.multi_reduction <add>, %17, %cst_10 [1] : vector<8x64x1280xf32> to vector<8x1280xf32>
    %19 = arith.addf %16, %18 : vector<8x1280xf32>
    %c0_11 = arith.constant 0 : index
    %c0_12 = arith.constant 0 : index
    %20 = vector.load %arg8[%c0_11, %c0_12] : memref<8x1280xf32, #tpu.memory_space<vmem>>, vector<8x1280xf32>
    tpu.vector_store %arg8[%c0_11, %c0_12], %19 {strides = array<i32>} : memref<8x1280xf32, #tpu.memory_space<vmem>>, vector<8x1280xf32>,
    %c0_i32_13 = arith.constant 0 : i32
    %21 = arith.cmpi eq, %arg1, %c0_i32_13 : i32
    %22 = arith.extui %21 : i1 to i32
    %c0_i32_14 = arith.constant 0 : i32
    %23 = arith.cmpi ne, %22, %c0_i32_14 : i32
    scf.if %23 {
      %c0_15 = arith.constant 0 : index
      %c0_16 = arith.constant 0 : index
      %24 = vector.load %arg8[%c0_15, %c0_16] : memref<8x1280xf32, #tpu.memory_space<vmem>>, vector<8x1280xf32>
      %cst_17 = arith.constant 1.562500e-02 : f32
      %25 = vector.broadcast %cst_17 : f32 to vector<8x1280xf32>
      %26 = arith.mulf %24, %25 : vector<8x1280xf32>
      %27 = arith.truncf %26 : vector<8x1280xf32> to vector<8x1280xbf16>
      %c0_18 = arith.constant 0 : index
      %c0_19 = arith.constant 0 : index
      %28 = vector.load %arg5[%c0_18, %c0_19] : memref<1280x128xbf16, #tpu.memory_space<vmem>>, vector<1280x128xbf16>
      %cst_20 = arith.constant dense<0.000000e+00> : vector<8x128xf32>
      %29 = tpu.matmul %27, %28, %cst_20 {dimension_numbers = #tpu.dot_dimension_numbers<[1], [0], [0], [1], [0, 0, 1, 1], [], []>} : vector<8x1280xbf16>, vector<1280x128xbf16>, vector<8x128xf32> -> vector<8x128xf32>
      %c0_21 = arith.constant 0 : index
      %c0_22 = arith.constant 0 : index
      %30 = vector.load %arg6[%c0_21, %c0_22] : memref<1x128xf32, #tpu.memory_space<vmem>>, vector<1x128xf32>
      %31 = vector.broadcast %30 : vector<1x128xf32> to vector<8x128xf32>
      %32 = arith.addf %29, %31 : vector<8x128xf32>
      %cst_23 = arith.constant dense<0xFF800000> : vector<8xf32>
      %33 = vector.multi_reduction <maximumf>, %32, %cst_23 [1] : vector<8x128xf32> to vector<8xf32>
      %34 = vector.shape_cast %33 : vector<8xf32> to vector<8x1xf32>
      %35 = vector.broadcast %34 : vector<8x1xf32> to vector<8x128xf32>
      %36 = arith.subf %32, %35 : vector<8x128xf32>
      %37 = math.exp %36 : vector<8x128xf32>
      %cst_24 = arith.constant dense<0.000000e+00> : vector<8xf32>
      %38 = vector.multi_reduction <add>, %37, %cst_24 [1] : vector<8x128xf32> to vector<8xf32>
      %39 = vector.shape_cast %38 : vector<8xf32> to vector<8x1xf32>
      %40 = vector.broadcast %39 : vector<8x1xf32> to vector<8x128xf32>
      %41 = arith.divf %37, %40 : vector<8x128xf32>
      %c0_25 = arith.constant 0 : index
      %c0_26 = arith.constant 0 : index
      %42 = vector.load %arg7[%c0_25, %c0_26] : memref<8x128xf32, #tpu.memory_space<vmem>>, vector<8x128xf32>
      tpu.vector_store %arg7[%c0_25, %c0_26], %41 {strides = array<i32>} : memref<8x128xf32, #tpu.memory_space<vmem>>, vector<8x128xf32>,
    } else {
    }
    return
  }
  func.func @transform_0(%arg0: i32, %arg1: i32) -> (i32, i32, i32) {
    %c0_i32 = arith.constant 0 : i32
    %c0_i32_0 = arith.constant 0 : i32
    return %arg0, %arg1, %c0_i32 : i32, i32, i32
  }
  func.func @transform_1(%arg0: i32, %arg1: i32) -> (i32, i32) {
    %c0_i32 = arith.constant 0 : i32
    %c0_i32_0 = arith.constant 0 : i32
    %c0_i32_1 = arith.constant 0 : i32
    return %c0_i32, %c0_i32_0 : i32, i32
  }
  func.func @transform_2(%arg0: i32, %arg1: i32) -> (i32, i32) {
    %c0_i32 = arith.constant 0 : i32
    %c0_i32_0 = arith.constant 0 : i32
    %c0_i32_1 = arith.constant 0 : i32
    return %c0_i32, %c0_i32_0 : i32, i32
  }
  func.func @transform_3(%arg0: i32, %arg1: i32) -> (i32, i32) {
    %c0_i32 = arith.constant 0 : i32
    %c0_i32_0 = arith.constant 0 : i32
    %c0_i32_1 = arith.constant 0 : i32
    return %c0_i32, %c0_i32_0 : i32, i32
  }
  func.func @transform_4(%arg0: i32, %arg1: i32) -> (i32, i32) {
    %c0_i32 = arith.constant 0 : i32
    %c0_i32_0 = arith.constant 0 : i32
    %c0_i32_1 = arith.constant 0 : i32
    return %c0_i32, %c0_i32_0 : i32, i32
  }
  func.func @transform_5(%arg0: i32, %arg1: i32) -> (i32, i32) {
    %c0_i32 = arith.constant 0 : i32
    %c0_i32_0 = arith.constant 0 : i32
    return %arg0, %c0_i32 : i32, i32
  }
}

</mosaic_0001>

<llo_original>
// kernel: tpu_custom_call.1
$region0: #{tpu_custom_call.1}
  #allocation0 [shape = 'u32[]', space=smem, size = 0x4, offset = 0x4, fixed_abs, tag = 'smem constant byte address 0x4 - core index']
  #allocation1 [shape = 'u32[144,128]{1,0:T(1,128)}', space=vmem, size = 0x12000, scoped, tag = 'internal scratch']
  #allocation2 [shape = 'f32[8,1280]{1,0:T(8,128)}', space=vmem, size = 0xa000, scoped, tag = 'scratch operand']
  %s0 = inlined_call_operand.hbm [shape: bf16[8,64,16], index: 0, kind: input, shape index: {}]
  %s1 = inlined_call_operand.hbm [shape: bf16[16,1280], index: 1, kind: input, shape index: {}]
  %s2 = inlined_call_operand.hbm [shape: f32[1,1280], index: 2, kind: input, shape index: {}]
  %s3 = inlined_call_operand.hbm [shape: bf16[1280,128], index: 3, kind: input, shape index: {}]
  %s4 = inlined_call_operand.hbm [shape: f32[1,128], index: 4, kind: input, shape index: {}]
  %s5 = inlined_call_operand.hbm [shape: f32[8,128], index: 5, kind: output, shape index: {}]
  %s6 = sld [smem:[#allocation0]]
  $region58: #{tpu_custom_call.1} parent=0
    _
  %s8 = ssub.s32 1, %s6
  %s9 = scalar_select 0, %s8, %s6
  $region1: #{tpu_custom_call.1} parent=0
    #allocation3 [shape = 'u8[131072]{0}', space=vmem, size = 0x20000, scoped, tag = 'input window, operand 0, single buffered']
    #allocation4 [shape = 's32[1]{0}', space=sflag, size = 0x4, scoped, tag = 'scoped memory for tpu_custom_call.1']
    #allocation5 [shape = 's32[1]{0}', space=sflag, size = 0x4, scoped, tag = 'scoped memory for tpu_custom_call.1']
    #allocation6 [shape = 'u8[40960]{0}', space=vmem, size = 0xa000, scoped, tag = 'input window, operand 1, single buffered']
    #allocation7 [shape = 's32[1]{0}', space=sflag, size = 0x4, scoped, tag = 'scoped memory for tpu_custom_call.1']
    #allocation8 [shape = 'u8[5120]{0}', space=vmem, size = 0x1400, scoped, tag = 'input window, operand 2, single buffered']
    #allocation9 [shape = 'u8[327680]{0}', space=vmem, size = 0x50000, scoped, tag = 'input window, operand 3, single buffered']
    #allocation10 [shape = 's32[1]{0}', space=sflag, size = 0x4, scoped, tag = 'scoped memory for tpu_custom_call.1']
    #allocation11 [shape = 'u8[512]{0}', space=vmem, size = 0x400, scoped, tag = 'input window, operand 4, single buffered']
    #allocation12 [shape = 'u8[4096]{0}', space=vmem, size = 0x1000, scoped, tag = 'output window, operand 0, single buffered']
    %10 = vsyncpa [#allocation4], 0
    %11 = vsyncpa [#allocation7], 0
    %12 = vsyncpa [#allocation10], 0
    %13 = vsyncpa [#allocation5], 0
    // Predicated region
    $region2: #{tpu_custom_call.1} parent=1 // pred_check
      _
    $region3: #{tpu_custom_call.1} parent=1 // pred_check_branch
      %15 = sbr.rel (0) target = $region5
    $region4: #{tpu_custom_call.1} parent=1 // pred_region
      %s17 = ssub.s32 4096, 4096
      %18 = vsyncadd [#allocation4], %s17
      %s19 = sshll.u32 [#allocation3], 4
      %s20 = int_to_ptr.vmem [resolvable:$true] %s19
      %25 = dma.hbm_to_vmem [thread:$0]  %s0, 4096, %s20, [#allocation4], 64, 64, 4
    $region5: #{tpu_custom_call.1} parent=1 // pred_fallthru
      _
    // Predicated region
    $region6: #{tpu_custom_call.1} parent=1 // pred_check
      _
    $region7: #{tpu_custom_call.1} parent=1 // pred_check_branch
      %27 = sbr.rel (0) target = $region9
    $region8: #{tpu_custom_call.1} parent=1 // pred_region
      %s29 = ssub.s32 1280, 1280
      %30 = vsyncadd [#allocation7], %s29
      %s31 = sshll.u32 [#allocation6], 4
      %s32 = int_to_ptr.vmem [resolvable:$true] %s31
      %37 = dma.hbm_to_vmem [thread:$0]  %s1, 1280, %s32, [#allocation7], 640, 640, 40
    $region9: #{tpu_custom_call.1} parent=1 // pred_fallthru
      _
    // Predicated region
    $region10: #{tpu_custom_call.1} parent=1 // pred_check
      _
    $region11: #{tpu_custom_call.1} parent=1 // pred_check_branch
      %39 = sbr.rel (0) target = $region13
    $region12: #{tpu_custom_call.1} parent=1 // pred_region
      %s41 = ssub.s32 160, 160
      %42 = vsyncadd [#allocation7], %s41
      %s44 = sshll.u32 [#allocation8], 4
      %s45 = int_to_ptr.vmem [resolvable:$true] %s44
      %47 = dma.hbm_to_vmem [thread:$0]  %s2, 160, %s45, [#allocation7]
    $region13: #{tpu_custom_call.1} parent=1 // pred_fallthru
      _
    // Predicated region
    $region14: #{tpu_custom_call.1} parent=1 // pred_check
      _
    $region15: #{tpu_custom_call.1} parent=1 // pred_check_branch
      %49 = sbr.rel (0) target = $region17
    $region16: #{tpu_custom_call.1} parent=1 // pred_region
      %s51 = ssub.s32 10240, 10240
      %52 = vsyncadd [#allocation10], %s51
      %s53 = sshll.u32 [#allocation9], 4
      %s54 = int_to_ptr.vmem [resolvable:$true] %s53
      %59 = dma.hbm_to_vmem [thread:$0]  %s3, 10240, %s54, [#allocation10], 64, 64, 4
    $region17: #{tpu_custom_call.1} parent=1 // pred_fallthru
      _
    // Predicated region
    $region18: #{tpu_custom_call.1} parent=1 // pred_check
      _
    $region19: #{tpu_custom_call.1} parent=1 // pred_check_branch
      %61 = sbr.rel (0) target = $region21
    $region20: #{tpu_custom_call.1} parent=1 // pred_region
      %s63 = ssub.s32 16, 16
      %64 = vsyncadd [#allocation10], %s63
      %s66 = sshll.u32 [#allocation11], 4
      %s67 = int_to_ptr.vmem [resolvable:$true] %s66
      %69 = dma.hbm_to_vmem [thread:$0]  %s4, 16, %s67, [#allocation10]
    $region21: #{tpu_custom_call.1} parent=1 // pred_fallthru
      _
    // Predicated region
    $region22: #{tpu_custom_call.1} parent=1 // pred_check
      _
    $region23: #{tpu_custom_call.1} parent=1 // pred_check_branch
      %71 = sbr.rel (0) target = $region25
    $region24: #{tpu_custom_call.1} parent=1 // pred_region
      %72 = dma.done [#allocation4], 4096
    $region25: #{tpu_custom_call.1} parent=1 // pred_fallthru
      _
    // Predicated region
    $region26: #{tpu_custom_call.1} parent=1 // pred_check
      _
    $region27: #{tpu_custom_call.1} parent=1 // pred_check_branch
      %74 = sbr.rel (0) target = $region29
    $region28: #{tpu_custom_call.1} parent=1 // pred_region
      %75 = dma.done [#allocation7], 1280
    $region29: #{tpu_custom_call.1} parent=1 // pred_fallthru
      _
    // Predicated region
    $region30: #{tpu_custom_call.1} parent=1 // pred_check
      _
    $region31: #{tpu_custom_call.1} parent=1 // pred_check_branch
      %77 = sbr.rel (0) target = $region33
    $region32: #{tpu_custom_call.1} parent=1 // pred_region
      %78 = dma.done [#allocation7], 160
    $region33: #{tpu_custom_call.1} parent=1 // pred_fallthru
      _
    // Predicated region
    $region34: #{tpu_custom_call.1} parent=1 // pred_check
      _
    $region35: #{tpu_custom_call.1} parent=1 // pred_check_branch
      %80 = sbr.rel (0) target = $region37
    $region36: #{tpu_custom_call.1} parent=1 // pred_region
      %81 = dma.done [#allocation10], 10240
    $region37: #{tpu_custom_call.1} parent=1 // pred_fallthru
      _
    // Predicated region
    $region38: #{tpu_custom_call.1} parent=1 // pred_check
      _
    $region39: #{tpu_custom_call.1} parent=1 // pred_check_branch
      %83 = sbr.rel (0) target = $region41
    $region40: #{tpu_custom_call.1} parent=1 // pred_region
      %84 = dma.done [#allocation10], 16
    $region41: #{tpu_custom_call.1} parent=1 // pred_fallthru
      _
    %v86 = vld [vmem:[#allocation8] sm:$0xff]
    %v87 = vld [vmem:[#allocation8 + $0x8] sm:$0x3]
    %p88 = scmp.eq.s32.totalorder 0, 0
    // Predicated region
    $region42: #{tpu_custom_call.1} parent=1 // pred_check
      %p89 = pneg %p88
    $region43: #{tpu_custom_call.1} parent=1 // pred_check_branch
      %91 = sbr.rel (%p89) target = $region45
    $region44: #{tpu_custom_call.1} parent=1 // pred_region
      %92 = vst [vmem:[#allocation2] sm:$0xff] 0.0
      %93 = vst [vmem:[#allocation2 + $0x8] sm:$0xff] 0.0
      %94 = vst [vmem:[#allocation2 + $0x10] sm:$0xff] 0.0
      %95 = vst [vmem:[#allocation2 + $0x18] sm:$0xff] 0.0
      %96 = vst [vmem:[#allocation2 + $0x20] sm:$0xff] 0.0
      %97 = vst [vmem:[#allocation2 + $0x28] sm:$0xff] 0.0
      %98 = vst [vmem:[#allocation2 + $0x30] sm:$0xff] 0.0
      %99 = vst [vmem:[#allocation2 + $0x38] sm:$0xff] 0.0
      %100 = vst [vmem:[#allocation2 + $0x40] sm:$0xff] 0.0
      %101 = vst [vmem:[#allocation2 + $0x48] sm:$0xff] 0.0
    $region45: #{tpu_custom_call.1} parent=1 // pred_fallthru
      _
    %v102 = vld [vmem:[#allocation3] sm:$0xf]
    %v103 = vld [vmem:[#allocation3 + $0x4] sm:$0xf]
    %v104 = vld [vmem:[#allocation3 + $0x8] sm:$0xf]
    %v105 = vld [vmem:[#allocation3 + $0xc] sm:$0xf]
    %v106 = vld [vmem:[#allocation3 + $0x10] sm:$0xf]
    %v107 = vld [vmem:[#allocation3 + $0x14] sm:$0xf]
    %v108 = vld [vmem:[#allocation3 + $0x18] sm:$0xf]
    %v109 = vld [vmem:[#allocation3 + $0x1c] sm:$0xf]
    %v110 = vld [vmem:[#allocation3 + $0x20] sm:$0xf]
    %v111 = vld [vmem:[#allocation3 + $0x24] sm:$0xf]
    %v112 = vld [vmem:[#allocation3 + $0x28] sm:$0xf]
    %v113 = vld [vmem:[#allocation3 + $0x2c] sm:$0xf]
    %v114 = vld [vmem:[#allocation3 + $0x30] sm:$0xf]
    %v115 = vld [vmem:[#allocation3 + $0x34] sm:$0xf]
    %v116 = vld [vmem:[#allocation3 + $0x38] sm:$0xf]
    %v117 = vld [vmem:[#allocation3 + $0x3c] sm:$0xf]
    %v118 = vld [vmem:[#allocation3 + $0x40] sm:$0xf]
    %v119 = vld [vmem:[#allocation3 + $0x44] sm:$0xf]
    %v120 = vld [vmem:[#allocation3 + $0x48] sm:$0xf]
    %v121 = vld [vmem:[#allocation3 + $0x4c] sm:$0xf]
    %v122 = vld [vmem:[#allocation3 + $0x50] sm:$0xf]
    %v123 = vld [vmem:[#allocation3 + $0x54] sm:$0xf]
    %v124 = vld [vmem:[#allocation3 + $0x58] sm:$0xf]
    %v125 = vld [vmem:[#allocation3 + $0x5c] sm:$0xf]
    %v126 = vld [vmem:[#allocation3 + $0x60] sm:$0xf]
    %v127 = vld [vmem:[#allocation3 + $0x64] sm:$0xf]
    %v128 = vld [vmem:[#allocation3 + $0x68] sm:$0xf]
    %v129 = vld [vmem:[#allocation3 + $0x6c] sm:$0xf]
    %v130 = vld [vmem:[#allocation3 + $0x70] sm:$0xf]
    %v131 = vld [vmem:[#allocation3 + $0x74] sm:$0xf]
    %v132 = vld [vmem:[#allocation3 + $0x78] sm:$0xf]
    %v133 = vld [vmem:[#allocation3 + $0x7c] sm:$0xf]
    %v134 = vld [vmem:[#allocation3 + $0x80] sm:$0xf]
    %v135 = vld [vmem:[#allocation3 + $0x84] sm:$0xf]
    %v136 = vld [vmem:[#allocation3 + $0x88] sm:$0xf]
    %v137 = vld [vmem:[#allocation3 + $0x8c] sm:$0xf]
    %v138 = vld [vmem:[#allocation3 + $0x90] sm:$0xf]
    %v139 = vld [vmem:[#allocation3 + $0x94] sm:$0xf]
    %v140 = vld [vmem:[#allocation3 + $0x98] sm:$0xf]
    %v141 = vld [vmem:[#allocation3 + $0x9c] sm:$0xf]
    %v142 = vld [vmem:[#allocation3 + $0xa0] sm:$0xf]
    %v143 = vld [vmem:[#allocation3 + $0xa4] sm:$0xf]
    %v144 = vld [vmem:[#allocation3 + $0xa8] sm:$0xf]
    %v145 = vld [vmem:[#allocation3 + $0xac] sm:$0xf]
    %v146 = vld [vmem:[#allocation3 + $0xb0] sm:$0xf]
    %v147 = vld [vmem:[#allocation3 + $0xb4] sm:$0xf]
    %v148 = vld [vmem:[#allocation3 + $0xb8] sm:$0xf]
    %v149 = vld [vmem:[#allocation3 + $0xbc] sm:$0xf]
    %v150 = vld [vmem:[#allocation3 + $0xc0] sm:$0xf]
    %v151 = vld [vmem:[#allocation3 + $0xc4] sm:$0xf]
    %v152 = vld [vmem:[#allocation3 + $0xc8] sm:$0xf]
    %v153 = vld [vmem:[#allocation3 + $0xcc] sm:$0xf]
    %v154 = vld [vmem:[#allocation3 + $0xd0] sm:$0xf]
    %v155 = vld [vmem:[#allocation3 + $0xd4] sm:$0xf]
    %v156 = vld [vmem:[#allocation3 + $0xd8] sm:$0xf]
    %v157 = vld [vmem:[#allocation3 + $0xdc] sm:$0xf]
    %v158 = vld [vmem:[#allocation3 + $0xe0] sm:$0xf]
    %v159 = vld [vmem:[#allocation3 + $0xe4] sm:$0xf]
    %v160 = vld [vmem:[#allocation3 + $0xe8] sm:$0xf]
    %v161 = vld [vmem:[#allocation3 + $0xec] sm:$0xf]
    %v162 = vld [vmem:[#allocation3 + $0xf0] sm:$0xf]
    %v163 = vld [vmem:[#allocation3 + $0xf4] sm:$0xf]
    %v164 = vld [vmem:[#allocation3 + $0xf8] sm:$0xf]
    %v165 = vld [vmem:[#allocation3 + $0xfc] sm:$0xf]
    %v166 = vld [vmem:[#allocation6] sm:$0xff]
    %v167 = vld [vmem:[#allocation6 + $0x8] sm:$0xff]
    %v168 = vld [vmem:[#allocation6 + $0x10] sm:$0xff]
    %v169 = vld [vmem:[#allocation6 + $0x18] sm:$0xff]
    %v170 = vld [vmem:[#allocation6 + $0x20] sm:$0xff]
    %v171 = vld [vmem:[#allocation6 + $0x28] sm:$0xff]
    %v172 = vld [vmem:[#allocation6 + $0x30] sm:$0xff]
    %v173 = vld [vmem:[#allocation6 + $0x38] sm:$0xff]
    %v174 = vld [vmem:[#allocation6 + $0x40] sm:$0xff]
    %v175 = vld [vmem:[#allocation6 + $0x48] sm:$0xff]
    %v178 = vlaneseq
    %v179 = vshrl.u32 %v178, 7
    %v180 = vsub.s32 0, %v179
    %v181 = vrot.slane %v86, %v180
    %v182 = vlaneseq
    %v183 = vshrl.u32 %v182, 7
    %v184 = vsub.s32 1, %v183
    %v185 = vrot.slane %v86, %v184
    %v186 = vlaneseq
    %v187 = vshrl.u32 %v186, 7
    %v188 = vsub.s32 2, %v187
    %v189 = vrot.slane %v86, %v188
    %v190 = vlaneseq
    %v191 = vshrl.u32 %v190, 7
    %v192 = vsub.s32 3, %v191
    %v193 = vrot.slane %v86, %v192
    %v194 = vlaneseq
    %v195 = vshrl.u32 %v194, 7
    %v196 = vsub.s32 4, %v195
    %v197 = vrot.slane %v86, %v196
    %v198 = vlaneseq
    %v199 = vshrl.u32 %v198, 7
    %v200 = vsub.s32 5, %v199
    %v201 = vrot.slane %v86, %v200
    %v202 = vlaneseq
    %v203 = vshrl.u32 %v202, 7
    %v204 = vsub.s32 6, %v203
    %v205 = vrot.slane %v86, %v204
    %v206 = vlaneseq
    %v207 = vshrl.u32 %v206, 7
    %v208 = vsub.s32 7, %v207
    %v209 = vrot.slane %v86, %v208
    %v210 = vlaneseq
    %v211 = vshrl.u32 %v210, 7
    %v212 = vsub.s32 0, %v211
    %v213 = vrot.slane %v87, %v212
    %v214 = vlaneseq
    %v215 = vshrl.u32 %v214, 7
    %v216 = vsub.s32 1, %v215
    %v217 = vrot.slane %v87, %v216
    %v292 = vunpack.c.l.b16 %v102
    %v293 = vunpack.c.l.b16 %v103
    %v294 = vunpack.c.l.b16 %v104
    %v295 = vunpack.c.l.b16 %v105
    %v296 = vunpack.c.l.b16 %v106
    %v297 = vunpack.c.l.b16 %v107
    %v298 = vunpack.c.l.b16 %v108
    %v299 = vunpack.c.l.b16 %v109
    %v300 = vunpack.c.l.b16 %v110
    %v301 = vunpack.c.l.b16 %v111
    %v302 = vunpack.c.l.b16 %v112
    %v303 = vunpack.c.l.b16 %v113
    %v304 = vunpack.c.l.b16 %v114
    %v305 = vunpack.c.l.b16 %v115
    %v306 = vunpack.c.l.b16 %v116
    %v307 = vunpack.c.l.b16 %v117
    %v308 = vunpack.c.l.b16 %v118
    %v309 = vunpack.c.l.b16 %v119
    %v310 = vunpack.c.l.b16 %v120
    %v311 = vunpack.c.l.b16 %v121
    %v312 = vunpack.c.l.b16 %v122
    %v313 = vunpack.c.l.b16 %v123
    %v314 = vunpack.c.l.b16 %v124
    %v315 = vunpack.c.l.b16 %v125
    %v316 = vunpack.c.l.b16 %v126
    %v317 = vunpack.c.l.b16 %v127
    %v318 = vunpack.c.l.b16 %v128
    %v319 = vunpack.c.l.b16 %v129
    %v320 = vunpack.c.l.b16 %v130
    %v321 = vunpack.c.l.b16 %v131
    %v322 = vunpack.c.l.b16 %v132
    %v323 = vunpack.c.l.b16 %v133
    %v324 = vunpack.c.l.b16 %v134
    %v325 = vunpack.c.l.b16 %v135
    %v326 = vunpack.c.l.b16 %v136
    %v327 = vunpack.c.l.b16 %v137
    %v328 = vunpack.c.l.b16 %v138
    %v329 = vunpack.c.l.b16 %v139
    %v330 = vunpack.c.l.b16 %v140
    %v331 = vunpack.c.l.b16 %v141
    %v332 = vunpack.c.l.b16 %v142
    %v333 = vunpack.c.l.b16 %v143
    %v334 = vunpack.c.l.b16 %v144
    %v335 = vunpack.c.l.b16 %v145
    %v336 = vunpack.c.l.b16 %v146
    %v337 = vunpack.c.l.b16 %v147
    %v338 = vunpack.c.l.b16 %v148
    %v339 = vunpack.c.l.b16 %v149
    %v340 = vunpack.c.l.b16 %v150
    %v341 = vunpack.c.l.b16 %v151
    %v342 = vunpack.c.l.b16 %v152
    %v343 = vunpack.c.l.b16 %v153
    %v344 = vunpack.c.l.b16 %v154
    %v345 = vunpack.c.l.b16 %v155
    %v346 = vunpack.c.l.b16 %v156
    %v347 = vunpack.c.l.b16 %v157
    %v348 = vunpack.c.l.b16 %v158
    %v349 = vunpack.c.l.b16 %v159
    %v350 = vunpack.c.l.b16 %v160
    %v351 = vunpack.c.l.b16 %v161
    %v352 = vunpack.c.l.b16 %v162
    %v353 = vunpack.c.l.b16 %v163
    %v354 = vunpack.c.l.b16 %v164
    %v355 = vunpack.c.l.b16 %v165
    %v356 = vpack.c.b16 %v293, %v292
    %v357 = vpack.c.b16 %v295, %v294
    %v358 = vpack.c.b16 %v297, %v296
    %v359 = vpack.c.b16 %v299, %v298
    %v360 = vpack.c.b16 %v301, %v300
    %v361 = vpack.c.b16 %v303, %v302
    %v362 = vpack.c.b16 %v305, %v304
    %v363 = vpack.c.b16 %v307, %v306
    %v364 = vpack.c.b16 %v309, %v308
    %v365 = vpack.c.b16 %v311, %v310
    %v366 = vpack.c.b16 %v313, %v312
    %v367 = vpack.c.b16 %v315, %v314
    %v368 = vpack.c.b16 %v317, %v316
    %v369 = vpack.c.b16 %v319, %v318
    %v370 = vpack.c.b16 %v321, %v320
    %v371 = vpack.c.b16 %v323, %v322
    %v372 = vpack.c.b16 %v325, %v324
    %v373 = vpack.c.b16 %v327, %v326
    %v374 = vpack.c.b16 %v329, %v328
    %v375 = vpack.c.b16 %v331, %v330
    %v376 = vpack.c.b16 %v333, %v332
    %v377 = vpack.c.b16 %v335, %v334
    %v378 = vpack.c.b16 %v337, %v336
    %v379 = vpack.c.b16 %v339, %v338
    %v380 = vpack.c.b16 %v341, %v340
    %v381 = vpack.c.b16 %v343, %v342
    %v382 = vpack.c.b16 %v345, %v344
    %v383 = vpack.c.b16 %v347, %v346
    %v384 = vpack.c.b16 %v349, %v348
    %v385 = vpack.c.b16 %v351, %v350
    %v386 = vpack.c.b16 %v353, %v352
    %v387 = vpack.c.b16 %v355, %v354
    %v398 = vunpack.c.l.b16 %v166
    %v399 = vunpack.c.h.b16 %v166
    %v400 = vunpack.c.l.b16 %v167
    %v401 = vunpack.c.h.b16 %v167
    %v402 = vunpack.c.l.b16 %v168
    %v403 = vunpack.c.h.b16 %v168
    %v404 = vunpack.c.l.b16 %v169
    %v405 = vunpack.c.h.b16 %v169
    %v406 = vunpack.c.l.b16 %v170
    %v407 = vunpack.c.h.b16 %v170
    %v408 = vunpack.c.l.b16 %v171
    %v409 = vunpack.c.h.b16 %v171
    %v410 = vunpack.c.l.b16 %v172
    %v411 = vunpack.c.h.b16 %v172
    %v412 = vunpack.c.l.b16 %v173
    %v413 = vunpack.c.h.b16 %v173
    %v414 = vunpack.c.l.b16 %v174
    %v415 = vunpack.c.h.b16 %v174
    %v416 = vunpack.c.l.b16 %v175
    %v417 = vunpack.c.h.b16 %v175
    %v418 = vpack.c.b16 %v408, %v398
    %v419 = vpack.c.b16 %v409, %v399
    %v420 = vpack.c.b16 %v410, %v400
    %v421 = vpack.c.b16 %v411, %v401
    %v422 = vpack.c.b16 %v412, %v402
    %v423 = vpack.c.b16 %v413, %v403
    %v424 = vpack.c.b16 %v414, %v404
    %v425 = vpack.c.b16 %v415, %v405
    %v426 = vpack.c.b16 %v416, %v406
    %v427 = vpack.c.b16 %v417, %v407
    %vm438 = vcmask 130048
    %v440 = vsel %vm438, %v356, 0
    %v443 = vsel %vm438, %v357, 0
    %v446 = vsel %vm438, %v358, 0
    %v449 = vsel %vm438, %v359, 0
    %v452 = vsel %vm438, %v360, 0
    %v455 = vsel %vm438, %v361, 0
    %v458 = vsel %vm438, %v362, 0
    %v461 = vsel %vm438, %v363, 0
    %v464 = vsel %vm438, %v364, 0
    %v467 = vsel %vm438, %v365, 0
    %v470 = vsel %vm438, %v366, 0
    %v473 = vsel %vm438, %v367, 0
    %v476 = vsel %vm438, %v368, 0
    %v479 = vsel %vm438, %v369, 0
    %v482 = vsel %vm438, %v370, 0
    %v485 = vsel %vm438, %v371, 0
    %v488 = vsel %vm438, %v372, 0
    %v491 = vsel %vm438, %v373, 0
    %v494 = vsel %vm438, %v374, 0
    %v497 = vsel %vm438, %v375, 0
    %v500 = vsel %vm438, %v376, 0
    %v503 = vsel %vm438, %v377, 0
    %v506 = vsel %vm438, %v378, 0
    %v509 = vsel %vm438, %v379, 0
    %v512 = vsel %vm438, %v380, 0
    %v515 = vsel %vm438, %v381, 0
    %v518 = vsel %vm438, %v382, 0
    %v521 = vsel %vm438, %v383, 0
    %v524 = vsel %vm438, %v384, 0
    %v527 = vsel %vm438, %v385, 0
    %v530 = vsel %vm438, %v386, 0
    %v533 = vsel %vm438, %v387, 0
    %535 = vmatprep.subr.bf16.mxu0 %v419
    %536 = vmatpush1.bf16.msra.mxu0 %v418
    %537 = vmatprep.subr.bf16.mxu0 0
    %538 = vmatpush1.bf16.msra.mxu0 0
    %539 = vmatprep.subr.bf16.mxu0 0
    %540 = vmatpush1.bf16.msra.mxu0 0
    %541 = vmatprep.subr.bf16.mxu0 0
    %542 = vmatpush1.bf16.msra.mxu0 0
    %543 = vmatprep.subr.bf16.mxu0 0
    %544 = vmatpush1.bf16.msra.mxu0 0
    %545 = vmatprep.subr.bf16.mxu0 0
    %546 = vmatpush1.bf16.msra.mxu0 0
    %547 = vmatprep.subr.bf16.mxu0 0
    %548 = vmatpush1.bf16.msra.mxu0 0
    %549 = vmatprep.subr.bf16.mxu0 0
    %550 = vmatpush1.bf16.msra.mxu0 0
    %551 = vmatprep.subr.bf16.mxu0 0
    %552 = vmatpush1.bf16.msra.mxu0 0
    %553 = vmatprep.subr.bf16.mxu0 0
    %554 = vmatpush1.bf16.msra.mxu0 0
    %555 = vmatprep.subr.bf16.mxu0 0
    %556 = vmatpush1.bf16.msra.mxu0 0
    %557 = vmatprep.subr.bf16.mxu0 0
    %558 = vmatpush1.bf16.msra.mxu0 0
    %559 = vmatprep.subr.bf16.mxu0 0
    %560 = vmatpush1.bf16.msra.mxu0 0
    %561 = vmatprep.subr.bf16.mxu0 0
    %562 = vmatpush1.bf16.msra.mxu0 0
    %563 = vmatprep.subr.bf16.mxu0 0
    %564 = vmatpush1.bf16.msra.mxu0 0
    %565 = vmatprep.subr.bf16.mxu0 0
    %566 = vmatpush1.bf16.msra.mxu0 0
    %567 = vmatprep.mubr.bf16.mxu0 0
    %568 = vmatmul.mubr.bf16.gmra.mrb[0].mxu0 %v440
    %v569 = vpop.f32.mrb[0].mxu0
    %v570 = vadd.f32 %v181, %v569
    %v571 = vpop.f32.mrb[0].mxu0
    %v572 = vadd.f32 %v185, %v571
    %v573 = vpop.f32.mrb[0].mxu0
    %v574 = vadd.f32 %v181, %v573
    %v575 = vpop.f32.mrb[0].mxu0
    %v576 = vadd.f32 %v185, %v575
    %577 = vmatprep.mubr.bf16.mxu0 0
    %578 = vmatmul.mubr.bf16.gmra.mrb[0].mxu0 %v443
    %v579 = vpop.f32.mrb[0].mxu0
    %v580 = vadd.f32 %v181, %v579
    %v581 = vpop.f32.mrb[0].mxu0
    %v582 = vadd.f32 %v185, %v581
    %v583 = vpop.f32.mrb[0].mxu0
    %v584 = vadd.f32 %v181, %v583
    %v585 = vpop.f32.mrb[0].mxu0
    %v586 = vadd.f32 %v185, %v585
    %587 = vmatprep.mubr.bf16.mxu0 0
    %588 = vmatmul.mubr.bf16.gmra.mrb[0].mxu0 %v446
    %v589 = vpop.f32.mrb[0].mxu0
    %v590 = vadd.f32 %v181, %v589
    %v591 = vpop.f32.mrb[0].mxu0
    %v592 = vadd.f32 %v185, %v591
    %v593 = vpop.f32.mrb[0].mxu0
    %v594 = vadd.f32 %v181, %v593
    %v595 = vpop.f32.mrb[0].mxu0
    %v596 = vadd.f32 %v185, %v595
    %597 = vmatprep.mubr.bf16.mxu0 0
    %598 = vmatmul.mubr.bf16.gmra.mrb[0].mxu0 %v449
    %v599 = vpop.f32.mrb[0].mxu0
    %v600 = vadd.f32 %v181, %v599
    %v601 = vpop.f32.mrb[0].mxu0
    %v602 = vadd.f32 %v185, %v601
    %v603 = vpop.f32.mrb[0].mxu0
    %v604 = vadd.f32 %v181, %v603
    %v605 = vpop.f32.mrb[0].mxu0
    %v606 = vadd.f32 %v185, %v605
    %607 = vmatprep.mubr.bf16.mxu0 0
    %608 = vmatmul.mubr.bf16.gmra.mrb[0].mxu0 %v452
    %v609 = vpop.f32.mrb[0].mxu0
    %v610 = vadd.f32 %v181, %v609
    %v611 = vpop.f32.mrb[0].mxu0
    %v612 = vadd.f32 %v185, %v611
    %v613 = vpop.f32.mrb[0].mxu0
    %v614 = vadd.f32 %v181, %v613
    %v615 = vpop.f32.mrb[0].mxu0
    %v616 = vadd.f32 %v185, %v615
    %617 = vmatprep.mubr.bf16.mxu0 0
    %618 = vmatmul.mubr.bf16.gmra.mrb[0].mxu0 %v455
    %v619 = vpop.f32.mrb[0].mxu0
    %v620 = vadd.f32 %v181, %v619
    %v621 = vpop.f32.mrb[0].mxu0
    %v622 = vadd.f32 %v185, %v621
    %v623 = vpop.f32.mrb[0].mxu0
    %v624 = vadd.f32 %v181, %v623
    %v625 = vpop.f32.mrb[0].mxu0
    %v626 = vadd.f32 %v185, %v625
    %627 = vmatprep.mubr.bf16.mxu0 0
    %628 = vmatmul.mubr.bf16.gmra.mrb[0].mxu0 %v458
    %v629 = vpop.f32.mrb[0].mxu0
    %v630 = vadd.f32 %v181, %v629
    %v631 = vpop.f32.mrb[0].mxu0
    %v632 = vadd.f32 %v185, %v631
    %v633 = vpop.f32.mrb[0].mxu0
    %v634 = vadd.f32 %v181, %v633
    %v635 = vpop.f32.mrb[0].mxu0
    %v636 = vadd.f32 %v185, %v635
    %637 = vmatprep.mubr.bf16.mxu0 0
    %638 = vmatmul.mubr.bf16.gmra.mrb[0].mxu0 %v461
    %v639 = vpop.f32.mrb[0].mxu0
    %v640 = vadd.f32 %v181, %v639
    %v641 = vpop.f32.mrb[0].mxu0
    %v642 = vadd.f32 %v185, %v641
    %v643 = vpop.f32.mrb[0].mxu0
    %v644 = vadd.f32 %v181, %v643
    %v645 = vpop.f32.mrb[0].mxu0
    %v646 = vadd.f32 %v185, %v645
    %647 = vmatprep.mubr.bf16.mxu0 0
    %648 = vmatmul.mubr.bf16.gmra.mrb[0].mxu0 %v464
    %v649 = vpop.f32.mrb[0].mxu0
    %v650 = vadd.f32 %v181, %v649
    %v651 = vpop.f32.mrb[0].mxu0
    %v652 = vadd.f32 %v185, %v651
    %v653 = vpop.f32.mrb[0].mxu0
    %v654 = vadd.f32 %v181, %v653
    %v655 = vpop.f32.mrb[0].mxu0
    %v656 = vadd.f32 %v185, %v655
    %657 = vmatprep.mubr.bf16.mxu0 0
    %658 = vmatmul.mubr.bf16.gmra.mrb[0].mxu0 %v467
    %v659 = vpop.f32.mrb[0].mxu0
    %v660 = vadd.f32 %v181, %v659
    %v661 = vpop.f32.mrb[0].mxu0
    %v662 = vadd.f32 %v185, %v661
    %v663 = vpop.f32.mrb[0].mxu0
    %v664 = vadd.f32 %v181, %v663
    %v665 = vpop.f32.mrb[0].mxu0
    %v666 = vadd.f32 %v185, %v665
    %667 = vmatprep.mubr.bf16.mxu0 0
    %668 = vmatmul.mubr.bf16.gmra.mrb[0].mxu0 %v470
    %v669 = vpop.f32.mrb[0].mxu0
    %v670 = vadd.f32 %v181, %v669
    %v671 = vpop.f32.mrb[0].mxu0
    %v672 = vadd.f32 %v185, %v671
    %v673 = vpop.f32.mrb[0].mxu0
    %v674 = vadd.f32 %v181, %v673
    %v675 = vpop.f32.mrb[0].mxu0
    %v676 = vadd.f32 %v185, %v675
    %677 = vmatprep.mubr.bf16.mxu0 0
    %678 = vmatmul.mubr.bf16.gmra.mrb[0].mxu0 %v473
    %v679 = vpop.f32.mrb[0].mxu0
    %v680 = vadd.f32 %v181, %v679
    %v681 = vpop.f32.mrb[0].mxu0
    %v682 = vadd.f32 %v185, %v681
    %v683 = vpop.f32.mrb[0].mxu0
    %v684 = vadd.f32 %v181, %v683
    %v685 = vpop.f32.mrb[0].mxu0
    %v686 = vadd.f32 %v185, %v685
    %687 = vmatprep.mubr.bf16.mxu0 0
    %688 = vmatmul.mubr.bf16.gmra.mrb[0].mxu0 %v476
    %v689 = vpop.f32.mrb[0].mxu0
    %v690 = vadd.f32 %v181, %v689
    %v691 = vpop.f32.mrb[0].mxu0
    %v692 = vadd.f32 %v185, %v691
    %v693 = vpop.f32.mrb[0].mxu0
    %v694 = vadd.f32 %v181, %v693
    %v695 = vpop.f32.mrb[0].mxu0
    %v696 = vadd.f32 %v185, %v695
    %697 = vmatprep.mubr.bf16.mxu0 0
    %698 = vmatmul.mubr.bf16.gmra.mrb[0].mxu0 %v479
    %v699 = vpop.f32.mrb[0].mxu0
    %v700 = vadd.f32 %v181, %v699
    %v701 = vpop.f32.mrb[0].mxu0
    %v702 = vadd.f32 %v185, %v701
    %v703 = vpop.f32.mrb[0].mxu0
    %v704 = vadd.f32 %v181, %v703
    %v705 = vpop.f32.mrb[0].mxu0
    %v706 = vadd.f32 %v185, %v705
    %707 = vmatprep.mubr.bf16.mxu0 0
    %708 = vmatmul.mubr.bf16.gmra.mrb[0].mxu0 %v482
    %v709 = vpop.f32.mrb[0].mxu0
    %v710 = vadd.f32 %v181, %v709
    %v711 = vpop.f32.mrb[0].mxu0
    %v712 = vadd.f32 %v185, %v711
    %v713 = vpop.f32.mrb[0].mxu0
    %v714 = vadd.f32 %v181, %v713
    %v715 = vpop.f32.mrb[0].mxu0
    %v716 = vadd.f32 %v185, %v715
    %717 = vmatprep.mubr.bf16.mxu0 0
    %718 = vmatmul.mubr.bf16.gmra.mrb[0].mxu0 %v485
    %v719 = vpop.f32.mrb[0].mxu0
    %v720 = vadd.f32 %v181, %v719
    %v721 = vpop.f32.mrb[0].mxu0
    %v722 = vadd.f32 %v185, %v721
    %v723 = vpop.f32.mrb[0].mxu0
    %v724 = vadd.f32 %v181, %v723
    %v725 = vpop.f32.mrb[0].mxu0
    %v726 = vadd.f32 %v185, %v725
    %727 = vmatprep.mubr.bf16.mxu0 0
    %728 = vmatmul.mubr.bf16.gmra.mrb[0].mxu0 %v488
    %v729 = vpop.f32.mrb[0].mxu0
    %v730 = vadd.f32 %v181, %v729
    %v731 = vpop.f32.mrb[0].mxu0
    %v732 = vadd.f32 %v185, %v731
    %v733 = vpop.f32.mrb[0].mxu0
    %v734 = vadd.f32 %v181, %v733
    %v735 = vpop.f32.mrb[0].mxu0
    %v736 = vadd.f32 %v185, %v735
    %737 = vmatprep.mubr.bf16.mxu0 0
    %738 = vmatmul.mubr.bf16.gmra.mrb[0].mxu0 %v491
    %v739 = vpop.f32.mrb[0].mxu0
    %v740 = vadd.f32 %v181, %v739
    %v741 = vpop.f32.mrb[0].mxu0
    %v742 = vadd.f32 %v185, %v741
    %v743 = vpop.f32.mrb[0].mxu0
    %v744 = vadd.f32 %v181, %v743
    %v745 = vpop.f32.mrb[0].mxu0
    %v746 = vadd.f32 %v185, %v745
    %747 = vmatprep.mubr.bf16.mxu0 0
    %748 = vmatmul.mubr.bf16.gmra.mrb[0].mxu0 %v494
    %v749 = vpop.f32.mrb[0].mxu0
    %v750 = vadd.f32 %v181, %v749
    %v751 = vpop.f32.mrb[0].mxu0
    %v752 = vadd.f32 %v185, %v751
    %v753 = vpop.f32.mrb[0].mxu0
    %v754 = vadd.f32 %v181, %v753
    %v755 = vpop.f32.mrb[0].mxu0
    %v756 = vadd.f32 %v185, %v755
    %757 = vmatprep.mubr.bf16.mxu0 0
    %758 = vmatmul.mubr.bf16.gmra.mrb[0].mxu0 %v497
    %v759 = vpop.f32.mrb[0].mxu0
    %v760 = vadd.f32 %v181, %v759
    %v761 = vpop.f32.mrb[0].mxu0
    %v762 = vadd.f32 %v185, %v761
    %v763 = vpop.f32.mrb[0].mxu0
    %v764 = vadd.f32 %v181, %v763
    %v765 = vpop.f32.mrb[0].mxu0
    %v766 = vadd.f32 %v185, %v765
    %767 = vmatprep.mubr.bf16.mxu0 0
    %768 = vmatmul.mubr.bf16.gmra.mrb[0].mxu0 %v500
    %v769 = vpop.f32.mrb[0].mxu0
    %v770 = vadd.f32 %v181, %v769
    %v771 = vpop.f32.mrb[0].mxu0
    %v772 = vadd.f32 %v185, %v771
    %v773 = vpop.f32.mrb[0].mxu0
    %v774 = vadd.f32 %v181, %v773
    %v775 = vpop.f32.mrb[0].mxu0
    %v776 = vadd.f32 %v185, %v775
    %777 = vmatprep.mubr.bf16.mxu0 0
    %778 = vmatmul.mubr.bf16.gmra.mrb[0].mxu0 %v503
    %v779 = vpop.f32.mrb[0].mxu0
    %v780 = vadd.f32 %v181, %v779
    %v781 = vpop.f32.mrb[0].mxu0
    %v782 = vadd.f32 %v185, %v781
    %v783 = vpop.f32.mrb[0].mxu0
    %v784 = vadd.f32 %v181, %v783
    %v785 = vpop.f32.mrb[0].mxu0
    %v786 = vadd.f32 %v185, %v785
    %787 = vmatprep.mubr.bf16.mxu0 0
    %788 = vmatmul.mubr.bf16.gmra.mrb[0].mxu0 %v506
    %v789 = vpop.f32.mrb[0].mxu0
    %v790 = vadd.f32 %v181, %v789
    %v791 = vpop.f32.mrb[0].mxu0
    %v792 = vadd.f32 %v185, %v791
    %v793 = vpop.f32.mrb[0].mxu0
    %v794 = vadd.f32 %v181, %v793
    %v795 = vpop.f32.mrb[0].mxu0
    %v796 = vadd.f32 %v185, %v795
    %797 = vmatprep.mubr.bf16.mxu0 0
    %798 = vmatmul.mubr.bf16.gmra.mrb[0].mxu0 %v509
    %v799 = vpop.f32.mrb[0].mxu0
    %v800 = vadd.f32 %v181, %v799
    %v801 = vpop.f32.mrb[0].mxu0
    %v802 = vadd.f32 %v185, %v801
    %v803 = vpop.f32.mrb[0].mxu0
    %v804 = vadd.f32 %v181, %v803
    %v805 = vpop.f32.mrb[0].mxu0
    %v806 = vadd.f32 %v185, %v805
    %807 = vmatprep.mubr.bf16.mxu0 0
    %808 = vmatmul.mubr.bf16.gmra.mrb[0].mxu0 %v512
    %v809 = vpop.f32.mrb[0].mxu0
    %v810 = vadd.f32 %v181, %v809
    %v811 = vpop.f32.mrb[0].mxu0
    %v812 = vadd.f32 %v185, %v811
    %v813 = vpop.f32.mrb[0].mxu0
    %v814 = vadd.f32 %v181, %v813
    %v815 = vpop.f32.mrb[0].mxu0
    %v816 = vadd.f32 %v185, %v815
    %817 = vmatprep.mubr.bf16.mxu0 0
    %818 = vmatmul.mubr.bf16.gmra.mrb[0].mxu0 %v515
    %v819 = vpop.f32.mrb[0].mxu0
    %v820 = vadd.f32 %v181, %v819
    %v821 = vpop.f32.mrb[0].mxu0
    %v822 = vadd.f32 %v185, %v821
    %v823 = vpop.f32.mrb[0].mxu0
    %v824 = vadd.f32 %v181, %v823
    %v825 = vpop.f32.mrb[0].mxu0
    %v826 = vadd.f32 %v185, %v825
    %827 = vmatprep.mubr.bf16.mxu0 0
    %828 = vmatmul.mubr.bf16.gmra.mrb[0].mxu0 %v518
    %v829 = vpop.f32.mrb[0].mxu0
    %v830 = vadd.f32 %v181, %v829
    %v831 = vpop.f32.mrb[0].mxu0
    %v832 = vadd.f32 %v185, %v831
    %v833 = vpop.f32.mrb[0].mxu0
    %v834 = vadd.f32 %v181, %v833
    %v835 = vpop.f32.mrb[0].mxu0
    %v836 = vadd.f32 %v185, %v835
    %837 = vmatprep.mubr.bf16.mxu0 0
    %838 = vmatmul.mubr.bf16.gmra.mrb[0].mxu0 %v521
    %v839 = vpop.f32.mrb[0].mxu0
    %v840 = vadd.f32 %v181, %v839
    %v841 = vpop.f32.mrb[0].mxu0
    %v842 = vadd.f32 %v185, %v841
    %v843 = vpop.f32.mrb[0].mxu0
    %v844 = vadd.f32 %v181, %v843
    %v845 = vpop.f32.mrb[0].mxu0
    %v846 = vadd.f32 %v185, %v845
    %847 = vmatprep.mubr.bf16.mxu0 0
    %848 = vmatmul.mubr.bf16.gmra.mrb[0].mxu0 %v524
    %v849 = vpop.f32.mrb[0].mxu0
    %v850 = vadd.f32 %v181, %v849
    %v851 = vpop.f32.mrb[0].mxu0
    %v852 = vadd.f32 %v185, %v851
    %v853 = vpop.f32.mrb[0].mxu0
    %v854 = vadd.f32 %v181, %v853
    %v855 = vpop.f32.mrb[0].mxu0
    %v856 = vadd.f32 %v185, %v855
    %857 = vmatprep.mubr.bf16.mxu0 0
    %858 = vmatmul.mubr.bf16.gmra.mrb[0].mxu0 %v527
    %v859 = vpop.f32.mrb[0].mxu0
    %v860 = vadd.f32 %v181, %v859
    %v861 = vpop.f32.mrb[0].mxu0
    %v862 = vadd.f32 %v185, %v861
    %v863 = vpop.f32.mrb[0].mxu0
    %v864 = vadd.f32 %v181, %v863
    %v865 = vpop.f32.mrb[0].mxu0
    %v866 = vadd.f32 %v185, %v865
    %867 = vmatprep.mubr.bf16.mxu0 0
    %868 = vmatmul.mubr.bf16.gmra.mrb[0].mxu0 %v530
    %v869 = vpop.f32.mrb[0].mxu0
    %v870 = vadd.f32 %v181, %v869
    %v871 = vpop.f32.mrb[0].mxu0
    %v872 = vadd.f32 %v185, %v871
    %v873 = vpop.f32.mrb[0].mxu0
    %v874 = vadd.f32 %v181, %v873
    %v875 = vpop.f32.mrb[0].mxu0
    %v876 = vadd.f32 %v185, %v875
    %877 = vmatprep.mubr.bf16.mxu0 0
    %878 = vmatmul.mubr.bf16.gmra.mrb[0].mxu0 %v533
    %v879 = vpop.f32.mrb[0].mxu0
    %v880 = vadd.f32 %v181, %v879
    %v881 = vpop.f32.mrb[0].mxu0
    %v882 = vadd.f32 %v185, %v881
    %v883 = vpop.f32.mrb[0].mxu0
    %v884 = vadd.f32 %v181, %v883
    %v885 = vpop.f32.mrb[0].mxu0
    %v886 = vadd.f32 %v185, %v885
    %887 = vdwg.mxu0
    %888 = vmatprep.subr.bf16.mxu0 %v421
    %889 = vmatpush1.bf16.msra.mxu0 %v420
    %890 = vmatprep.subr.bf16.mxu0 0
    %891 = vmatpush1.bf16.msra.mxu0 0
    %892 = vmatprep.subr.bf16.mxu0 0
    %893 = vmatpush1.bf16.msra.mxu0 0
    %894 = vmatprep.subr.bf16.mxu0 0
    %895 = vmatpush1.bf16.msra.mxu0 0
    %896 = vmatprep.subr.bf16.mxu0 0
    %897 = vmatpush1.bf16.msra.mxu0 0
    %898 = vmatprep.subr.bf16.mxu0 0
    %899 = vmatpush1.bf16.msra.mxu0 0
    %900 = vmatprep.subr.bf16.mxu0 0
    %901 = vmatpush1.bf16.msra.mxu0 0
    %902 = vmatprep.subr.bf16.mxu0 0
    %903 = vmatpush1.bf16.msra.mxu0 0
    %904 = vmatprep.subr.bf16.mxu0 0
    %905 = vmatpush1.bf16.msra.mxu0 0
    %906 = vmatprep.subr.bf16.mxu0 0
    %907 = vmatpush1.bf16.msra.mxu0 0
    %908 = vmatprep.subr.bf16.mxu0 0
    %909 = vmatpush1.bf16.msra.mxu0 0
    %910 = vmatprep.subr.bf16.mxu0 0
    %911 = vmatpush1.bf16.msra.mxu0 0
    %912 = vmatprep.subr.bf16.mxu0 0
    %913 = vmatpush1.bf16.msra.mxu0 0
    %914 = vmatprep.subr.bf16.mxu0 0
    %915 = vmatpush1.bf16.msra.mxu0 0
    %916 = vmatprep.subr.bf16.mxu0 0
    %917 = vmatpush1.bf16.msra.mxu0 0
    %918 = vmatprep.subr.bf16.mxu0 0
    %919 = vmatpush1.bf16.msra.mxu0 0
    %920 = vmatprep.mubr.bf16.mxu0 0
    %921 = vmatmul.mubr.bf16.gmra.mrb[0].mxu0 %v440
    %v922 = vpop.f32.mrb[0].mxu0
    %v923 = vadd.f32 %v189, %v922
    %v924 = vpop.f32.mrb[0].mxu0
    %v925 = vadd.f32 %v193, %v924
    %v926 = vpop.f32.mrb[0].mxu0
    %v927 = vadd.f32 %v189, %v926
    %v928 = vpop.f32.mrb[0].mxu0
    %v929 = vadd.f32 %v193, %v928
    %930 = vmatprep.mubr.bf16.mxu0 0
    %931 = vmatmul.mubr.bf16.gmra.mrb[0].mxu0 %v443
    %v932 = vpop.f32.mrb[0].mxu0
    %v933 = vadd.f32 %v189, %v932
    %v934 = vpop.f32.mrb[0].mxu0
    %v935 = vadd.f32 %v193, %v934
    %v936 = vpop.f32.mrb[0].mxu0
    %v937 = vadd.f32 %v189, %v936
    %v938 = vpop.f32.mrb[0].mxu0
    %v939 = vadd.f32 %v193, %v938
    %940 = vmatprep.mubr.bf16.mxu0 0
    %941 = vmatmul.mubr.bf16.gmra.mrb[0].mxu0 %v446
    %v942 = vpop.f32.mrb[0].mxu0
    %v943 = vadd.f32 %v189, %v942
    %v944 = vpop.f32.mrb[0].mxu0
    %v945 = vadd.f32 %v193, %v944
    %v946 = vpop.f32.mrb[0].mxu0
    %v947 = vadd.f32 %v189, %v946
    %v948 = vpop.f32.mrb[0].mxu0
    %v949 = vadd.f32 %v193, %v948
    %950 = vmatprep.mubr.bf16.mxu0 0
    %951 = vmatmul.mubr.bf16.gmra.mrb[0].mxu0 %v449
    %v952 = vpop.f32.mrb[0].mxu0
    %v953 = vadd.f32 %v189, %v952
    %v954 = vpop.f32.mrb[0].mxu0
    %v955 = vadd.f32 %v193, %v954
    %v956 = vpop.f32.mrb[0].mxu0
    %v957 = vadd.f32 %v189, %v956
    %v958 = vpop.f32.mrb[0].mxu0
    %v959 = vadd.f32 %v193, %v958
    %960 = vmatprep.mubr.bf16.mxu0 0
    %961 = vmatmul.mubr.bf16.gmra.mrb[0].mxu0 %v452
    %v962 = vpop.f32.mrb[0].mxu0
    %v963 = vadd.f32 %v189, %v962
    %v964 = vpop.f32.mrb[0].mxu0
    %v965 = vadd.f32 %v193, %v964
    %v966 = vpop.f32.mrb[0].mxu0
    %v967 = vadd.f32 %v189, %v966
    %v968 = vpop.f32.mrb[0].mxu0
    %v969 = vadd.f32 %v193, %v968
    %970 = vmatprep.mubr.bf16.mxu0 0
    %971 = vmatmul.mubr.bf16.gmra.mrb[0].mxu0 %v455
    %v972 = vpop.f32.mrb[0].mxu0
    %v973 = vadd.f32 %v189, %v972
    %v974 = vpop.f32.mrb[0].mxu0
    %v975 = vadd.f32 %v193, %v974
    %v976 = vpop.f32.mrb[0].mxu0
    %v977 = vadd.f32 %v189, %v976
    %v978 = vpop.f32.mrb[0].mxu0
    %v979 = vadd.f32 %v193, %v978
    %980 = vmatprep.mubr.bf16.mxu0 0
    %981 = vmatmul.mubr.bf16.gmra.mrb[0].mxu0 %v458
    %v982 = vpop.f32.mrb[0].mxu0
    %v983 = vadd.f32 %v189, %v982
    %v984 = vpop.f32.mrb[0].mxu0
    %v985 = vadd.f32 %v193, %v984
    %v986 = vpop.f32.mrb[0].mxu0
    %v987 = vadd.f32 %v189, %v986
    %v988 = vpop.f32.mrb[0].mxu0
    %v989 = vadd.f32 %v193, %v988
    %990 = vmatprep.mubr.bf16.mxu0 0
    %991 = vmatmul.mubr.bf16.gmra.mrb[0].mxu0 %v461
    %v992 = vpop.f32.mrb[0].mxu0
    %v993 = vadd.f32 %v189, %v992
    %v994 = vpop.f32.mrb[0].mxu0
    %v995 = vadd.f32 %v193, %v994
    %v996 = vpop.f32.mrb[0].mxu0
    %v997 = vadd.f32 %v189, %v996
    %v998 = vpop.f32.mrb[0].mxu0
    %v999 = vadd.f32 %v193, %v998
    %1000 = vmatprep.mubr.bf16.mxu0 0
    %1001 = vmatmul.mubr.bf16.gmra.mrb[0].mxu0 %v464
    %v1002 = vpop.f32.mrb[0].mxu0
    %v1003 = vadd.f32 %v189, %v1002
    %v1004 = vpop.f32.mrb[0].mxu0
    %v1005 = vadd.f32 %v193, %v1004
    %v1006 = vpop.f32.mrb[0].mxu0
    %v1007 = vadd.f32 %v189, %v1006
    %v1008 = vpop.f32.mrb[0].mxu0
    %v1009 = vadd.f32 %v193, %v1008
    %1010 = vmatprep.mubr.bf16.mxu0 0
    %1011 = vmatmul.mubr.bf16.gmra.mrb[0].mxu0 %v467
    %v1012 = vpop.f32.mrb[0].mxu0
    %v1013 = vadd.f32 %v189, %v1012
    %v1014 = vpop.f32.mrb[0].mxu0
    %v1015 = vadd.f32 %v193, %v1014
    %v1016 = vpop.f32.mrb[0].mxu0
    %v1017 = vadd.f32 %v189, %v1016
    %v1018 = vpop.f32.mrb[0].mxu0
    %v1019 = vadd.f32 %v193, %v1018
    %1020 = vmatprep.mubr.bf16.mxu0 0
    %1021 = vmatmul.mubr.bf16.gmra.mrb[0].mxu0 %v470
    %v1022 = vpop.f32.mrb[0].mxu0
    %v1023 = vadd.f32 %v189, %v1022
    %v1024 = vpop.f32.mrb[0].mxu0
    %v1025 = vadd.f32 %v193, %v1024
    %v1026 = vpop.f32.mrb[0].mxu0
    %v1027 = vadd.f32 %v189, %v1026
    %v1028 = vpop.f32.mrb[0].mxu0
    %v1029 = vadd.f32 %v193, %v1028
    %1030 = vmatprep.mubr.bf16.mxu0 0
    %1031 = vmatmul.mubr.bf16.gmra.mrb[0].mxu0 %v473
    %v1032 = vpop.f32.mrb[0].mxu0
    %v1033 = vadd.f32 %v189, %v1032
    %v1034 = vpop.f32.mrb[0].mxu0
    %v1035 = vadd.f32 %v193, %v1034
    %v1036 = vpop.f32.mrb[0].mxu0
    %v1037 = vadd.f32 %v189, %v1036
    %v1038 = vpop.f32.mrb[0].mxu0
    %v1039 = vadd.f32 %v193, %v1038
    %1040 = vmatprep.mubr.bf16.mxu0 0
    %1041 = vmatmul.mubr.bf16.gmra.mrb[0].mxu0 %v476
    %v1042 = vpop.f32.mrb[0].mxu0
    %v1043 = vadd.f32 %v189, %v1042
    %v1044 = vpop.f32.mrb[0].mxu0
    %v1045 = vadd.f32 %v193, %v1044
    %v1046 = vpop.f32.mrb[0].mxu0
    %v1047 = vadd.f32 %v189, %v1046
    %v1048 = vpop.f32.mrb[0].mxu0
    %v1049 = vadd.f32 %v193, %v1048
    %1050 = vmatprep.mubr.bf16.mxu0 0
    %1051 = vmatmul.mubr.bf16.gmra.mrb[0].mxu0 %v479
    %v1052 = vpop.f32.mrb[0].mxu0
    %v1053 = vadd.f32 %v189, %v1052
    %v1054 = vpop.f32.mrb[0].mxu0
    %v1055 = vadd.f32 %v193, %v1054
    %v1056 = vpop.f32.mrb[0].mxu0
    %v1057 = vadd.f32 %v189, %v1056
    %v1058 = vpop.f32.mrb[0].mxu0
    %v1059 = vadd.f32 %v193, %v1058
    %1060 = vmatprep.mubr.bf16.mxu0 0
    %1061 = vmatmul.mubr.bf16.gmra.mrb[0].mxu0 %v482
    %v1062 = vpop.f32.mrb[0].mxu0
    %v1063 = vadd.f32 %v189, %v1062
    %v1064 = vpop.f32.mrb[0].mxu0
    %v1065 = vadd.f32 %v193, %v1064
    %v1066 = vpop.f32.mrb[0].mxu0
    %v1067 = vadd.f32 %v189, %v1066
    %v1068 = vpop.f32.mrb[0].mxu0
    %v1069 = vadd.f32 %v193, %v1068
    %1070 = vmatprep.mubr.bf16.mxu0 0
    %1071 = vmatmul.mubr.bf16.gmra.mrb[0].mxu0 %v485
    %v1072 = vpop.f32.mrb[0].mxu0
    %v1073 = vadd.f32 %v189, %v1072
    %v1074 = vpop.f32.mrb[0].mxu0
    %v1075 = vadd.f32 %v193, %v1074
    %v1076 = vpop.f32.mrb[0].mxu0
    %v1077 = vadd.f32 %v189, %v1076
    %v1078 = vpop.f32.mrb[0].mxu0
    %v1079 = vadd.f32 %v193, %v1078
    %1080 = vmatprep.mubr.bf16.mxu0 0
    %1081 = vmatmul.mubr.bf16.gmra.mrb[0].mxu0 %v488
    %v1082 = vpop.f32.mrb[0].mxu0
    %v1083 = vadd.f32 %v189, %v1082
    %v1084 = vpop.f32.mrb[0].mxu0
    %v1085 = vadd.f32 %v193, %v1084
    %v1086 = vpop.f32.mrb[0].mxu0
    %v1087 = vadd.f32 %v189, %v1086
    %v1088 = vpop.f32.mrb[0].mxu0
    %v1089 = vadd.f32 %v193, %v1088
    %1090 = vmatprep.mubr.bf16.mxu0 0
    %1091 = vmatmul.mubr.bf16.gmra.mrb[0].mxu0 %v491
    %v1092 = vpop.f32.mrb[0].mxu0
    %v1093 = vadd.f32 %v189, %v1092
    %v1094 = vpop.f32.mrb[0].mxu0
    %v1095 = vadd.f32 %v193, %v1094
    %v1096 = vpop.f32.mrb[0].mxu0
    %v1097 = vadd.f32 %v189, %v1096
    %v1098 = vpop.f32.mrb[0].mxu0
    %v1099 = vadd.f32 %v193, %v1098
    %1100 = vmatprep.mubr.bf16.mxu0 0
    %1101 = vmatmul.mubr.bf16.gmra.mrb[0].mxu0 %v494
    %v1102 = vpop.f32.mrb[0].mxu0
    %v1103 = vadd.f32 %v189, %v1102
    %v1104 = vpop.f32.mrb[0].mxu0
    %v1105 = vadd.f32 %v193, %v1104
    %v1106 = vpop.f32.mrb[0].mxu0
    %v1107 = vadd.f32 %v189, %v1106
    %v1108 = vpop.f32.mrb[0].mxu0
    %v1109 = vadd.f32 %v193, %v1108
    %1110 = vmatprep.mubr.bf16.mxu0 0
    %1111 = vmatmul.mubr.bf16.gmra.mrb[0].mxu0 %v497
    %v1112 = vpop.f32.mrb[0].mxu0
    %v1113 = vadd.f32 %v189, %v1112
    %v1114 = vpop.f32.mrb[0].mxu0
    %v1115 = vadd.f32 %v193, %v1114
    %v1116 = vpop.f32.mrb[0].mxu0
    %v1117 = vadd.f32 %v189, %v1116
    %v1118 = vpop.f32.mrb[0].mxu0
    %v1119 = vadd.f32 %v193, %v1118
    %1120 = vmatprep.mubr.bf16.mxu0 0
    %1121 = vmatmul.mubr.bf16.gmra.mrb[0].mxu0 %v500
    %v1122 = vpop.f32.mrb[0].mxu0
    %v1123 = vadd.f32 %v189, %v1122
    %v1124 = vpop.f32.mrb[0].mxu0
    %v1125 = vadd.f32 %v193, %v1124
    %v1126 = vpop.f32.mrb[0].mxu0
    %v1127 = vadd.f32 %v189, %v1126
    %v1128 = vpop.f32.mrb[0].mxu0
    %v1129 = vadd.f32 %v193, %v1128
    %1130 = vmatprep.mubr.bf16.mxu0 0
    %1131 = vmatmul.mubr.bf16.gmra.mrb[0].mxu0 %v503
    %v1132 = vpop.f32.mrb[0].mxu0
    %v1133 = vadd.f32 %v189, %v1132
    %v1134 = vpop.f32.mrb[0].mxu0
    %v1135 = vadd.f32 %v193, %v1134
    %v1136 = vpop.f32.mrb[0].mxu0
    %v1137 = vadd.f32 %v189, %v1136
    %v1138 = vpop.f32.mrb[0].mxu0
    %v1139 = vadd.f32 %v193, %v1138
    %1140 = vmatprep.mubr.bf16.mxu0 0
    %1141 = vmatmul.mubr.bf16.gmra.mrb[0].mxu0 %v506
    %v1142 = vpop.f32.mrb[0].mxu0
    %v1143 = vadd.f32 %v189, %v1142
    %v1144 = vpop.f32.mrb[0].mxu0
    %v1145 = vadd.f32 %v193, %v1144
    %v1146 = vpop.f32.mrb[0].mxu0
    %v1147 = vadd.f32 %v189, %v1146
    %v1148 = vpop.f32.mrb[0].mxu0
    %v1149 = vadd.f32 %v193, %v1148
    %1150 = vmatprep.mubr.bf16.mxu0 0
    %1151 = vmatmul.mubr.bf16.gmra.mrb[0].mxu0 %v509
    %v1152 = vpop.f32.mrb[0].mxu0
    %v1153 = vadd.f32 %v189, %v1152
    %v1154 = vpop.f32.mrb[0].mxu0
    %v1155 = vadd.f32 %v193, %v1154
    %v1156 = vpop.f32.mrb[0].mxu0
    %v1157 = vadd.f32 %v189, %v1156
    %v1158 = vpop.f32.mrb[0].mxu0
    %v1159 = vadd.f32 %v193, %v1158
    %1160 = vmatprep.mubr.bf16.mxu0 0
    %1161 = vmatmul.mubr.bf16.gmra.mrb[0].mxu0 %v512
    %v1162 = vpop.f32.mrb[0].mxu0
    %v1163 = vadd.f32 %v189, %v1162
    %v1164 = vpop.f32.mrb[0].mxu0
    %v1165 = vadd.f32 %v193, %v1164
    %v1166 = vpop.f32.mrb[0].mxu0
    %v1167 = vadd.f32 %v189, %v1166
    %v1168 = vpop.f32.mrb[0].mxu0
    %v1169 = vadd.f32 %v193, %v1168
    %1170 = vmatprep.mubr.bf16.mxu0 0
    %1171 = vmatmul.mubr.bf16.gmra.mrb[0].mxu0 %v515
    %v1172 = vpop.f32.mrb[0].mxu0
    %v1173 = vadd.f32 %v189, %v1172
    %v1174 = vpop.f32.mrb[0].mxu0
    %v1175 = vadd.f32 %v193, %v1174
    %v1176 = vpop.f32.mrb[0].mxu0
    %v1177 = vadd.f32 %v189, %v1176
    %v1178 = vpop.f32.mrb[0].mxu0
    %v1179 = vadd.f32 %v193, %v1178
    %1180 = vmatprep.mubr.bf16.mxu0 0
    %1181 = vmatmul.mubr.bf16.gmra.mrb[0].mxu0 %v518
    %v1182 = vpop.f32.mrb[0].mxu0
    %v1183 = vadd.f32 %v189, %v1182
    %v1184 = vpop.f32.mrb[0].mxu0
    %v1185 = vadd.f32 %v193, %v1184
    %v1186 = vpop.f32.mrb[0].mxu0
    %v1187 = vadd.f32 %v189, %v1186
    %v1188 = vpop.f32.mrb[0].mxu0
    %v1189 = vadd.f32 %v193, %v1188
    %1190 = vmatprep.mubr.bf16.mxu0 0
    %1191 = vmatmul.mubr.bf16.gmra.mrb[0].mxu0 %v521
    %v1192 = vpop.f32.mrb[0].mxu0
    %v1193 = vadd.f32 %v189, %v1192
    %v1194 = vpop.f32.mrb[0].mxu0
    %v1195 = vadd.f32 %v193, %v1194
    %v1196 = vpop.f32.mrb[0].mxu0
    %v1197 = vadd.f32 %v189, %v1196
    %v1198 = vpop.f32.mrb[0].mxu0
    %v1199 = vadd.f32 %v193, %v1198
    %1200 = vmatprep.mubr.bf16.mxu0 0
    %1201 = vmatmul.mubr.bf16.gmra.mrb[0].mxu0 %v524
    %v1202 = vpop.f32.mrb[0].mxu0
    %v1203 = vadd.f32 %v189, %v1202
    %v1204 = vpop.f32.mrb[0].mxu0
    %v1205 = vadd.f32 %v193, %v1204
    %v1206 = vpop.f32.mrb[0].mxu0
    %v1207 = vadd.f32 %v189, %v1206
    %v1208 = vpop.f32.mrb[0].mxu0
    %v1209 = vadd.f32 %v193, %v1208
    %1210 = vmatprep.mubr.bf16.mxu0 0
    %1211 = vmatmul.mubr.bf16.gmra.mrb[0].mxu0 %v527
    %v1212 = vpop.f32.mrb[0].mxu0
    %v1213 = vadd.f32 %v189, %v1212
    %v1214 = vpop.f32.mrb[0].mxu0
    %v1215 = vadd.f32 %v193, %v1214
    %v1216 = vpop.f32.mrb[0].mxu0
    %v1217 = vadd.f32 %v189, %v1216
    %v1218 = vpop.f32.mrb[0].mxu0
    %v1219 = vadd.f32 %v193, %v1218
    %1220 = vmatprep.mubr.bf16.mxu0 0
    %1221 = vmatmul.mubr.bf16.gmra.mrb[0].mxu0 %v530
    %v1222 = vpop.f32.mrb[0].mxu0
    %v1223 = vadd.f32 %v189, %v1222
    %v1224 = vpop.f32.mrb[0].mxu0
    %v1225 = vadd.f32 %v193, %v1224
    %v1226 = vpop.f32.mrb[0].mxu0
    %v1227 = vadd.f32 %v189, %v1226
    %v1228 = vpop.f32.mrb[0].mxu0
    %v1229 = vadd.f32 %v193, %v1228
    %1230 = vmatprep.mubr.bf16.mxu0 0
    %1231 = vmatmul.mubr.bf16.gmra.mrb[0].mxu0 %v533
    %v1232 = vpop.f32.mrb[0].mxu0
    %v1233 = vadd.f32 %v189, %v1232
    %v1234 = vpop.f32.mrb[0].mxu0
    %v1235 = vadd.f32 %v193, %v1234
    %v1236 = vpop.f32.mrb[0].mxu0
    %v1237 = vadd.f32 %v189, %v1236
    %v1238 = vpop.f32.mrb[0].mxu0
    %v1239 = vadd.f32 %v193, %v1238
    %1240 = vdwg.mxu0
    %1241 = vmatprep.subr.bf16.mxu0 %v423
    %1242 = vmatpush1.bf16.msra.mxu0 %v422
    %1243 = vmatprep.subr.bf16.mxu0 0
    %1244 = vmatpush1.bf16.msra.mxu0 0
    %1245 = vmatprep.subr.bf16.mxu0 0
    %1246 = vmatpush1.bf16.msra.mxu0 0
    %1247 = vmatprep.subr.bf16.mxu0 0
    %1248 = vmatpush1.bf16.msra.mxu0 0
    %1249 = vmatprep.subr.bf16.mxu0 0
    %1250 = vmatpush1.bf16.msra.mxu0 0
    %1251 = vmatprep.subr.bf16.mxu0 0
    %1252 = vmatpush1.bf16.msra.mxu0 0
    %1253 = vmatprep.subr.bf16.mxu0 0
    %1254 = vmatpush1.bf16.msra.mxu0 0
    %1255 = vmatprep.subr.bf16.mxu0 0
    %1256 = vmatpush1.bf16.msra.mxu0 0
    %1257 = vmatprep.subr.bf16.mxu0 0
    %1258 = vmatpush1.bf16.msra.mxu0 0
    %1259 = vmatprep.subr.bf16.mxu0 0
    %1260 = vmatpush1.bf16.msra.mxu0 0
    %1261 = vmatprep.subr.bf16.mxu0 0
    %1262 = vmatpush1.bf16.msra.mxu0 0
    %1263 = vmatprep.subr.bf16.mxu0 0
    %1264 = vmatpush1.bf16.msra.mxu0 0
    %1265 = vmatprep.subr.bf16.mxu0 0
    %1266 = vmatpush1.bf16.msra.mxu0 0
    %1267 = vmatprep.subr.bf16.mxu0 0
    %1268 = vmatpush1.bf16.msra.mxu0 0
    %1269 = vmatprep.subr.bf16.mxu0 0
    %1270 = vmatpush1.bf16.msra.mxu0 0
    %1271 = vmatprep.subr.bf16.mxu0 0
    %1272 = vmatpush1.bf16.msra.mxu0 0
    %1273 = vmatprep.mubr.bf16.mxu0 0
    %1274 = vmatmul.mubr.bf16.gmra.mrb[0].mxu0 %v440
    %v1275 = vpop.f32.mrb[0].mxu0
    %v1276 = vadd.f32 %v197, %v1275
    %v1277 = vpop.f32.mrb[0].mxu0
    %v1278 = vadd.f32 %v201, %v1277
    %v1279 = vpop.f32.mrb[0].mxu0
    %v1280 = vadd.f32 %v197, %v1279
    %v1281 = vpop.f32.mrb[0].mxu0
    %v1282 = vadd.f32 %v201, %v1281
    %1283 = vmatprep.mubr.bf16.mxu0 0
    %1284 = vmatmul.mubr.bf16.gmra.mrb[0].mxu0 %v443
    %v1285 = vpop.f32.mrb[0].mxu0
    %v1286 = vadd.f32 %v197, %v1285
    %v1287 = vpop.f32.mrb[0].mxu0
    %v1288 = vadd.f32 %v201, %v1287
    %v1289 = vpop.f32.mrb[0].mxu0
    %v1290 = vadd.f32 %v197, %v1289
    %v1291 = vpop.f32.mrb[0].mxu0
    %v1292 = vadd.f32 %v201, %v1291
    %1293 = vmatprep.mubr.bf16.mxu0 0
    %1294 = vmatmul.mubr.bf16.gmra.mrb[0].mxu0 %v446
    %v1295 = vpop.f32.mrb[0].mxu0
    %v1296 = vadd.f32 %v197, %v1295
    %v1297 = vpop.f32.mrb[0].mxu0
    %v1298 = vadd.f32 %v201, %v1297
    %v1299 = vpop.f32.mrb[0].mxu0
    %v1300 = vadd.f32 %v197, %v1299
    %v1301 = vpop.f32.mrb[0].mxu0
    %v1302 = vadd.f32 %v201, %v1301
    %1303 = vmatprep.mubr.bf16.mxu0 0
    %1304 = vmatmul.mubr.bf16.gmra.mrb[0].mxu0 %v449
    %v1305 = vpop.f32.mrb[0].mxu0
    %v1306 = vadd.f32 %v197, %v1305
    %v1307 = vpop.f32.mrb[0].mxu0
    %v1308 = vadd.f32 %v201, %v1307
    %v1309 = vpop.f32.mrb[0].mxu0
    %v1310 = vadd.f32 %v197, %v1309
    %v1311 = vpop.f32.mrb[0].mxu0
    %v1312 = vadd.f32 %v201, %v1311
    %1313 = vmatprep.mubr.bf16.mxu0 0
    %1314 = vmatmul.mubr.bf16.gmra.mrb[0].mxu0 %v452
    %v1315 = vpop.f32.mrb[0].mxu0
    %v1316 = vadd.f32 %v197, %v1315
    %v1317 = vpop.f32.mrb[0].mxu0
    %v1318 = vadd.f32 %v201, %v1317
    %v1319 = vpop.f32.mrb[0].mxu0
    %v1320 = vadd.f32 %v197, %v1319
    %v1321 = vpop.f32.mrb[0].mxu0
    %v1322 = vadd.f32 %v201, %v1321
    %1323 = vmatprep.mubr.bf16.mxu0 0
    %1324 = vmatmul.mubr.bf16.gmra.mrb[0].mxu0 %v455
    %v1325 = vpop.f32.mrb[0].mxu0
    %v1326 = vadd.f32 %v197, %v1325
    %v1327 = vpop.f32.mrb[0].mxu0
    %v1328 = vadd.f32 %v201, %v1327
    %v1329 = vpop.f32.mrb[0].mxu0
    %v1330 = vadd.f32 %v197, %v1329
    %v1331 = vpop.f32.mrb[0].mxu0
    %v1332 = vadd.f32 %v201, %v1331
    %1333 = vmatprep.mubr.bf16.mxu0 0
    %1334 = vmatmul.mubr.bf16.gmra.mrb[0].mxu0 %v458
    %v1335 = vpop.f32.mrb[0].mxu0
    %v1336 = vadd.f32 %v197, %v1335
    %v1337 = vpop.f32.mrb[0].mxu0
    %v1338 = vadd.f32 %v201, %v1337
    %v1339 = vpop.f32.mrb[0].mxu0
    %v1340 = vadd.f32 %v197, %v1339
    %v1341 = vpop.f32.mrb[0].mxu0
    %v1342 = vadd.f32 %v201, %v1341
    %1343 = vmatprep.mubr.bf16.mxu0 0
    %1344 = vmatmul.mubr.bf16.gmra.mrb[0].mxu0 %v461
    %v1345 = vpop.f32.mrb[0].mxu0
    %v1346 = vadd.f32 %v197, %v1345
    %v1347 = vpop.f32.mrb[0].mxu0
    %v1348 = vadd.f32 %v201, %v1347
    %v1349 = vpop.f32.mrb[0].mxu0
    %v1350 = vadd.f32 %v197, %v1349
    %v1351 = vpop.f32.mrb[0].mxu0
    %v1352 = vadd.f32 %v201, %v1351
    %1353 = vmatprep.mubr.bf16.mxu0 0
    %1354 = vmatmul.mubr.bf16.gmra.mrb[0].mxu0 %v464
    %v1355 = vpop.f32.mrb[0].mxu0
    %v1356 = vadd.f32 %v197, %v1355
    %v1357 = vpop.f32.mrb[0].mxu0
    %v1358 = vadd.f32 %v201, %v1357
    %v1359 = vpop.f32.mrb[0].mxu0
    %v1360 = vadd.f32 %v197, %v1359
    %v1361 = vpop.f32.mrb[0].mxu0
    %v1362 = vadd.f32 %v201, %v1361
    %1363 = vmatprep.mubr.bf16.mxu0 0
    %1364 = vmatmul.mubr.bf16.gmra.mrb[0].mxu0 %v467
    %v1365 = vpop.f32.mrb[0].mxu0
    %v1366 = vadd.f32 %v197, %v1365
    %v1367 = vpop.f32.mrb[0].mxu0
    %v1368 = vadd.f32 %v201, %v1367
    %v1369 = vpop.f32.mrb[0].mxu0
    %v1370 = vadd.f32 %v197, %v1369
    %v1371 = vpop.f32.mrb[0].mxu0
    %v1372 = vadd.f32 %v201, %v1371
    %1373 = vmatprep.mubr.bf16.mxu0 0
    %1374 = vmatmul.mubr.bf16.gmra.mrb[0].mxu0 %v470
    %v1375 = vpop.f32.mrb[0].mxu0
    %v1376 = vadd.f32 %v197, %v1375
    %v1377 = vpop.f32.mrb[0].mxu0
    %v1378 = vadd.f32 %v201, %v1377
    %v1379 = vpop.f32.mrb[0].mxu0
    %v1380 = vadd.f32 %v197, %v1379
    %v1381 = vpop.f32.mrb[0].mxu0
    %v1382 = vadd.f32 %v201, %v1381
    %1383 = vmatprep.mubr.bf16.mxu0 0
    %1384 = vmatmul.mubr.bf16.gmra.mrb[0].mxu0 %v473
    %v1385 = vpop.f32.mrb[0].mxu0
    %v1386 = vadd.f32 %v197, %v1385
    %v1387 = vpop.f32.mrb[0].mxu0
    %v1388 = vadd.f32 %v201, %v1387
    %v1389 = vpop.f32.mrb[0].mxu0
    %v1390 = vadd.f32 %v197, %v1389
    %v1391 = vpop.f32.mrb[0].mxu0
    %v1392 = vadd.f32 %v201, %v1391
    %1393 = vmatprep.mubr.bf16.mxu0 0
    %1394 = vmatmul.mubr.bf16.gmra.mrb[0].mxu0 %v476
    %v1395 = vpop.f32.mrb[0].mxu0
    %v1396 = vadd.f32 %v197, %v1395
    %v1397 = vpop.f32.mrb[0].mxu0
    %v1398 = vadd.f32 %v201, %v1397
    %v1399 = vpop.f32.mrb[0].mxu0
    %v1400 = vadd.f32 %v197, %v1399
    %v1401 = vpop.f32.mrb[0].mxu0
    %v1402 = vadd.f32 %v201, %v1401
    %1403 = vmatprep.mubr.bf16.mxu0 0
    %1404 = vmatmul.mubr.bf16.gmra.mrb[0].mxu0 %v479
    %v1405 = vpop.f32.mrb[0].mxu0
    %v1406 = vadd.f32 %v197, %v1405
    %v1407 = vpop.f32.mrb[0].mxu0
    %v1408 = vadd.f32 %v201, %v1407
    %v1409 = vpop.f32.mrb[0].mxu0
    %v1410 = vadd.f32 %v197, %v1409
    %v1411 = vpop.f32.mrb[0].mxu0
    %v1412 = vadd.f32 %v201, %v1411
    %1413 = vmatprep.mubr.bf16.mxu0 0
    %1414 = vmatmul.mubr.bf16.gmra.mrb[0].mxu0 %v482
    %v1415 = vpop.f32.mrb[0].mxu0
    %v1416 = vadd.f32 %v197, %v1415
    %v1417 = vpop.f32.mrb[0].mxu0
    %v1418 = vadd.f32 %v201, %v1417
    %v1419 = vpop.f32.mrb[0].mxu0
    %v1420 = vadd.f32 %v197, %v1419
    %v1421 = vpop.f32.mrb[0].mxu0
    %v1422 = vadd.f32 %v201, %v1421
    %1423 = vmatprep.mubr.bf16.mxu0 0
    %1424 = vmatmul.mubr.bf16.gmra.mrb[0].mxu0 %v485
    %v1425 = vpop.f32.mrb[0].mxu0
    %v1426 = vadd.f32 %v197, %v1425
    %v1427 = vpop.f32.mrb[0].mxu0
    %v1428 = vadd.f32 %v201, %v1427
    %v1429 = vpop.f32.mrb[0].mxu0
    %v1430 = vadd.f32 %v197, %v1429
    %v1431 = vpop.f32.mrb[0].mxu0
    %v1432 = vadd.f32 %v201, %v1431
    %1433 = vmatprep.mubr.bf16.mxu0 0
    %1434 = vmatmul.mubr.bf16.gmra.mrb[0].mxu0 %v488
    %v1435 = vpop.f32.mrb[0].mxu0
    %v1436 = vadd.f32 %v197, %v1435
    %v1437 = vpop.f32.mrb[0].mxu0
    %v1438 = vadd.f32 %v201, %v1437
    %v1439 = vpop.f32.mrb[0].mxu0
    %v1440 = vadd.f32 %v197, %v1439
    %v1441 = vpop.f32.mrb[0].mxu0
    %v1442 = vadd.f32 %v201, %v1441
    %1443 = vmatprep.mubr.bf16.mxu0 0
    %1444 = vmatmul.mubr.bf16.gmra.mrb[0].mxu0 %v491
    %v1445 = vpop.f32.mrb[0].mxu0
    %v1446 = vadd.f32 %v197, %v1445
    %v1447 = vpop.f32.mrb[0].mxu0
    %v1448 = vadd.f32 %v201, %v1447
    %v1449 = vpop.f32.mrb[0].mxu0
    %v1450 = vadd.f32 %v197, %v1449
    %v1451 = vpop.f32.mrb[0].mxu0
    %v1452 = vadd.f32 %v201, %v1451
    %1453 = vmatprep.mubr.bf16.mxu0 0
    %1454 = vmatmul.mubr.bf16.gmra.mrb[0].mxu0 %v494
    %v1455 = vpop.f32.mrb[0].mxu0
    %v1456 = vadd.f32 %v197, %v1455
    %v1457 = vpop.f32.mrb[0].mxu0
    %v1458 = vadd.f32 %v201, %v1457
    %v1459 = vpop.f32.mrb[0].mxu0
    %v1460 = vadd.f32 %v197, %v1459
    %v1461 = vpop.f32.mrb[0].mxu0
    %v1462 = vadd.f32 %v201, %v1461
    %1463 = vmatprep.mubr.bf16.mxu0 0
    %1464 = vmatmul.mubr.bf16.gmra.mrb[0].mxu0 %v497
    %v1465 = vpop.f32.mrb[0].mxu0
    %v1466 = vadd.f32 %v197, %v1465
    %v1467 = vpop.f32.mrb[0].mxu0
    %v1468 = vadd.f32 %v201, %v1467
    %v1469 = vpop.f32.mrb[0].mxu0
    %v1470 = vadd.f32 %v197, %v1469
    %v1471 = vpop.f32.mrb[0].mxu0
    %v1472 = vadd.f32 %v201, %v1471
    %1473 = vmatprep.mubr.bf16.mxu0 0
    %1474 = vmatmul.mubr.bf16.gmra.mrb[0].mxu0 %v500
    %v1475 = vpop.f32.mrb[0].mxu0
    %v1476 = vadd.f32 %v197, %v1475
    %v1477 = vpop.f32.mrb[0].mxu0
    %v1478 = vadd.f32 %v201, %v1477
    %v1479 = vpop.f32.mrb[0].mxu0
    %v1480 = vadd.f32 %v197, %v1479
    %v1481 = vpop.f32.mrb[0].mxu0
    %v1482 = vadd.f32 %v201, %v1481
    %1483 = vmatprep.mubr.bf16.mxu0 0
    %1484 = vmatmul.mubr.bf16.gmra.mrb[0].mxu0 %v503
    %v1485 = vpop.f32.mrb[0].mxu0
    %v1486 = vadd.f32 %v197, %v1485
    %v1487 = vpop.f32.mrb[0].mxu0
    %v1488 = vadd.f32 %v201, %v1487
    %v1489 = vpop.f32.mrb[0].mxu0
    %v1490 = vadd.f32 %v197, %v1489
    %v1491 = vpop.f32.mrb[0].mxu0
    %v1492 = vadd.f32 %v201, %v1491
    %1493 = vmatprep.mubr.bf16.mxu0 0
    %1494 = vmatmul.mubr.bf16.gmra.mrb[0].mxu0 %v506
    %v1495 = vpop.f32.mrb[0].mxu0
    %v1496 = vadd.f32 %v197, %v1495
    %v1497 = vpop.f32.mrb[0].mxu0
    %v1498 = vadd.f32 %v201, %v1497
    %v1499 = vpop.f32.mrb[0].mxu0
    %v1500 = vadd.f32 %v197, %v1499
    %v1501 = vpop.f32.mrb[0].mxu0
    %v1502 = vadd.f32 %v201, %v1501
    %1503 = vmatprep.mubr.bf16.mxu0 0
    %1504 = vmatmul.mubr.bf16.gmra.mrb[0].mxu0 %v509
    %v1505 = vpop.f32.mrb[0].mxu0
    %v1506 = vadd.f32 %v197, %v1505
    %v1507 = vpop.f32.mrb[0].mxu0
    %v1508 = vadd.f32 %v201, %v1507
    %v1509 = vpop.f32.mrb[0].mxu0
    %v1510 = vadd.f32 %v197, %v1509
    %v1511 = vpop.f32.mrb[0].mxu0
    %v1512 = vadd.f32 %v201, %v1511
    %1513 = vmatprep.mubr.bf16.mxu0 0
    %1514 = vmatmul.mubr.bf16.gmra.mrb[0].mxu0 %v512
    %v1515 = vpop.f32.mrb[0].mxu0
    %v1516 = vadd.f32 %v197, %v1515
    %v1517 = vpop.f32.mrb[0].mxu0
    %v1518 = vadd.f32 %v201, %v1517
    %v1519 = vpop.f32.mrb[0].mxu0
    %v1520 = vadd.f32 %v197, %v1519
    %v1521 = vpop.f32.mrb[0].mxu0
    %v1522 = vadd.f32 %v201, %v1521
    %1523 = vmatprep.mubr.bf16.mxu0 0
    %1524 = vmatmul.mubr.bf16.gmra.mrb[0].mxu0 %v515
    %v1525 = vpop.f32.mrb[0].mxu0
    %v1526 = vadd.f32 %v197, %v1525
    %v1527 = vpop.f32.mrb[0].mxu0
    %v1528 = vadd.f32 %v201, %v1527
    %v1529 = vpop.f32.mrb[0].mxu0
    %v1530 = vadd.f32 %v197, %v1529
    %v1531 = vpop.f32.mrb[0].mxu0
    %v1532 = vadd.f32 %v201, %v1531
    %1533 = vmatprep.mubr.bf16.mxu0 0
    %1534 = vmatmul.mubr.bf16.gmra.mrb[0].mxu0 %v518
    %v1535 = vpop.f32.mrb[0].mxu0
    %v1536 = vadd.f32 %v197, %v1535
    %v1537 = vpop.f32.mrb[0].mxu0
    %v1538 = vadd.f32 %v201, %v1537
    %v1539 = vpop.f32.mrb[0].mxu0
    %v1540 = vadd.f32 %v197, %v1539
    %v1541 = vpop.f32.mrb[0].mxu0
    %v1542 = vadd.f32 %v201, %v1541
    %1543 = vmatprep.mubr.bf16.mxu0 0
    %1544 = vmatmul.mubr.bf16.gmra.mrb[0].mxu0 %v521
    %v1545 = vpop.f32.mrb[0].mxu0
    %v1546 = vadd.f32 %v197, %v1545
    %v1547 = vpop.f32.mrb[0].mxu0
    %v1548 = vadd.f32 %v201, %v1547
    %v1549 = vpop.f32.mrb[0].mxu0
    %v1550 = vadd.f32 %v197, %v1549
    %v1551 = vpop.f32.mrb[0].mxu0
    %v1552 = vadd.f32 %v201, %v1551
    %1553 = vmatprep.mubr.bf16.mxu0 0
    %1554 = vmatmul.mubr.bf16.gmra.mrb[0].mxu0 %v524
    %v1555 = vpop.f32.mrb[0].mxu0
    %v1556 = vadd.f32 %v197, %v1555
    %v1557 = vpop.f32.mrb[0].mxu0
    %v1558 = vadd.f32 %v201, %v1557
    %v1559 = vpop.f32.mrb[0].mxu0
    %v1560 = vadd.f32 %v197, %v1559
    %v1561 = vpop.f32.mrb[0].mxu0
    %v1562 = vadd.f32 %v201, %v1561
    %1563 = vmatprep.mubr.bf16.mxu0 0
    %1564 = vmatmul.mubr.bf16.gmra.mrb[0].mxu0 %v527
    %v1565 = vpop.f32.mrb[0].mxu0
    %v1566 = vadd.f32 %v197, %v1565
    %v1567 = vpop.f32.mrb[0].mxu0
    %v1568 = vadd.f32 %v201, %v1567
    %v1569 = vpop.f32.mrb[0].mxu0
    %v1570 = vadd.f32 %v197, %v1569
    %v1571 = vpop.f32.mrb[0].mxu0
    %v1572 = vadd.f32 %v201, %v1571
    %1573 = vmatprep.mubr.bf16.mxu0 0
    %1574 = vmatmul.mubr.bf16.gmra.mrb[0].mxu0 %v530
    %v1575 = vpop.f32.mrb[0].mxu0
    %v1576 = vadd.f32 %v197, %v1575
    %v1577 = vpop.f32.mrb[0].mxu0
    %v1578 = vadd.f32 %v201, %v1577
    %v1579 = vpop.f32.mrb[0].mxu0
    %v1580 = vadd.f32 %v197, %v1579
    %v1581 = vpop.f32.mrb[0].mxu0
    %v1582 = vadd.f32 %v201, %v1581
    %1583 = vmatprep.mubr.bf16.mxu0 0
    %1584 = vmatmul.mubr.bf16.gmra.mrb[0].mxu0 %v533
    %v1585 = vpop.f32.mrb[0].mxu0
    %v1586 = vadd.f32 %v197, %v1585
    %v1587 = vpop.f32.mrb[0].mxu0
    %v1588 = vadd.f32 %v201, %v1587
    %v1589 = vpop.f32.mrb[0].mxu0
    %v1590 = vadd.f32 %v197, %v1589
    %v1591 = vpop.f32.mrb[0].mxu0
    %v1592 = vadd.f32 %v201, %v1591
    %1593 = vdwg.mxu0
    %1594 = vmatprep.subr.bf16.mxu0 %v425
    %1595 = vmatpush1.bf16.msra.mxu0 %v424
    %1596 = vmatprep.subr.bf16.mxu0 0
    %1597 = vmatpush1.bf16.msra.mxu0 0
    %1598 = vmatprep.subr.bf16.mxu0 0
    %1599 = vmatpush1.bf16.msra.mxu0 0
    %1600 = vmatprep.subr.bf16.mxu0 0
    %1601 = vmatpush1.bf16.msra.mxu0 0
    %1602 = vmatprep.subr.bf16.mxu0 0
    %1603 = vmatpush1.bf16.msra.mxu0 0
    %1604 = vmatprep.subr.bf16.mxu0 0
    %1605 = vmatpush1.bf16.msra.mxu0 0
    %1606 = vmatprep.subr.bf16.mxu0 0
    %1607 = vmatpush1.bf16.msra.mxu0 0
    %1608 = vmatprep.subr.bf16.mxu0 0
    %1609 = vmatpush1.bf16.msra.mxu0 0
    %1610 = vmatprep.subr.bf16.mxu0 0
    %1611 = vmatpush1.bf16.msra.mxu0 0
    %1612 = vmatprep.subr.bf16.mxu0 0
    %1613 = vmatpush1.bf16.msra.mxu0 0
    %1614 = vmatprep.subr.bf16.mxu0 0
    %1615 = vmatpush1.bf16.msra.mxu0 0
    %1616 = vmatprep.subr.bf16.mxu0 0
    %1617 = vmatpush1.bf16.msra.mxu0 0
    %1618 = vmatprep.subr.bf16.mxu0 0
    %1619 = vmatpush1.bf16.msra.mxu0 0
    %1620 = vmatprep.subr.bf16.mxu0 0
    %1621 = vmatpush1.bf16.msra.mxu0 0
    %1622 = vmatprep.subr.bf16.mxu0 0
    %1623 = vmatpush1.bf16.msra.mxu0 0
    %1624 = vmatprep.subr.bf16.mxu0 0
    %1625 = vmatpush1.bf16.msra.mxu0 0
    %1626 = vmatprep.mubr.bf16.mxu0 0
    %1627 = vmatmul.mubr.bf16.gmra.mrb[0].mxu0 %v440
    %v1628 = vpop.f32.mrb[0].mxu0
    %v1629 = vadd.f32 %v205, %v1628
    %v1630 = vpop.f32.mrb[0].mxu0
    %v1631 = vadd.f32 %v209, %v1630
    %v1632 = vpop.f32.mrb[0].mxu0
    %v1633 = vadd.f32 %v205, %v1632
    %v1634 = vpop.f32.mrb[0].mxu0
    %v1635 = vadd.f32 %v209, %v1634
    %1636 = vmatprep.mubr.bf16.mxu0 0
    %1637 = vmatmul.mubr.bf16.gmra.mrb[0].mxu0 %v443
    %v1638 = vpop.f32.mrb[0].mxu0
    %v1639 = vadd.f32 %v205, %v1638
    %v1640 = vpop.f32.mrb[0].mxu0
    %v1641 = vadd.f32 %v209, %v1640
    %v1642 = vpop.f32.mrb[0].mxu0
    %v1643 = vadd.f32 %v205, %v1642
    %v1644 = vpop.f32.mrb[0].mxu0
    %v1645 = vadd.f32 %v209, %v1644
    %1646 = vmatprep.mubr.bf16.mxu0 0
    %1647 = vmatmul.mubr.bf16.gmra.mrb[0].mxu0 %v446
    %v1648 = vpop.f32.mrb[0].mxu0
    %v1649 = vadd.f32 %v205, %v1648
    %v1650 = vpop.f32.mrb[0].mxu0
    %v1651 = vadd.f32 %v209, %v1650
    %v1652 = vpop.f32.mrb[0].mxu0
    %v1653 = vadd.f32 %v205, %v1652
    %v1654 = vpop.f32.mrb[0].mxu0
    %v1655 = vadd.f32 %v209, %v1654
    %1656 = vmatprep.mubr.bf16.mxu0 0
    %1657 = vmatmul.mubr.bf16.gmra.mrb[0].mxu0 %v449
    %v1658 = vpop.f32.mrb[0].mxu0
    %v1659 = vadd.f32 %v205, %v1658
    %v1660 = vpop.f32.mrb[0].mxu0
    %v1661 = vadd.f32 %v209, %v1660
    %v1662 = vpop.f32.mrb[0].mxu0
    %v1663 = vadd.f32 %v205, %v1662
    %v1664 = vpop.f32.mrb[0].mxu0
    %v1665 = vadd.f32 %v209, %v1664
    %1666 = vmatprep.mubr.bf16.mxu0 0
    %1667 = vmatmul.mubr.bf16.gmra.mrb[0].mxu0 %v452
    %v1668 = vpop.f32.mrb[0].mxu0
    %v1669 = vadd.f32 %v205, %v1668
    %v1670 = vpop.f32.mrb[0].mxu0
    %v1671 = vadd.f32 %v209, %v1670
    %v1672 = vpop.f32.mrb[0].mxu0
    %v1673 = vadd.f32 %v205, %v1672
    %v1674 = vpop.f32.mrb[0].mxu0
    %v1675 = vadd.f32 %v209, %v1674
    %1676 = vmatprep.mubr.bf16.mxu0 0
    %1677 = vmatmul.mubr.bf16.gmra.mrb[0].mxu0 %v455
    %v1678 = vpop.f32.mrb[0].mxu0
    %v1679 = vadd.f32 %v205, %v1678
    %v1680 = vpop.f32.mrb[0].mxu0
    %v1681 = vadd.f32 %v209, %v1680
    %v1682 = vpop.f32.mrb[0].mxu0
    %v1683 = vadd.f32 %v205, %v1682
    %v1684 = vpop.f32.mrb[0].mxu0
    %v1685 = vadd.f32 %v209, %v1684
    %1686 = vmatprep.mubr.bf16.mxu0 0
    %1687 = vmatmul.mubr.bf16.gmra.mrb[0].mxu0 %v458
    %v1688 = vpop.f32.mrb[0].mxu0
    %v1689 = vadd.f32 %v205, %v1688
    %v1690 = vpop.f32.mrb[0].mxu0
    %v1691 = vadd.f32 %v209, %v1690
    %v1692 = vpop.f32.mrb[0].mxu0
    %v1693 = vadd.f32 %v205, %v1692
    %v1694 = vpop.f32.mrb[0].mxu0
    %v1695 = vadd.f32 %v209, %v1694
    %1696 = vmatprep.mubr.bf16.mxu0 0
    %1697 = vmatmul.mubr.bf16.gmra.mrb[0].mxu0 %v461
    %v1698 = vpop.f32.mrb[0].mxu0
    %v1699 = vadd.f32 %v205, %v1698
    %v1700 = vpop.f32.mrb[0].mxu0
    %v1701 = vadd.f32 %v209, %v1700
    %v1702 = vpop.f32.mrb[0].mxu0
    %v1703 = vadd.f32 %v205, %v1702
    %v1704 = vpop.f32.mrb[0].mxu0
    %v1705 = vadd.f32 %v209, %v1704
    %1706 = vmatprep.mubr.bf16.mxu0 0
    %1707 = vmatmul.mubr.bf16.gmra.mrb[0].mxu0 %v464
    %v1708 = vpop.f32.mrb[0].mxu0
    %v1709 = vadd.f32 %v205, %v1708
    %v1710 = vpop.f32.mrb[0].mxu0
    %v1711 = vadd.f32 %v209, %v1710
    %v1712 = vpop.f32.mrb[0].mxu0
    %v1713 = vadd.f32 %v205, %v1712
    %v1714 = vpop.f32.mrb[0].mxu0
    %v1715 = vadd.f32 %v209, %v1714
    %1716 = vmatprep.mubr.bf16.mxu0 0
    %1717 = vmatmul.mubr.bf16.gmra.mrb[0].mxu0 %v467
    %v1718 = vpop.f32.mrb[0].mxu0
    %v1719 = vadd.f32 %v205, %v1718
    %v1720 = vpop.f32.mrb[0].mxu0
    %v1721 = vadd.f32 %v209, %v1720
    %v1722 = vpop.f32.mrb[0].mxu0
    %v1723 = vadd.f32 %v205, %v1722
    %v1724 = vpop.f32.mrb[0].mxu0
    %v1725 = vadd.f32 %v209, %v1724
    %1726 = vmatprep.mubr.bf16.mxu0 0
    %1727 = vmatmul.mubr.bf16.gmra.mrb[0].mxu0 %v470
    %v1728 = vpop.f32.mrb[0].mxu0
    %v1729 = vadd.f32 %v205, %v1728
    %v1730 = vpop.f32.mrb[0].mxu0
    %v1731 = vadd.f32 %v209, %v1730
    %v1732 = vpop.f32.mrb[0].mxu0
    %v1733 = vadd.f32 %v205, %v1732
    %v1734 = vpop.f32.mrb[0].mxu0
    %v1735 = vadd.f32 %v209, %v1734
    %1736 = vmatprep.mubr.bf16.mxu0 0
    %1737 = vmatmul.mubr.bf16.gmra.mrb[0].mxu0 %v473
    %v1738 = vpop.f32.mrb[0].mxu0
    %v1739 = vadd.f32 %v205, %v1738
    %v1740 = vpop.f32.mrb[0].mxu0
    %v1741 = vadd.f32 %v209, %v1740
    %v1742 = vpop.f32.mrb[0].mxu0
    %v1743 = vadd.f32 %v205, %v1742
    %v1744 = vpop.f32.mrb[0].mxu0
    %v1745 = vadd.f32 %v209, %v1744
    %1746 = vmatprep.mubr.bf16.mxu0 0
    %1747 = vmatmul.mubr.bf16.gmra.mrb[0].mxu0 %v476
    %v1748 = vpop.f32.mrb[0].mxu0
    %v1749 = vadd.f32 %v205, %v1748
    %v1750 = vpop.f32.mrb[0].mxu0
    %v1751 = vadd.f32 %v209, %v1750
    %v1752 = vpop.f32.mrb[0].mxu0
    %v1753 = vadd.f32 %v205, %v1752
    %v1754 = vpop.f32.mrb[0].mxu0
    %v1755 = vadd.f32 %v209, %v1754
    %1756 = vmatprep.mubr.bf16.mxu0 0
    %1757 = vmatmul.mubr.bf16.gmra.mrb[0].mxu0 %v479
    %v1758 = vpop.f32.mrb[0].mxu0
    %v1759 = vadd.f32 %v205, %v1758
    %v1760 = vpop.f32.mrb[0].mxu0
    %v1761 = vadd.f32 %v209, %v1760
    %v1762 = vpop.f32.mrb[0].mxu0
    %v1763 = vadd.f32 %v205, %v1762
    %v1764 = vpop.f32.mrb[0].mxu0
    %v1765 = vadd.f32 %v209, %v1764
    %1766 = vmatprep.mubr.bf16.mxu0 0
    %1767 = vmatmul.mubr.bf16.gmra.mrb[0].mxu0 %v482
    %v1768 = vpop.f32.mrb[0].mxu0
    %v1769 = vadd.f32 %v205, %v1768
    %v1770 = vpop.f32.mrb[0].mxu0
    %v1771 = vadd.f32 %v209, %v1770
    %v1772 = vpop.f32.mrb[0].mxu0
    %v1773 = vadd.f32 %v205, %v1772
    %v1774 = vpop.f32.mrb[0].mxu0
    %v1775 = vadd.f32 %v209, %v1774
    %1776 = vmatprep.mubr.bf16.mxu0 0
    %1777 = vmatmul.mubr.bf16.gmra.mrb[0].mxu0 %v485
    %v1778 = vpop.f32.mrb[0].mxu0
    %v1779 = vadd.f32 %v205, %v1778
    %v1780 = vpop.f32.mrb[0].mxu0
    %v1781 = vadd.f32 %v209, %v1780
    %v1782 = vpop.f32.mrb[0].mxu0
    %v1783 = vadd.f32 %v205, %v1782
    %v1784 = vpop.f32.mrb[0].mxu0
    %v1785 = vadd.f32 %v209, %v1784
    %1786 = vmatprep.mubr.bf16.mxu0 0
    %1787 = vmatmul.mubr.bf16.gmra.mrb[0].mxu0 %v488
    %v1788 = vpop.f32.mrb[0].mxu0
    %v1789 = vadd.f32 %v205, %v1788
    %v1790 = vpop.f32.mrb[0].mxu0
    %v1791 = vadd.f32 %v209, %v1790
    %v1792 = vpop.f32.mrb[0].mxu0
    %v1793 = vadd.f32 %v205, %v1792
    %v1794 = vpop.f32.mrb[0].mxu0
    %v1795 = vadd.f32 %v209, %v1794
    %1796 = vmatprep.mubr.bf16.mxu0 0
    %1797 = vmatmul.mubr.bf16.gmra.mrb[0].mxu0 %v491
    %v1798 = vpop.f32.mrb[0].mxu0
    %v1799 = vadd.f32 %v205, %v1798
    %v1800 = vpop.f32.mrb[0].mxu0
    %v1801 = vadd.f32 %v209, %v1800
    %v1802 = vpop.f32.mrb[0].mxu0
    %v1803 = vadd.f32 %v205, %v1802
    %v1804 = vpop.f32.mrb[0].mxu0
    %v1805 = vadd.f32 %v209, %v1804
    %1806 = vmatprep.mubr.bf16.mxu0 0
    %1807 = vmatmul.mubr.bf16.gmra.mrb[0].mxu0 %v494
    %v1808 = vpop.f32.mrb[0].mxu0
    %v1809 = vadd.f32 %v205, %v1808
    %v1810 = vpop.f32.mrb[0].mxu0
    %v1811 = vadd.f32 %v209, %v1810
    %v1812 = vpop.f32.mrb[0].mxu0
    %v1813 = vadd.f32 %v205, %v1812
    %v1814 = vpop.f32.mrb[0].mxu0
    %v1815 = vadd.f32 %v209, %v1814
    %1816 = vmatprep.mubr.bf16.mxu0 0
    %1817 = vmatmul.mubr.bf16.gmra.mrb[0].mxu0 %v497
    %v1818 = vpop.f32.mrb[0].mxu0
    %v1819 = vadd.f32 %v205, %v1818
    %v1820 = vpop.f32.mrb[0].mxu0
    %v1821 = vadd.f32 %v209, %v1820
    %v1822 = vpop.f32.mrb[0].mxu0
    %v1823 = vadd.f32 %v205, %v1822
    %v1824 = vpop.f32.mrb[0].mxu0
    %v1825 = vadd.f32 %v209, %v1824
    %1826 = vmatprep.mubr.bf16.mxu0 0
    %1827 = vmatmul.mubr.bf16.gmra.mrb[0].mxu0 %v500
    %v1828 = vpop.f32.mrb[0].mxu0
    %v1829 = vadd.f32 %v205, %v1828
    %v1830 = vpop.f32.mrb[0].mxu0
    %v1831 = vadd.f32 %v209, %v1830
    %v1832 = vpop.f32.mrb[0].mxu0
    %v1833 = vadd.f32 %v205, %v1832
    %v1834 = vpop.f32.mrb[0].mxu0
    %v1835 = vadd.f32 %v209, %v1834
    %1836 = vmatprep.mubr.bf16.mxu0 0
    %1837 = vmatmul.mubr.bf16.gmra.mrb[0].mxu0 %v503
    %v1838 = vpop.f32.mrb[0].mxu0
    %v1839 = vadd.f32 %v205, %v1838
    %v1840 = vpop.f32.mrb[0].mxu0
    %v1841 = vadd.f32 %v209, %v1840
    %v1842 = vpop.f32.mrb[0].mxu0
    %v1843 = vadd.f32 %v205, %v1842
    %v1844 = vpop.f32.mrb[0].mxu0
    %v1845 = vadd.f32 %v209, %v1844
    %1846 = vmatprep.mubr.bf16.mxu0 0
    %1847 = vmatmul.mubr.bf16.gmra.mrb[0].mxu0 %v506
    %v1848 = vpop.f32.mrb[0].mxu0
    %v1849 = vadd.f32 %v205, %v1848
    %v1850 = vpop.f32.mrb[0].mxu0
    %v1851 = vadd.f32 %v209, %v1850
    %v1852 = vpop.f32.mrb[0].mxu0
    %v1853 = vadd.f32 %v205, %v1852
    %v1854 = vpop.f32.mrb[0].mxu0
    %v1855 = vadd.f32 %v209, %v1854
    %1856 = vmatprep.mubr.bf16.mxu0 0
    %1857 = vmatmul.mubr.bf16.gmra.mrb[0].mxu0 %v509
    %v1858 = vpop.f32.mrb[0].mxu0
    %v1859 = vadd.f32 %v205, %v1858
    %v1860 = vpop.f32.mrb[0].mxu0
    %v1861 = vadd.f32 %v209, %v1860
    %v1862 = vpop.f32.mrb[0].mxu0
    %v1863 = vadd.f32 %v205, %v1862
    %v1864 = vpop.f32.mrb[0].mxu0
    %v1865 = vadd.f32 %v209, %v1864
    %1866 = vmatprep.mubr.bf16.mxu0 0
    %1867 = vmatmul.mubr.bf16.gmra.mrb[0].mxu0 %v512
    %v1868 = vpop.f32.mrb[0].mxu0
    %v1869 = vadd.f32 %v205, %v1868
    %v1870 = vpop.f32.mrb[0].mxu0
    %v1871 = vadd.f32 %v209, %v1870
    %v1872 = vpop.f32.mrb[0].mxu0
    %v1873 = vadd.f32 %v205, %v1872
    %v1874 = vpop.f32.mrb[0].mxu0
    %v1875 = vadd.f32 %v209, %v1874
    %1876 = vmatprep.mubr.bf16.mxu0 0
    %1877 = vmatmul.mubr.bf16.gmra.mrb[0].mxu0 %v515
    %v1878 = vpop.f32.mrb[0].mxu0
    %v1879 = vadd.f32 %v205, %v1878
    %v1880 = vpop.f32.mrb[0].mxu0
    %v1881 = vadd.f32 %v209, %v1880
    %v1882 = vpop.f32.mrb[0].mxu0
    %v1883 = vadd.f32 %v205, %v1882
    %v1884 = vpop.f32.mrb[0].mxu0
    %v1885 = vadd.f32 %v209, %v1884
    %1886 = vmatprep.mubr.bf16.mxu0 0
    %1887 = vmatmul.mubr.bf16.gmra.mrb[0].mxu0 %v518
    %v1888 = vpop.f32.mrb[0].mxu0
    %v1889 = vadd.f32 %v205, %v1888
    %v1890 = vpop.f32.mrb[0].mxu0
    %v1891 = vadd.f32 %v209, %v1890
    %v1892 = vpop.f32.mrb[0].mxu0
    %v1893 = vadd.f32 %v205, %v1892
    %v1894 = vpop.f32.mrb[0].mxu0
    %v1895 = vadd.f32 %v209, %v1894
    %1896 = vmatprep.mubr.bf16.mxu0 0
    %1897 = vmatmul.mubr.bf16.gmra.mrb[0].mxu0 %v521
    %v1898 = vpop.f32.mrb[0].mxu0
    %v1899 = vadd.f32 %v205, %v1898
    %v1900 = vpop.f32.mrb[0].mxu0
    %v1901 = vadd.f32 %v209, %v1900
    %v1902 = vpop.f32.mrb[0].mxu0
    %v1903 = vadd.f32 %v205, %v1902
    %v1904 = vpop.f32.mrb[0].mxu0
    %v1905 = vadd.f32 %v209, %v1904
    %1906 = vmatprep.mubr.bf16.mxu0 0
    %1907 = vmatmul.mubr.bf16.gmra.mrb[0].mxu0 %v524
    %v1908 = vpop.f32.mrb[0].mxu0
    %v1909 = vadd.f32 %v205, %v1908
    %v1910 = vpop.f32.mrb[0].mxu0
    %v1911 = vadd.f32 %v209, %v1910
    %v1912 = vpop.f32.mrb[0].mxu0
    %v1913 = vadd.f32 %v205, %v1912
    %v1914 = vpop.f32.mrb[0].mxu0
    %v1915 = vadd.f32 %v209, %v1914
    %1916 = vmatprep.mubr.bf16.mxu0 0
    %1917 = vmatmul.mubr.bf16.gmra.mrb[0].mxu0 %v527
    %v1918 = vpop.f32.mrb[0].mxu0
    %v1919 = vadd.f32 %v205, %v1918
    %v1920 = vpop.f32.mrb[0].mxu0
    %v1921 = vadd.f32 %v209, %v1920
    %v1922 = vpop.f32.mrb[0].mxu0
    %v1923 = vadd.f32 %v205, %v1922
    %v1924 = vpop.f32.mrb[0].mxu0
    %v1925 = vadd.f32 %v209, %v1924
    %1926 = vmatprep.mubr.bf16.mxu0 0
    %1927 = vmatmul.mubr.bf16.gmra.mrb[0].mxu0 %v530
    %v1928 = vpop.f32.mrb[0].mxu0
    %v1929 = vadd.f32 %v205, %v1928
    %v1930 = vpop.f32.mrb[0].mxu0
    %v1931 = vadd.f32 %v209, %v1930
    %v1932 = vpop.f32.mrb[0].mxu0
    %v1933 = vadd.f32 %v205, %v1932
    %v1934 = vpop.f32.mrb[0].mxu0
    %v1935 = vadd.f32 %v209, %v1934
    %1936 = vmatprep.mubr.bf16.mxu0 0
    %1937 = vmatmul.mubr.bf16.gmra.mrb[0].mxu0 %v533
    %v1938 = vpop.f32.mrb[0].mxu0
    %v1939 = vadd.f32 %v205, %v1938
    %v1940 = vpop.f32.mrb[0].mxu0
    %v1941 = vadd.f32 %v209, %v1940
    %v1942 = vpop.f32.mrb[0].mxu0
    %v1943 = vadd.f32 %v205, %v1942
    %v1944 = vpop.f32.mrb[0].mxu0
    %v1945 = vadd.f32 %v209, %v1944
    %1946 = vdwg.mxu0
    %1947 = vmatprep.subr.bf16.mxu0 %v427
    %1948 = vmatpush1.bf16.msra.mxu0 %v426
    %1949 = vmatprep.subr.bf16.mxu0 0
    %1950 = vmatpush1.bf16.msra.mxu0 0
    %1951 = vmatprep.subr.bf16.mxu0 0
    %1952 = vmatpush1.bf16.msra.mxu0 0
    %1953 = vmatprep.subr.bf16.mxu0 0
    %1954 = vmatpush1.bf16.msra.mxu0 0
    %1955 = vmatprep.subr.bf16.mxu0 0
    %1956 = vmatpush1.bf16.msra.mxu0 0
    %1957 = vmatprep.subr.bf16.mxu0 0
    %1958 = vmatpush1.bf16.msra.mxu0 0
    %1959 = vmatprep.subr.bf16.mxu0 0
    %1960 = vmatpush1.bf16.msra.mxu0 0
    %1961 = vmatprep.subr.bf16.mxu0 0
    %1962 = vmatpush1.bf16.msra.mxu0 0
    %1963 = vmatprep.subr.bf16.mxu0 0
    %1964 = vmatpush1.bf16.msra.mxu0 0
    %1965 = vmatprep.subr.bf16.mxu0 0
    %1966 = vmatpush1.bf16.msra.mxu0 0
    %1967 = vmatprep.subr.bf16.mxu0 0
    %1968 = vmatpush1.bf16.msra.mxu0 0
    %1969 = vmatprep.subr.bf16.mxu0 0
    %1970 = vmatpush1.bf16.msra.mxu0 0
    %1971 = vmatprep.subr.bf16.mxu0 0
    %1972 = vmatpush1.bf16.msra.mxu0 0
    %1973 = vmatprep.subr.bf16.mxu0 0
    %1974 = vmatpush1.bf16.msra.mxu0 0
    %1975 = vmatprep.subr.bf16.mxu0 0
    %1976 = vmatpush1.bf16.msra.mxu0 0
    %1977 = vmatprep.subr.bf16.mxu0 0
    %1978 = vmatpush1.bf16.msra.mxu0 0
    %1979 = vmatprep.mubr.bf16.mxu0 0
    %1980 = vmatmul.mubr.bf16.gmra.mrb[0].mxu0 %v440
    %v1981 = vpop.f32.mrb[0].mxu0
    %v1982 = vadd.f32 %v213, %v1981
    %v1983 = vpop.f32.mrb[0].mxu0
    %v1984 = vadd.f32 %v217, %v1983
    %v1985 = vpop.f32.mrb[0].mxu0
    %v1986 = vadd.f32 %v213, %v1985
    %v1987 = vpop.f32.mrb[0].mxu0
    %v1988 = vadd.f32 %v217, %v1987
    %1989 = vmatprep.mubr.bf16.mxu0 0
    %1990 = vmatmul.mubr.bf16.gmra.mrb[0].mxu0 %v443
    %v1991 = vpop.f32.mrb[0].mxu0
    %v1992 = vadd.f32 %v213, %v1991
    %v1993 = vpop.f32.mrb[0].mxu0
    %v1994 = vadd.f32 %v217, %v1993
    %v1995 = vpop.f32.mrb[0].mxu0
    %v1996 = vadd.f32 %v213, %v1995
    %v1997 = vpop.f32.mrb[0].mxu0
    %v1998 = vadd.f32 %v217, %v1997
    %1999 = vmatprep.mubr.bf16.mxu0 0
    %2000 = vmatmul.mubr.bf16.gmra.mrb[0].mxu0 %v446
    %v2001 = vpop.f32.mrb[0].mxu0
    %v2002 = vadd.f32 %v213, %v2001
    %v2003 = vpop.f32.mrb[0].mxu0
    %v2004 = vadd.f32 %v217, %v2003
    %v2005 = vpop.f32.mrb[0].mxu0
    %v2006 = vadd.f32 %v213, %v2005
    %v2007 = vpop.f32.mrb[0].mxu0
    %v2008 = vadd.f32 %v217, %v2007
    %2009 = vmatprep.mubr.bf16.mxu0 0
    %2010 = vmatmul.mubr.bf16.gmra.mrb[0].mxu0 %v449
    %v2011 = vpop.f32.mrb[0].mxu0
    %v2012 = vadd.f32 %v213, %v2011
    %v2013 = vpop.f32.mrb[0].mxu0
    %v2014 = vadd.f32 %v217, %v2013
    %v2015 = vpop.f32.mrb[0].mxu0
    %v2016 = vadd.f32 %v213, %v2015
    %v2017 = vpop.f32.mrb[0].mxu0
    %v2018 = vadd.f32 %v217, %v2017
    %2019 = vmatprep.mubr.bf16.mxu0 0
    %2020 = vmatmul.mubr.bf16.gmra.mrb[0].mxu0 %v452
    %v2021 = vpop.f32.mrb[0].mxu0
    %v2022 = vadd.f32 %v213, %v2021
    %v2023 = vpop.f32.mrb[0].mxu0
    %v2024 = vadd.f32 %v217, %v2023
    %v2025 = vpop.f32.mrb[0].mxu0
    %v2026 = vadd.f32 %v213, %v2025
    %v2027 = vpop.f32.mrb[0].mxu0
    %v2028 = vadd.f32 %v217, %v2027
    %2029 = vmatprep.mubr.bf16.mxu0 0
    %2030 = vmatmul.mubr.bf16.gmra.mrb[0].mxu0 %v455
    %v2031 = vpop.f32.mrb[0].mxu0
    %v2032 = vadd.f32 %v213, %v2031
    %v2033 = vpop.f32.mrb[0].mxu0
    %v2034 = vadd.f32 %v217, %v2033
    %v2035 = vpop.f32.mrb[0].mxu0
    %v2036 = vadd.f32 %v213, %v2035
    %v2037 = vpop.f32.mrb[0].mxu0
    %v2038 = vadd.f32 %v217, %v2037
    %2039 = vmatprep.mubr.bf16.mxu0 0
    %2040 = vmatmul.mubr.bf16.gmra.mrb[0].mxu0 %v458
    %v2041 = vpop.f32.mrb[0].mxu0
    %v2042 = vadd.f32 %v213, %v2041
    %v2043 = vpop.f32.mrb[0].mxu0
    %v2044 = vadd.f32 %v217, %v2043
    %v2045 = vpop.f32.mrb[0].mxu0
    %v2046 = vadd.f32 %v213, %v2045
    %v2047 = vpop.f32.mrb[0].mxu0
    %v2048 = vadd.f32 %v217, %v2047
    %2049 = vmatprep.mubr.bf16.mxu0 0
    %2050 = vmatmul.mubr.bf16.gmra.mrb[0].mxu0 %v461
    %v2051 = vpop.f32.mrb[0].mxu0
    %v2052 = vadd.f32 %v213, %v2051
    %v2053 = vpop.f32.mrb[0].mxu0
    %v2054 = vadd.f32 %v217, %v2053
    %v2055 = vpop.f32.mrb[0].mxu0
    %v2056 = vadd.f32 %v213, %v2055
    %v2057 = vpop.f32.mrb[0].mxu0
    %v2058 = vadd.f32 %v217, %v2057
    %2059 = vmatprep.mubr.bf16.mxu0 0
    %2060 = vmatmul.mubr.bf16.gmra.mrb[0].mxu0 %v464
    %v2061 = vpop.f32.mrb[0].mxu0
    %v2062 = vadd.f32 %v213, %v2061
    %v2063 = vpop.f32.mrb[0].mxu0
    %v2064 = vadd.f32 %v217, %v2063
    %v2065 = vpop.f32.mrb[0].mxu0
    %v2066 = vadd.f32 %v213, %v2065
    %v2067 = vpop.f32.mrb[0].mxu0
    %v2068 = vadd.f32 %v217, %v2067
    %2069 = vmatprep.mubr.bf16.mxu0 0
    %2070 = vmatmul.mubr.bf16.gmra.mrb[0].mxu0 %v467
    %v2071 = vpop.f32.mrb[0].mxu0
    %v2072 = vadd.f32 %v213, %v2071
    %v2073 = vpop.f32.mrb[0].mxu0
    %v2074 = vadd.f32 %v217, %v2073
    %v2075 = vpop.f32.mrb[0].mxu0
    %v2076 = vadd.f32 %v213, %v2075
    %v2077 = vpop.f32.mrb[0].mxu0
    %v2078 = vadd.f32 %v217, %v2077
    %2079 = vmatprep.mubr.bf16.mxu0 0
    %2080 = vmatmul.mubr.bf16.gmra.mrb[0].mxu0 %v470
    %v2081 = vpop.f32.mrb[0].mxu0
    %v2082 = vadd.f32 %v213, %v2081
    %v2083 = vpop.f32.mrb[0].mxu0
    %v2084 = vadd.f32 %v217, %v2083
    %v2085 = vpop.f32.mrb[0].mxu0
    %v2086 = vadd.f32 %v213, %v2085
    %v2087 = vpop.f32.mrb[0].mxu0
    %v2088 = vadd.f32 %v217, %v2087
    %2089 = vmatprep.mubr.bf16.mxu0 0
    %2090 = vmatmul.mubr.bf16.gmra.mrb[0].mxu0 %v473
    %v2091 = vpop.f32.mrb[0].mxu0
    %v2092 = vadd.f32 %v213, %v2091
    %v2093 = vpop.f32.mrb[0].mxu0
    %v2094 = vadd.f32 %v217, %v2093
    %v2095 = vpop.f32.mrb[0].mxu0
    %v2096 = vadd.f32 %v213, %v2095
    %v2097 = vpop.f32.mrb[0].mxu0
    %v2098 = vadd.f32 %v217, %v2097
    %2099 = vmatprep.mubr.bf16.mxu0 0
    %2100 = vmatmul.mubr.bf16.gmra.mrb[0].mxu0 %v476
    %v2101 = vpop.f32.mrb[0].mxu0
    %v2102 = vadd.f32 %v213, %v2101
    %v2103 = vpop.f32.mrb[0].mxu0
    %v2104 = vadd.f32 %v217, %v2103
    %v2105 = vpop.f32.mrb[0].mxu0
    %v2106 = vadd.f32 %v213, %v2105
    %v2107 = vpop.f32.mrb[0].mxu0
    %v2108 = vadd.f32 %v217, %v2107
    %2109 = vmatprep.mubr.bf16.mxu0 0
    %2110 = vmatmul.mubr.bf16.gmra.mrb[0].mxu0 %v479
    %v2111 = vpop.f32.mrb[0].mxu0
    %v2112 = vadd.f32 %v213, %v2111
    %v2113 = vpop.f32.mrb[0].mxu0
    %v2114 = vadd.f32 %v217, %v2113
    %v2115 = vpop.f32.mrb[0].mxu0
    %v2116 = vadd.f32 %v213, %v2115
    %v2117 = vpop.f32.mrb[0].mxu0
    %v2118 = vadd.f32 %v217, %v2117
    %2119 = vmatprep.mubr.bf16.mxu0 0
    %2120 = vmatmul.mubr.bf16.gmra.mrb[0].mxu0 %v482
    %v2121 = vpop.f32.mrb[0].mxu0
    %v2122 = vadd.f32 %v213, %v2121
    %v2123 = vpop.f32.mrb[0].mxu0
    %v2124 = vadd.f32 %v217, %v2123
    %v2125 = vpop.f32.mrb[0].mxu0
    %v2126 = vadd.f32 %v213, %v2125
    %v2127 = vpop.f32.mrb[0].mxu0
    %v2128 = vadd.f32 %v217, %v2127
    %2129 = vmatprep.mubr.bf16.mxu0 0
    %2130 = vmatmul.mubr.bf16.gmra.mrb[0].mxu0 %v485
    %v2131 = vpop.f32.mrb[0].mxu0
    %v2132 = vadd.f32 %v213, %v2131
    %v2133 = vpop.f32.mrb[0].mxu0
    %v2134 = vadd.f32 %v217, %v2133
    %v2135 = vpop.f32.mrb[0].mxu0
    %v2136 = vadd.f32 %v213, %v2135
    %v2137 = vpop.f32.mrb[0].mxu0
    %v2138 = vadd.f32 %v217, %v2137
    %2139 = vmatprep.mubr.bf16.mxu0 0
    %2140 = vmatmul.mubr.bf16.gmra.mrb[0].mxu0 %v488
    %v2141 = vpop.f32.mrb[0].mxu0
    %v2142 = vadd.f32 %v213, %v2141
    %v2143 = vpop.f32.mrb[0].mxu0
    %v2144 = vadd.f32 %v217, %v2143
    %v2145 = vpop.f32.mrb[0].mxu0
    %v2146 = vadd.f32 %v213, %v2145
    %v2147 = vpop.f32.mrb[0].mxu0
    %v2148 = vadd.f32 %v217, %v2147
    %2149 = vmatprep.mubr.bf16.mxu0 0
    %2150 = vmatmul.mubr.bf16.gmra.mrb[0].mxu0 %v491
    %v2151 = vpop.f32.mrb[0].mxu0
    %v2152 = vadd.f32 %v213, %v2151
    %v2153 = vpop.f32.mrb[0].mxu0
    %v2154 = vadd.f32 %v217, %v2153
    %v2155 = vpop.f32.mrb[0].mxu0
    %v2156 = vadd.f32 %v213, %v2155
    %v2157 = vpop.f32.mrb[0].mxu0
    %v2158 = vadd.f32 %v217, %v2157
    %2159 = vmatprep.mubr.bf16.mxu0 0
    %2160 = vmatmul.mubr.bf16.gmra.mrb[0].mxu0 %v494
    %v2161 = vpop.f32.mrb[0].mxu0
    %v2162 = vadd.f32 %v213, %v2161
    %v2163 = vpop.f32.mrb[0].mxu0
    %v2164 = vadd.f32 %v217, %v2163
    %v2165 = vpop.f32.mrb[0].mxu0
    %v2166 = vadd.f32 %v213, %v2165
    %v2167 = vpop.f32.mrb[0].mxu0
    %v2168 = vadd.f32 %v217, %v2167
    %2169 = vmatprep.mubr.bf16.mxu0 0
    %2170 = vmatmul.mubr.bf16.gmra.mrb[0].mxu0 %v497
    %v2171 = vpop.f32.mrb[0].mxu0
    %v2172 = vadd.f32 %v213, %v2171
    %v2173 = vpop.f32.mrb[0].mxu0
    %v2174 = vadd.f32 %v217, %v2173
    %v2175 = vpop.f32.mrb[0].mxu0
    %v2176 = vadd.f32 %v213, %v2175
    %v2177 = vpop.f32.mrb[0].mxu0
    %v2178 = vadd.f32 %v217, %v2177
    %2179 = vmatprep.mubr.bf16.mxu0 0
    %2180 = vmatmul.mubr.bf16.gmra.mrb[0].mxu0 %v500
    %v2181 = vpop.f32.mrb[0].mxu0
    %v2182 = vadd.f32 %v213, %v2181
    %v2183 = vpop.f32.mrb[0].mxu0
    %v2184 = vadd.f32 %v217, %v2183
    %v2185 = vpop.f32.mrb[0].mxu0
    %v2186 = vadd.f32 %v213, %v2185
    %v2187 = vpop.f32.mrb[0].mxu0
    %v2188 = vadd.f32 %v217, %v2187
    %2189 = vmatprep.mubr.bf16.mxu0 0
    %2190 = vmatmul.mubr.bf16.gmra.mrb[0].mxu0 %v503
    %v2191 = vpop.f32.mrb[0].mxu0
    %v2192 = vadd.f32 %v213, %v2191
    %v2193 = vpop.f32.mrb[0].mxu0
    %v2194 = vadd.f32 %v217, %v2193
    %v2195 = vpop.f32.mrb[0].mxu0
    %v2196 = vadd.f32 %v213, %v2195
    %v2197 = vpop.f32.mrb[0].mxu0
    %v2198 = vadd.f32 %v217, %v2197
    %2199 = vmatprep.mubr.bf16.mxu0 0
    %2200 = vmatmul.mubr.bf16.gmra.mrb[0].mxu0 %v506
    %v2201 = vpop.f32.mrb[0].mxu0
    %v2202 = vadd.f32 %v213, %v2201
    %v2203 = vpop.f32.mrb[0].mxu0
    %v2204 = vadd.f32 %v217, %v2203
    %v2205 = vpop.f32.mrb[0].mxu0
    %v2206 = vadd.f32 %v213, %v2205
    %v2207 = vpop.f32.mrb[0].mxu0
    %v2208 = vadd.f32 %v217, %v2207
    %2209 = vmatprep.mubr.bf16.mxu0 0
    %2210 = vmatmul.mubr.bf16.gmra.mrb[0].mxu0 %v509
    %v2211 = vpop.f32.mrb[0].mxu0
    %v2212 = vadd.f32 %v213, %v2211
    %v2213 = vpop.f32.mrb[0].mxu0
    %v2214 = vadd.f32 %v217, %v2213
    %v2215 = vpop.f32.mrb[0].mxu0
    %v2216 = vadd.f32 %v213, %v2215
    %v2217 = vpop.f32.mrb[0].mxu0
    %v2218 = vadd.f32 %v217, %v2217
    %2219 = vmatprep.mubr.bf16.mxu0 0
    %2220 = vmatmul.mubr.bf16.gmra.mrb[0].mxu0 %v512
    %v2221 = vpop.f32.mrb[0].mxu0
    %v2222 = vadd.f32 %v213, %v2221
    %v2223 = vpop.f32.mrb[0].mxu0
    %v2224 = vadd.f32 %v217, %v2223
    %v2225 = vpop.f32.mrb[0].mxu0
    %v2226 = vadd.f32 %v213, %v2225
    %v2227 = vpop.f32.mrb[0].mxu0
    %v2228 = vadd.f32 %v217, %v2227
    %2229 = vmatprep.mubr.bf16.mxu0 0
    %2230 = vmatmul.mubr.bf16.gmra.mrb[0].mxu0 %v515
    %v2231 = vpop.f32.mrb[0].mxu0
    %v2232 = vadd.f32 %v213, %v2231
    %v2233 = vpop.f32.mrb[0].mxu0
    %v2234 = vadd.f32 %v217, %v2233
    %v2235 = vpop.f32.mrb[0].mxu0
    %v2236 = vadd.f32 %v213, %v2235
    %v2237 = vpop.f32.mrb[0].mxu0
    %v2238 = vadd.f32 %v217, %v2237
    %2239 = vmatprep.mubr.bf16.mxu0 0
    %2240 = vmatmul.mubr.bf16.gmra.mrb[0].mxu0 %v518
    %v2241 = vpop.f32.mrb[0].mxu0
    %v2242 = vadd.f32 %v213, %v2241
    %v2243 = vpop.f32.mrb[0].mxu0
    %v2244 = vadd.f32 %v217, %v2243
    %v2245 = vpop.f32.mrb[0].mxu0
    %v2246 = vadd.f32 %v213, %v2245
    %v2247 = vpop.f32.mrb[0].mxu0
    %v2248 = vadd.f32 %v217, %v2247
    %2249 = vmatprep.mubr.bf16.mxu0 0
    %2250 = vmatmul.mubr.bf16.gmra.mrb[0].mxu0 %v521
    %v2251 = vpop.f32.mrb[0].mxu0
    %v2252 = vadd.f32 %v213, %v2251
    %v2253 = vpop.f32.mrb[0].mxu0
    %v2254 = vadd.f32 %v217, %v2253
    %v2255 = vpop.f32.mrb[0].mxu0
    %v2256 = vadd.f32 %v213, %v2255
    %v2257 = vpop.f32.mrb[0].mxu0
    %v2258 = vadd.f32 %v217, %v2257
    %2259 = vmatprep.mubr.bf16.mxu0 0
    %2260 = vmatmul.mubr.bf16.gmra.mrb[0].mxu0 %v524
    %v2261 = vpop.f32.mrb[0].mxu0
    %v2262 = vadd.f32 %v213, %v2261
    %v2263 = vpop.f32.mrb[0].mxu0
    %v2264 = vadd.f32 %v217, %v2263
    %v2265 = vpop.f32.mrb[0].mxu0
    %v2266 = vadd.f32 %v213, %v2265
    %v2267 = vpop.f32.mrb[0].mxu0
    %v2268 = vadd.f32 %v217, %v2267
    %2269 = vmatprep.mubr.bf16.mxu0 0
    %2270 = vmatmul.mubr.bf16.gmra.mrb[0].mxu0 %v527
    %v2271 = vpop.f32.mrb[0].mxu0
    %v2272 = vadd.f32 %v213, %v2271
    %v2273 = vpop.f32.mrb[0].mxu0
    %v2274 = vadd.f32 %v217, %v2273
    %v2275 = vpop.f32.mrb[0].mxu0
    %v2276 = vadd.f32 %v213, %v2275
    %v2277 = vpop.f32.mrb[0].mxu0
    %v2278 = vadd.f32 %v217, %v2277
    %2279 = vmatprep.mubr.bf16.mxu0 0
    %2280 = vmatmul.mubr.bf16.gmra.mrb[0].mxu0 %v530
    %v2281 = vpop.f32.mrb[0].mxu0
    %v2282 = vadd.f32 %v213, %v2281
    %v2283 = vpop.f32.mrb[0].mxu0
    %v2284 = vadd.f32 %v217, %v2283
    %v2285 = vpop.f32.mrb[0].mxu0
    %v2286 = vadd.f32 %v213, %v2285
    %v2287 = vpop.f32.mrb[0].mxu0
    %v2288 = vadd.f32 %v217, %v2287
    %2289 = vmatprep.mubr.bf16.mxu0 0
    %2290 = vmatmul.mubr.bf16.gmra.mrb[0].mxu0 %v533
    %v2291 = vpop.f32.mrb[0].mxu0
    %v2292 = vadd.f32 %v213, %v2291
    %v2293 = vpop.f32.mrb[0].mxu0
    %v2294 = vadd.f32 %v217, %v2293
    %v2295 = vpop.f32.mrb[0].mxu0
    %v2296 = vadd.f32 %v213, %v2295
    %v2297 = vpop.f32.mrb[0].mxu0
    %v2298 = vadd.f32 %v217, %v2297
    %2299 = vdwg.mxu0
    %v2300 = vxor.u32 %v570, 2147483648
    %v2301 = vxor.u32 %v572, 2147483648
    %v2302 = vxor.u32 %v923, 2147483648
    %v2303 = vxor.u32 %v925, 2147483648
    %v2304 = vxor.u32 %v1276, 2147483648
    %v2305 = vxor.u32 %v1278, 2147483648
    %v2306 = vxor.u32 %v1629, 2147483648
    %v2307 = vxor.u32 %v1631, 2147483648
    %v2308 = vxor.u32 %v1982, 2147483648
    %v2309 = vxor.u32 %v1984, 2147483648
    %v2310 = vxor.u32 %v574, 2147483648
    %v2311 = vxor.u32 %v576, 2147483648
    %v2312 = vxor.u32 %v927, 2147483648
    %v2313 = vxor.u32 %v929, 2147483648
    %v2314 = vxor.u32 %v1280, 2147483648
    %v2315 = vxor.u32 %v1282, 2147483648
    %v2316 = vxor.u32 %v1633, 2147483648
    %v2317 = vxor.u32 %v1635, 2147483648
    %v2318 = vxor.u32 %v1986, 2147483648
    %v2319 = vxor.u32 %v1988, 2147483648
    %v2320 = vxor.u32 %v580, 2147483648
    %v2321 = vxor.u32 %v582, 2147483648
    %v2322 = vxor.u32 %v933, 2147483648
    %v2323 = vxor.u32 %v935, 2147483648
    %v2324 = vxor.u32 %v1286, 2147483648
    %v2325 = vxor.u32 %v1288, 2147483648
    %v2326 = vxor.u32 %v1639, 2147483648
    %v2327 = vxor.u32 %v1641, 2147483648
    %v2328 = vxor.u32 %v1992, 2147483648
    %v2329 = vxor.u32 %v1994, 2147483648
    %v2330 = vxor.u32 %v584, 2147483648
    %v2331 = vxor.u32 %v586, 2147483648
    %v2332 = vxor.u32 %v937, 2147483648
    %v2333 = vxor.u32 %v939, 2147483648
    %v2334 = vxor.u32 %v1290, 2147483648
    %v2335 = vxor.u32 %v1292, 2147483648
    %v2336 = vxor.u32 %v1643, 2147483648
    %v2337 = vxor.u32 %v1645, 2147483648
    %v2338 = vxor.u32 %v1996, 2147483648
    %v2339 = vxor.u32 %v1998, 2147483648
    %v2340 = vxor.u32 %v590, 2147483648
    %v2341 = vxor.u32 %v592, 2147483648
    %v2342 = vxor.u32 %v943, 2147483648
    %v2343 = vxor.u32 %v945, 2147483648
    %v2344 = vxor.u32 %v1296, 2147483648
    %v2345 = vxor.u32 %v1298, 2147483648
    %v2346 = vxor.u32 %v1649, 2147483648
    %v2347 = vxor.u32 %v1651, 2147483648
    %v2348 = vxor.u32 %v2002, 2147483648
    %v2349 = vxor.u32 %v2004, 2147483648
    %v2350 = vxor.u32 %v594, 2147483648
    %v2351 = vxor.u32 %v596, 2147483648
    %v2352 = vxor.u32 %v947, 2147483648
    %v2353 = vxor.u32 %v949, 2147483648
    %v2354 = vxor.u32 %v1300, 2147483648
    %v2355 = vxor.u32 %v1302, 2147483648
    %v2356 = vxor.u32 %v1653, 2147483648
    %v2357 = vxor.u32 %v1655, 2147483648
    %v2358 = vxor.u32 %v2006, 2147483648
    %v2359 = vxor.u32 %v2008, 2147483648
    %v2360 = vxor.u32 %v600, 2147483648
    %v2361 = vxor.u32 %v602, 2147483648
    %v2362 = vxor.u32 %v953, 2147483648
    %v2363 = vxor.u32 %v955, 2147483648
    %v2364 = vxor.u32 %v1306, 2147483648
    %v2365 = vxor.u32 %v1308, 2147483648
    %v2366 = vxor.u32 %v1659, 2147483648
    %v2367 = vxor.u32 %v1661, 2147483648
    %v2368 = vxor.u32 %v2012, 2147483648
    %v2369 = vxor.u32 %v2014, 2147483648
    %v2370 = vxor.u32 %v604, 2147483648
    %v2371 = vxor.u32 %v606, 2147483648
    %v2372 = vxor.u32 %v957, 2147483648
    %v2373 = vxor.u32 %v959, 2147483648
    %v2374 = vxor.u32 %v1310, 2147483648
    %v2375 = vxor.u32 %v1312, 2147483648
    %v2376 = vxor.u32 %v1663, 2147483648
    %v2377 = vxor.u32 %v1665, 2147483648
    %v2378 = vxor.u32 %v2016, 2147483648
    %v2379 = vxor.u32 %v2018, 2147483648
    %v2380 = vxor.u32 %v610, 2147483648
    %v2381 = vxor.u32 %v612, 2147483648
    %v2382 = vxor.u32 %v963, 2147483648
    %v2383 = vxor.u32 %v965, 2147483648
    %v2384 = vxor.u32 %v1316, 2147483648
    %v2385 = vxor.u32 %v1318, 2147483648
    %v2386 = vxor.u32 %v1669, 2147483648
    %v2387 = vxor.u32 %v1671, 2147483648
    %v2388 = vxor.u32 %v2022, 2147483648
    %v2389 = vxor.u32 %v2024, 2147483648
    %v2390 = vxor.u32 %v614, 2147483648
    %v2391 = vxor.u32 %v616, 2147483648
    %v2392 = vxor.u32 %v967, 2147483648
    %v2393 = vxor.u32 %v969, 2147483648
    %v2394 = vxor.u32 %v1320, 2147483648
    %v2395 = vxor.u32 %v1322, 2147483648
    %v2396 = vxor.u32 %v1673, 2147483648
    %v2397 = vxor.u32 %v1675, 2147483648
    %v2398 = vxor.u32 %v2026, 2147483648
    %v2399 = vxor.u32 %v2028, 2147483648
    %v2400 = vxor.u32 %v620, 2147483648
    %v2401 = vxor.u32 %v622, 2147483648
    %v2402 = vxor.u32 %v973, 2147483648
    %v2403 = vxor.u32 %v975, 2147483648
    %v2404 = vxor.u32 %v1326, 2147483648
    %v2405 = vxor.u32 %v1328, 2147483648
    %v2406 = vxor.u32 %v1679, 2147483648
    %v2407 = vxor.u32 %v1681, 2147483648
    %v2408 = vxor.u32 %v2032, 2147483648
    %v2409 = vxor.u32 %v2034, 2147483648
    %v2410 = vxor.u32 %v624, 2147483648
    %v2411 = vxor.u32 %v626, 2147483648
    %v2412 = vxor.u32 %v977, 2147483648
    %v2413 = vxor.u32 %v979, 2147483648
    %v2414 = vxor.u32 %v1330, 2147483648
    %v2415 = vxor.u32 %v1332, 2147483648
    %v2416 = vxor.u32 %v1683, 2147483648
    %v2417 = vxor.u32 %v1685, 2147483648
    %v2418 = vxor.u32 %v2036, 2147483648
    %v2419 = vxor.u32 %v2038, 2147483648
    %v2420 = vxor.u32 %v630, 2147483648
    %v2421 = vxor.u32 %v632, 2147483648
    %v2422 = vxor.u32 %v983, 2147483648
    %v2423 = vxor.u32 %v985, 2147483648
    %v2424 = vxor.u32 %v1336, 2147483648
    %v2425 = vxor.u32 %v1338, 2147483648
    %v2426 = vxor.u32 %v1689, 2147483648
    %v2427 = vxor.u32 %v1691, 2147483648
    %v2428 = vxor.u32 %v2042, 2147483648
    %v2429 = vxor.u32 %v2044, 2147483648
    %v2430 = vxor.u32 %v634, 2147483648
    %v2431 = vxor.u32 %v636, 2147483648
    %v2432 = vxor.u32 %v987, 2147483648
    %v2433 = vxor.u32 %v989, 2147483648
    %v2434 = vxor.u32 %v1340, 2147483648
    %v2435 = vxor.u32 %v1342, 2147483648
    %v2436 = vxor.u32 %v1693, 2147483648
    %v2437 = vxor.u32 %v1695, 2147483648
    %v2438 = vxor.u32 %v2046, 2147483648
    %v2439 = vxor.u32 %v2048, 2147483648
    %v2440 = vxor.u32 %v640, 2147483648
    %v2441 = vxor.u32 %v642, 2147483648
    %v2442 = vxor.u32 %v993, 2147483648
    %v2443 = vxor.u32 %v995, 2147483648
    %v2444 = vxor.u32 %v1346, 2147483648
    %v2445 = vxor.u32 %v1348, 2147483648
    %v2446 = vxor.u32 %v1699, 2147483648
    %v2447 = vxor.u32 %v1701, 2147483648
    %v2448 = vxor.u32 %v2052, 2147483648
    %v2449 = vxor.u32 %v2054, 2147483648
    %v2450 = vxor.u32 %v644, 2147483648
    %v2451 = vxor.u32 %v646, 2147483648
    %v2452 = vxor.u32 %v997, 2147483648
    %v2453 = vxor.u32 %v999, 2147483648
    %v2454 = vxor.u32 %v1350, 2147483648
    %v2455 = vxor.u32 %v1352, 2147483648
    %v2456 = vxor.u32 %v1703, 2147483648
    %v2457 = vxor.u32 %v1705, 2147483648
    %v2458 = vxor.u32 %v2056, 2147483648
    %v2459 = vxor.u32 %v2058, 2147483648
    %v2460 = vxor.u32 %v650, 2147483648
    %v2461 = vxor.u32 %v652, 2147483648
    %v2462 = vxor.u32 %v1003, 2147483648
    %v2463 = vxor.u32 %v1005, 2147483648
    %v2464 = vxor.u32 %v1356, 2147483648
    %v2465 = vxor.u32 %v1358, 2147483648
    %v2466 = vxor.u32 %v1709, 2147483648
    %v2467 = vxor.u32 %v1711, 2147483648
    %v2468 = vxor.u32 %v2062, 2147483648
    %v2469 = vxor.u32 %v2064, 2147483648
    %v2470 = vxor.u32 %v654, 2147483648
    %v2471 = vxor.u32 %v656, 2147483648
    %v2472 = vxor.u32 %v1007, 2147483648
    %v2473 = vxor.u32 %v1009, 2147483648
    %v2474 = vxor.u32 %v1360, 2147483648
    %v2475 = vxor.u32 %v1362, 2147483648
    %v2476 = vxor.u32 %v1713, 2147483648
    %v2477 = vxor.u32 %v1715, 2147483648
    %v2478 = vxor.u32 %v2066, 2147483648
    %v2479 = vxor.u32 %v2068, 2147483648
    %v2480 = vxor.u32 %v660, 2147483648
    %v2481 = vxor.u32 %v662, 2147483648
    %v2482 = vxor.u32 %v1013, 2147483648
    %v2483 = vxor.u32 %v1015, 2147483648
    %v2484 = vxor.u32 %v1366, 2147483648
    %v2485 = vxor.u32 %v1368, 2147483648
    %v2486 = vxor.u32 %v1719, 2147483648
    %v2487 = vxor.u32 %v1721, 2147483648
    %v2488 = vxor.u32 %v2072, 2147483648
    %v2489 = vxor.u32 %v2074, 2147483648
    %v2490 = vxor.u32 %v664, 2147483648
    %v2491 = vxor.u32 %v666, 2147483648
    %v2492 = vxor.u32 %v1017, 2147483648
    %v2493 = vxor.u32 %v1019, 2147483648
    %v2494 = vxor.u32 %v1370, 2147483648
    %v2495 = vxor.u32 %v1372, 2147483648
    %v2496 = vxor.u32 %v1723, 2147483648
    %v2497 = vxor.u32 %v1725, 2147483648
    %v2498 = vxor.u32 %v2076, 2147483648
    %v2499 = vxor.u32 %v2078, 2147483648
    %v2500 = vxor.u32 %v670, 2147483648
    %v2501 = vxor.u32 %v672, 2147483648
    %v2502 = vxor.u32 %v1023, 2147483648
    %v2503 = vxor.u32 %v1025, 2147483648
    %v2504 = vxor.u32 %v1376, 2147483648
    %v2505 = vxor.u32 %v1378, 2147483648
    %v2506 = vxor.u32 %v1729, 2147483648
    %v2507 = vxor.u32 %v1731, 2147483648
    %v2508 = vxor.u32 %v2082, 2147483648
    %v2509 = vxor.u32 %v2084, 2147483648
    %v2510 = vxor.u32 %v674, 2147483648
    %v2511 = vxor.u32 %v676, 2147483648
    %v2512 = vxor.u32 %v1027, 2147483648
    %v2513 = vxor.u32 %v1029, 2147483648
    %v2514 = vxor.u32 %v1380, 2147483648
    %v2515 = vxor.u32 %v1382, 2147483648
    %v2516 = vxor.u32 %v1733, 2147483648
    %v2517 = vxor.u32 %v1735, 2147483648
    %v2518 = vxor.u32 %v2086, 2147483648
    %v2519 = vxor.u32 %v2088, 2147483648
    %v2520 = vxor.u32 %v680, 2147483648
    %v2521 = vxor.u32 %v682, 2147483648
    %v2522 = vxor.u32 %v1033, 2147483648
    %v2523 = vxor.u32 %v1035, 2147483648
    %v2524 = vxor.u32 %v1386, 2147483648
    %v2525 = vxor.u32 %v1388, 2147483648
    %v2526 = vxor.u32 %v1739, 2147483648
    %v2527 = vxor.u32 %v1741, 2147483648
    %v2528 = vxor.u32 %v2092, 2147483648
    %v2529 = vxor.u32 %v2094, 2147483648
    %v2530 = vxor.u32 %v684, 2147483648
    %v2531 = vxor.u32 %v686, 2147483648
    %v2532 = vxor.u32 %v1037, 2147483648
    %v2533 = vxor.u32 %v1039, 2147483648
    %v2534 = vxor.u32 %v1390, 2147483648
    %v2535 = vxor.u32 %v1392, 2147483648
    %v2536 = vxor.u32 %v1743, 2147483648
    %v2537 = vxor.u32 %v1745, 2147483648
    %v2538 = vxor.u32 %v2096, 2147483648
    %v2539 = vxor.u32 %v2098, 2147483648
    %v2540 = vxor.u32 %v690, 2147483648
    %v2541 = vxor.u32 %v692, 2147483648
    %v2542 = vxor.u32 %v1043, 2147483648
    %v2543 = vxor.u32 %v1045, 2147483648
    %v2544 = vxor.u32 %v1396, 2147483648
    %v2545 = vxor.u32 %v1398, 2147483648
    %v2546 = vxor.u32 %v1749, 2147483648
    %v2547 = vxor.u32 %v1751, 2147483648
    %v2548 = vxor.u32 %v2102, 2147483648
    %v2549 = vxor.u32 %v2104, 2147483648
    %v2550 = vxor.u32 %v694, 2147483648
    %v2551 = vxor.u32 %v696, 2147483648
    %v2552 = vxor.u32 %v1047, 2147483648
    %v2553 = vxor.u32 %v1049, 2147483648
    %v2554 = vxor.u32 %v1400, 2147483648
    %v2555 = vxor.u32 %v1402, 2147483648
    %v2556 = vxor.u32 %v1753, 2147483648
    %v2557 = vxor.u32 %v1755, 2147483648
    %v2558 = vxor.u32 %v2106, 2147483648
    %v2559 = vxor.u32 %v2108, 2147483648
    %v2560 = vxor.u32 %v700, 2147483648
    %v2561 = vxor.u32 %v702, 2147483648
    %v2562 = vxor.u32 %v1053, 2147483648
    %v2563 = vxor.u32 %v1055, 2147483648
    %v2564 = vxor.u32 %v1406, 2147483648
    %v2565 = vxor.u32 %v1408, 2147483648
    %v2566 = vxor.u32 %v1759, 2147483648
    %v2567 = vxor.u32 %v1761, 2147483648
    %v2568 = vxor.u32 %v2112, 2147483648
    %v2569 = vxor.u32 %v2114, 2147483648
    %v2570 = vxor.u32 %v704, 2147483648
    %v2571 = vxor.u32 %v706, 2147483648
    %v2572 = vxor.u32 %v1057, 2147483648
    %v2573 = vxor.u32 %v1059, 2147483648
    %v2574 = vxor.u32 %v1410, 2147483648
    %v2575 = vxor.u32 %v1412, 2147483648
    %v2576 = vxor.u32 %v1763, 2147483648
    %v2577 = vxor.u32 %v1765, 2147483648
    %v2578 = vxor.u32 %v2116, 2147483648
    %v2579 = vxor.u32 %v2118, 2147483648
    %v2580 = vxor.u32 %v710, 2147483648
    %v2581 = vxor.u32 %v712, 2147483648
    %v2582 = vxor.u32 %v1063, 2147483648
    %v2583 = vxor.u32 %v1065, 2147483648
    %v2584 = vxor.u32 %v1416, 2147483648
    %v2585 = vxor.u32 %v1418, 2147483648
    %v2586 = vxor.u32 %v1769, 2147483648
    %v2587 = vxor.u32 %v1771, 2147483648
    %v2588 = vxor.u32 %v2122, 2147483648
    %v2589 = vxor.u32 %v2124, 2147483648
    %v2590 = vxor.u32 %v714, 2147483648
    %v2591 = vxor.u32 %v716, 2147483648
    %v2592 = vxor.u32 %v1067, 2147483648
    %v2593 = vxor.u32 %v1069, 2147483648
    %v2594 = vxor.u32 %v1420, 2147483648
    %v2595 = vxor.u32 %v1422, 2147483648
    %v2596 = vxor.u32 %v1773, 2147483648
    %v2597 = vxor.u32 %v1775, 2147483648
    %v2598 = vxor.u32 %v2126, 2147483648
    %v2599 = vxor.u32 %v2128, 2147483648
    %v2600 = vxor.u32 %v720, 2147483648
    %v2601 = vxor.u32 %v722, 2147483648
    %v2602 = vxor.u32 %v1073, 2147483648
    %v2603 = vxor.u32 %v1075, 2147483648
    %v2604 = vxor.u32 %v1426, 2147483648
    %v2605 = vxor.u32 %v1428, 2147483648
    %v2606 = vxor.u32 %v1779, 2147483648
    %v2607 = vxor.u32 %v1781, 2147483648
    %v2608 = vxor.u32 %v2132, 2147483648
    %v2609 = vxor.u32 %v2134, 2147483648
    %v2610 = vxor.u32 %v724, 2147483648
    %v2611 = vxor.u32 %v726, 2147483648
    %v2612 = vxor.u32 %v1077, 2147483648
    %v2613 = vxor.u32 %v1079, 2147483648
    %v2614 = vxor.u32 %v1430, 2147483648
    %v2615 = vxor.u32 %v1432, 2147483648
    %v2616 = vxor.u32 %v1783, 2147483648
    %v2617 = vxor.u32 %v1785, 2147483648
    %v2618 = vxor.u32 %v2136, 2147483648
    %v2619 = vxor.u32 %v2138, 2147483648
    %v2620 = vxor.u32 %v730, 2147483648
    %v2621 = vxor.u32 %v732, 2147483648
    %v2622 = vxor.u32 %v1083, 2147483648
    %v2623 = vxor.u32 %v1085, 2147483648
    %v2624 = vxor.u32 %v1436, 2147483648
    %v2625 = vxor.u32 %v1438, 2147483648
    %v2626 = vxor.u32 %v1789, 2147483648
    %v2627 = vxor.u32 %v1791, 2147483648
    %v2628 = vxor.u32 %v2142, 2147483648
    %v2629 = vxor.u32 %v2144, 2147483648
    %v2630 = vxor.u32 %v734, 2147483648
    %v2631 = vxor.u32 %v736, 2147483648
    %v2632 = vxor.u32 %v1087, 2147483648
    %v2633 = vxor.u32 %v1089, 2147483648
    %v2634 = vxor.u32 %v1440, 2147483648
    %v2635 = vxor.u32 %v1442, 2147483648
    %v2636 = vxor.u32 %v1793, 2147483648
    %v2637 = vxor.u32 %v1795, 2147483648
    %v2638 = vxor.u32 %v2146, 2147483648
    %v2639 = vxor.u32 %v2148, 2147483648
    %v2640 = vxor.u32 %v740, 2147483648
    %v2641 = vxor.u32 %v742, 2147483648
    %v2642 = vxor.u32 %v1093, 2147483648
    %v2643 = vxor.u32 %v1095, 2147483648
    %v2644 = vxor.u32 %v1446, 2147483648
    %v2645 = vxor.u32 %v1448, 2147483648
    %v2646 = vxor.u32 %v1799, 2147483648
    %v2647 = vxor.u32 %v1801, 2147483648
    %v2648 = vxor.u32 %v2152, 2147483648
    %v2649 = vxor.u32 %v2154, 2147483648
    %v2650 = vxor.u32 %v744, 2147483648
    %v2651 = vxor.u32 %v746, 2147483648
    %v2652 = vxor.u32 %v1097, 2147483648
    %v2653 = vxor.u32 %v1099, 2147483648
    %v2654 = vxor.u32 %v1450, 2147483648
    %v2655 = vxor.u32 %v1452, 2147483648
    %v2656 = vxor.u32 %v1803, 2147483648
    %v2657 = vxor.u32 %v1805, 2147483648
    %v2658 = vxor.u32 %v2156, 2147483648
    %v2659 = vxor.u32 %v2158, 2147483648
    %v2660 = vxor.u32 %v750, 2147483648
    %v2661 = vxor.u32 %v752, 2147483648
    %v2662 = vxor.u32 %v1103, 2147483648
    %v2663 = vxor.u32 %v1105, 2147483648
    %v2664 = vxor.u32 %v1456, 2147483648
    %v2665 = vxor.u32 %v1458, 2147483648
    %v2666 = vxor.u32 %v1809, 2147483648
    %v2667 = vxor.u32 %v1811, 2147483648
    %v2668 = vxor.u32 %v2162, 2147483648
    %v2669 = vxor.u32 %v2164, 2147483648
    %v2670 = vxor.u32 %v754, 2147483648
    %v2671 = vxor.u32 %v756, 2147483648
    %v2672 = vxor.u32 %v1107, 2147483648
    %v2673 = vxor.u32 %v1109, 2147483648
    %v2674 = vxor.u32 %v1460, 2147483648
    %v2675 = vxor.u32 %v1462, 2147483648
    %v2676 = vxor.u32 %v1813, 2147483648
    %v2677 = vxor.u32 %v1815, 2147483648
    %v2678 = vxor.u32 %v2166, 2147483648
    %v2679 = vxor.u32 %v2168, 2147483648
    %v2680 = vxor.u32 %v760, 2147483648
    %v2681 = vxor.u32 %v762, 2147483648
    %v2682 = vxor.u32 %v1113, 2147483648
    %v2683 = vxor.u32 %v1115, 2147483648
    %v2684 = vxor.u32 %v1466, 2147483648
    %v2685 = vxor.u32 %v1468, 2147483648
    %v2686 = vxor.u32 %v1819, 2147483648
    %v2687 = vxor.u32 %v1821, 2147483648
    %v2688 = vxor.u32 %v2172, 2147483648
    %v2689 = vxor.u32 %v2174, 2147483648
    %v2690 = vxor.u32 %v764, 2147483648
    %v2691 = vxor.u32 %v766, 2147483648
    %v2692 = vxor.u32 %v1117, 2147483648
    %v2693 = vxor.u32 %v1119, 2147483648
    %v2694 = vxor.u32 %v1470, 2147483648
    %v2695 = vxor.u32 %v1472, 2147483648
    %v2696 = vxor.u32 %v1823, 2147483648
    %v2697 = vxor.u32 %v1825, 2147483648
    %v2698 = vxor.u32 %v2176, 2147483648
    %v2699 = vxor.u32 %v2178, 2147483648
    %v2700 = vxor.u32 %v770, 2147483648
    %v2701 = vxor.u32 %v772, 2147483648
    %v2702 = vxor.u32 %v1123, 2147483648
    %v2703 = vxor.u32 %v1125, 2147483648
    %v2704 = vxor.u32 %v1476, 2147483648
    %v2705 = vxor.u32 %v1478, 2147483648
    %v2706 = vxor.u32 %v1829, 2147483648
    %v2707 = vxor.u32 %v1831, 2147483648
    %v2708 = vxor.u32 %v2182, 2147483648
    %v2709 = vxor.u32 %v2184, 2147483648
    %v2710 = vxor.u32 %v774, 2147483648
    %v2711 = vxor.u32 %v776, 2147483648
    %v2712 = vxor.u32 %v1127, 2147483648
    %v2713 = vxor.u32 %v1129, 2147483648
    %v2714 = vxor.u32 %v1480, 2147483648
    %v2715 = vxor.u32 %v1482, 2147483648
    %v2716 = vxor.u32 %v1833, 2147483648
    %v2717 = vxor.u32 %v1835, 2147483648
    %v2718 = vxor.u32 %v2186, 2147483648
    %v2719 = vxor.u32 %v2188, 2147483648
    %v2720 = vxor.u32 %v780, 2147483648
    %v2721 = vxor.u32 %v782, 2147483648
    %v2722 = vxor.u32 %v1133, 2147483648
    %v2723 = vxor.u32 %v1135, 2147483648
    %v2724 = vxor.u32 %v1486, 2147483648
    %v2725 = vxor.u32 %v1488, 2147483648
    %v2726 = vxor.u32 %v1839, 2147483648
    %v2727 = vxor.u32 %v1841, 2147483648
    %v2728 = vxor.u32 %v2192, 2147483648
    %v2729 = vxor.u32 %v2194, 2147483648
    %v2730 = vxor.u32 %v784, 2147483648
    %v2731 = vxor.u32 %v786, 2147483648
    %v2732 = vxor.u32 %v1137, 2147483648
    %v2733 = vxor.u32 %v1139, 2147483648
    %v2734 = vxor.u32 %v1490, 2147483648
    %v2735 = vxor.u32 %v1492, 2147483648
    %v2736 = vxor.u32 %v1843, 2147483648
    %v2737 = vxor.u32 %v1845, 2147483648
    %v2738 = vxor.u32 %v2196, 2147483648
    %v2739 = vxor.u32 %v2198, 2147483648
    %v2740 = vxor.u32 %v790, 2147483648
    %v2741 = vxor.u32 %v792, 2147483648
    %v2742 = vxor.u32 %v1143, 2147483648
    %v2743 = vxor.u32 %v1145, 2147483648
    %v2744 = vxor.u32 %v1496, 2147483648
    %v2745 = vxor.u32 %v1498, 2147483648
    %v2746 = vxor.u32 %v1849, 2147483648
    %v2747 = vxor.u32 %v1851, 2147483648
    %v2748 = vxor.u32 %v2202, 2147483648
    %v2749 = vxor.u32 %v2204, 2147483648
    %v2750 = vxor.u32 %v794, 2147483648
    %v2751 = vxor.u32 %v796, 2147483648
    %v2752 = vxor.u32 %v1147, 2147483648
    %v2753 = vxor.u32 %v1149, 2147483648
    %v2754 = vxor.u32 %v1500, 2147483648
    %v2755 = vxor.u32 %v1502, 2147483648
    %v2756 = vxor.u32 %v1853, 2147483648
    %v2757 = vxor.u32 %v1855, 2147483648
    %v2758 = vxor.u32 %v2206, 2147483648
    %v2759 = vxor.u32 %v2208, 2147483648
    %v2760 = vxor.u32 %v800, 2147483648
    %v2761 = vxor.u32 %v802, 2147483648
    %v2762 = vxor.u32 %v1153, 2147483648
    %v2763 = vxor.u32 %v1155, 2147483648
    %v2764 = vxor.u32 %v1506, 2147483648
    %v2765 = vxor.u32 %v1508, 2147483648
    %v2766 = vxor.u32 %v1859, 2147483648
    %v2767 = vxor.u32 %v1861, 2147483648
    %v2768 = vxor.u32 %v2212, 2147483648
    %v2769 = vxor.u32 %v2214, 2147483648
    %v2770 = vxor.u32 %v804, 2147483648
    %v2771 = vxor.u32 %v806, 2147483648
    %v2772 = vxor.u32 %v1157, 2147483648
    %v2773 = vxor.u32 %v1159, 2147483648
    %v2774 = vxor.u32 %v1510, 2147483648
    %v2775 = vxor.u32 %v1512, 2147483648
    %v2776 = vxor.u32 %v1863, 2147483648
    %v2777 = vxor.u32 %v1865, 2147483648
    %v2778 = vxor.u32 %v2216, 2147483648
    %v2779 = vxor.u32 %v2218, 2147483648
    %v2780 = vxor.u32 %v810, 2147483648
    %v2781 = vxor.u32 %v812, 2147483648
    %v2782 = vxor.u32 %v1163, 2147483648
    %v2783 = vxor.u32 %v1165, 2147483648
    %v2784 = vxor.u32 %v1516, 2147483648
    %v2785 = vxor.u32 %v1518, 2147483648
    %v2786 = vxor.u32 %v1869, 2147483648
    %v2787 = vxor.u32 %v1871, 2147483648
    %v2788 = vxor.u32 %v2222, 2147483648
    %v2789 = vxor.u32 %v2224, 2147483648
    %v2790 = vxor.u32 %v814, 2147483648
    %v2791 = vxor.u32 %v816, 2147483648
    %v2792 = vxor.u32 %v1167, 2147483648
    %v2793 = vxor.u32 %v1169, 2147483648
    %v2794 = vxor.u32 %v1520, 2147483648
    %v2795 = vxor.u32 %v1522, 2147483648
    %v2796 = vxor.u32 %v1873, 2147483648
    %v2797 = vxor.u32 %v1875, 2147483648
    %v2798 = vxor.u32 %v2226, 2147483648
    %v2799 = vxor.u32 %v2228, 2147483648
    %v2800 = vxor.u32 %v820, 2147483648
    %v2801 = vxor.u32 %v822, 2147483648
    %v2802 = vxor.u32 %v1173, 2147483648
    %v2803 = vxor.u32 %v1175, 2147483648
    %v2804 = vxor.u32 %v1526, 2147483648
    %v2805 = vxor.u32 %v1528, 2147483648
    %v2806 = vxor.u32 %v1879, 2147483648
    %v2807 = vxor.u32 %v1881, 2147483648
    %v2808 = vxor.u32 %v2232, 2147483648
    %v2809 = vxor.u32 %v2234, 2147483648
    %v2810 = vxor.u32 %v824, 2147483648
    %v2811 = vxor.u32 %v826, 2147483648
    %v2812 = vxor.u32 %v1177, 2147483648
    %v2813 = vxor.u32 %v1179, 2147483648
    %v2814 = vxor.u32 %v1530, 2147483648
    %v2815 = vxor.u32 %v1532, 2147483648
    %v2816 = vxor.u32 %v1883, 2147483648
    %v2817 = vxor.u32 %v1885, 2147483648
    %v2818 = vxor.u32 %v2236, 2147483648
    %v2819 = vxor.u32 %v2238, 2147483648
    %v2820 = vxor.u32 %v830, 2147483648
    %v2821 = vxor.u32 %v832, 2147483648
    %v2822 = vxor.u32 %v1183, 2147483648
    %v2823 = vxor.u32 %v1185, 2147483648
    %v2824 = vxor.u32 %v1536, 2147483648
    %v2825 = vxor.u32 %v1538, 2147483648
    %v2826 = vxor.u32 %v1889, 2147483648
    %v2827 = vxor.u32 %v1891, 2147483648
    %v2828 = vxor.u32 %v2242, 2147483648
    %v2829 = vxor.u32 %v2244, 2147483648
    %v2830 = vxor.u32 %v834, 2147483648
    %v2831 = vxor.u32 %v836, 2147483648
    %v2832 = vxor.u32 %v1187, 2147483648
    %v2833 = vxor.u32 %v1189, 2147483648
    %v2834 = vxor.u32 %v1540, 2147483648
    %v2835 = vxor.u32 %v1542, 2147483648
    %v2836 = vxor.u32 %v1893, 2147483648
    %v2837 = vxor.u32 %v1895, 2147483648
    %v2838 = vxor.u32 %v2246, 2147483648
    %v2839 = vxor.u32 %v2248, 2147483648
    %v2840 = vxor.u32 %v840, 2147483648
    %v2841 = vxor.u32 %v842, 2147483648
    %v2842 = vxor.u32 %v1193, 2147483648
    %v2843 = vxor.u32 %v1195, 2147483648
    %v2844 = vxor.u32 %v1546, 2147483648
    %v2845 = vxor.u32 %v1548, 2147483648
    %v2846 = vxor.u32 %v1899, 2147483648
    %v2847 = vxor.u32 %v1901, 2147483648
    %v2848 = vxor.u32 %v2252, 2147483648
    %v2849 = vxor.u32 %v2254, 2147483648
    %v2850 = vxor.u32 %v844, 2147483648
    %v2851 = vxor.u32 %v846, 2147483648
    %v2852 = vxor.u32 %v1197, 2147483648
    %v2853 = vxor.u32 %v1199, 2147483648
    %v2854 = vxor.u32 %v1550, 2147483648
    %v2855 = vxor.u32 %v1552, 2147483648
    %v2856 = vxor.u32 %v1903, 2147483648
    %v2857 = vxor.u32 %v1905, 2147483648
    %v2858 = vxor.u32 %v2256, 2147483648
    %v2859 = vxor.u32 %v2258, 2147483648
    %v2860 = vxor.u32 %v850, 2147483648
    %v2861 = vxor.u32 %v852, 2147483648
    %v2862 = vxor.u32 %v1203, 2147483648
    %v2863 = vxor.u32 %v1205, 2147483648
    %v2864 = vxor.u32 %v1556, 2147483648
    %v2865 = vxor.u32 %v1558, 2147483648
    %v2866 = vxor.u32 %v1909, 2147483648
    %v2867 = vxor.u32 %v1911, 2147483648
    %v2868 = vxor.u32 %v2262, 2147483648
    %v2869 = vxor.u32 %v2264, 2147483648
    %v2870 = vxor.u32 %v854, 2147483648
    %v2871 = vxor.u32 %v856, 2147483648
    %v2872 = vxor.u32 %v1207, 2147483648
    %v2873 = vxor.u32 %v1209, 2147483648
    %v2874 = vxor.u32 %v1560, 2147483648
    %v2875 = vxor.u32 %v1562, 2147483648
    %v2876 = vxor.u32 %v1913, 2147483648
    %v2877 = vxor.u32 %v1915, 2147483648
    %v2878 = vxor.u32 %v2266, 2147483648
    %v2879 = vxor.u32 %v2268, 2147483648
    %v2880 = vxor.u32 %v860, 2147483648
    %v2881 = vxor.u32 %v862, 2147483648
    %v2882 = vxor.u32 %v1213, 2147483648
    %v2883 = vxor.u32 %v1215, 2147483648
    %v2884 = vxor.u32 %v1566, 2147483648
    %v2885 = vxor.u32 %v1568, 2147483648
    %v2886 = vxor.u32 %v1919, 2147483648
    %v2887 = vxor.u32 %v1921, 2147483648
    %v2888 = vxor.u32 %v2272, 2147483648
    %v2889 = vxor.u32 %v2274, 2147483648
    %v2890 = vxor.u32 %v864, 2147483648
    %v2891 = vxor.u32 %v866, 2147483648
    %v2892 = vxor.u32 %v1217, 2147483648
    %v2893 = vxor.u32 %v1219, 2147483648
    %v2894 = vxor.u32 %v1570, 2147483648
    %v2895 = vxor.u32 %v1572, 2147483648
    %v2896 = vxor.u32 %v1923, 2147483648
    %v2897 = vxor.u32 %v1925, 2147483648
    %v2898 = vxor.u32 %v2276, 2147483648
    %v2899 = vxor.u32 %v2278, 2147483648
    %v2900 = vxor.u32 %v870, 2147483648
    %v2901 = vxor.u32 %v872, 2147483648
    %v2902 = vxor.u32 %v1223, 2147483648
    %v2903 = vxor.u32 %v1225, 2147483648
    %v2904 = vxor.u32 %v1576, 2147483648
    %v2905 = vxor.u32 %v1578, 2147483648
    %v2906 = vxor.u32 %v1929, 2147483648
    %v2907 = vxor.u32 %v1931, 2147483648
    %v2908 = vxor.u32 %v2282, 2147483648
    %v2909 = vxor.u32 %v2284, 2147483648
    %v2910 = vxor.u32 %v874, 2147483648
    %v2911 = vxor.u32 %v876, 2147483648
    %v2912 = vxor.u32 %v1227, 2147483648
    %v2913 = vxor.u32 %v1229, 2147483648
    %v2914 = vxor.u32 %v1580, 2147483648
    %v2915 = vxor.u32 %v1582, 2147483648
    %v2916 = vxor.u32 %v1933, 2147483648
    %v2917 = vxor.u32 %v1935, 2147483648
    %v2918 = vxor.u32 %v2286, 2147483648
    %v2919 = vxor.u32 %v2288, 2147483648
    %v2920 = vxor.u32 %v880, 2147483648
    %v2921 = vxor.u32 %v882, 2147483648
    %v2922 = vxor.u32 %v1233, 2147483648
    %v2923 = vxor.u32 %v1235, 2147483648
    %v2924 = vxor.u32 %v1586, 2147483648
    %v2925 = vxor.u32 %v1588, 2147483648
    %v2926 = vxor.u32 %v1939, 2147483648
    %v2927 = vxor.u32 %v1941, 2147483648
    %v2928 = vxor.u32 %v2292, 2147483648
    %v2929 = vxor.u32 %v2294, 2147483648
    %v2930 = vxor.u32 %v884, 2147483648
    %v2931 = vxor.u32 %v886, 2147483648
    %v2932 = vxor.u32 %v1237, 2147483648
    %v2933 = vxor.u32 %v1239, 2147483648
    %v2934 = vxor.u32 %v1590, 2147483648
    %v2935 = vxor.u32 %v1592, 2147483648
    %v2936 = vxor.u32 %v1943, 2147483648
    %v2937 = vxor.u32 %v1945, 2147483648
    %v2938 = vxor.u32 %v2296, 2147483648
    %v2939 = vxor.u32 %v2298, 2147483648
    %v2940 = vmul.f32 %v2300, 1.442695
    %v2941 = vpow.pop %v2940
    %v2942 = vmul.f32 %v2301, 1.442695
    %v2943 = vpow.pop %v2942
    %v2944 = vmul.f32 %v2302, 1.442695
    %v2945 = vpow.pop %v2944
    %v2946 = vmul.f32 %v2303, 1.442695
    %v2947 = vpow.pop %v2946
    %v2948 = vmul.f32 %v2304, 1.442695
    %v2949 = vpow.pop %v2948
    %v2950 = vmul.f32 %v2305, 1.442695
    %v2951 = vpow.pop %v2950
    %v2952 = vmul.f32 %v2306, 1.442695
    %v2953 = vpow.pop %v2952
    %v2954 = vmul.f32 %v2307, 1.442695
    %v2955 = vpow.pop %v2954
    %v2956 = vmul.f32 %v2308, 1.442695
    %v2957 = vpow.pop %v2956
    %v2958 = vmul.f32 %v2309, 1.442695
    %v2959 = vpow.pop %v2958
    %v2960 = vmul.f32 %v2310, 1.442695
    %v2961 = vpow.pop %v2960
    %v2962 = vmul.f32 %v2311, 1.442695
    %v2963 = vpow.pop %v2962
    %v2964 = vmul.f32 %v2312, 1.442695
    %v2965 = vpow.pop %v2964
    %v2966 = vmul.f32 %v2313, 1.442695
    %v2967 = vpow.pop %v2966
    %v2968 = vmul.f32 %v2314, 1.442695
    %v2969 = vpow.pop %v2968
    %v2970 = vmul.f32 %v2315, 1.442695
    %v2971 = vpow.pop %v2970
    %v2972 = vmul.f32 %v2316, 1.442695
    %v2973 = vpow.pop %v2972
    %v2974 = vmul.f32 %v2317, 1.442695
    %v2975 = vpow.pop %v2974
    %v2976 = vmul.f32 %v2318, 1.442695
    %v2977 = vpow.pop %v2976
    %v2978 = vmul.f32 %v2319, 1.442695
    %v2979 = vpow.pop %v2978
    %v2980 = vmul.f32 %v2320, 1.442695
    %v2981 = vpow.pop %v2980
    %v2982 = vmul.f32 %v2321, 1.442695
    %v2983 = vpow.pop %v2982
    %v2984 = vmul.f32 %v2322, 1.442695
    %v2985 = vpow.pop %v2984
    %v2986 = vmul.f32 %v2323, 1.442695
    %v2987 = vpow.pop %v2986
    %v2988 = vmul.f32 %v2324, 1.442695
    %v2989 = vpow.pop %v2988
    %v2990 = vmul.f32 %v2325, 1.442695
    %v2991 = vpow.pop %v2990
    %v2992 = vmul.f32 %v2326, 1.442695
    %v2993 = vpow.pop %v2992
    %v2994 = vmul.f32 %v2327, 1.442695
    %v2995 = vpow.pop %v2994
    %v2996 = vmul.f32 %v2328, 1.442695
    %v2997 = vpow.pop %v2996
    %v2998 = vmul.f32 %v2329, 1.442695
    %v2999 = vpow.pop %v2998
    %v3000 = vmul.f32 %v2330, 1.442695
    %v3001 = vpow.pop %v3000
    %v3002 = vmul.f32 %v2331, 1.442695
    %v3003 = vpow.pop %v3002
    %v3004 = vmul.f32 %v2332, 1.442695
    %v3005 = vpow.pop %v3004
    %v3006 = vmul.f32 %v2333, 1.442695
    %v3007 = vpow.pop %v3006
    %v3008 = vmul.f32 %v2334, 1.442695
    %v3009 = vpow.pop %v3008
    %v3010 = vmul.f32 %v2335, 1.442695
    %v3011 = vpow.pop %v3010
    %v3012 = vmul.f32 %v2336, 1.442695
    %v3013 = vpow.pop %v3012
    %v3014 = vmul.f32 %v2337, 1.442695
    %v3015 = vpow.pop %v3014
    %v3016 = vmul.f32 %v2338, 1.442695
    %v3017 = vpow.pop %v3016
    %v3018 = vmul.f32 %v2339, 1.442695
    %v3019 = vpow.pop %v3018
    %v3020 = vmul.f32 %v2340, 1.442695
    %v3021 = vpow.pop %v3020
    %v3022 = vmul.f32 %v2341, 1.442695
    %v3023 = vpow.pop %v3022
    %v3024 = vmul.f32 %v2342, 1.442695
    %v3025 = vpow.pop %v3024
    %v3026 = vmul.f32 %v2343, 1.442695
    %v3027 = vpow.pop %v3026
    %v3028 = vmul.f32 %v2344, 1.442695
    %v3029 = vpow.pop %v3028
    %v3030 = vmul.f32 %v2345, 1.442695
    %v3031 = vpow.pop %v3030
    %v3032 = vmul.f32 %v2346, 1.442695
    %v3033 = vpow.pop %v3032
    %v3034 = vmul.f32 %v2347, 1.442695
    %v3035 = vpow.pop %v3034
    %v3036 = vmul.f32 %v2348, 1.442695
    %v3037 = vpow.pop %v3036
    %v3038 = vmul.f32 %v2349, 1.442695
    %v3039 = vpow.pop %v3038
    %v3040 = vmul.f32 %v2350, 1.442695
    %v3041 = vpow.pop %v3040
    %v3042 = vmul.f32 %v2351, 1.442695
    %v3043 = vpow.pop %v3042
    %v3044 = vmul.f32 %v2352, 1.442695
    %v3045 = vpow.pop %v3044
    %v3046 = vmul.f32 %v2353, 1.442695
    %v3047 = vpow.pop %v3046
    %v3048 = vmul.f32 %v2354, 1.442695
    %v3049 = vpow.pop %v3048
    %v3050 = vmul.f32 %v2355, 1.442695
    %v3051 = vpow.pop %v3050
    %v3052 = vmul.f32 %v2356, 1.442695
    %v3053 = vpow.pop %v3052
    %v3054 = vmul.f32 %v2357, 1.442695
    %v3055 = vpow.pop %v3054
    %v3056 = vmul.f32 %v2358, 1.442695
    %v3057 = vpow.pop %v3056
    %v3058 = vmul.f32 %v2359, 1.442695
    %v3059 = vpow.pop %v3058
    %v3060 = vmul.f32 %v2360, 1.442695
    %v3061 = vpow.pop %v3060
    %v3062 = vmul.f32 %v2361, 1.442695
    %v3063 = vpow.pop %v3062
    %v3064 = vmul.f32 %v2362, 1.442695
    %v3065 = vpow.pop %v3064
    %v3066 = vmul.f32 %v2363, 1.442695
    %v3067 = vpow.pop %v3066
    %v3068 = vmul.f32 %v2364, 1.442695
    %v3069 = vpow.pop %v3068
    %v3070 = vmul.f32 %v2365, 1.442695
    %v3071 = vpow.pop %v3070
    %v3072 = vmul.f32 %v2366, 1.442695
    %v3073 = vpow.pop %v3072
    %v3074 = vmul.f32 %v2367, 1.442695
    %v3075 = vpow.pop %v3074
    %v3076 = vmul.f32 %v2368, 1.442695
    %v3077 = vpow.pop %v3076
    %v3078 = vmul.f32 %v2369, 1.442695
    %v3079 = vpow.pop %v3078
    %v3080 = vmul.f32 %v2370, 1.442695
    %v3081 = vpow.pop %v3080
    %v3082 = vmul.f32 %v2371, 1.442695
    %v3083 = vpow.pop %v3082
    %v3084 = vmul.f32 %v2372, 1.442695
    %v3085 = vpow.pop %v3084
    %v3086 = vmul.f32 %v2373, 1.442695
    %v3087 = vpow.pop %v3086
    %v3088 = vmul.f32 %v2374, 1.442695
    %v3089 = vpow.pop %v3088
    %v3090 = vmul.f32 %v2375, 1.442695
    %v3091 = vpow.pop %v3090
    %v3092 = vmul.f32 %v2376, 1.442695
    %v3093 = vpow.pop %v3092
    %v3094 = vmul.f32 %v2377, 1.442695
    %v3095 = vpow.pop %v3094
    %v3096 = vmul.f32 %v2378, 1.442695
    %v3097 = vpow.pop %v3096
    %v3098 = vmul.f32 %v2379, 1.442695
    %v3099 = vpow.pop %v3098
    %v3100 = vmul.f32 %v2380, 1.442695
    %v3101 = vpow.pop %v3100
    %v3102 = vmul.f32 %v2381, 1.442695
    %v3103 = vpow.pop %v3102
    %v3104 = vmul.f32 %v2382, 1.442695
    %v3105 = vpow.pop %v3104
    %v3106 = vmul.f32 %v2383, 1.442695
    %v3107 = vpow.pop %v3106
    %v3108 = vmul.f32 %v2384, 1.442695
    %v3109 = vpow.pop %v3108
    %v3110 = vmul.f32 %v2385, 1.442695
    %v3111 = vpow.pop %v3110
    %v3112 = vmul.f32 %v2386, 1.442695
    %v3113 = vpow.pop %v3112
    %v3114 = vmul.f32 %v2387, 1.442695
    %v3115 = vpow.pop %v3114
    %v3116 = vmul.f32 %v2388, 1.442695
    %v3117 = vpow.pop %v3116
    %v3118 = vmul.f32 %v2389, 1.442695
    %v3119 = vpow.pop %v3118
    %v3120 = vmul.f32 %v2390, 1.442695
    %v3121 = vpow.pop %v3120
    %v3122 = vmul.f32 %v2391, 1.442695
    %v3123 = vpow.pop %v3122
    %v3124 = vmul.f32 %v2392, 1.442695
    %v3125 = vpow.pop %v3124
    %v3126 = vmul.f32 %v2393, 1.442695
    %v3127 = vpow.pop %v3126
    %v3128 = vmul.f32 %v2394, 1.442695
    %v3129 = vpow.pop %v3128
    %v3130 = vmul.f32 %v2395, 1.442695
    %v3131 = vpow.pop %v3130
    %v3132 = vmul.f32 %v2396, 1.442695
    %v3133 = vpow.pop %v3132
    %v3134 = vmul.f32 %v2397, 1.442695
    %v3135 = vpow.pop %v3134
    %v3136 = vmul.f32 %v2398, 1.442695
    %v3137 = vpow.pop %v3136
    %v3138 = vmul.f32 %v2399, 1.442695
    %v3139 = vpow.pop %v3138
    %v3140 = vmul.f32 %v2400, 1.442695
    %v3141 = vpow.pop %v3140
    %v3142 = vmul.f32 %v2401, 1.442695
    %v3143 = vpow.pop %v3142
    %v3144 = vmul.f32 %v2402, 1.442695
    %v3145 = vpow.pop %v3144
    %v3146 = vmul.f32 %v2403, 1.442695
    %v3147 = vpow.pop %v3146
    %v3148 = vmul.f32 %v2404, 1.442695
    %v3149 = vpow.pop %v3148
    %v3150 = vmul.f32 %v2405, 1.442695
    %v3151 = vpow.pop %v3150
    %v3152 = vmul.f32 %v2406, 1.442695
    %v3153 = vpow.pop %v3152
    %v3154 = vmul.f32 %v2407, 1.442695
    %v3155 = vpow.pop %v3154
    %v3156 = vmul.f32 %v2408, 1.442695
    %v3157 = vpow.pop %v3156
    %v3158 = vmul.f32 %v2409, 1.442695
    %v3159 = vpow.pop %v3158
    %v3160 = vmul.f32 %v2410, 1.442695
    %v3161 = vpow.pop %v3160
    %v3162 = vmul.f32 %v2411, 1.442695
    %v3163 = vpow.pop %v3162
    %v3164 = vmul.f32 %v2412, 1.442695
    %v3165 = vpow.pop %v3164
    %v3166 = vmul.f32 %v2413, 1.442695
    %v3167 = vpow.pop %v3166
    %v3168 = vmul.f32 %v2414, 1.442695
    %v3169 = vpow.pop %v3168
    %v3170 = vmul.f32 %v2415, 1.442695
    %v3171 = vpow.pop %v3170
    %v3172 = vmul.f32 %v2416, 1.442695
    %v3173 = vpow.pop %v3172
    %v3174 = vmul.f32 %v2417, 1.442695
    %v3175 = vpow.pop %v3174
    %v3176 = vmul.f32 %v2418, 1.442695
    %v3177 = vpow.pop %v3176
    %v3178 = vmul.f32 %v2419, 1.442695
    %v3179 = vpow.pop %v3178
    %v3180 = vmul.f32 %v2420, 1.442695
    %v3181 = vpow.pop %v3180
    %v3182 = vmul.f32 %v2421, 1.442695
    %v3183 = vpow.pop %v3182
    %v3184 = vmul.f32 %v2422, 1.442695
    %v3185 = vpow.pop %v3184
    %v3186 = vmul.f32 %v2423, 1.442695
    %v3187 = vpow.pop %v3186
    %v3188 = vmul.f32 %v2424, 1.442695
    %v3189 = vpow.pop %v3188
    %v3190 = vmul.f32 %v2425, 1.442695
    %v3191 = vpow.pop %v3190
    %v3192 = vmul.f32 %v2426, 1.442695
    %v3193 = vpow.pop %v3192
    %v3194 = vmul.f32 %v2427, 1.442695
    %v3195 = vpow.pop %v3194
    %v3196 = vmul.f32 %v2428, 1.442695
    %v3197 = vpow.pop %v3196
    %v3198 = vmul.f32 %v2429, 1.442695
    %v3199 = vpow.pop %v3198
    %v3200 = vmul.f32 %v2430, 1.442695
    %v3201 = vpow.pop %v3200
    %v3202 = vmul.f32 %v2431, 1.442695
    %v3203 = vpow.pop %v3202
    %v3204 = vmul.f32 %v2432, 1.442695
    %v3205 = vpow.pop %v3204
    %v3206 = vmul.f32 %v2433, 1.442695
    %v3207 = vpow.pop %v3206
    %v3208 = vmul.f32 %v2434, 1.442695
    %v3209 = vpow.pop %v3208
    %v3210 = vmul.f32 %v2435, 1.442695
    %v3211 = vpow.pop %v3210
    %v3212 = vmul.f32 %v2436, 1.442695
    %v3213 = vpow.pop %v3212
    %v3214 = vmul.f32 %v2437, 1.442695
    %v3215 = vpow.pop %v3214
    %v3216 = vmul.f32 %v2438, 1.442695
    %v3217 = vpow.pop %v3216
    %v3218 = vmul.f32 %v2439, 1.442695
    %v3219 = vpow.pop %v3218
    %v3220 = vmul.f32 %v2440, 1.442695
    %v3221 = vpow.pop %v3220
    %v3222 = vmul.f32 %v2441, 1.442695
    %v3223 = vpow.pop %v3222
    %v3224 = vmul.f32 %v2442, 1.442695
    %v3225 = vpow.pop %v3224
    %v3226 = vmul.f32 %v2443, 1.442695
    %v3227 = vpow.pop %v3226
    %v3228 = vmul.f32 %v2444, 1.442695
    %v3229 = vpow.pop %v3228
    %v3230 = vmul.f32 %v2445, 1.442695
    %v3231 = vpow.pop %v3230
    %v3232 = vmul.f32 %v2446, 1.442695
    %v3233 = vpow.pop %v3232
    %v3234 = vmul.f32 %v2447, 1.442695
    %v3235 = vpow.pop %v3234
    %v3236 = vmul.f32 %v2448, 1.442695
    %v3237 = vpow.pop %v3236
    %v3238 = vmul.f32 %v2449, 1.442695
    %v3239 = vpow.pop %v3238
    %v3240 = vmul.f32 %v2450, 1.442695
    %v3241 = vpow.pop %v3240
    %v3242 = vmul.f32 %v2451, 1.442695
    %v3243 = vpow.pop %v3242
    %v3244 = vmul.f32 %v2452, 1.442695
    %v3245 = vpow.pop %v3244
    %v3246 = vmul.f32 %v2453, 1.442695
    %v3247 = vpow.pop %v3246
    %v3248 = vmul.f32 %v2454, 1.442695
    %v3249 = vpow.pop %v3248
    %v3250 = vmul.f32 %v2455, 1.442695
    %v3251 = vpow.pop %v3250
    %v3252 = vmul.f32 %v2456, 1.442695
    %v3253 = vpow.pop %v3252
    %v3254 = vmul.f32 %v2457, 1.442695
    %v3255 = vpow.pop %v3254
    %v3256 = vmul.f32 %v2458, 1.442695
    %v3257 = vpow.pop %v3256
    %v3258 = vmul.f32 %v2459, 1.442695
    %v3259 = vpow.pop %v3258
    %v3260 = vmul.f32 %v2460, 1.442695
    %v3261 = vpow.pop %v3260
    %v3262 = vmul.f32 %v2461, 1.442695
    %v3263 = vpow.pop %v3262
    %v3264 = vmul.f32 %v2462, 1.442695
    %v3265 = vpow.pop %v3264
    %v3266 = vmul.f32 %v2463, 1.442695
    %v3267 = vpow.pop %v3266
    %v3268 = vmul.f32 %v2464, 1.442695
    %v3269 = vpow.pop %v3268
    %v3270 = vmul.f32 %v2465, 1.442695
    %v3271 = vpow.pop %v3270
    %v3272 = vmul.f32 %v2466, 1.442695
    %v3273 = vpow.pop %v3272
    %v3274 = vmul.f32 %v2467, 1.442695
    %v3275 = vpow.pop %v3274
    %v3276 = vmul.f32 %v2468, 1.442695
    %v3277 = vpow.pop %v3276
    %v3278 = vmul.f32 %v2469, 1.442695
    %v3279 = vpow.pop %v3278
    %v3280 = vmul.f32 %v2470, 1.442695
    %v3281 = vpow.pop %v3280
    %v3282 = vmul.f32 %v2471, 1.442695
    %v3283 = vpow.pop %v3282
    %v3284 = vmul.f32 %v2472, 1.442695
    %v3285 = vpow.pop %v3284
    %v3286 = vmul.f32 %v2473, 1.442695
    %v3287 = vpow.pop %v3286
    %v3288 = vmul.f32 %v2474, 1.442695
    %v3289 = vpow.pop %v3288
    %v3290 = vmul.f32 %v2475, 1.442695
    %v3291 = vpow.pop %v3290
    %v3292 = vmul.f32 %v2476, 1.442695
    %v3293 = vpow.pop %v3292
    %v3294 = vmul.f32 %v2477, 1.442695
    %v3295 = vpow.pop %v3294
    %v3296 = vmul.f32 %v2478, 1.442695
    %v3297 = vpow.pop %v3296
    %v3298 = vmul.f32 %v2479, 1.442695
    %v3299 = vpow.pop %v3298
    %v3300 = vmul.f32 %v2480, 1.442695
    %v3301 = vpow.pop %v3300
    %v3302 = vmul.f32 %v2481, 1.442695
    %v3303 = vpow.pop %v3302
    %v3304 = vmul.f32 %v2482, 1.442695
    %v3305 = vpow.pop %v3304
    %v3306 = vmul.f32 %v2483, 1.442695
    %v3307 = vpow.pop %v3306
    %v3308 = vmul.f32 %v2484, 1.442695
    %v3309 = vpow.pop %v3308
    %v3310 = vmul.f32 %v2485, 1.442695
    %v3311 = vpow.pop %v3310
    %v3312 = vmul.f32 %v2486, 1.442695
    %v3313 = vpow.pop %v3312
    %v3314 = vmul.f32 %v2487, 1.442695
    %v3315 = vpow.pop %v3314
    %v3316 = vmul.f32 %v2488, 1.442695
    %v3317 = vpow.pop %v3316
    %v3318 = vmul.f32 %v2489, 1.442695
    %v3319 = vpow.pop %v3318
    %v3320 = vmul.f32 %v2490, 1.442695
    %v3321 = vpow.pop %v3320
    %v3322 = vmul.f32 %v2491, 1.442695
    %v3323 = vpow.pop %v3322
    %v3324 = vmul.f32 %v2492, 1.442695
    %v3325 = vpow.pop %v3324
    %v3326 = vmul.f32 %v2493, 1.442695
    %v3327 = vpow.pop %v3326
    %v3328 = vmul.f32 %v2494, 1.442695
    %v3329 = vpow.pop %v3328
    %v3330 = vmul.f32 %v2495, 1.442695
    %v3331 = vpow.pop %v3330
    %v3332 = vmul.f32 %v2496, 1.442695
    %v3333 = vpow.pop %v3332
    %v3334 = vmul.f32 %v2497, 1.442695
    %v3335 = vpow.pop %v3334
    %v3336 = vmul.f32 %v2498, 1.442695
    %v3337 = vpow.pop %v3336
    %v3338 = vmul.f32 %v2499, 1.442695
    %v3339 = vpow.pop %v3338
    %v3340 = vmul.f32 %v2500, 1.442695
    %v3341 = vpow.pop %v3340
    %v3342 = vmul.f32 %v2501, 1.442695
    %v3343 = vpow.pop %v3342
    %v3344 = vmul.f32 %v2502, 1.442695
    %v3345 = vpow.pop %v3344
    %v3346 = vmul.f32 %v2503, 1.442695
    %v3347 = vpow.pop %v3346
    %v3348 = vmul.f32 %v2504, 1.442695
    %v3349 = vpow.pop %v3348
    %v3350 = vmul.f32 %v2505, 1.442695
    %v3351 = vpow.pop %v3350
    %v3352 = vmul.f32 %v2506, 1.442695
    %v3353 = vpow.pop %v3352
    %v3354 = vmul.f32 %v2507, 1.442695
    %v3355 = vpow.pop %v3354
    %v3356 = vmul.f32 %v2508, 1.442695
    %v3357 = vpow.pop %v3356
    %v3358 = vmul.f32 %v2509, 1.442695
    %v3359 = vpow.pop %v3358
    %v3360 = vmul.f32 %v2510, 1.442695
    %v3361 = vpow.pop %v3360
    %v3362 = vmul.f32 %v2511, 1.442695
    %v3363 = vpow.pop %v3362
    %v3364 = vmul.f32 %v2512, 1.442695
    %v3365 = vpow.pop %v3364
    %v3366 = vmul.f32 %v2513, 1.442695
    %v3367 = vpow.pop %v3366
    %v3368 = vmul.f32 %v2514, 1.442695
    %v3369 = vpow.pop %v3368
    %v3370 = vmul.f32 %v2515, 1.442695
    %v3371 = vpow.pop %v3370
    %v3372 = vmul.f32 %v2516, 1.442695
    %v3373 = vpow.pop %v3372
    %v3374 = vmul.f32 %v2517, 1.442695
    %v3375 = vpow.pop %v3374
    %v3376 = vmul.f32 %v2518, 1.442695
    %v3377 = vpow.pop %v3376
    %v3378 = vmul.f32 %v2519, 1.442695
    %v3379 = vpow.pop %v3378
    %v3380 = vmul.f32 %v2520, 1.442695
    %v3381 = vpow.pop %v3380
    %v3382 = vmul.f32 %v2521, 1.442695
    %v3383 = vpow.pop %v3382
    %v3384 = vmul.f32 %v2522, 1.442695
    %v3385 = vpow.pop %v3384
    %v3386 = vmul.f32 %v2523, 1.442695
    %v3387 = vpow.pop %v3386
    %v3388 = vmul.f32 %v2524, 1.442695
    %v3389 = vpow.pop %v3388
    %v3390 = vmul.f32 %v2525, 1.442695
    %v3391 = vpow.pop %v3390
    %v3392 = vmul.f32 %v2526, 1.442695
    %v3393 = vpow.pop %v3392
    %v3394 = vmul.f32 %v2527, 1.442695
    %v3395 = vpow.pop %v3394
    %v3396 = vmul.f32 %v2528, 1.442695
    %v3397 = vpow.pop %v3396
    %v3398 = vmul.f32 %v2529, 1.442695
    %v3399 = vpow.pop %v3398
    %v3400 = vmul.f32 %v2530, 1.442695
    %v3401 = vpow.pop %v3400
    %v3402 = vmul.f32 %v2531, 1.442695
    %v3403 = vpow.pop %v3402
    %v3404 = vmul.f32 %v2532, 1.442695
    %v3405 = vpow.pop %v3404
    %v3406 = vmul.f32 %v2533, 1.442695
    %v3407 = vpow.pop %v3406
    %v3408 = vmul.f32 %v2534, 1.442695
    %v3409 = vpow.pop %v3408
    %v3410 = vmul.f32 %v2535, 1.442695
    %v3411 = vpow.pop %v3410
    %v3412 = vmul.f32 %v2536, 1.442695
    %v3413 = vpow.pop %v3412
    %v3414 = vmul.f32 %v2537, 1.442695
    %v3415 = vpow.pop %v3414
    %v3416 = vmul.f32 %v2538, 1.442695
    %v3417 = vpow.pop %v3416
    %v3418 = vmul.f32 %v2539, 1.442695
    %v3419 = vpow.pop %v3418
    %v3420 = vmul.f32 %v2540, 1.442695
    %v3421 = vpow.pop %v3420
    %v3422 = vmul.f32 %v2541, 1.442695
    %v3423 = vpow.pop %v3422
    %v3424 = vmul.f32 %v2542, 1.442695
    %v3425 = vpow.pop %v3424
    %v3426 = vmul.f32 %v2543, 1.442695
    %v3427 = vpow.pop %v3426
    %v3428 = vmul.f32 %v2544, 1.442695
    %v3429 = vpow.pop %v3428
    %v3430 = vmul.f32 %v2545, 1.442695
    %v3431 = vpow.pop %v3430
    %v3432 = vmul.f32 %v2546, 1.442695
    %v3433 = vpow.pop %v3432
    %v3434 = vmul.f32 %v2547, 1.442695
    %v3435 = vpow.pop %v3434
    %v3436 = vmul.f32 %v2548, 1.442695
    %v3437 = vpow.pop %v3436
    %v3438 = vmul.f32 %v2549, 1.442695
    %v3439 = vpow.pop %v3438
    %v3440 = vmul.f32 %v2550, 1.442695
    %v3441 = vpow.pop %v3440
    %v3442 = vmul.f32 %v2551, 1.442695
    %v3443 = vpow.pop %v3442
    %v3444 = vmul.f32 %v2552, 1.442695
    %v3445 = vpow.pop %v3444
    %v3446 = vmul.f32 %v2553, 1.442695
    %v3447 = vpow.pop %v3446
    %v3448 = vmul.f32 %v2554, 1.442695
    %v3449 = vpow.pop %v3448
    %v3450 = vmul.f32 %v2555, 1.442695
    %v3451 = vpow.pop %v3450
    %v3452 = vmul.f32 %v2556, 1.442695
    %v3453 = vpow.pop %v3452
    %v3454 = vmul.f32 %v2557, 1.442695
    %v3455 = vpow.pop %v3454
    %v3456 = vmul.f32 %v2558, 1.442695
    %v3457 = vpow.pop %v3456
    %v3458 = vmul.f32 %v2559, 1.442695
    %v3459 = vpow.pop %v3458
    %v3460 = vmul.f32 %v2560, 1.442695
    %v3461 = vpow.pop %v3460
    %v3462 = vmul.f32 %v2561, 1.442695
    %v3463 = vpow.pop %v3462
    %v3464 = vmul.f32 %v2562, 1.442695
    %v3465 = vpow.pop %v3464
    %v3466 = vmul.f32 %v2563, 1.442695
    %v3467 = vpow.pop %v3466
    %v3468 = vmul.f32 %v2564, 1.442695
    %v3469 = vpow.pop %v3468
    %v3470 = vmul.f32 %v2565, 1.442695
    %v3471 = vpow.pop %v3470
    %v3472 = vmul.f32 %v2566, 1.442695
    %v3473 = vpow.pop %v3472
    %v3474 = vmul.f32 %v2567, 1.442695
    %v3475 = vpow.pop %v3474
    %v3476 = vmul.f32 %v2568, 1.442695
    %v3477 = vpow.pop %v3476
    %v3478 = vmul.f32 %v2569, 1.442695
    %v3479 = vpow.pop %v3478
    %v3480 = vmul.f32 %v2570, 1.442695
    %v3481 = vpow.pop %v3480
    %v3482 = vmul.f32 %v2571, 1.442695
    %v3483 = vpow.pop %v3482
    %v3484 = vmul.f32 %v2572, 1.442695
    %v3485 = vpow.pop %v3484
    %v3486 = vmul.f32 %v2573, 1.442695
    %v3487 = vpow.pop %v3486
    %v3488 = vmul.f32 %v2574, 1.442695
    %v3489 = vpow.pop %v3488
    %v3490 = vmul.f32 %v2575, 1.442695
    %v3491 = vpow.pop %v3490
    %v3492 = vmul.f32 %v2576, 1.442695
    %v3493 = vpow.pop %v3492
    %v3494 = vmul.f32 %v2577, 1.442695
    %v3495 = vpow.pop %v3494
    %v3496 = vmul.f32 %v2578, 1.442695
    %v3497 = vpow.pop %v3496
    %v3498 = vmul.f32 %v2579, 1.442695
    %v3499 = vpow.pop %v3498
    %v3500 = vmul.f32 %v2580, 1.442695
    %v3501 = vpow.pop %v3500
    %v3502 = vmul.f32 %v2581, 1.442695
    %v3503 = vpow.pop %v3502
    %v3504 = vmul.f32 %v2582, 1.442695
    %v3505 = vpow.pop %v3504
    %v3506 = vmul.f32 %v2583, 1.442695
    %v3507 = vpow.pop %v3506
    %v3508 = vmul.f32 %v2584, 1.442695
    %v3509 = vpow.pop %v3508
    %v3510 = vmul.f32 %v2585, 1.442695
    %v3511 = vpow.pop %v3510
    %v3512 = vmul.f32 %v2586, 1.442695
    %v3513 = vpow.pop %v3512
    %v3514 = vmul.f32 %v2587, 1.442695
    %v3515 = vpow.pop %v3514
    %v3516 = vmul.f32 %v2588, 1.442695
    %v3517 = vpow.pop %v3516
    %v3518 = vmul.f32 %v2589, 1.442695
    %v3519 = vpow.pop %v3518
    %v3520 = vmul.f32 %v2590, 1.442695
    %v3521 = vpow.pop %v3520
    %v3522 = vmul.f32 %v2591, 1.442695
    %v3523 = vpow.pop %v3522
    %v3524 = vmul.f32 %v2592, 1.442695
    %v3525 = vpow.pop %v3524
    %v3526 = vmul.f32 %v2593, 1.442695
    %v3527 = vpow.pop %v3526
    %v3528 = vmul.f32 %v2594, 1.442695
    %v3529 = vpow.pop %v3528
    %v3530 = vmul.f32 %v2595, 1.442695
    %v3531 = vpow.pop %v3530
    %v3532 = vmul.f32 %v2596, 1.442695
    %v3533 = vpow.pop %v3532
    %v3534 = vmul.f32 %v2597, 1.442695
    %v3535 = vpow.pop %v3534
    %v3536 = vmul.f32 %v2598, 1.442695
    %v3537 = vpow.pop %v3536
    %v3538 = vmul.f32 %v2599, 1.442695
    %v3539 = vpow.pop %v3538
    %v3540 = vmul.f32 %v2600, 1.442695
    %v3541 = vpow.pop %v3540
    %v3542 = vmul.f32 %v2601, 1.442695
    %v3543 = vpow.pop %v3542
    %v3544 = vmul.f32 %v2602, 1.442695
    %v3545 = vpow.pop %v3544
    %v3546 = vmul.f32 %v2603, 1.442695
    %v3547 = vpow.pop %v3546
    %v3548 = vmul.f32 %v2604, 1.442695
    %v3549 = vpow.pop %v3548
    %v3550 = vmul.f32 %v2605, 1.442695
    %v3551 = vpow.pop %v3550
    %v3552 = vmul.f32 %v2606, 1.442695
    %v3553 = vpow.pop %v3552
    %v3554 = vmul.f32 %v2607, 1.442695
    %v3555 = vpow.pop %v3554
    %v3556 = vmul.f32 %v2608, 1.442695
    %v3557 = vpow.pop %v3556
    %v3558 = vmul.f32 %v2609, 1.442695
    %v3559 = vpow.pop %v3558
    %v3560 = vmul.f32 %v2610, 1.442695
    %v3561 = vpow.pop %v3560
    %v3562 = vmul.f32 %v2611, 1.442695
    %v3563 = vpow.pop %v3562
    %v3564 = vmul.f32 %v2612, 1.442695
    %v3565 = vpow.pop %v3564
    %v3566 = vmul.f32 %v2613, 1.442695
    %v3567 = vpow.pop %v3566
    %v3568 = vmul.f32 %v2614, 1.442695
    %v3569 = vpow.pop %v3568
    %v3570 = vmul.f32 %v2615, 1.442695
    %v3571 = vpow.pop %v3570
    %v3572 = vmul.f32 %v2616, 1.442695
    %v3573 = vpow.pop %v3572
    %v3574 = vmul.f32 %v2617, 1.442695
    %v3575 = vpow.pop %v3574
    %v3576 = vmul.f32 %v2618, 1.442695
    %v3577 = vpow.pop %v3576
    %v3578 = vmul.f32 %v2619, 1.442695
    %v3579 = vpow.pop %v3578
    %v3580 = vmul.f32 %v2620, 1.442695
    %v3581 = vpow.pop %v3580
    %v3582 = vmul.f32 %v2621, 1.442695
    %v3583 = vpow.pop %v3582
    %v3584 = vmul.f32 %v2622, 1.442695
    %v3585 = vpow.pop %v3584
    %v3586 = vmul.f32 %v2623, 1.442695
    %v3587 = vpow.pop %v3586
    %v3588 = vmul.f32 %v2624, 1.442695
    %v3589 = vpow.pop %v3588
    %v3590 = vmul.f32 %v2625, 1.442695
    %v3591 = vpow.pop %v3590
    %v3592 = vmul.f32 %v2626, 1.442695
    %v3593 = vpow.pop %v3592
    %v3594 = vmul.f32 %v2627, 1.442695
    %v3595 = vpow.pop %v3594
    %v3596 = vmul.f32 %v2628, 1.442695
    %v3597 = vpow.pop %v3596
    %v3598 = vmul.f32 %v2629, 1.442695
    %v3599 = vpow.pop %v3598
    %v3600 = vmul.f32 %v2630, 1.442695
    %v3601 = vpow.pop %v3600
    %v3602 = vmul.f32 %v2631, 1.442695
    %v3603 = vpow.pop %v3602
    %v3604 = vmul.f32 %v2632, 1.442695
    %v3605 = vpow.pop %v3604
    %v3606 = vmul.f32 %v2633, 1.442695
    %v3607 = vpow.pop %v3606
    %v3608 = vmul.f32 %v2634, 1.442695
    %v3609 = vpow.pop %v3608
    %v3610 = vmul.f32 %v2635, 1.442695
    %v3611 = vpow.pop %v3610
    %v3612 = vmul.f32 %v2636, 1.442695
    %v3613 = vpow.pop %v3612
    %v3614 = vmul.f32 %v2637, 1.442695
    %v3615 = vpow.pop %v3614
    %v3616 = vmul.f32 %v2638, 1.442695
    %v3617 = vpow.pop %v3616
    %v3618 = vmul.f32 %v2639, 1.442695
    %v3619 = vpow.pop %v3618
    %v3620 = vmul.f32 %v2640, 1.442695
    %v3621 = vpow.pop %v3620
    %v3622 = vmul.f32 %v2641, 1.442695
    %v3623 = vpow.pop %v3622
    %v3624 = vmul.f32 %v2642, 1.442695
    %v3625 = vpow.pop %v3624
    %v3626 = vmul.f32 %v2643, 1.442695
    %v3627 = vpow.pop %v3626
    %v3628 = vmul.f32 %v2644, 1.442695
    %v3629 = vpow.pop %v3628
    %v3630 = vmul.f32 %v2645, 1.442695
    %v3631 = vpow.pop %v3630
    %v3632 = vmul.f32 %v2646, 1.442695
    %v3633 = vpow.pop %v3632
    %v3634 = vmul.f32 %v2647, 1.442695
    %v3635 = vpow.pop %v3634
    %v3636 = vmul.f32 %v2648, 1.442695
    %v3637 = vpow.pop %v3636
    %v3638 = vmul.f32 %v2649, 1.442695
    %v3639 = vpow.pop %v3638
    %v3640 = vmul.f32 %v2650, 1.442695
    %v3641 = vpow.pop %v3640
    %v3642 = vmul.f32 %v2651, 1.442695
    %v3643 = vpow.pop %v3642
    %v3644 = vmul.f32 %v2652, 1.442695
    %v3645 = vpow.pop %v3644
    %v3646 = vmul.f32 %v2653, 1.442695
    %v3647 = vpow.pop %v3646
    %v3648 = vmul.f32 %v2654, 1.442695
    %v3649 = vpow.pop %v3648
    %v3650 = vmul.f32 %v2655, 1.442695
    %v3651 = vpow.pop %v3650
    %v3652 = vmul.f32 %v2656, 1.442695
    %v3653 = vpow.pop %v3652
    %v3654 = vmul.f32 %v2657, 1.442695
    %v3655 = vpow.pop %v3654
    %v3656 = vmul.f32 %v2658, 1.442695
    %v3657 = vpow.pop %v3656
    %v3658 = vmul.f32 %v2659, 1.442695
    %v3659 = vpow.pop %v3658
    %v3660 = vmul.f32 %v2660, 1.442695
    %v3661 = vpow.pop %v3660
    %v3662 = vmul.f32 %v2661, 1.442695
    %v3663 = vpow.pop %v3662
    %v3664 = vmul.f32 %v2662, 1.442695
    %v3665 = vpow.pop %v3664
    %v3666 = vmul.f32 %v2663, 1.442695
    %v3667 = vpow.pop %v3666
    %v3668 = vmul.f32 %v2664, 1.442695
    %v3669 = vpow.pop %v3668
    %v3670 = vmul.f32 %v2665, 1.442695
    %v3671 = vpow.pop %v3670
    %v3672 = vmul.f32 %v2666, 1.442695
    %v3673 = vpow.pop %v3672
    %v3674 = vmul.f32 %v2667, 1.442695
    %v3675 = vpow.pop %v3674
    %v3676 = vmul.f32 %v2668, 1.442695
    %v3677 = vpow.pop %v3676
    %v3678 = vmul.f32 %v2669, 1.442695
    %v3679 = vpow.pop %v3678
    %v3680 = vmul.f32 %v2670, 1.442695
    %v3681 = vpow.pop %v3680
    %v3682 = vmul.f32 %v2671, 1.442695
    %v3683 = vpow.pop %v3682
    %v3684 = vmul.f32 %v2672, 1.442695
    %v3685 = vpow.pop %v3684
    %v3686 = vmul.f32 %v2673, 1.442695
    %v3687 = vpow.pop %v3686
    %v3688 = vmul.f32 %v2674, 1.442695
    %v3689 = vpow.pop %v3688
    %v3690 = vmul.f32 %v2675, 1.442695
    %v3691 = vpow.pop %v3690
    %v3692 = vmul.f32 %v2676, 1.442695
    %v3693 = vpow.pop %v3692
    %v3694 = vmul.f32 %v2677, 1.442695
    %v3695 = vpow.pop %v3694
    %v3696 = vmul.f32 %v2678, 1.442695
    %v3697 = vpow.pop %v3696
    %v3698 = vmul.f32 %v2679, 1.442695
    %v3699 = vpow.pop %v3698
    %v3700 = vmul.f32 %v2680, 1.442695
    %v3701 = vpow.pop %v3700
    %v3702 = vmul.f32 %v2681, 1.442695
    %v3703 = vpow.pop %v3702
    %v3704 = vmul.f32 %v2682, 1.442695
    %v3705 = vpow.pop %v3704
    %v3706 = vmul.f32 %v2683, 1.442695
    %v3707 = vpow.pop %v3706
    %v3708 = vmul.f32 %v2684, 1.442695
    %v3709 = vpow.pop %v3708
    %v3710 = vmul.f32 %v2685, 1.442695
    %v3711 = vpow.pop %v3710
    %v3712 = vmul.f32 %v2686, 1.442695
    %v3713 = vpow.pop %v3712
    %v3714 = vmul.f32 %v2687, 1.442695
    %v3715 = vpow.pop %v3714
    %v3716 = vmul.f32 %v2688, 1.442695
    %v3717 = vpow.pop %v3716
    %v3718 = vmul.f32 %v2689, 1.442695
    %v3719 = vpow.pop %v3718
    %v3720 = vmul.f32 %v2690, 1.442695
    %v3721 = vpow.pop %v3720
    %v3722 = vmul.f32 %v2691, 1.442695
    %v3723 = vpow.pop %v3722
    %v3724 = vmul.f32 %v2692, 1.442695
    %v3725 = vpow.pop %v3724
    %v3726 = vmul.f32 %v2693, 1.442695
    %v3727 = vpow.pop %v3726
    %v3728 = vmul.f32 %v2694, 1.442695
    %v3729 = vpow.pop %v3728
    %v3730 = vmul.f32 %v2695, 1.442695
    %v3731 = vpow.pop %v3730
    %v3732 = vmul.f32 %v2696, 1.442695
    %v3733 = vpow.pop %v3732
    %v3734 = vmul.f32 %v2697, 1.442695
    %v3735 = vpow.pop %v3734
    %v3736 = vmul.f32 %v2698, 1.442695
    %v3737 = vpow.pop %v3736
    %v3738 = vmul.f32 %v2699, 1.442695
    %v3739 = vpow.pop %v3738
    %v3740 = vmul.f32 %v2700, 1.442695
    %v3741 = vpow.pop %v3740
    %v3742 = vmul.f32 %v2701, 1.442695
    %v3743 = vpow.pop %v3742
    %v3744 = vmul.f32 %v2702, 1.442695
    %v3745 = vpow.pop %v3744
    %v3746 = vmul.f32 %v2703, 1.442695
    %v3747 = vpow.pop %v3746
    %v3748 = vmul.f32 %v2704, 1.442695
    %v3749 = vpow.pop %v3748
    %v3750 = vmul.f32 %v2705, 1.442695
    %v3751 = vpow.pop %v3750
    %v3752 = vmul.f32 %v2706, 1.442695
    %v3753 = vpow.pop %v3752
    %v3754 = vmul.f32 %v2707, 1.442695
    %v3755 = vpow.pop %v3754
    %v3756 = vmul.f32 %v2708, 1.442695
    %v3757 = vpow.pop %v3756
    %v3758 = vmul.f32 %v2709, 1.442695
    %v3759 = vpow.pop %v3758
    %v3760 = vmul.f32 %v2710, 1.442695
    %v3761 = vpow.pop %v3760
    %v3762 = vmul.f32 %v2711, 1.442695
    %v3763 = vpow.pop %v3762
    %v3764 = vmul.f32 %v2712, 1.442695
    %v3765 = vpow.pop %v3764
    %v3766 = vmul.f32 %v2713, 1.442695
    %v3767 = vpow.pop %v3766
    %v3768 = vmul.f32 %v2714, 1.442695
    %v3769 = vpow.pop %v3768
    %v3770 = vmul.f32 %v2715, 1.442695
    %v3771 = vpow.pop %v3770
    %v3772 = vmul.f32 %v2716, 1.442695
    %v3773 = vpow.pop %v3772
    %v3774 = vmul.f32 %v2717, 1.442695
    %v3775 = vpow.pop %v3774
    %v3776 = vmul.f32 %v2718, 1.442695
    %v3777 = vpow.pop %v3776
    %v3778 = vmul.f32 %v2719, 1.442695
    %v3779 = vpow.pop %v3778
    %v3780 = vmul.f32 %v2720, 1.442695
    %v3781 = vpow.pop %v3780
    %v3782 = vmul.f32 %v2721, 1.442695
    %v3783 = vpow.pop %v3782
    %v3784 = vmul.f32 %v2722, 1.442695
    %v3785 = vpow.pop %v3784
    %v3786 = vmul.f32 %v2723, 1.442695
    %v3787 = vpow.pop %v3786
    %v3788 = vmul.f32 %v2724, 1.442695
    %v3789 = vpow.pop %v3788
    %v3790 = vmul.f32 %v2725, 1.442695
    %v3791 = vpow.pop %v3790
    %v3792 = vmul.f32 %v2726, 1.442695
    %v3793 = vpow.pop %v3792
    %v3794 = vmul.f32 %v2727, 1.442695
    %v3795 = vpow.pop %v3794
    %v3796 = vmul.f32 %v2728, 1.442695
    %v3797 = vpow.pop %v3796
    %v3798 = vmul.f32 %v2729, 1.442695
    %v3799 = vpow.pop %v3798
    %v3800 = vmul.f32 %v2730, 1.442695
    %v3801 = vpow.pop %v3800
    %v3802 = vmul.f32 %v2731, 1.442695
    %v3803 = vpow.pop %v3802
    %v3804 = vmul.f32 %v2732, 1.442695
    %v3805 = vpow.pop %v3804
    %v3806 = vmul.f32 %v2733, 1.442695
    %v3807 = vpow.pop %v3806
    %v3808 = vmul.f32 %v2734, 1.442695
    %v3809 = vpow.pop %v3808
    %v3810 = vmul.f32 %v2735, 1.442695
    %v3811 = vpow.pop %v3810
    %v3812 = vmul.f32 %v2736, 1.442695
    %v3813 = vpow.pop %v3812
    %v3814 = vmul.f32 %v2737, 1.442695
    %v3815 = vpow.pop %v3814
    %v3816 = vmul.f32 %v2738, 1.442695
    %v3817 = vpow.pop %v3816
    %v3818 = vmul.f32 %v2739, 1.442695
    %v3819 = vpow.pop %v3818
    %v3820 = vmul.f32 %v2740, 1.442695
    %v3821 = vpow.pop %v3820
    %v3822 = vmul.f32 %v2741, 1.442695
    %v3823 = vpow.pop %v3822
    %v3824 = vmul.f32 %v2742, 1.442695
    %v3825 = vpow.pop %v3824
    %v3826 = vmul.f32 %v2743, 1.442695
    %v3827 = vpow.pop %v3826
    %v3828 = vmul.f32 %v2744, 1.442695
    %v3829 = vpow.pop %v3828
    %v3830 = vmul.f32 %v2745, 1.442695
    %v3831 = vpow.pop %v3830
    %v3832 = vmul.f32 %v2746, 1.442695
    %v3833 = vpow.pop %v3832
    %v3834 = vmul.f32 %v2747, 1.442695
    %v3835 = vpow.pop %v3834
    %v3836 = vmul.f32 %v2748, 1.442695
    %v3837 = vpow.pop %v3836
    %v3838 = vmul.f32 %v2749, 1.442695
    %v3839 = vpow.pop %v3838
    %v3840 = vmul.f32 %v2750, 1.442695
    %v3841 = vpow.pop %v3840
    %v3842 = vmul.f32 %v2751, 1.442695
    %v3843 = vpow.pop %v3842
    %v3844 = vmul.f32 %v2752, 1.442695
    %v3845 = vpow.pop %v3844
    %v3846 = vmul.f32 %v2753, 1.442695
    %v3847 = vpow.pop %v3846
    %v3848 = vmul.f32 %v2754, 1.442695
    %v3849 = vpow.pop %v3848
    %v3850 = vmul.f32 %v2755, 1.442695
    %v3851 = vpow.pop %v3850
    %v3852 = vmul.f32 %v2756, 1.442695
    %v3853 = vpow.pop %v3852
    %v3854 = vmul.f32 %v2757, 1.442695
    %v3855 = vpow.pop %v3854
    %v3856 = vmul.f32 %v2758, 1.442695
    %v3857 = vpow.pop %v3856
    %v3858 = vmul.f32 %v2759, 1.442695
    %v3859 = vpow.pop %v3858
    %v3860 = vmul.f32 %v2760, 1.442695
    %v3861 = vpow.pop %v3860
    %v3862 = vmul.f32 %v2761, 1.442695
    %v3863 = vpow.pop %v3862
    %v3864 = vmul.f32 %v2762, 1.442695
    %v3865 = vpow.pop %v3864
    %v3866 = vmul.f32 %v2763, 1.442695
    %v3867 = vpow.pop %v3866
    %v3868 = vmul.f32 %v2764, 1.442695
    %v3869 = vpow.pop %v3868
    %v3870 = vmul.f32 %v2765, 1.442695
    %v3871 = vpow.pop %v3870
    %v3872 = vmul.f32 %v2766, 1.442695
    %v3873 = vpow.pop %v3872
    %v3874 = vmul.f32 %v2767, 1.442695
    %v3875 = vpow.pop %v3874
    %v3876 = vmul.f32 %v2768, 1.442695
    %v3877 = vpow.pop %v3876
    %v3878 = vmul.f32 %v2769, 1.442695
    %v3879 = vpow.pop %v3878
    %v3880 = vmul.f32 %v2770, 1.442695
    %v3881 = vpow.pop %v3880
    %v3882 = vmul.f32 %v2771, 1.442695
    %v3883 = vpow.pop %v3882
    %v3884 = vmul.f32 %v2772, 1.442695
    %v3885 = vpow.pop %v3884
    %v3886 = vmul.f32 %v2773, 1.442695
    %v3887 = vpow.pop %v3886
    %v3888 = vmul.f32 %v2774, 1.442695
    %v3889 = vpow.pop %v3888
    %v3890 = vmul.f32 %v2775, 1.442695
    %v3891 = vpow.pop %v3890
    %v3892 = vmul.f32 %v2776, 1.442695
    %v3893 = vpow.pop %v3892
    %v3894 = vmul.f32 %v2777, 1.442695
    %v3895 = vpow.pop %v3894
    %v3896 = vmul.f32 %v2778, 1.442695
    %v3897 = vpow.pop %v3896
    %v3898 = vmul.f32 %v2779, 1.442695
    %v3899 = vpow.pop %v3898
    %v3900 = vmul.f32 %v2780, 1.442695
    %v3901 = vpow.pop %v3900
    %v3902 = vmul.f32 %v2781, 1.442695
    %v3903 = vpow.pop %v3902
    %v3904 = vmul.f32 %v2782, 1.442695
    %v3905 = vpow.pop %v3904
    %v3906 = vmul.f32 %v2783, 1.442695
    %v3907 = vpow.pop %v3906
    %v3908 = vmul.f32 %v2784, 1.442695
    %v3909 = vpow.pop %v3908
    %v3910 = vmul.f32 %v2785, 1.442695
    %v3911 = vpow.pop %v3910
    %v3912 = vmul.f32 %v2786, 1.442695
    %v3913 = vpow.pop %v3912
    %v3914 = vmul.f32 %v2787, 1.442695
    %v3915 = vpow.pop %v3914
    %v3916 = vmul.f32 %v2788, 1.442695
    %v3917 = vpow.pop %v3916
    %v3918 = vmul.f32 %v2789, 1.442695
    %v3919 = vpow.pop %v3918
    %v3920 = vmul.f32 %v2790, 1.442695
    %v3921 = vpow.pop %v3920
    %v3922 = vmul.f32 %v2791, 1.442695
    %v3923 = vpow.pop %v3922
    %v3924 = vmul.f32 %v2792, 1.442695
    %v3925 = vpow.pop %v3924
    %v3926 = vmul.f32 %v2793, 1.442695
    %v3927 = vpow.pop %v3926
    %v3928 = vmul.f32 %v2794, 1.442695
    %v3929 = vpow.pop %v3928
    %v3930 = vmul.f32 %v2795, 1.442695
    %v3931 = vpow.pop %v3930
    %v3932 = vmul.f32 %v2796, 1.442695
    %v3933 = vpow.pop %v3932
    %v3934 = vmul.f32 %v2797, 1.442695
    %v3935 = vpow.pop %v3934
    %v3936 = vmul.f32 %v2798, 1.442695
    %v3937 = vpow.pop %v3936
    %v3938 = vmul.f32 %v2799, 1.442695
    %v3939 = vpow.pop %v3938
    %v3940 = vmul.f32 %v2800, 1.442695
    %v3941 = vpow.pop %v3940
    %v3942 = vmul.f32 %v2801, 1.442695
    %v3943 = vpow.pop %v3942
    %v3944 = vmul.f32 %v2802, 1.442695
    %v3945 = vpow.pop %v3944
    %v3946 = vmul.f32 %v2803, 1.442695
    %v3947 = vpow.pop %v3946
    %v3948 = vmul.f32 %v2804, 1.442695
    %v3949 = vpow.pop %v3948
    %v3950 = vmul.f32 %v2805, 1.442695
    %v3951 = vpow.pop %v3950
    %v3952 = vmul.f32 %v2806, 1.442695
    %v3953 = vpow.pop %v3952
    %v3954 = vmul.f32 %v2807, 1.442695
    %v3955 = vpow.pop %v3954
    %v3956 = vmul.f32 %v2808, 1.442695
    %v3957 = vpow.pop %v3956
    %v3958 = vmul.f32 %v2809, 1.442695
    %v3959 = vpow.pop %v3958
    %v3960 = vmul.f32 %v2810, 1.442695
    %v3961 = vpow.pop %v3960
    %v3962 = vmul.f32 %v2811, 1.442695
    %v3963 = vpow.pop %v3962
    %v3964 = vmul.f32 %v2812, 1.442695
    %v3965 = vpow.pop %v3964
    %v3966 = vmul.f32 %v2813, 1.442695
    %v3967 = vpow.pop %v3966
    %v3968 = vmul.f32 %v2814, 1.442695
    %v3969 = vpow.pop %v3968
    %v3970 = vmul.f32 %v2815, 1.442695
    %v3971 = vpow.pop %v3970
    %v3972 = vmul.f32 %v2816, 1.442695
    %v3973 = vpow.pop %v3972
    %v3974 = vmul.f32 %v2817, 1.442695
    %v3975 = vpow.pop %v3974
    %v3976 = vmul.f32 %v2818, 1.442695
    %v3977 = vpow.pop %v3976
    %v3978 = vmul.f32 %v2819, 1.442695
    %v3979 = vpow.pop %v3978
    %v3980 = vmul.f32 %v2820, 1.442695
    %v3981 = vpow.pop %v3980
    %v3982 = vmul.f32 %v2821, 1.442695
    %v3983 = vpow.pop %v3982
    %v3984 = vmul.f32 %v2822, 1.442695
    %v3985 = vpow.pop %v3984
    %v3986 = vmul.f32 %v2823, 1.442695
    %v3987 = vpow.pop %v3986
    %v3988 = vmul.f32 %v2824, 1.442695
    %v3989 = vpow.pop %v3988
    %v3990 = vmul.f32 %v2825, 1.442695
    %v3991 = vpow.pop %v3990
    %v3992 = vmul.f32 %v2826, 1.442695
    %v3993 = vpow.pop %v3992
    %v3994 = vmul.f32 %v2827, 1.442695
    %v3995 = vpow.pop %v3994
    %v3996 = vmul.f32 %v2828, 1.442695
    %v3997 = vpow.pop %v3996
    %v3998 = vmul.f32 %v2829, 1.442695
    %v3999 = vpow.pop %v3998
    %v4000 = vmul.f32 %v2830, 1.442695
    %v4001 = vpow.pop %v4000
    %v4002 = vmul.f32 %v2831, 1.442695
    %v4003 = vpow.pop %v4002
    %v4004 = vmul.f32 %v2832, 1.442695
    %v4005 = vpow.pop %v4004
    %v4006 = vmul.f32 %v2833, 1.442695
    %v4007 = vpow.pop %v4006
    %v4008 = vmul.f32 %v2834, 1.442695
    %v4009 = vpow.pop %v4008
    %v4010 = vmul.f32 %v2835, 1.442695
    %v4011 = vpow.pop %v4010
    %v4012 = vmul.f32 %v2836, 1.442695
    %v4013 = vpow.pop %v4012
    %v4014 = vmul.f32 %v2837, 1.442695
    %v4015 = vpow.pop %v4014
    %v4016 = vmul.f32 %v2838, 1.442695
    %v4017 = vpow.pop %v4016
    %v4018 = vmul.f32 %v2839, 1.442695
    %v4019 = vpow.pop %v4018
    %v4020 = vmul.f32 %v2840, 1.442695
    %v4021 = vpow.pop %v4020
    %v4022 = vmul.f32 %v2841, 1.442695
    %v4023 = vpow.pop %v4022
    %v4024 = vmul.f32 %v2842, 1.442695
    %v4025 = vpow.pop %v4024
    %v4026 = vmul.f32 %v2843, 1.442695
    %v4027 = vpow.pop %v4026
    %v4028 = vmul.f32 %v2844, 1.442695
    %v4029 = vpow.pop %v4028
    %v4030 = vmul.f32 %v2845, 1.442695
    %v4031 = vpow.pop %v4030
    %v4032 = vmul.f32 %v2846, 1.442695
    %v4033 = vpow.pop %v4032
    %v4034 = vmul.f32 %v2847, 1.442695
    %v4035 = vpow.pop %v4034
    %v4036 = vmul.f32 %v2848, 1.442695
    %v4037 = vpow.pop %v4036
    %v4038 = vmul.f32 %v2849, 1.442695
    %v4039 = vpow.pop %v4038
    %v4040 = vmul.f32 %v2850, 1.442695
    %v4041 = vpow.pop %v4040
    %v4042 = vmul.f32 %v2851, 1.442695
    %v4043 = vpow.pop %v4042
    %v4044 = vmul.f32 %v2852, 1.442695
    %v4045 = vpow.pop %v4044
    %v4046 = vmul.f32 %v2853, 1.442695
    %v4047 = vpow.pop %v4046
    %v4048 = vmul.f32 %v2854, 1.442695
    %v4049 = vpow.pop %v4048
    %v4050 = vmul.f32 %v2855, 1.442695
    %v4051 = vpow.pop %v4050
    %v4052 = vmul.f32 %v2856, 1.442695
    %v4053 = vpow.pop %v4052
    %v4054 = vmul.f32 %v2857, 1.442695
    %v4055 = vpow.pop %v4054
    %v4056 = vmul.f32 %v2858, 1.442695
    %v4057 = vpow.pop %v4056
    %v4058 = vmul.f32 %v2859, 1.442695
    %v4059 = vpow.pop %v4058
    %v4060 = vmul.f32 %v2860, 1.442695
    %v4061 = vpow.pop %v4060
    %v4062 = vmul.f32 %v2861, 1.442695
    %v4063 = vpow.pop %v4062
    %v4064 = vmul.f32 %v2862, 1.442695
    %v4065 = vpow.pop %v4064
    %v4066 = vmul.f32 %v2863, 1.442695
    %v4067 = vpow.pop %v4066
    %v4068 = vmul.f32 %v2864, 1.442695
    %v4069 = vpow.pop %v4068
    %v4070 = vmul.f32 %v2865, 1.442695
    %v4071 = vpow.pop %v4070
    %v4072 = vmul.f32 %v2866, 1.442695
    %v4073 = vpow.pop %v4072
    %v4074 = vmul.f32 %v2867, 1.442695
    %v4075 = vpow.pop %v4074
    %v4076 = vmul.f32 %v2868, 1.442695
    %v4077 = vpow.pop %v4076
    %v4078 = vmul.f32 %v2869, 1.442695
    %v4079 = vpow.pop %v4078
    %v4080 = vmul.f32 %v2870, 1.442695
    %v4081 = vpow.pop %v4080
    %v4082 = vmul.f32 %v2871, 1.442695
    %v4083 = vpow.pop %v4082
    %v4084 = vmul.f32 %v2872, 1.442695
    %v4085 = vpow.pop %v4084
    %v4086 = vmul.f32 %v2873, 1.442695
    %v4087 = vpow.pop %v4086
    %v4088 = vmul.f32 %v2874, 1.442695
    %v4089 = vpow.pop %v4088
    %v4090 = vmul.f32 %v2875, 1.442695
    %v4091 = vpow.pop %v4090
    %v4092 = vmul.f32 %v2876, 1.442695
    %v4093 = vpow.pop %v4092
    %v4094 = vmul.f32 %v2877, 1.442695
    %v4095 = vpow.pop %v4094
    %v4096 = vmul.f32 %v2878, 1.442695
    %v4097 = vpow.pop %v4096
    %v4098 = vmul.f32 %v2879, 1.442695
    %v4099 = vpow.pop %v4098
    %v4100 = vmul.f32 %v2880, 1.442695
    %v4101 = vpow.pop %v4100
    %v4102 = vmul.f32 %v2881, 1.442695
    %v4103 = vpow.pop %v4102
    %v4104 = vmul.f32 %v2882, 1.442695
    %v4105 = vpow.pop %v4104
    %v4106 = vmul.f32 %v2883, 1.442695
    %v4107 = vpow.pop %v4106
    %v4108 = vmul.f32 %v2884, 1.442695
    %v4109 = vpow.pop %v4108
    %v4110 = vmul.f32 %v2885, 1.442695
    %v4111 = vpow.pop %v4110
    %v4112 = vmul.f32 %v2886, 1.442695
    %v4113 = vpow.pop %v4112
    %v4114 = vmul.f32 %v2887, 1.442695
    %v4115 = vpow.pop %v4114
    %v4116 = vmul.f32 %v2888, 1.442695
    %v4117 = vpow.pop %v4116
    %v4118 = vmul.f32 %v2889, 1.442695
    %v4119 = vpow.pop %v4118
    %v4120 = vmul.f32 %v2890, 1.442695
    %v4121 = vpow.pop %v4120
    %v4122 = vmul.f32 %v2891, 1.442695
    %v4123 = vpow.pop %v4122
    %v4124 = vmul.f32 %v2892, 1.442695
    %v4125 = vpow.pop %v4124
    %v4126 = vmul.f32 %v2893, 1.442695
    %v4127 = vpow.pop %v4126
    %v4128 = vmul.f32 %v2894, 1.442695
    %v4129 = vpow.pop %v4128
    %v4130 = vmul.f32 %v2895, 1.442695
    %v4131 = vpow.pop %v4130
    %v4132 = vmul.f32 %v2896, 1.442695
    %v4133 = vpow.pop %v4132
    %v4134 = vmul.f32 %v2897, 1.442695
    %v4135 = vpow.pop %v4134
    %v4136 = vmul.f32 %v2898, 1.442695
    %v4137 = vpow.pop %v4136
    %v4138 = vmul.f32 %v2899, 1.442695
    %v4139 = vpow.pop %v4138
    %v4140 = vmul.f32 %v2900, 1.442695
    %v4141 = vpow.pop %v4140
    %v4142 = vmul.f32 %v2901, 1.442695
    %v4143 = vpow.pop %v4142
    %v4144 = vmul.f32 %v2902, 1.442695
    %v4145 = vpow.pop %v4144
    %v4146 = vmul.f32 %v2903, 1.442695
    %v4147 = vpow.pop %v4146
    %v4148 = vmul.f32 %v2904, 1.442695
    %v4149 = vpow.pop %v4148
    %v4150 = vmul.f32 %v2905, 1.442695
    %v4151 = vpow.pop %v4150
    %v4152 = vmul.f32 %v2906, 1.442695
    %v4153 = vpow.pop %v4152
    %v4154 = vmul.f32 %v2907, 1.442695
    %v4155 = vpow.pop %v4154
    %v4156 = vmul.f32 %v2908, 1.442695
    %v4157 = vpow.pop %v4156
    %v4158 = vmul.f32 %v2909, 1.442695
    %v4159 = vpow.pop %v4158
    %v4160 = vmul.f32 %v2910, 1.442695
    %v4161 = vpow.pop %v4160
    %v4162 = vmul.f32 %v2911, 1.442695
    %v4163 = vpow.pop %v4162
    %v4164 = vmul.f32 %v2912, 1.442695
    %v4165 = vpow.pop %v4164
    %v4166 = vmul.f32 %v2913, 1.442695
    %v4167 = vpow.pop %v4166
    %v4168 = vmul.f32 %v2914, 1.442695
    %v4169 = vpow.pop %v4168
    %v4170 = vmul.f32 %v2915, 1.442695
    %v4171 = vpow.pop %v4170
    %v4172 = vmul.f32 %v2916, 1.442695
    %v4173 = vpow.pop %v4172
    %v4174 = vmul.f32 %v2917, 1.442695
    %v4175 = vpow.pop %v4174
    %v4176 = vmul.f32 %v2918, 1.442695
    %v4177 = vpow.pop %v4176
    %v4178 = vmul.f32 %v2919, 1.442695
    %v4179 = vpow.pop %v4178
    %v4180 = vmul.f32 %v2920, 1.442695
    %v4181 = vpow.pop %v4180
    %v4182 = vmul.f32 %v2921, 1.442695
    %v4183 = vpow.pop %v4182
    %v4184 = vmul.f32 %v2922, 1.442695
    %v4185 = vpow.pop %v4184
    %v4186 = vmul.f32 %v2923, 1.442695
    %v4187 = vpow.pop %v4186
    %v4188 = vmul.f32 %v2924, 1.442695
    %v4189 = vpow.pop %v4188
    %v4190 = vmul.f32 %v2925, 1.442695
    %v4191 = vpow.pop %v4190
    %v4192 = vmul.f32 %v2926, 1.442695
    %v4193 = vpow.pop %v4192
    %v4194 = vmul.f32 %v2927, 1.442695
    %v4195 = vpow.pop %v4194
    %v4196 = vmul.f32 %v2928, 1.442695
    %v4197 = vpow.pop %v4196
    %v4198 = vmul.f32 %v2929, 1.442695
    %v4199 = vpow.pop %v4198
    %v4200 = vmul.f32 %v2930, 1.442695
    %v4201 = vpow.pop %v4200
    %v4202 = vmul.f32 %v2931, 1.442695
    %v4203 = vpow.pop %v4202
    %v4204 = vmul.f32 %v2932, 1.442695
    %v4205 = vpow.pop %v4204
    %v4206 = vmul.f32 %v2933, 1.442695
    %v4207 = vpow.pop %v4206
    %v4208 = vmul.f32 %v2934, 1.442695
    %v4209 = vpow.pop %v4208
    %v4210 = vmul.f32 %v2935, 1.442695
    %v4211 = vpow.pop %v4210
    %v4212 = vmul.f32 %v2936, 1.442695
    %v4213 = vpow.pop %v4212
    %v4214 = vmul.f32 %v2937, 1.442695
    %v4215 = vpow.pop %v4214
    %v4216 = vmul.f32 %v2938, 1.442695
    %v4217 = vpow.pop %v4216
    %v4218 = vmul.f32 %v2939, 1.442695
    %v4219 = vpow.pop %v4218
    %v4220 = vadd.f32 %v2941, 1.0
    %v4221 = vadd.f32 %v2943, 1.0
    %v4222 = vadd.f32 %v2945, 1.0
    %v4223 = vadd.f32 %v2947, 1.0
    %v4224 = vadd.f32 %v2949, 1.0
    %v4225 = vadd.f32 %v2951, 1.0
    %v4226 = vadd.f32 %v2953, 1.0
    %v4227 = vadd.f32 %v2955, 1.0
    %v4228 = vadd.f32 %v2957, 1.0
    %v4229 = vadd.f32 %v2959, 1.0
    %v4230 = vadd.f32 %v2961, 1.0
    %v4231 = vadd.f32 %v2963, 1.0
    %v4232 = vadd.f32 %v2965, 1.0
    %v4233 = vadd.f32 %v2967, 1.0
    %v4234 = vadd.f32 %v2969, 1.0
    %v4235 = vadd.f32 %v2971, 1.0
    %v4236 = vadd.f32 %v2973, 1.0
    %v4237 = vadd.f32 %v2975, 1.0
    %v4238 = vadd.f32 %v2977, 1.0
    %v4239 = vadd.f32 %v2979, 1.0
    %v4240 = vadd.f32 %v2981, 1.0
    %v4241 = vadd.f32 %v2983, 1.0
    %v4242 = vadd.f32 %v2985, 1.0
    %v4243 = vadd.f32 %v2987, 1.0
    %v4244 = vadd.f32 %v2989, 1.0
    %v4245 = vadd.f32 %v2991, 1.0
    %v4246 = vadd.f32 %v2993, 1.0
    %v4247 = vadd.f32 %v2995, 1.0
    %v4248 = vadd.f32 %v2997, 1.0
    %v4249 = vadd.f32 %v2999, 1.0
    %v4250 = vadd.f32 %v3001, 1.0
    %v4251 = vadd.f32 %v3003, 1.0
    %v4252 = vadd.f32 %v3005, 1.0
    %v4253 = vadd.f32 %v3007, 1.0
    %v4254 = vadd.f32 %v3009, 1.0
    %v4255 = vadd.f32 %v3011, 1.0
    %v4256 = vadd.f32 %v3013, 1.0
    %v4257 = vadd.f32 %v3015, 1.0
    %v4258 = vadd.f32 %v3017, 1.0
    %v4259 = vadd.f32 %v3019, 1.0
    %v4260 = vadd.f32 %v3021, 1.0
    %v4261 = vadd.f32 %v3023, 1.0
    %v4262 = vadd.f32 %v3025, 1.0
    %v4263 = vadd.f32 %v3027, 1.0
    %v4264 = vadd.f32 %v3029, 1.0
    %v4265 = vadd.f32 %v3031, 1.0
    %v4266 = vadd.f32 %v3033, 1.0
    %v4267 = vadd.f32 %v3035, 1.0
    %v4268 = vadd.f32 %v3037, 1.0
    %v4269 = vadd.f32 %v3039, 1.0
    %v4270 = vadd.f32 %v3041, 1.0
    %v4271 = vadd.f32 %v3043, 1.0
    %v4272 = vadd.f32 %v3045, 1.0
    %v4273 = vadd.f32 %v3047, 1.0
    %v4274 = vadd.f32 %v3049, 1.0
    %v4275 = vadd.f32 %v3051, 1.0
    %v4276 = vadd.f32 %v3053, 1.0
    %v4277 = vadd.f32 %v3055, 1.0
    %v4278 = vadd.f32 %v3057, 1.0
    %v4279 = vadd.f32 %v3059, 1.0
    %v4280 = vadd.f32 %v3061, 1.0
    %v4281 = vadd.f32 %v3063, 1.0
    %v4282 = vadd.f32 %v3065, 1.0
    %v4283 = vadd.f32 %v3067, 1.0
    %v4284 = vadd.f32 %v3069, 1.0
    %v4285 = vadd.f32 %v3071, 1.0
    %v4286 = vadd.f32 %v3073, 1.0
    %v4287 = vadd.f32 %v3075, 1.0
    %v4288 = vadd.f32 %v3077, 1.0
    %v4289 = vadd.f32 %v3079, 1.0
    %v4290 = vadd.f32 %v3081, 1.0
    %v4291 = vadd.f32 %v3083, 1.0
    %v4292 = vadd.f32 %v3085, 1.0
    %v4293 = vadd.f32 %v3087, 1.0
    %v4294 = vadd.f32 %v3089, 1.0
    %v4295 = vadd.f32 %v3091, 1.0
    %v4296 = vadd.f32 %v3093, 1.0
    %v4297 = vadd.f32 %v3095, 1.0
    %v4298 = vadd.f32 %v3097, 1.0
    %v4299 = vadd.f32 %v3099, 1.0
    %v4300 = vadd.f32 %v3101, 1.0
    %v4301 = vadd.f32 %v3103, 1.0
    %v4302 = vadd.f32 %v3105, 1.0
    %v4303 = vadd.f32 %v3107, 1.0
    %v4304 = vadd.f32 %v3109, 1.0
    %v4305 = vadd.f32 %v3111, 1.0
    %v4306 = vadd.f32 %v3113, 1.0
    %v4307 = vadd.f32 %v3115, 1.0
    %v4308 = vadd.f32 %v3117, 1.0
    %v4309 = vadd.f32 %v3119, 1.0
    %v4310 = vadd.f32 %v3121, 1.0
    %v4311 = vadd.f32 %v3123, 1.0
    %v4312 = vadd.f32 %v3125, 1.0
    %v4313 = vadd.f32 %v3127, 1.0
    %v4314 = vadd.f32 %v3129, 1.0
    %v4315 = vadd.f32 %v3131, 1.0
    %v4316 = vadd.f32 %v3133, 1.0
    %v4317 = vadd.f32 %v3135, 1.0
    %v4318 = vadd.f32 %v3137, 1.0
    %v4319 = vadd.f32 %v3139, 1.0
    %v4320 = vadd.f32 %v3141, 1.0
    %v4321 = vadd.f32 %v3143, 1.0
    %v4322 = vadd.f32 %v3145, 1.0
    %v4323 = vadd.f32 %v3147, 1.0
    %v4324 = vadd.f32 %v3149, 1.0
    %v4325 = vadd.f32 %v3151, 1.0
    %v4326 = vadd.f32 %v3153, 1.0
    %v4327 = vadd.f32 %v3155, 1.0
    %v4328 = vadd.f32 %v3157, 1.0
    %v4329 = vadd.f32 %v3159, 1.0
    %v4330 = vadd.f32 %v3161, 1.0
    %v4331 = vadd.f32 %v3163, 1.0
    %v4332 = vadd.f32 %v3165, 1.0
    %v4333 = vadd.f32 %v3167, 1.0
    %v4334 = vadd.f32 %v3169, 1.0
    %v4335 = vadd.f32 %v3171, 1.0
    %v4336 = vadd.f32 %v3173, 1.0
    %v4337 = vadd.f32 %v3175, 1.0
    %v4338 = vadd.f32 %v3177, 1.0
    %v4339 = vadd.f32 %v3179, 1.0
    %v4340 = vadd.f32 %v3181, 1.0
    %v4341 = vadd.f32 %v3183, 1.0
    %v4342 = vadd.f32 %v3185, 1.0
    %v4343 = vadd.f32 %v3187, 1.0
    %v4344 = vadd.f32 %v3189, 1.0
    %v4345 = vadd.f32 %v3191, 1.0
    %v4346 = vadd.f32 %v3193, 1.0
    %v4347 = vadd.f32 %v3195, 1.0
    %v4348 = vadd.f32 %v3197, 1.0
    %v4349 = vadd.f32 %v3199, 1.0
    %v4350 = vadd.f32 %v3201, 1.0
    %v4351 = vadd.f32 %v3203, 1.0
    %v4352 = vadd.f32 %v3205, 1.0
    %v4353 = vadd.f32 %v3207, 1.0
    %v4354 = vadd.f32 %v3209, 1.0
    %v4355 = vadd.f32 %v3211, 1.0
    %v4356 = vadd.f32 %v3213, 1.0
    %v4357 = vadd.f32 %v3215, 1.0
    %v4358 = vadd.f32 %v3217, 1.0
    %v4359 = vadd.f32 %v3219, 1.0
    %v4360 = vadd.f32 %v3221, 1.0
    %v4361 = vadd.f32 %v3223, 1.0
    %v4362 = vadd.f32 %v3225, 1.0
    %v4363 = vadd.f32 %v3227, 1.0
    %v4364 = vadd.f32 %v3229, 1.0
    %v4365 = vadd.f32 %v3231, 1.0
    %v4366 = vadd.f32 %v3233, 1.0
    %v4367 = vadd.f32 %v3235, 1.0
    %v4368 = vadd.f32 %v3237, 1.0
    %v4369 = vadd.f32 %v3239, 1.0
    %v4370 = vadd.f32 %v3241, 1.0
    %v4371 = vadd.f32 %v3243, 1.0
    %v4372 = vadd.f32 %v3245, 1.0
    %v4373 = vadd.f32 %v3247, 1.0
    %v4374 = vadd.f32 %v3249, 1.0
    %v4375 = vadd.f32 %v3251, 1.0
    %v4376 = vadd.f32 %v3253, 1.0
    %v4377 = vadd.f32 %v3255, 1.0
    %v4378 = vadd.f32 %v3257, 1.0
    %v4379 = vadd.f32 %v3259, 1.0
    %v4380 = vadd.f32 %v3261, 1.0
    %v4381 = vadd.f32 %v3263, 1.0
    %v4382 = vadd.f32 %v3265, 1.0
    %v4383 = vadd.f32 %v3267, 1.0
    %v4384 = vadd.f32 %v3269, 1.0
    %v4385 = vadd.f32 %v3271, 1.0
    %v4386 = vadd.f32 %v3273, 1.0
    %v4387 = vadd.f32 %v3275, 1.0
    %v4388 = vadd.f32 %v3277, 1.0
    %v4389 = vadd.f32 %v3279, 1.0
    %v4390 = vadd.f32 %v3281, 1.0
    %v4391 = vadd.f32 %v3283, 1.0
    %v4392 = vadd.f32 %v3285, 1.0
    %v4393 = vadd.f32 %v3287, 1.0
    %v4394 = vadd.f32 %v3289, 1.0
    %v4395 = vadd.f32 %v3291, 1.0
    %v4396 = vadd.f32 %v3293, 1.0
    %v4397 = vadd.f32 %v3295, 1.0
    %v4398 = vadd.f32 %v3297, 1.0
    %v4399 = vadd.f32 %v3299, 1.0
    %v4400 = vadd.f32 %v3301, 1.0
    %v4401 = vadd.f32 %v3303, 1.0
    %v4402 = vadd.f32 %v3305, 1.0
    %v4403 = vadd.f32 %v3307, 1.0
    %v4404 = vadd.f32 %v3309, 1.0
    %v4405 = vadd.f32 %v3311, 1.0
    %v4406 = vadd.f32 %v3313, 1.0
    %v4407 = vadd.f32 %v3315, 1.0
    %v4408 = vadd.f32 %v3317, 1.0
    %v4409 = vadd.f32 %v3319, 1.0
    %v4410 = vadd.f32 %v3321, 1.0
    %v4411 = vadd.f32 %v3323, 1.0
    %v4412 = vadd.f32 %v3325, 1.0
    %v4413 = vadd.f32 %v3327, 1.0
    %v4414 = vadd.f32 %v3329, 1.0
    %v4415 = vadd.f32 %v3331, 1.0
    %v4416 = vadd.f32 %v3333, 1.0
    %v4417 = vadd.f32 %v3335, 1.0
    %v4418 = vadd.f32 %v3337, 1.0
    %v4419 = vadd.f32 %v3339, 1.0
    %v4420 = vadd.f32 %v3341, 1.0
    %v4421 = vadd.f32 %v3343, 1.0
    %v4422 = vadd.f32 %v3345, 1.0
    %v4423 = vadd.f32 %v3347, 1.0
    %v4424 = vadd.f32 %v3349, 1.0
    %v4425 = vadd.f32 %v3351, 1.0
    %v4426 = vadd.f32 %v3353, 1.0
    %v4427 = vadd.f32 %v3355, 1.0
    %v4428 = vadd.f32 %v3357, 1.0
    %v4429 = vadd.f32 %v3359, 1.0
    %v4430 = vadd.f32 %v3361, 1.0
    %v4431 = vadd.f32 %v3363, 1.0
    %v4432 = vadd.f32 %v3365, 1.0
    %v4433 = vadd.f32 %v3367, 1.0
    %v4434 = vadd.f32 %v3369, 1.0
    %v4435 = vadd.f32 %v3371, 1.0
    %v4436 = vadd.f32 %v3373, 1.0
    %v4437 = vadd.f32 %v3375, 1.0
    %v4438 = vadd.f32 %v3377, 1.0
    %v4439 = vadd.f32 %v3379, 1.0
    %v4440 = vadd.f32 %v3381, 1.0
    %v4441 = vadd.f32 %v3383, 1.0
    %v4442 = vadd.f32 %v3385, 1.0
    %v4443 = vadd.f32 %v3387, 1.0
    %v4444 = vadd.f32 %v3389, 1.0
    %v4445 = vadd.f32 %v3391, 1.0
    %v4446 = vadd.f32 %v3393, 1.0
    %v4447 = vadd.f32 %v3395, 1.0
    %v4448 = vadd.f32 %v3397, 1.0
    %v4449 = vadd.f32 %v3399, 1.0
    %v4450 = vadd.f32 %v3401, 1.0
    %v4451 = vadd.f32 %v3403, 1.0
    %v4452 = vadd.f32 %v3405, 1.0
    %v4453 = vadd.f32 %v3407, 1.0
    %v4454 = vadd.f32 %v3409, 1.0
    %v4455 = vadd.f32 %v3411, 1.0
    %v4456 = vadd.f32 %v3413, 1.0
    %v4457 = vadd.f32 %v3415, 1.0
    %v4458 = vadd.f32 %v3417, 1.0
    %v4459 = vadd.f32 %v3419, 1.0
    %v4460 = vadd.f32 %v3421, 1.0
    %v4461 = vadd.f32 %v3423, 1.0
    %v4462 = vadd.f32 %v3425, 1.0
    %v4463 = vadd.f32 %v3427, 1.0
    %v4464 = vadd.f32 %v3429, 1.0
    %v4465 = vadd.f32 %v3431, 1.0
    %v4466 = vadd.f32 %v3433, 1.0
    %v4467 = vadd.f32 %v3435, 1.0
    %v4468 = vadd.f32 %v3437, 1.0
    %v4469 = vadd.f32 %v3439, 1.0
    %v4470 = vadd.f32 %v3441, 1.0
    %v4471 = vadd.f32 %v3443, 1.0
    %v4472 = vadd.f32 %v3445, 1.0
    %v4473 = vadd.f32 %v3447, 1.0
    %v4474 = vadd.f32 %v3449, 1.0
    %v4475 = vadd.f32 %v3451, 1.0
    %v4476 = vadd.f32 %v3453, 1.0
    %v4477 = vadd.f32 %v3455, 1.0
    %v4478 = vadd.f32 %v3457, 1.0
    %v4479 = vadd.f32 %v3459, 1.0
    %v4480 = vadd.f32 %v3461, 1.0
    %v4481 = vadd.f32 %v3463, 1.0
    %v4482 = vadd.f32 %v3465, 1.0
    %v4483 = vadd.f32 %v3467, 1.0
    %v4484 = vadd.f32 %v3469, 1.0
    %v4485 = vadd.f32 %v3471, 1.0
    %v4486 = vadd.f32 %v3473, 1.0
    %v4487 = vadd.f32 %v3475, 1.0
    %v4488 = vadd.f32 %v3477, 1.0
    %v4489 = vadd.f32 %v3479, 1.0
    %v4490 = vadd.f32 %v3481, 1.0
    %v4491 = vadd.f32 %v3483, 1.0
    %v4492 = vadd.f32 %v3485, 1.0
    %v4493 = vadd.f32 %v3487, 1.0
    %v4494 = vadd.f32 %v3489, 1.0
    %v4495 = vadd.f32 %v3491, 1.0
    %v4496 = vadd.f32 %v3493, 1.0
    %v4497 = vadd.f32 %v3495, 1.0
    %v4498 = vadd.f32 %v3497, 1.0
    %v4499 = vadd.f32 %v3499, 1.0
    %v4500 = vadd.f32 %v3501, 1.0
    %v4501 = vadd.f32 %v3503, 1.0
    %v4502 = vadd.f32 %v3505, 1.0
    %v4503 = vadd.f32 %v3507, 1.0
    %v4504 = vadd.f32 %v3509, 1.0
    %v4505 = vadd.f32 %v3511, 1.0
    %v4506 = vadd.f32 %v3513, 1.0
    %v4507 = vadd.f32 %v3515, 1.0
    %v4508 = vadd.f32 %v3517, 1.0
    %v4509 = vadd.f32 %v3519, 1.0
    %v4510 = vadd.f32 %v3521, 1.0
    %v4511 = vadd.f32 %v3523, 1.0
    %v4512 = vadd.f32 %v3525, 1.0
    %v4513 = vadd.f32 %v3527, 1.0
    %v4514 = vadd.f32 %v3529, 1.0
    %v4515 = vadd.f32 %v3531, 1.0
    %v4516 = vadd.f32 %v3533, 1.0
    %v4517 = vadd.f32 %v3535, 1.0
    %v4518 = vadd.f32 %v3537, 1.0
    %v4519 = vadd.f32 %v3539, 1.0
    %v4520 = vadd.f32 %v3541, 1.0
    %v4521 = vadd.f32 %v3543, 1.0
    %v4522 = vadd.f32 %v3545, 1.0
    %v4523 = vadd.f32 %v3547, 1.0
    %v4524 = vadd.f32 %v3549, 1.0
    %v4525 = vadd.f32 %v3551, 1.0
    %v4526 = vadd.f32 %v3553, 1.0
    %v4527 = vadd.f32 %v3555, 1.0
    %v4528 = vadd.f32 %v3557, 1.0
    %v4529 = vadd.f32 %v3559, 1.0
    %v4530 = vadd.f32 %v3561, 1.0
    %v4531 = vadd.f32 %v3563, 1.0
    %v4532 = vadd.f32 %v3565, 1.0
    %v4533 = vadd.f32 %v3567, 1.0
    %v4534 = vadd.f32 %v3569, 1.0
    %v4535 = vadd.f32 %v3571, 1.0
    %v4536 = vadd.f32 %v3573, 1.0
    %v4537 = vadd.f32 %v3575, 1.0
    %v4538 = vadd.f32 %v3577, 1.0
    %v4539 = vadd.f32 %v3579, 1.0
    %v4540 = vadd.f32 %v3581, 1.0
    %v4541 = vadd.f32 %v3583, 1.0
    %v4542 = vadd.f32 %v3585, 1.0
    %v4543 = vadd.f32 %v3587, 1.0
    %v4544 = vadd.f32 %v3589, 1.0
    %v4545 = vadd.f32 %v3591, 1.0
    %v4546 = vadd.f32 %v3593, 1.0
    %v4547 = vadd.f32 %v3595, 1.0
    %v4548 = vadd.f32 %v3597, 1.0
    %v4549 = vadd.f32 %v3599, 1.0
    %v4550 = vadd.f32 %v3601, 1.0
    %v4551 = vadd.f32 %v3603, 1.0
    %v4552 = vadd.f32 %v3605, 1.0
    %v4553 = vadd.f32 %v3607, 1.0
    %v4554 = vadd.f32 %v3609, 1.0
    %v4555 = vadd.f32 %v3611, 1.0
    %v4556 = vadd.f32 %v3613, 1.0
    %v4557 = vadd.f32 %v3615, 1.0
    %v4558 = vadd.f32 %v3617, 1.0
    %v4559 = vadd.f32 %v3619, 1.0
    %v4560 = vadd.f32 %v3621, 1.0
    %v4561 = vadd.f32 %v3623, 1.0
    %v4562 = vadd.f32 %v3625, 1.0
    %v4563 = vadd.f32 %v3627, 1.0
    %v4564 = vadd.f32 %v3629, 1.0
    %v4565 = vadd.f32 %v3631, 1.0
    %v4566 = vadd.f32 %v3633, 1.0
    %v4567 = vadd.f32 %v3635, 1.0
    %v4568 = vadd.f32 %v3637, 1.0
    %v4569 = vadd.f32 %v3639, 1.0
    %v4570 = vadd.f32 %v3641, 1.0
    %v4571 = vadd.f32 %v3643, 1.0
    %v4572 = vadd.f32 %v3645, 1.0
    %v4573 = vadd.f32 %v3647, 1.0
    %v4574 = vadd.f32 %v3649, 1.0
    %v4575 = vadd.f32 %v3651, 1.0
    %v4576 = vadd.f32 %v3653, 1.0
    %v4577 = vadd.f32 %v3655, 1.0
    %v4578 = vadd.f32 %v3657, 1.0
    %v4579 = vadd.f32 %v3659, 1.0
    %v4580 = vadd.f32 %v3661, 1.0
    %v4581 = vadd.f32 %v3663, 1.0
    %v4582 = vadd.f32 %v3665, 1.0
    %v4583 = vadd.f32 %v3667, 1.0
    %v4584 = vadd.f32 %v3669, 1.0
    %v4585 = vadd.f32 %v3671, 1.0
    %v4586 = vadd.f32 %v3673, 1.0
    %v4587 = vadd.f32 %v3675, 1.0
    %v4588 = vadd.f32 %v3677, 1.0
    %v4589 = vadd.f32 %v3679, 1.0
    %v4590 = vadd.f32 %v3681, 1.0
    %v4591 = vadd.f32 %v3683, 1.0
    %v4592 = vadd.f32 %v3685, 1.0
    %v4593 = vadd.f32 %v3687, 1.0
    %v4594 = vadd.f32 %v3689, 1.0
    %v4595 = vadd.f32 %v3691, 1.0
    %v4596 = vadd.f32 %v3693, 1.0
    %v4597 = vadd.f32 %v3695, 1.0
    %v4598 = vadd.f32 %v3697, 1.0
    %v4599 = vadd.f32 %v3699, 1.0
    %v4600 = vadd.f32 %v3701, 1.0
    %v4601 = vadd.f32 %v3703, 1.0
    %v4602 = vadd.f32 %v3705, 1.0
    %v4603 = vadd.f32 %v3707, 1.0
    %v4604 = vadd.f32 %v3709, 1.0
    %v4605 = vadd.f32 %v3711, 1.0
    %v4606 = vadd.f32 %v3713, 1.0
    %v4607 = vadd.f32 %v3715, 1.0
    %v4608 = vadd.f32 %v3717, 1.0
    %v4609 = vadd.f32 %v3719, 1.0
    %v4610 = vadd.f32 %v3721, 1.0
    %v4611 = vadd.f32 %v3723, 1.0
    %v4612 = vadd.f32 %v3725, 1.0
    %v4613 = vadd.f32 %v3727, 1.0
    %v4614 = vadd.f32 %v3729, 1.0
    %v4615 = vadd.f32 %v3731, 1.0
    %v4616 = vadd.f32 %v3733, 1.0
    %v4617 = vadd.f32 %v3735, 1.0
    %v4618 = vadd.f32 %v3737, 1.0
    %v4619 = vadd.f32 %v3739, 1.0
    %v4620 = vadd.f32 %v3741, 1.0
    %v4621 = vadd.f32 %v3743, 1.0
    %v4622 = vadd.f32 %v3745, 1.0
    %v4623 = vadd.f32 %v3747, 1.0
    %v4624 = vadd.f32 %v3749, 1.0
    %v4625 = vadd.f32 %v3751, 1.0
    %v4626 = vadd.f32 %v3753, 1.0
    %v4627 = vadd.f32 %v3755, 1.0
    %v4628 = vadd.f32 %v3757, 1.0
    %v4629 = vadd.f32 %v3759, 1.0
    %v4630 = vadd.f32 %v3761, 1.0
    %v4631 = vadd.f32 %v3763, 1.0
    %v4632 = vadd.f32 %v3765, 1.0
    %v4633 = vadd.f32 %v3767, 1.0
    %v4634 = vadd.f32 %v3769, 1.0
    %v4635 = vadd.f32 %v3771, 1.0
    %v4636 = vadd.f32 %v3773, 1.0
    %v4637 = vadd.f32 %v3775, 1.0
    %v4638 = vadd.f32 %v3777, 1.0
    %v4639 = vadd.f32 %v3779, 1.0
    %v4640 = vadd.f32 %v3781, 1.0
    %v4641 = vadd.f32 %v3783, 1.0
    %v4642 = vadd.f32 %v3785, 1.0
    %v4643 = vadd.f32 %v3787, 1.0
    %v4644 = vadd.f32 %v3789, 1.0
    %v4645 = vadd.f32 %v3791, 1.0
    %v4646 = vadd.f32 %v3793, 1.0
    %v4647 = vadd.f32 %v3795, 1.0
    %v4648 = vadd.f32 %v3797, 1.0
    %v4649 = vadd.f32 %v3799, 1.0
    %v4650 = vadd.f32 %v3801, 1.0
    %v4651 = vadd.f32 %v3803, 1.0
    %v4652 = vadd.f32 %v3805, 1.0
    %v4653 = vadd.f32 %v3807, 1.0
    %v4654 = vadd.f32 %v3809, 1.0
    %v4655 = vadd.f32 %v3811, 1.0
    %v4656 = vadd.f32 %v3813, 1.0
    %v4657 = vadd.f32 %v3815, 1.0
    %v4658 = vadd.f32 %v3817, 1.0
    %v4659 = vadd.f32 %v3819, 1.0
    %v4660 = vadd.f32 %v3821, 1.0
    %v4661 = vadd.f32 %v3823, 1.0
    %v4662 = vadd.f32 %v3825, 1.0
    %v4663 = vadd.f32 %v3827, 1.0
    %v4664 = vadd.f32 %v3829, 1.0
    %v4665 = vadd.f32 %v3831, 1.0
    %v4666 = vadd.f32 %v3833, 1.0
    %v4667 = vadd.f32 %v3835, 1.0
    %v4668 = vadd.f32 %v3837, 1.0
    %v4669 = vadd.f32 %v3839, 1.0
    %v4670 = vadd.f32 %v3841, 1.0
    %v4671 = vadd.f32 %v3843, 1.0
    %v4672 = vadd.f32 %v3845, 1.0
    %v4673 = vadd.f32 %v3847, 1.0
    %v4674 = vadd.f32 %v3849, 1.0
    %v4675 = vadd.f32 %v3851, 1.0
    %v4676 = vadd.f32 %v3853, 1.0
    %v4677 = vadd.f32 %v3855, 1.0
    %v4678 = vadd.f32 %v3857, 1.0
    %v4679 = vadd.f32 %v3859, 1.0
    %v4680 = vadd.f32 %v3861, 1.0
    %v4681 = vadd.f32 %v3863, 1.0
    %v4682 = vadd.f32 %v3865, 1.0
    %v4683 = vadd.f32 %v3867, 1.0
    %v4684 = vadd.f32 %v3869, 1.0
    %v4685 = vadd.f32 %v3871, 1.0
    %v4686 = vadd.f32 %v3873, 1.0
    %v4687 = vadd.f32 %v3875, 1.0
    %v4688 = vadd.f32 %v3877, 1.0
    %v4689 = vadd.f32 %v3879, 1.0
    %v4690 = vadd.f32 %v3881, 1.0
    %v4691 = vadd.f32 %v3883, 1.0
    %v4692 = vadd.f32 %v3885, 1.0
    %v4693 = vadd.f32 %v3887, 1.0
    %v4694 = vadd.f32 %v3889, 1.0
    %v4695 = vadd.f32 %v3891, 1.0
    %v4696 = vadd.f32 %v3893, 1.0
    %v4697 = vadd.f32 %v3895, 1.0
    %v4698 = vadd.f32 %v3897, 1.0
    %v4699 = vadd.f32 %v3899, 1.0
    %v4700 = vadd.f32 %v3901, 1.0
    %v4701 = vadd.f32 %v3903, 1.0
    %v4702 = vadd.f32 %v3905, 1.0
    %v4703 = vadd.f32 %v3907, 1.0
    %v4704 = vadd.f32 %v3909, 1.0
    %v4705 = vadd.f32 %v3911, 1.0
    %v4706 = vadd.f32 %v3913, 1.0
    %v4707 = vadd.f32 %v3915, 1.0
    %v4708 = vadd.f32 %v3917, 1.0
    %v4709 = vadd.f32 %v3919, 1.0
    %v4710 = vadd.f32 %v3921, 1.0
    %v4711 = vadd.f32 %v3923, 1.0
    %v4712 = vadd.f32 %v3925, 1.0
    %v4713 = vadd.f32 %v3927, 1.0
    %v4714 = vadd.f32 %v3929, 1.0
    %v4715 = vadd.f32 %v3931, 1.0
    %v4716 = vadd.f32 %v3933, 1.0
    %v4717 = vadd.f32 %v3935, 1.0
    %v4718 = vadd.f32 %v3937, 1.0
    %v4719 = vadd.f32 %v3939, 1.0
    %v4720 = vadd.f32 %v3941, 1.0
    %v4721 = vadd.f32 %v3943, 1.0
    %v4722 = vadd.f32 %v3945, 1.0
    %v4723 = vadd.f32 %v3947, 1.0
    %v4724 = vadd.f32 %v3949, 1.0
    %v4725 = vadd.f32 %v3951, 1.0
    %v4726 = vadd.f32 %v3953, 1.0
    %v4727 = vadd.f32 %v3955, 1.0
    %v4728 = vadd.f32 %v3957, 1.0
    %v4729 = vadd.f32 %v3959, 1.0
    %v4730 = vadd.f32 %v3961, 1.0
    %v4731 = vadd.f32 %v3963, 1.0
    %v4732 = vadd.f32 %v3965, 1.0
    %v4733 = vadd.f32 %v3967, 1.0
    %v4734 = vadd.f32 %v3969, 1.0
    %v4735 = vadd.f32 %v3971, 1.0
    %v4736 = vadd.f32 %v3973, 1.0
    %v4737 = vadd.f32 %v3975, 1.0
    %v4738 = vadd.f32 %v3977, 1.0
    %v4739 = vadd.f32 %v3979, 1.0
    %v4740 = vadd.f32 %v3981, 1.0
    %v4741 = vadd.f32 %v3983, 1.0
    %v4742 = vadd.f32 %v3985, 1.0
    %v4743 = vadd.f32 %v3987, 1.0
    %v4744 = vadd.f32 %v3989, 1.0
    %v4745 = vadd.f32 %v3991, 1.0
    %v4746 = vadd.f32 %v3993, 1.0
    %v4747 = vadd.f32 %v3995, 1.0
    %v4748 = vadd.f32 %v3997, 1.0
    %v4749 = vadd.f32 %v3999, 1.0
    %v4750 = vadd.f32 %v4001, 1.0
    %v4751 = vadd.f32 %v4003, 1.0
    %v4752 = vadd.f32 %v4005, 1.0
    %v4753 = vadd.f32 %v4007, 1.0
    %v4754 = vadd.f32 %v4009, 1.0
    %v4755 = vadd.f32 %v4011, 1.0
    %v4756 = vadd.f32 %v4013, 1.0
    %v4757 = vadd.f32 %v4015, 1.0
    %v4758 = vadd.f32 %v4017, 1.0
    %v4759 = vadd.f32 %v4019, 1.0
    %v4760 = vadd.f32 %v4021, 1.0
    %v4761 = vadd.f32 %v4023, 1.0
    %v4762 = vadd.f32 %v4025, 1.0
    %v4763 = vadd.f32 %v4027, 1.0
    %v4764 = vadd.f32 %v4029, 1.0
    %v4765 = vadd.f32 %v4031, 1.0
    %v4766 = vadd.f32 %v4033, 1.0
    %v4767 = vadd.f32 %v4035, 1.0
    %v4768 = vadd.f32 %v4037, 1.0
    %v4769 = vadd.f32 %v4039, 1.0
    %v4770 = vadd.f32 %v4041, 1.0
    %v4771 = vadd.f32 %v4043, 1.0
    %v4772 = vadd.f32 %v4045, 1.0
    %v4773 = vadd.f32 %v4047, 1.0
    %v4774 = vadd.f32 %v4049, 1.0
    %v4775 = vadd.f32 %v4051, 1.0
    %v4776 = vadd.f32 %v4053, 1.0
    %v4777 = vadd.f32 %v4055, 1.0
    %v4778 = vadd.f32 %v4057, 1.0
    %v4779 = vadd.f32 %v4059, 1.0
    %v4780 = vadd.f32 %v4061, 1.0
    %v4781 = vadd.f32 %v4063, 1.0
    %v4782 = vadd.f32 %v4065, 1.0
    %v4783 = vadd.f32 %v4067, 1.0
    %v4784 = vadd.f32 %v4069, 1.0
    %v4785 = vadd.f32 %v4071, 1.0
    %v4786 = vadd.f32 %v4073, 1.0
    %v4787 = vadd.f32 %v4075, 1.0
    %v4788 = vadd.f32 %v4077, 1.0
    %v4789 = vadd.f32 %v4079, 1.0
    %v4790 = vadd.f32 %v4081, 1.0
    %v4791 = vadd.f32 %v4083, 1.0
    %v4792 = vadd.f32 %v4085, 1.0
    %v4793 = vadd.f32 %v4087, 1.0
    %v4794 = vadd.f32 %v4089, 1.0
    %v4795 = vadd.f32 %v4091, 1.0
    %v4796 = vadd.f32 %v4093, 1.0
    %v4797 = vadd.f32 %v4095, 1.0
    %v4798 = vadd.f32 %v4097, 1.0
    %v4799 = vadd.f32 %v4099, 1.0
    %v4800 = vadd.f32 %v4101, 1.0
    %v4801 = vadd.f32 %v4103, 1.0
    %v4802 = vadd.f32 %v4105, 1.0
    %v4803 = vadd.f32 %v4107, 1.0
    %v4804 = vadd.f32 %v4109, 1.0
    %v4805 = vadd.f32 %v4111, 1.0
    %v4806 = vadd.f32 %v4113, 1.0
    %v4807 = vadd.f32 %v4115, 1.0
    %v4808 = vadd.f32 %v4117, 1.0
    %v4809 = vadd.f32 %v4119, 1.0
    %v4810 = vadd.f32 %v4121, 1.0
    %v4811 = vadd.f32 %v4123, 1.0
    %v4812 = vadd.f32 %v4125, 1.0
    %v4813 = vadd.f32 %v4127, 1.0
    %v4814 = vadd.f32 %v4129, 1.0
    %v4815 = vadd.f32 %v4131, 1.0
    %v4816 = vadd.f32 %v4133, 1.0
    %v4817 = vadd.f32 %v4135, 1.0
    %v4818 = vadd.f32 %v4137, 1.0
    %v4819 = vadd.f32 %v4139, 1.0
    %v4820 = vadd.f32 %v4141, 1.0
    %v4821 = vadd.f32 %v4143, 1.0
    %v4822 = vadd.f32 %v4145, 1.0
    %v4823 = vadd.f32 %v4147, 1.0
    %v4824 = vadd.f32 %v4149, 1.0
    %v4825 = vadd.f32 %v4151, 1.0
    %v4826 = vadd.f32 %v4153, 1.0
    %v4827 = vadd.f32 %v4155, 1.0
    %v4828 = vadd.f32 %v4157, 1.0
    %v4829 = vadd.f32 %v4159, 1.0
    %v4830 = vadd.f32 %v4161, 1.0
    %v4831 = vadd.f32 %v4163, 1.0
    %v4832 = vadd.f32 %v4165, 1.0
    %v4833 = vadd.f32 %v4167, 1.0
    %v4834 = vadd.f32 %v4169, 1.0
    %v4835 = vadd.f32 %v4171, 1.0
    %v4836 = vadd.f32 %v4173, 1.0
    %v4837 = vadd.f32 %v4175, 1.0
    %v4838 = vadd.f32 %v4177, 1.0
    %v4839 = vadd.f32 %v4179, 1.0
    %v4840 = vadd.f32 %v4181, 1.0
    %v4841 = vadd.f32 %v4183, 1.0
    %v4842 = vadd.f32 %v4185, 1.0
    %v4843 = vadd.f32 %v4187, 1.0
    %v4844 = vadd.f32 %v4189, 1.0
    %v4845 = vadd.f32 %v4191, 1.0
    %v4846 = vadd.f32 %v4193, 1.0
    %v4847 = vadd.f32 %v4195, 1.0
    %v4848 = vadd.f32 %v4197, 1.0
    %v4849 = vadd.f32 %v4199, 1.0
    %v4850 = vadd.f32 %v4201, 1.0
    %v4851 = vadd.f32 %v4203, 1.0
    %v4852 = vadd.f32 %v4205, 1.0
    %v4853 = vadd.f32 %v4207, 1.0
    %v4854 = vadd.f32 %v4209, 1.0
    %v4855 = vadd.f32 %v4211, 1.0
    %v4856 = vadd.f32 %v4213, 1.0
    %v4857 = vadd.f32 %v4215, 1.0
    %v4858 = vadd.f32 %v4217, 1.0
    %v4859 = vadd.f32 %v4219, 1.0
    %v4860 = vrcp.pop %v4220
    %v4861 = vmul.f32 1.0, %v4860
    %v4862 = vrcp.pop %v4221
    %v4863 = vmul.f32 1.0, %v4862
    %v4864 = vrcp.pop %v4222
    %v4865 = vmul.f32 1.0, %v4864
    %v4866 = vrcp.pop %v4223
    %v4867 = vmul.f32 1.0, %v4866
    %v4868 = vrcp.pop %v4224
    %v4869 = vmul.f32 1.0, %v4868
    %v4870 = vrcp.pop %v4225
    %v4871 = vmul.f32 1.0, %v4870
    %v4872 = vrcp.pop %v4226
    %v4873 = vmul.f32 1.0, %v4872
    %v4874 = vrcp.pop %v4227
    %v4875 = vmul.f32 1.0, %v4874
    %v4876 = vrcp.pop %v4228
    %v4877 = vmul.f32 1.0, %v4876
    %v4878 = vrcp.pop %v4229
    %v4879 = vmul.f32 1.0, %v4878
    %v4880 = vrcp.pop %v4230
    %v4881 = vmul.f32 1.0, %v4880
    %v4882 = vrcp.pop %v4231
    %v4883 = vmul.f32 1.0, %v4882
    %v4884 = vrcp.pop %v4232
    %v4885 = vmul.f32 1.0, %v4884
    %v4886 = vrcp.pop %v4233
    %v4887 = vmul.f32 1.0, %v4886
    %v4888 = vrcp.pop %v4234
    %v4889 = vmul.f32 1.0, %v4888
    %v4890 = vrcp.pop %v4235
    %v4891 = vmul.f32 1.0, %v4890
    %v4892 = vrcp.pop %v4236
    %v4893 = vmul.f32 1.0, %v4892
    %v4894 = vrcp.pop %v4237
    %v4895 = vmul.f32 1.0, %v4894
    %v4896 = vrcp.pop %v4238
    %v4897 = vmul.f32 1.0, %v4896
    %v4898 = vrcp.pop %v4239
    %v4899 = vmul.f32 1.0, %v4898
    %v4900 = vrcp.pop %v4240
    %v4901 = vmul.f32 1.0, %v4900
    %v4902 = vrcp.pop %v4241
    %v4903 = vmul.f32 1.0, %v4902
    %v4904 = vrcp.pop %v4242
    %v4905 = vmul.f32 1.0, %v4904
    %v4906 = vrcp.pop %v4243
    %v4907 = vmul.f32 1.0, %v4906
    %v4908 = vrcp.pop %v4244
    %v4909 = vmul.f32 1.0, %v4908
    %v4910 = vrcp.pop %v4245
    %v4911 = vmul.f32 1.0, %v4910
    %v4912 = vrcp.pop %v4246
    %v4913 = vmul.f32 1.0, %v4912
    %v4914 = vrcp.pop %v4247
    %v4915 = vmul.f32 1.0, %v4914
    %v4916 = vrcp.pop %v4248
    %v4917 = vmul.f32 1.0, %v4916
    %v4918 = vrcp.pop %v4249
    %v4919 = vmul.f32 1.0, %v4918
    %v4920 = vrcp.pop %v4250
    %v4921 = vmul.f32 1.0, %v4920
    %v4922 = vrcp.pop %v4251
    %v4923 = vmul.f32 1.0, %v4922
    %v4924 = vrcp.pop %v4252
    %v4925 = vmul.f32 1.0, %v4924
    %v4926 = vrcp.pop %v4253
    %v4927 = vmul.f32 1.0, %v4926
    %v4928 = vrcp.pop %v4254
    %v4929 = vmul.f32 1.0, %v4928
    %v4930 = vrcp.pop %v4255
    %v4931 = vmul.f32 1.0, %v4930
    %v4932 = vrcp.pop %v4256
    %v4933 = vmul.f32 1.0, %v4932
    %v4934 = vrcp.pop %v4257
    %v4935 = vmul.f32 1.0, %v4934
    %v4936 = vrcp.pop %v4258
    %v4937 = vmul.f32 1.0, %v4936
    %v4938 = vrcp.pop %v4259
    %v4939 = vmul.f32 1.0, %v4938
    %v4940 = vrcp.pop %v4260
    %v4941 = vmul.f32 1.0, %v4940
    %v4942 = vrcp.pop %v4261
    %v4943 = vmul.f32 1.0, %v4942
    %v4944 = vrcp.pop %v4262
    %v4945 = vmul.f32 1.0, %v4944
    %v4946 = vrcp.pop %v4263
    %v4947 = vmul.f32 1.0, %v4946
    %v4948 = vrcp.pop %v4264
    %v4949 = vmul.f32 1.0, %v4948
    %v4950 = vrcp.pop %v4265
    %v4951 = vmul.f32 1.0, %v4950
    %v4952 = vrcp.pop %v4266
    %v4953 = vmul.f32 1.0, %v4952
    %v4954 = vrcp.pop %v4267
    %v4955 = vmul.f32 1.0, %v4954
    %v4956 = vrcp.pop %v4268
    %v4957 = vmul.f32 1.0, %v4956
    %v4958 = vrcp.pop %v4269
    %v4959 = vmul.f32 1.0, %v4958
    %v4960 = vrcp.pop %v4270
    %v4961 = vmul.f32 1.0, %v4960
    %v4962 = vrcp.pop %v4271
    %v4963 = vmul.f32 1.0, %v4962
    %v4964 = vrcp.pop %v4272
    %v4965 = vmul.f32 1.0, %v4964
    %v4966 = vrcp.pop %v4273
    %v4967 = vmul.f32 1.0, %v4966
    %v4968 = vrcp.pop %v4274
    %v4969 = vmul.f32 1.0, %v4968
    %v4970 = vrcp.pop %v4275
    %v4971 = vmul.f32 1.0, %v4970
    %v4972 = vrcp.pop %v4276
    %v4973 = vmul.f32 1.0, %v4972
    %v4974 = vrcp.pop %v4277
    %v4975 = vmul.f32 1.0, %v4974
    %v4976 = vrcp.pop %v4278
    %v4977 = vmul.f32 1.0, %v4976
    %v4978 = vrcp.pop %v4279
    %v4979 = vmul.f32 1.0, %v4978
    %v4980 = vrcp.pop %v4280
    %v4981 = vmul.f32 1.0, %v4980
    %v4982 = vrcp.pop %v4281
    %v4983 = vmul.f32 1.0, %v4982
    %v4984 = vrcp.pop %v4282
    %v4985 = vmul.f32 1.0, %v4984
    %v4986 = vrcp.pop %v4283
    %v4987 = vmul.f32 1.0, %v4986
    %v4988 = vrcp.pop %v4284
    %v4989 = vmul.f32 1.0, %v4988
    %v4990 = vrcp.pop %v4285
    %v4991 = vmul.f32 1.0, %v4990
    %v4992 = vrcp.pop %v4286
    %v4993 = vmul.f32 1.0, %v4992
    %v4994 = vrcp.pop %v4287
    %v4995 = vmul.f32 1.0, %v4994
    %v4996 = vrcp.pop %v4288
    %v4997 = vmul.f32 1.0, %v4996
    %v4998 = vrcp.pop %v4289
    %v4999 = vmul.f32 1.0, %v4998
    %v5000 = vrcp.pop %v4290
    %v5001 = vmul.f32 1.0, %v5000
    %v5002 = vrcp.pop %v4291
    %v5003 = vmul.f32 1.0, %v5002
    %v5004 = vrcp.pop %v4292
    %v5005 = vmul.f32 1.0, %v5004
    %v5006 = vrcp.pop %v4293
    %v5007 = vmul.f32 1.0, %v5006
    %v5008 = vrcp.pop %v4294
    %v5009 = vmul.f32 1.0, %v5008
    %v5010 = vrcp.pop %v4295
    %v5011 = vmul.f32 1.0, %v5010
    %v5012 = vrcp.pop %v4296
    %v5013 = vmul.f32 1.0, %v5012
    %v5014 = vrcp.pop %v4297
    %v5015 = vmul.f32 1.0, %v5014
    %v5016 = vrcp.pop %v4298
    %v5017 = vmul.f32 1.0, %v5016
    %v5018 = vrcp.pop %v4299
    %v5019 = vmul.f32 1.0, %v5018
    %v5020 = vrcp.pop %v4300
    %v5021 = vmul.f32 1.0, %v5020
    %v5022 = vrcp.pop %v4301
    %v5023 = vmul.f32 1.0, %v5022
    %v5024 = vrcp.pop %v4302
    %v5025 = vmul.f32 1.0, %v5024
    %v5026 = vrcp.pop %v4303
    %v5027 = vmul.f32 1.0, %v5026
    %v5028 = vrcp.pop %v4304
    %v5029 = vmul.f32 1.0, %v5028
    %v5030 = vrcp.pop %v4305
    %v5031 = vmul.f32 1.0, %v5030
    %v5032 = vrcp.pop %v4306
    %v5033 = vmul.f32 1.0, %v5032
    %v5034 = vrcp.pop %v4307
    %v5035 = vmul.f32 1.0, %v5034
    %v5036 = vrcp.pop %v4308
    %v5037 = vmul.f32 1.0, %v5036
    %v5038 = vrcp.pop %v4309
    %v5039 = vmul.f32 1.0, %v5038
    %v5040 = vrcp.pop %v4310
    %v5041 = vmul.f32 1.0, %v5040
    %v5042 = vrcp.pop %v4311
    %v5043 = vmul.f32 1.0, %v5042
    %v5044 = vrcp.pop %v4312
    %v5045 = vmul.f32 1.0, %v5044
    %v5046 = vrcp.pop %v4313
    %v5047 = vmul.f32 1.0, %v5046
    %v5048 = vrcp.pop %v4314
    %v5049 = vmul.f32 1.0, %v5048
    %v5050 = vrcp.pop %v4315
    %v5051 = vmul.f32 1.0, %v5050
    %v5052 = vrcp.pop %v4316
    %v5053 = vmul.f32 1.0, %v5052
    %v5054 = vrcp.pop %v4317
    %v5055 = vmul.f32 1.0, %v5054
    %v5056 = vrcp.pop %v4318
    %v5057 = vmul.f32 1.0, %v5056
    %v5058 = vrcp.pop %v4319
    %v5059 = vmul.f32 1.0, %v5058
    %v5060 = vrcp.pop %v4320
    %v5061 = vmul.f32 1.0, %v5060
    %v5062 = vrcp.pop %v4321
    %v5063 = vmul.f32 1.0, %v5062
    %v5064 = vrcp.pop %v4322
    %v5065 = vmul.f32 1.0, %v5064
    %v5066 = vrcp.pop %v4323
    %v5067 = vmul.f32 1.0, %v5066
    %v5068 = vrcp.pop %v4324
    %v5069 = vmul.f32 1.0, %v5068
    %v5070 = vrcp.pop %v4325
    %v5071 = vmul.f32 1.0, %v5070
    %v5072 = vrcp.pop %v4326
    %v5073 = vmul.f32 1.0, %v5072
    %v5074 = vrcp.pop %v4327
    %v5075 = vmul.f32 1.0, %v5074
    %v5076 = vrcp.pop %v4328
    %v5077 = vmul.f32 1.0, %v5076
    %v5078 = vrcp.pop %v4329
    %v5079 = vmul.f32 1.0, %v5078
    %v5080 = vrcp.pop %v4330
    %v5081 = vmul.f32 1.0, %v5080
    %v5082 = vrcp.pop %v4331
    %v5083 = vmul.f32 1.0, %v5082
    %v5084 = vrcp.pop %v4332
    %v5085 = vmul.f32 1.0, %v5084
    %v5086 = vrcp.pop %v4333
    %v5087 = vmul.f32 1.0, %v5086
    %v5088 = vrcp.pop %v4334
    %v5089 = vmul.f32 1.0, %v5088
    %v5090 = vrcp.pop %v4335
    %v5091 = vmul.f32 1.0, %v5090
    %v5092 = vrcp.pop %v4336
    %v5093 = vmul.f32 1.0, %v5092
    %v5094 = vrcp.pop %v4337
    %v5095 = vmul.f32 1.0, %v5094
    %v5096 = vrcp.pop %v4338
    %v5097 = vmul.f32 1.0, %v5096
    %v5098 = vrcp.pop %v4339
    %v5099 = vmul.f32 1.0, %v5098
    %v5100 = vrcp.pop %v4340
    %v5101 = vmul.f32 1.0, %v5100
    %v5102 = vrcp.pop %v4341
    %v5103 = vmul.f32 1.0, %v5102
    %v5104 = vrcp.pop %v4342
    %v5105 = vmul.f32 1.0, %v5104
    %v5106 = vrcp.pop %v4343
    %v5107 = vmul.f32 1.0, %v5106
    %v5108 = vrcp.pop %v4344
    %v5109 = vmul.f32 1.0, %v5108
    %v5110 = vrcp.pop %v4345
    %v5111 = vmul.f32 1.0, %v5110
    %v5112 = vrcp.pop %v4346
    %v5113 = vmul.f32 1.0, %v5112
    %v5114 = vrcp.pop %v4347
    %v5115 = vmul.f32 1.0, %v5114
    %v5116 = vrcp.pop %v4348
    %v5117 = vmul.f32 1.0, %v5116
    %v5118 = vrcp.pop %v4349
    %v5119 = vmul.f32 1.0, %v5118
    %v5120 = vrcp.pop %v4350
    %v5121 = vmul.f32 1.0, %v5120
    %v5122 = vrcp.pop %v4351
    %v5123 = vmul.f32 1.0, %v5122
    %v5124 = vrcp.pop %v4352
    %v5125 = vmul.f32 1.0, %v5124
    %v5126 = vrcp.pop %v4353
    %v5127 = vmul.f32 1.0, %v5126
    %v5128 = vrcp.pop %v4354
    %v5129 = vmul.f32 1.0, %v5128
    %v5130 = vrcp.pop %v4355
    %v5131 = vmul.f32 1.0, %v5130
    %v5132 = vrcp.pop %v4356
    %v5133 = vmul.f32 1.0, %v5132
    %v5134 = vrcp.pop %v4357
    %v5135 = vmul.f32 1.0, %v5134
    %v5136 = vrcp.pop %v4358
    %v5137 = vmul.f32 1.0, %v5136
    %v5138 = vrcp.pop %v4359
    %v5139 = vmul.f32 1.0, %v5138
    %v5140 = vrcp.pop %v4360
    %v5141 = vmul.f32 1.0, %v5140
    %v5142 = vrcp.pop %v4361
    %v5143 = vmul.f32 1.0, %v5142
    %v5144 = vrcp.pop %v4362
    %v5145 = vmul.f32 1.0, %v5144
    %v5146 = vrcp.pop %v4363
    %v5147 = vmul.f32 1.0, %v5146
    %v5148 = vrcp.pop %v4364
    %v5149 = vmul.f32 1.0, %v5148
    %v5150 = vrcp.pop %v4365
    %v5151 = vmul.f32 1.0, %v5150
    %v5152 = vrcp.pop %v4366
    %v5153 = vmul.f32 1.0, %v5152
    %v5154 = vrcp.pop %v4367
    %v5155 = vmul.f32 1.0, %v5154
    %v5156 = vrcp.pop %v4368
    %v5157 = vmul.f32 1.0, %v5156
    %v5158 = vrcp.pop %v4369
    %v5159 = vmul.f32 1.0, %v5158
    %v5160 = vrcp.pop %v4370
    %v5161 = vmul.f32 1.0, %v5160
    %v5162 = vrcp.pop %v4371
    %v5163 = vmul.f32 1.0, %v5162
    %v5164 = vrcp.pop %v4372
    %v5165 = vmul.f32 1.0, %v5164
    %v5166 = vrcp.pop %v4373
    %v5167 = vmul.f32 1.0, %v5166
    %v5168 = vrcp.pop %v4374
    %v5169 = vmul.f32 1.0, %v5168
    %v5170 = vrcp.pop %v4375
    %v5171 = vmul.f32 1.0, %v5170
    %v5172 = vrcp.pop %v4376
    %v5173 = vmul.f32 1.0, %v5172
    %v5174 = vrcp.pop %v4377
    %v5175 = vmul.f32 1.0, %v5174
    %v5176 = vrcp.pop %v4378
    %v5177 = vmul.f32 1.0, %v5176
    %v5178 = vrcp.pop %v4379
    %v5179 = vmul.f32 1.0, %v5178
    %v5180 = vrcp.pop %v4380
    %v5181 = vmul.f32 1.0, %v5180
    %v5182 = vrcp.pop %v4381
    %v5183 = vmul.f32 1.0, %v5182
    %v5184 = vrcp.pop %v4382
    %v5185 = vmul.f32 1.0, %v5184
    %v5186 = vrcp.pop %v4383
    %v5187 = vmul.f32 1.0, %v5186
    %v5188 = vrcp.pop %v4384
    %v5189 = vmul.f32 1.0, %v5188
    %v5190 = vrcp.pop %v4385
    %v5191 = vmul.f32 1.0, %v5190
    %v5192 = vrcp.pop %v4386
    %v5193 = vmul.f32 1.0, %v5192
    %v5194 = vrcp.pop %v4387
    %v5195 = vmul.f32 1.0, %v5194
    %v5196 = vrcp.pop %v4388
    %v5197 = vmul.f32 1.0, %v5196
    %v5198 = vrcp.pop %v4389
    %v5199 = vmul.f32 1.0, %v5198
    %v5200 = vrcp.pop %v4390
    %v5201 = vmul.f32 1.0, %v5200
    %v5202 = vrcp.pop %v4391
    %v5203 = vmul.f32 1.0, %v5202
    %v5204 = vrcp.pop %v4392
    %v5205 = vmul.f32 1.0, %v5204
    %v5206 = vrcp.pop %v4393
    %v5207 = vmul.f32 1.0, %v5206
    %v5208 = vrcp.pop %v4394
    %v5209 = vmul.f32 1.0, %v5208
    %v5210 = vrcp.pop %v4395
    %v5211 = vmul.f32 1.0, %v5210
    %v5212 = vrcp.pop %v4396
    %v5213 = vmul.f32 1.0, %v5212
    %v5214 = vrcp.pop %v4397
    %v5215 = vmul.f32 1.0, %v5214
    %v5216 = vrcp.pop %v4398
    %v5217 = vmul.f32 1.0, %v5216
    %v5218 = vrcp.pop %v4399
    %v5219 = vmul.f32 1.0, %v5218
    %v5220 = vrcp.pop %v4400
    %v5221 = vmul.f32 1.0, %v5220
    %v5222 = vrcp.pop %v4401
    %v5223 = vmul.f32 1.0, %v5222
    %v5224 = vrcp.pop %v4402
    %v5225 = vmul.f32 1.0, %v5224
    %v5226 = vrcp.pop %v4403
    %v5227 = vmul.f32 1.0, %v5226
    %v5228 = vrcp.pop %v4404
    %v5229 = vmul.f32 1.0, %v5228
    %v5230 = vrcp.pop %v4405
    %v5231 = vmul.f32 1.0, %v5230
    %v5232 = vrcp.pop %v4406
    %v5233 = vmul.f32 1.0, %v5232
    %v5234 = vrcp.pop %v4407
    %v5235 = vmul.f32 1.0, %v5234
    %v5236 = vrcp.pop %v4408
    %v5237 = vmul.f32 1.0, %v5236
    %v5238 = vrcp.pop %v4409
    %v5239 = vmul.f32 1.0, %v5238
    %v5240 = vrcp.pop %v4410
    %v5241 = vmul.f32 1.0, %v5240
    %v5242 = vrcp.pop %v4411
    %v5243 = vmul.f32 1.0, %v5242
    %v5244 = vrcp.pop %v4412
    %v5245 = vmul.f32 1.0, %v5244
    %v5246 = vrcp.pop %v4413
    %v5247 = vmul.f32 1.0, %v5246
    %v5248 = vrcp.pop %v4414
    %v5249 = vmul.f32 1.0, %v5248
    %v5250 = vrcp.pop %v4415
    %v5251 = vmul.f32 1.0, %v5250
    %v5252 = vrcp.pop %v4416
    %v5253 = vmul.f32 1.0, %v5252
    %v5254 = vrcp.pop %v4417
    %v5255 = vmul.f32 1.0, %v5254
    %v5256 = vrcp.pop %v4418
    %v5257 = vmul.f32 1.0, %v5256
    %v5258 = vrcp.pop %v4419
    %v5259 = vmul.f32 1.0, %v5258
    %v5260 = vrcp.pop %v4420
    %v5261 = vmul.f32 1.0, %v5260
    %v5262 = vrcp.pop %v4421
    %v5263 = vmul.f32 1.0, %v5262
    %v5264 = vrcp.pop %v4422
    %v5265 = vmul.f32 1.0, %v5264
    %v5266 = vrcp.pop %v4423
    %v5267 = vmul.f32 1.0, %v5266
    %v5268 = vrcp.pop %v4424
    %v5269 = vmul.f32 1.0, %v5268
    %v5270 = vrcp.pop %v4425
    %v5271 = vmul.f32 1.0, %v5270
    %v5272 = vrcp.pop %v4426
    %v5273 = vmul.f32 1.0, %v5272
    %v5274 = vrcp.pop %v4427
    %v5275 = vmul.f32 1.0, %v5274
    %v5276 = vrcp.pop %v4428
    %v5277 = vmul.f32 1.0, %v5276
    %v5278 = vrcp.pop %v4429
    %v5279 = vmul.f32 1.0, %v5278
    %v5280 = vrcp.pop %v4430
    %v5281 = vmul.f32 1.0, %v5280
    %v5282 = vrcp.pop %v4431
    %v5283 = vmul.f32 1.0, %v5282
    %v5284 = vrcp.pop %v4432
    %v5285 = vmul.f32 1.0, %v5284
    %v5286 = vrcp.pop %v4433
    %v5287 = vmul.f32 1.0, %v5286
    %v5288 = vrcp.pop %v4434
    %v5289 = vmul.f32 1.0, %v5288
    %v5290 = vrcp.pop %v4435
    %v5291 = vmul.f32 1.0, %v5290
    %v5292 = vrcp.pop %v4436
    %v5293 = vmul.f32 1.0, %v5292
    %v5294 = vrcp.pop %v4437
    %v5295 = vmul.f32 1.0, %v5294
    %v5296 = vrcp.pop %v4438
    %v5297 = vmul.f32 1.0, %v5296
    %v5298 = vrcp.pop %v4439
    %v5299 = vmul.f32 1.0, %v5298
    %v5300 = vrcp.pop %v4440
    %v5301 = vmul.f32 1.0, %v5300
    %v5302 = vrcp.pop %v4441
    %v5303 = vmul.f32 1.0, %v5302
    %v5304 = vrcp.pop %v4442
    %v5305 = vmul.f32 1.0, %v5304
    %v5306 = vrcp.pop %v4443
    %v5307 = vmul.f32 1.0, %v5306
    %v5308 = vrcp.pop %v4444
    %v5309 = vmul.f32 1.0, %v5308
    %v5310 = vrcp.pop %v4445
    %v5311 = vmul.f32 1.0, %v5310
    %v5312 = vrcp.pop %v4446
    %v5313 = vmul.f32 1.0, %v5312
    %v5314 = vrcp.pop %v4447
    %v5315 = vmul.f32 1.0, %v5314
    %v5316 = vrcp.pop %v4448
    %v5317 = vmul.f32 1.0, %v5316
    %v5318 = vrcp.pop %v4449
    %v5319 = vmul.f32 1.0, %v5318
    %v5320 = vrcp.pop %v4450
    %v5321 = vmul.f32 1.0, %v5320
    %v5322 = vrcp.pop %v4451
    %v5323 = vmul.f32 1.0, %v5322
    %v5324 = vrcp.pop %v4452
    %v5325 = vmul.f32 1.0, %v5324
    %v5326 = vrcp.pop %v4453
    %v5327 = vmul.f32 1.0, %v5326
    %v5328 = vrcp.pop %v4454
    %v5329 = vmul.f32 1.0, %v5328
    %v5330 = vrcp.pop %v4455
    %v5331 = vmul.f32 1.0, %v5330
    %v5332 = vrcp.pop %v4456
    %v5333 = vmul.f32 1.0, %v5332
    %v5334 = vrcp.pop %v4457
    %v5335 = vmul.f32 1.0, %v5334
    %v5336 = vrcp.pop %v4458
    %v5337 = vmul.f32 1.0, %v5336
    %v5338 = vrcp.pop %v4459
    %v5339 = vmul.f32 1.0, %v5338
    %v5340 = vrcp.pop %v4460
    %v5341 = vmul.f32 1.0, %v5340
    %v5342 = vrcp.pop %v4461
    %v5343 = vmul.f32 1.0, %v5342
    %v5344 = vrcp.pop %v4462
    %v5345 = vmul.f32 1.0, %v5344
    %v5346 = vrcp.pop %v4463
    %v5347 = vmul.f32 1.0, %v5346
    %v5348 = vrcp.pop %v4464
    %v5349 = vmul.f32 1.0, %v5348
    %v5350 = vrcp.pop %v4465
    %v5351 = vmul.f32 1.0, %v5350
    %v5352 = vrcp.pop %v4466
    %v5353 = vmul.f32 1.0, %v5352
    %v5354 = vrcp.pop %v4467
    %v5355 = vmul.f32 1.0, %v5354
    %v5356 = vrcp.pop %v4468
    %v5357 = vmul.f32 1.0, %v5356
    %v5358 = vrcp.pop %v4469
    %v5359 = vmul.f32 1.0, %v5358
    %v5360 = vrcp.pop %v4470
    %v5361 = vmul.f32 1.0, %v5360
    %v5362 = vrcp.pop %v4471
    %v5363 = vmul.f32 1.0, %v5362
    %v5364 = vrcp.pop %v4472
    %v5365 = vmul.f32 1.0, %v5364
    %v5366 = vrcp.pop %v4473
    %v5367 = vmul.f32 1.0, %v5366
    %v5368 = vrcp.pop %v4474
    %v5369 = vmul.f32 1.0, %v5368
    %v5370 = vrcp.pop %v4475
    %v5371 = vmul.f32 1.0, %v5370
    %v5372 = vrcp.pop %v4476
    %v5373 = vmul.f32 1.0, %v5372
    %v5374 = vrcp.pop %v4477
    %v5375 = vmul.f32 1.0, %v5374
    %v5376 = vrcp.pop %v4478
    %v5377 = vmul.f32 1.0, %v5376
    %v5378 = vrcp.pop %v4479
    %v5379 = vmul.f32 1.0, %v5378
    %v5380 = vrcp.pop %v4480
    %v5381 = vmul.f32 1.0, %v5380
    %v5382 = vrcp.pop %v4481
    %v5383 = vmul.f32 1.0, %v5382
    %v5384 = vrcp.pop %v4482
    %v5385 = vmul.f32 1.0, %v5384
    %v5386 = vrcp.pop %v4483
    %v5387 = vmul.f32 1.0, %v5386
    %v5388 = vrcp.pop %v4484
    %v5389 = vmul.f32 1.0, %v5388
    %v5390 = vrcp.pop %v4485
    %v5391 = vmul.f32 1.0, %v5390
    %v5392 = vrcp.pop %v4486
    %v5393 = vmul.f32 1.0, %v5392
    %v5394 = vrcp.pop %v4487
    %v5395 = vmul.f32 1.0, %v5394
    %v5396 = vrcp.pop %v4488
    %v5397 = vmul.f32 1.0, %v5396
    %v5398 = vrcp.pop %v4489
    %v5399 = vmul.f32 1.0, %v5398
    %v5400 = vrcp.pop %v4490
    %v5401 = vmul.f32 1.0, %v5400
    %v5402 = vrcp.pop %v4491
    %v5403 = vmul.f32 1.0, %v5402
    %v5404 = vrcp.pop %v4492
    %v5405 = vmul.f32 1.0, %v5404
    %v5406 = vrcp.pop %v4493
    %v5407 = vmul.f32 1.0, %v5406
    %v5408 = vrcp.pop %v4494
    %v5409 = vmul.f32 1.0, %v5408
    %v5410 = vrcp.pop %v4495
    %v5411 = vmul.f32 1.0, %v5410
    %v5412 = vrcp.pop %v4496
    %v5413 = vmul.f32 1.0, %v5412
    %v5414 = vrcp.pop %v4497
    %v5415 = vmul.f32 1.0, %v5414
    %v5416 = vrcp.pop %v4498
    %v5417 = vmul.f32 1.0, %v5416
    %v5418 = vrcp.pop %v4499
    %v5419 = vmul.f32 1.0, %v5418
    %v5420 = vrcp.pop %v4500
    %v5421 = vmul.f32 1.0, %v5420
    %v5422 = vrcp.pop %v4501
    %v5423 = vmul.f32 1.0, %v5422
    %v5424 = vrcp.pop %v4502
    %v5425 = vmul.f32 1.0, %v5424
    %v5426 = vrcp.pop %v4503
    %v5427 = vmul.f32 1.0, %v5426
    %v5428 = vrcp.pop %v4504
    %v5429 = vmul.f32 1.0, %v5428
    %v5430 = vrcp.pop %v4505
    %v5431 = vmul.f32 1.0, %v5430
    %v5432 = vrcp.pop %v4506
    %v5433 = vmul.f32 1.0, %v5432
    %v5434 = vrcp.pop %v4507
    %v5435 = vmul.f32 1.0, %v5434
    %v5436 = vrcp.pop %v4508
    %v5437 = vmul.f32 1.0, %v5436
    %v5438 = vrcp.pop %v4509
    %v5439 = vmul.f32 1.0, %v5438
    %v5440 = vrcp.pop %v4510
    %v5441 = vmul.f32 1.0, %v5440
    %v5442 = vrcp.pop %v4511
    %v5443 = vmul.f32 1.0, %v5442
    %v5444 = vrcp.pop %v4512
    %v5445 = vmul.f32 1.0, %v5444
    %v5446 = vrcp.pop %v4513
    %v5447 = vmul.f32 1.0, %v5446
    %v5448 = vrcp.pop %v4514
    %v5449 = vmul.f32 1.0, %v5448
    %v5450 = vrcp.pop %v4515
    %v5451 = vmul.f32 1.0, %v5450
    %v5452 = vrcp.pop %v4516
    %v5453 = vmul.f32 1.0, %v5452
    %v5454 = vrcp.pop %v4517
    %v5455 = vmul.f32 1.0, %v5454
    %v5456 = vrcp.pop %v4518
    %v5457 = vmul.f32 1.0, %v5456
    %v5458 = vrcp.pop %v4519
    %v5459 = vmul.f32 1.0, %v5458
    %v5460 = vrcp.pop %v4520
    %v5461 = vmul.f32 1.0, %v5460
    %v5462 = vrcp.pop %v4521
    %v5463 = vmul.f32 1.0, %v5462
    %v5464 = vrcp.pop %v4522
    %v5465 = vmul.f32 1.0, %v5464
    %v5466 = vrcp.pop %v4523
    %v5467 = vmul.f32 1.0, %v5466
    %v5468 = vrcp.pop %v4524
    %v5469 = vmul.f32 1.0, %v5468
    %v5470 = vrcp.pop %v4525
    %v5471 = vmul.f32 1.0, %v5470
    %v5472 = vrcp.pop %v4526
    %v5473 = vmul.f32 1.0, %v5472
    %v5474 = vrcp.pop %v4527
    %v5475 = vmul.f32 1.0, %v5474
    %v5476 = vrcp.pop %v4528
    %v5477 = vmul.f32 1.0, %v5476
    %v5478 = vrcp.pop %v4529
    %v5479 = vmul.f32 1.0, %v5478
    %v5480 = vrcp.pop %v4530
    %v5481 = vmul.f32 1.0, %v5480
    %v5482 = vrcp.pop %v4531
    %v5483 = vmul.f32 1.0, %v5482
    %v5484 = vrcp.pop %v4532
    %v5485 = vmul.f32 1.0, %v5484
    %v5486 = vrcp.pop %v4533
    %v5487 = vmul.f32 1.0, %v5486
    %v5488 = vrcp.pop %v4534
    %v5489 = vmul.f32 1.0, %v5488
    %v5490 = vrcp.pop %v4535
    %v5491 = vmul.f32 1.0, %v5490
    %v5492 = vrcp.pop %v4536
    %v5493 = vmul.f32 1.0, %v5492
    %v5494 = vrcp.pop %v4537
    %v5495 = vmul.f32 1.0, %v5494
    %v5496 = vrcp.pop %v4538
    %v5497 = vmul.f32 1.0, %v5496
    %v5498 = vrcp.pop %v4539
    %v5499 = vmul.f32 1.0, %v5498
    %v5500 = vrcp.pop %v4540
    %v5501 = vmul.f32 1.0, %v5500
    %v5502 = vrcp.pop %v4541
    %v5503 = vmul.f32 1.0, %v5502
    %v5504 = vrcp.pop %v4542
    %v5505 = vmul.f32 1.0, %v5504
    %v5506 = vrcp.pop %v4543
    %v5507 = vmul.f32 1.0, %v5506
    %v5508 = vrcp.pop %v4544
    %v5509 = vmul.f32 1.0, %v5508
    %v5510 = vrcp.pop %v4545
    %v5511 = vmul.f32 1.0, %v5510
    %v5512 = vrcp.pop %v4546
    %v5513 = vmul.f32 1.0, %v5512
    %v5514 = vrcp.pop %v4547
    %v5515 = vmul.f32 1.0, %v5514
    %v5516 = vrcp.pop %v4548
    %v5517 = vmul.f32 1.0, %v5516
    %v5518 = vrcp.pop %v4549
    %v5519 = vmul.f32 1.0, %v5518
    %v5520 = vrcp.pop %v4550
    %v5521 = vmul.f32 1.0, %v5520
    %v5522 = vrcp.pop %v4551
    %v5523 = vmul.f32 1.0, %v5522
    %v5524 = vrcp.pop %v4552
    %v5525 = vmul.f32 1.0, %v5524
    %v5526 = vrcp.pop %v4553
    %v5527 = vmul.f32 1.0, %v5526
    %v5528 = vrcp.pop %v4554
    %v5529 = vmul.f32 1.0, %v5528
    %v5530 = vrcp.pop %v4555
    %v5531 = vmul.f32 1.0, %v5530
    %v5532 = vrcp.pop %v4556
    %v5533 = vmul.f32 1.0, %v5532
    %v5534 = vrcp.pop %v4557
    %v5535 = vmul.f32 1.0, %v5534
    %v5536 = vrcp.pop %v4558
    %v5537 = vmul.f32 1.0, %v5536
    %v5538 = vrcp.pop %v4559
    %v5539 = vmul.f32 1.0, %v5538
    %v5540 = vrcp.pop %v4560
    %v5541 = vmul.f32 1.0, %v5540
    %v5542 = vrcp.pop %v4561
    %v5543 = vmul.f32 1.0, %v5542
    %v5544 = vrcp.pop %v4562
    %v5545 = vmul.f32 1.0, %v5544
    %v5546 = vrcp.pop %v4563
    %v5547 = vmul.f32 1.0, %v5546
    %v5548 = vrcp.pop %v4564
    %v5549 = vmul.f32 1.0, %v5548
    %v5550 = vrcp.pop %v4565
    %v5551 = vmul.f32 1.0, %v5550
    %v5552 = vrcp.pop %v4566
    %v5553 = vmul.f32 1.0, %v5552
    %v5554 = vrcp.pop %v4567
    %v5555 = vmul.f32 1.0, %v5554
    %v5556 = vrcp.pop %v4568
    %v5557 = vmul.f32 1.0, %v5556
    %v5558 = vrcp.pop %v4569
    %v5559 = vmul.f32 1.0, %v5558
    %v5560 = vrcp.pop %v4570
    %v5561 = vmul.f32 1.0, %v5560
    %v5562 = vrcp.pop %v4571
    %v5563 = vmul.f32 1.0, %v5562
    %v5564 = vrcp.pop %v4572
    %v5565 = vmul.f32 1.0, %v5564
    %v5566 = vrcp.pop %v4573
    %v5567 = vmul.f32 1.0, %v5566
    %v5568 = vrcp.pop %v4574
    %v5569 = vmul.f32 1.0, %v5568
    %v5570 = vrcp.pop %v4575
    %v5571 = vmul.f32 1.0, %v5570
    %v5572 = vrcp.pop %v4576
    %v5573 = vmul.f32 1.0, %v5572
    %v5574 = vrcp.pop %v4577
    %v5575 = vmul.f32 1.0, %v5574
    %v5576 = vrcp.pop %v4578
    %v5577 = vmul.f32 1.0, %v5576
    %v5578 = vrcp.pop %v4579
    %v5579 = vmul.f32 1.0, %v5578
    %v5580 = vrcp.pop %v4580
    %v5581 = vmul.f32 1.0, %v5580
    %v5582 = vrcp.pop %v4581
    %v5583 = vmul.f32 1.0, %v5582
    %v5584 = vrcp.pop %v4582
    %v5585 = vmul.f32 1.0, %v5584
    %v5586 = vrcp.pop %v4583
    %v5587 = vmul.f32 1.0, %v5586
    %v5588 = vrcp.pop %v4584
    %v5589 = vmul.f32 1.0, %v5588
    %v5590 = vrcp.pop %v4585
    %v5591 = vmul.f32 1.0, %v5590
    %v5592 = vrcp.pop %v4586
    %v5593 = vmul.f32 1.0, %v5592
    %v5594 = vrcp.pop %v4587
    %v5595 = vmul.f32 1.0, %v5594
    %v5596 = vrcp.pop %v4588
    %v5597 = vmul.f32 1.0, %v5596
    %v5598 = vrcp.pop %v4589
    %v5599 = vmul.f32 1.0, %v5598
    %v5600 = vrcp.pop %v4590
    %v5601 = vmul.f32 1.0, %v5600
    %v5602 = vrcp.pop %v4591
    %v5603 = vmul.f32 1.0, %v5602
    %v5604 = vrcp.pop %v4592
    %v5605 = vmul.f32 1.0, %v5604
    %v5606 = vrcp.pop %v4593
    %v5607 = vmul.f32 1.0, %v5606
    %v5608 = vrcp.pop %v4594
    %v5609 = vmul.f32 1.0, %v5608
    %v5610 = vrcp.pop %v4595
    %v5611 = vmul.f32 1.0, %v5610
    %v5612 = vrcp.pop %v4596
    %v5613 = vmul.f32 1.0, %v5612
    %v5614 = vrcp.pop %v4597
    %v5615 = vmul.f32 1.0, %v5614
    %v5616 = vrcp.pop %v4598
    %v5617 = vmul.f32 1.0, %v5616
    %v5618 = vrcp.pop %v4599
    %v5619 = vmul.f32 1.0, %v5618
    %v5620 = vrcp.pop %v4600
    %v5621 = vmul.f32 1.0, %v5620
    %v5622 = vrcp.pop %v4601
    %v5623 = vmul.f32 1.0, %v5622
    %v5624 = vrcp.pop %v4602
    %v5625 = vmul.f32 1.0, %v5624
    %v5626 = vrcp.pop %v4603
    %v5627 = vmul.f32 1.0, %v5626
    %v5628 = vrcp.pop %v4604
    %v5629 = vmul.f32 1.0, %v5628
    %v5630 = vrcp.pop %v4605
    %v5631 = vmul.f32 1.0, %v5630
    %v5632 = vrcp.pop %v4606
    %v5633 = vmul.f32 1.0, %v5632
    %v5634 = vrcp.pop %v4607
    %v5635 = vmul.f32 1.0, %v5634
    %v5636 = vrcp.pop %v4608
    %v5637 = vmul.f32 1.0, %v5636
    %v5638 = vrcp.pop %v4609
    %v5639 = vmul.f32 1.0, %v5638
    %v5640 = vrcp.pop %v4610
    %v5641 = vmul.f32 1.0, %v5640
    %v5642 = vrcp.pop %v4611
    %v5643 = vmul.f32 1.0, %v5642
    %v5644 = vrcp.pop %v4612
    %v5645 = vmul.f32 1.0, %v5644
    %v5646 = vrcp.pop %v4613
    %v5647 = vmul.f32 1.0, %v5646
    %v5648 = vrcp.pop %v4614
    %v5649 = vmul.f32 1.0, %v5648
    %v5650 = vrcp.pop %v4615
    %v5651 = vmul.f32 1.0, %v5650
    %v5652 = vrcp.pop %v4616
    %v5653 = vmul.f32 1.0, %v5652
    %v5654 = vrcp.pop %v4617
    %v5655 = vmul.f32 1.0, %v5654
    %v5656 = vrcp.pop %v4618
    %v5657 = vmul.f32 1.0, %v5656
    %v5658 = vrcp.pop %v4619
    %v5659 = vmul.f32 1.0, %v5658
    %v5660 = vrcp.pop %v4620
    %v5661 = vmul.f32 1.0, %v5660
    %v5662 = vrcp.pop %v4621
    %v5663 = vmul.f32 1.0, %v5662
    %v5664 = vrcp.pop %v4622
    %v5665 = vmul.f32 1.0, %v5664
    %v5666 = vrcp.pop %v4623
    %v5667 = vmul.f32 1.0, %v5666
    %v5668 = vrcp.pop %v4624
    %v5669 = vmul.f32 1.0, %v5668
    %v5670 = vrcp.pop %v4625
    %v5671 = vmul.f32 1.0, %v5670
    %v5672 = vrcp.pop %v4626
    %v5673 = vmul.f32 1.0, %v5672
    %v5674 = vrcp.pop %v4627
    %v5675 = vmul.f32 1.0, %v5674
    %v5676 = vrcp.pop %v4628
    %v5677 = vmul.f32 1.0, %v5676
    %v5678 = vrcp.pop %v4629
    %v5679 = vmul.f32 1.0, %v5678
    %v5680 = vrcp.pop %v4630
    %v5681 = vmul.f32 1.0, %v5680
    %v5682 = vrcp.pop %v4631
    %v5683 = vmul.f32 1.0, %v5682
    %v5684 = vrcp.pop %v4632
    %v5685 = vmul.f32 1.0, %v5684
    %v5686 = vrcp.pop %v4633
    %v5687 = vmul.f32 1.0, %v5686
    %v5688 = vrcp.pop %v4634
    %v5689 = vmul.f32 1.0, %v5688
    %v5690 = vrcp.pop %v4635
    %v5691 = vmul.f32 1.0, %v5690
    %v5692 = vrcp.pop %v4636
    %v5693 = vmul.f32 1.0, %v5692
    %v5694 = vrcp.pop %v4637
    %v5695 = vmul.f32 1.0, %v5694
    %v5696 = vrcp.pop %v4638
    %v5697 = vmul.f32 1.0, %v5696
    %v5698 = vrcp.pop %v4639
    %v5699 = vmul.f32 1.0, %v5698
    %v5700 = vrcp.pop %v4640
    %v5701 = vmul.f32 1.0, %v5700
    %v5702 = vrcp.pop %v4641
    %v5703 = vmul.f32 1.0, %v5702
    %v5704 = vrcp.pop %v4642
    %v5705 = vmul.f32 1.0, %v5704
    %v5706 = vrcp.pop %v4643
    %v5707 = vmul.f32 1.0, %v5706
    %v5708 = vrcp.pop %v4644
    %v5709 = vmul.f32 1.0, %v5708
    %v5710 = vrcp.pop %v4645
    %v5711 = vmul.f32 1.0, %v5710
    %v5712 = vrcp.pop %v4646
    %v5713 = vmul.f32 1.0, %v5712
    %v5714 = vrcp.pop %v4647
    %v5715 = vmul.f32 1.0, %v5714
    %v5716 = vrcp.pop %v4648
    %v5717 = vmul.f32 1.0, %v5716
    %v5718 = vrcp.pop %v4649
    %v5719 = vmul.f32 1.0, %v5718
    %v5720 = vrcp.pop %v4650
    %v5721 = vmul.f32 1.0, %v5720
    %v5722 = vrcp.pop %v4651
    %v5723 = vmul.f32 1.0, %v5722
    %v5724 = vrcp.pop %v4652
    %v5725 = vmul.f32 1.0, %v5724
    %v5726 = vrcp.pop %v4653
    %v5727 = vmul.f32 1.0, %v5726
    %v5728 = vrcp.pop %v4654
    %v5729 = vmul.f32 1.0, %v5728
    %v5730 = vrcp.pop %v4655
    %v5731 = vmul.f32 1.0, %v5730
    %v5732 = vrcp.pop %v4656
    %v5733 = vmul.f32 1.0, %v5732
    %v5734 = vrcp.pop %v4657
    %v5735 = vmul.f32 1.0, %v5734
    %v5736 = vrcp.pop %v4658
    %v5737 = vmul.f32 1.0, %v5736
    %v5738 = vrcp.pop %v4659
    %v5739 = vmul.f32 1.0, %v5738
    %v5740 = vrcp.pop %v4660
    %v5741 = vmul.f32 1.0, %v5740
    %v5742 = vrcp.pop %v4661
    %v5743 = vmul.f32 1.0, %v5742
    %v5744 = vrcp.pop %v4662
    %v5745 = vmul.f32 1.0, %v5744
    %v5746 = vrcp.pop %v4663
    %v5747 = vmul.f32 1.0, %v5746
    %v5748 = vrcp.pop %v4664
    %v5749 = vmul.f32 1.0, %v5748
    %v5750 = vrcp.pop %v4665
    %v5751 = vmul.f32 1.0, %v5750
    %v5752 = vrcp.pop %v4666
    %v5753 = vmul.f32 1.0, %v5752
    %v5754 = vrcp.pop %v4667
    %v5755 = vmul.f32 1.0, %v5754
    %v5756 = vrcp.pop %v4668
    %v5757 = vmul.f32 1.0, %v5756
    %v5758 = vrcp.pop %v4669
    %v5759 = vmul.f32 1.0, %v5758
    %v5760 = vrcp.pop %v4670
    %v5761 = vmul.f32 1.0, %v5760
    %v5762 = vrcp.pop %v4671
    %v5763 = vmul.f32 1.0, %v5762
    %v5764 = vrcp.pop %v4672
    %v5765 = vmul.f32 1.0, %v5764
    %v5766 = vrcp.pop %v4673
    %v5767 = vmul.f32 1.0, %v5766
    %v5768 = vrcp.pop %v4674
    %v5769 = vmul.f32 1.0, %v5768
    %v5770 = vrcp.pop %v4675
    %v5771 = vmul.f32 1.0, %v5770
    %v5772 = vrcp.pop %v4676
    %v5773 = vmul.f32 1.0, %v5772
    %v5774 = vrcp.pop %v4677
    %v5775 = vmul.f32 1.0, %v5774
    %v5776 = vrcp.pop %v4678
    %v5777 = vmul.f32 1.0, %v5776
    %v5778 = vrcp.pop %v4679
    %v5779 = vmul.f32 1.0, %v5778
    %v5780 = vrcp.pop %v4680
    %v5781 = vmul.f32 1.0, %v5780
    %v5782 = vrcp.pop %v4681
    %v5783 = vmul.f32 1.0, %v5782
    %v5784 = vrcp.pop %v4682
    %v5785 = vmul.f32 1.0, %v5784
    %v5786 = vrcp.pop %v4683
    %v5787 = vmul.f32 1.0, %v5786
    %v5788 = vrcp.pop %v4684
    %v5789 = vmul.f32 1.0, %v5788
    %v5790 = vrcp.pop %v4685
    %v5791 = vmul.f32 1.0, %v5790
    %v5792 = vrcp.pop %v4686
    %v5793 = vmul.f32 1.0, %v5792
    %v5794 = vrcp.pop %v4687
    %v5795 = vmul.f32 1.0, %v5794
    %v5796 = vrcp.pop %v4688
    %v5797 = vmul.f32 1.0, %v5796
    %v5798 = vrcp.pop %v4689
    %v5799 = vmul.f32 1.0, %v5798
    %v5800 = vrcp.pop %v4690
    %v5801 = vmul.f32 1.0, %v5800
    %v5802 = vrcp.pop %v4691
    %v5803 = vmul.f32 1.0, %v5802
    %v5804 = vrcp.pop %v4692
    %v5805 = vmul.f32 1.0, %v5804
    %v5806 = vrcp.pop %v4693
    %v5807 = vmul.f32 1.0, %v5806
    %v5808 = vrcp.pop %v4694
    %v5809 = vmul.f32 1.0, %v5808
    %v5810 = vrcp.pop %v4695
    %v5811 = vmul.f32 1.0, %v5810
    %v5812 = vrcp.pop %v4696
    %v5813 = vmul.f32 1.0, %v5812
    %v5814 = vrcp.pop %v4697
    %v5815 = vmul.f32 1.0, %v5814
    %v5816 = vrcp.pop %v4698
    %v5817 = vmul.f32 1.0, %v5816
    %v5818 = vrcp.pop %v4699
    %v5819 = vmul.f32 1.0, %v5818
    %v5820 = vrcp.pop %v4700
    %v5821 = vmul.f32 1.0, %v5820
    %v5822 = vrcp.pop %v4701
    %v5823 = vmul.f32 1.0, %v5822
    %v5824 = vrcp.pop %v4702
    %v5825 = vmul.f32 1.0, %v5824
    %v5826 = vrcp.pop %v4703
    %v5827 = vmul.f32 1.0, %v5826
    %v5828 = vrcp.pop %v4704
    %v5829 = vmul.f32 1.0, %v5828
    %v5830 = vrcp.pop %v4705
    %v5831 = vmul.f32 1.0, %v5830
    %v5832 = vrcp.pop %v4706
    %v5833 = vmul.f32 1.0, %v5832
    %v5834 = vrcp.pop %v4707
    %v5835 = vmul.f32 1.0, %v5834
    %v5836 = vrcp.pop %v4708
    %v5837 = vmul.f32 1.0, %v5836
    %v5838 = vrcp.pop %v4709
    %v5839 = vmul.f32 1.0, %v5838
    %v5840 = vrcp.pop %v4710
    %v5841 = vmul.f32 1.0, %v5840
    %v5842 = vrcp.pop %v4711
    %v5843 = vmul.f32 1.0, %v5842
    %v5844 = vrcp.pop %v4712
    %v5845 = vmul.f32 1.0, %v5844
    %v5846 = vrcp.pop %v4713
    %v5847 = vmul.f32 1.0, %v5846
    %v5848 = vrcp.pop %v4714
    %v5849 = vmul.f32 1.0, %v5848
    %v5850 = vrcp.pop %v4715
    %v5851 = vmul.f32 1.0, %v5850
    %v5852 = vrcp.pop %v4716
    %v5853 = vmul.f32 1.0, %v5852
    %v5854 = vrcp.pop %v4717
    %v5855 = vmul.f32 1.0, %v5854
    %v5856 = vrcp.pop %v4718
    %v5857 = vmul.f32 1.0, %v5856
    %v5858 = vrcp.pop %v4719
    %v5859 = vmul.f32 1.0, %v5858
    %v5860 = vrcp.pop %v4720
    %v5861 = vmul.f32 1.0, %v5860
    %v5862 = vrcp.pop %v4721
    %v5863 = vmul.f32 1.0, %v5862
    %v5864 = vrcp.pop %v4722
    %v5865 = vmul.f32 1.0, %v5864
    %v5866 = vrcp.pop %v4723
    %v5867 = vmul.f32 1.0, %v5866
    %v5868 = vrcp.pop %v4724
    %v5869 = vmul.f32 1.0, %v5868
    %v5870 = vrcp.pop %v4725
    %v5871 = vmul.f32 1.0, %v5870
    %v5872 = vrcp.pop %v4726
    %v5873 = vmul.f32 1.0, %v5872
    %v5874 = vrcp.pop %v4727
    %v5875 = vmul.f32 1.0, %v5874
    %v5876 = vrcp.pop %v4728
    %v5877 = vmul.f32 1.0, %v5876
    %v5878 = vrcp.pop %v4729
    %v5879 = vmul.f32 1.0, %v5878
    %v5880 = vrcp.pop %v4730
    %v5881 = vmul.f32 1.0, %v5880
    %v5882 = vrcp.pop %v4731
    %v5883 = vmul.f32 1.0, %v5882
    %v5884 = vrcp.pop %v4732
    %v5885 = vmul.f32 1.0, %v5884
    %v5886 = vrcp.pop %v4733
    %v5887 = vmul.f32 1.0, %v5886
    %v5888 = vrcp.pop %v4734
    %v5889 = vmul.f32 1.0, %v5888
    %v5890 = vrcp.pop %v4735
    %v5891 = vmul.f32 1.0, %v5890
    %v5892 = vrcp.pop %v4736
    %v5893 = vmul.f32 1.0, %v5892
    %v5894 = vrcp.pop %v4737
    %v5895 = vmul.f32 1.0, %v5894
    %v5896 = vrcp.pop %v4738
    %v5897 = vmul.f32 1.0, %v5896
    %v5898 = vrcp.pop %v4739
    %v5899 = vmul.f32 1.0, %v5898
    %v5900 = vrcp.pop %v4740
    %v5901 = vmul.f32 1.0, %v5900
    %v5902 = vrcp.pop %v4741
    %v5903 = vmul.f32 1.0, %v5902
    %v5904 = vrcp.pop %v4742
    %v5905 = vmul.f32 1.0, %v5904
    %v5906 = vrcp.pop %v4743
    %v5907 = vmul.f32 1.0, %v5906
    %v5908 = vrcp.pop %v4744
    %v5909 = vmul.f32 1.0, %v5908
    %v5910 = vrcp.pop %v4745
    %v5911 = vmul.f32 1.0, %v5910
    %v5912 = vrcp.pop %v4746
    %v5913 = vmul.f32 1.0, %v5912
    %v5914 = vrcp.pop %v4747
    %v5915 = vmul.f32 1.0, %v5914
    %v5916 = vrcp.pop %v4748
    %v5917 = vmul.f32 1.0, %v5916
    %v5918 = vrcp.pop %v4749
    %v5919 = vmul.f32 1.0, %v5918
    %v5920 = vrcp.pop %v4750
    %v5921 = vmul.f32 1.0, %v5920
    %v5922 = vrcp.pop %v4751
    %v5923 = vmul.f32 1.0, %v5922
    %v5924 = vrcp.pop %v4752
    %v5925 = vmul.f32 1.0, %v5924
    %v5926 = vrcp.pop %v4753
    %v5927 = vmul.f32 1.0, %v5926
    %v5928 = vrcp.pop %v4754
    %v5929 = vmul.f32 1.0, %v5928
    %v5930 = vrcp.pop %v4755
    %v5931 = vmul.f32 1.0, %v5930
    %v5932 = vrcp.pop %v4756
    %v5933 = vmul.f32 1.0, %v5932
    %v5934 = vrcp.pop %v4757
    %v5935 = vmul.f32 1.0, %v5934
    %v5936 = vrcp.pop %v4758
    %v5937 = vmul.f32 1.0, %v5936
    %v5938 = vrcp.pop %v4759
    %v5939 = vmul.f32 1.0, %v5938
    %v5940 = vrcp.pop %v4760
    %v5941 = vmul.f32 1.0, %v5940
    %v5942 = vrcp.pop %v4761
    %v5943 = vmul.f32 1.0, %v5942
    %v5944 = vrcp.pop %v4762
    %v5945 = vmul.f32 1.0, %v5944
    %v5946 = vrcp.pop %v4763
    %v5947 = vmul.f32 1.0, %v5946
    %v5948 = vrcp.pop %v4764
    %v5949 = vmul.f32 1.0, %v5948
    %v5950 = vrcp.pop %v4765
    %v5951 = vmul.f32 1.0, %v5950
    %v5952 = vrcp.pop %v4766
    %v5953 = vmul.f32 1.0, %v5952
    %v5954 = vrcp.pop %v4767
    %v5955 = vmul.f32 1.0, %v5954
    %v5956 = vrcp.pop %v4768
    %v5957 = vmul.f32 1.0, %v5956
    %v5958 = vrcp.pop %v4769
    %v5959 = vmul.f32 1.0, %v5958
    %v5960 = vrcp.pop %v4770
    %v5961 = vmul.f32 1.0, %v5960
    %v5962 = vrcp.pop %v4771
    %v5963 = vmul.f32 1.0, %v5962
    %v5964 = vrcp.pop %v4772
    %v5965 = vmul.f32 1.0, %v5964
    %v5966 = vrcp.pop %v4773
    %v5967 = vmul.f32 1.0, %v5966
    %v5968 = vrcp.pop %v4774
    %v5969 = vmul.f32 1.0, %v5968
    %v5970 = vrcp.pop %v4775
    %v5971 = vmul.f32 1.0, %v5970
    %v5972 = vrcp.pop %v4776
    %v5973 = vmul.f32 1.0, %v5972
    %v5974 = vrcp.pop %v4777
    %v5975 = vmul.f32 1.0, %v5974
    %v5976 = vrcp.pop %v4778
    %v5977 = vmul.f32 1.0, %v5976
    %v5978 = vrcp.pop %v4779
    %v5979 = vmul.f32 1.0, %v5978
    %v5980 = vrcp.pop %v4780
    %v5981 = vmul.f32 1.0, %v5980
    %v5982 = vrcp.pop %v4781
    %v5983 = vmul.f32 1.0, %v5982
    %v5984 = vrcp.pop %v4782
    %v5985 = vmul.f32 1.0, %v5984
    %v5986 = vrcp.pop %v4783
    %v5987 = vmul.f32 1.0, %v5986
    %v5988 = vrcp.pop %v4784
    %v5989 = vmul.f32 1.0, %v5988
    %v5990 = vrcp.pop %v4785
    %v5991 = vmul.f32 1.0, %v5990
    %v5992 = vrcp.pop %v4786
    %v5993 = vmul.f32 1.0, %v5992
    %v5994 = vrcp.pop %v4787
    %v5995 = vmul.f32 1.0, %v5994
    %v5996 = vrcp.pop %v4788
    %v5997 = vmul.f32 1.0, %v5996
    %v5998 = vrcp.pop %v4789
    %v5999 = vmul.f32 1.0, %v5998
    %v6000 = vrcp.pop %v4790
    %v6001 = vmul.f32 1.0, %v6000
    %v6002 = vrcp.pop %v4791
    %v6003 = vmul.f32 1.0, %v6002
    %v6004 = vrcp.pop %v4792
    %v6005 = vmul.f32 1.0, %v6004
    %v6006 = vrcp.pop %v4793
    %v6007 = vmul.f32 1.0, %v6006
    %v6008 = vrcp.pop %v4794
    %v6009 = vmul.f32 1.0, %v6008
    %v6010 = vrcp.pop %v4795
    %v6011 = vmul.f32 1.0, %v6010
    %v6012 = vrcp.pop %v4796
    %v6013 = vmul.f32 1.0, %v6012
    %v6014 = vrcp.pop %v4797
    %v6015 = vmul.f32 1.0, %v6014
    %v6016 = vrcp.pop %v4798
    %v6017 = vmul.f32 1.0, %v6016
    %v6018 = vrcp.pop %v4799
    %v6019 = vmul.f32 1.0, %v6018
    %v6020 = vrcp.pop %v4800
    %v6021 = vmul.f32 1.0, %v6020
    %v6022 = vrcp.pop %v4801
    %v6023 = vmul.f32 1.0, %v6022
    %v6024 = vrcp.pop %v4802
    %v6025 = vmul.f32 1.0, %v6024
    %v6026 = vrcp.pop %v4803
    %v6027 = vmul.f32 1.0, %v6026
    %v6028 = vrcp.pop %v4804
    %v6029 = vmul.f32 1.0, %v6028
    %v6030 = vrcp.pop %v4805
    %v6031 = vmul.f32 1.0, %v6030
    %v6032 = vrcp.pop %v4806
    %v6033 = vmul.f32 1.0, %v6032
    %v6034 = vrcp.pop %v4807
    %v6035 = vmul.f32 1.0, %v6034
    %v6036 = vrcp.pop %v4808
    %v6037 = vmul.f32 1.0, %v6036
    %v6038 = vrcp.pop %v4809
    %v6039 = vmul.f32 1.0, %v6038
    %v6040 = vrcp.pop %v4810
    %v6041 = vmul.f32 1.0, %v6040
    %v6042 = vrcp.pop %v4811
    %v6043 = vmul.f32 1.0, %v6042
    %v6044 = vrcp.pop %v4812
    %v6045 = vmul.f32 1.0, %v6044
    %v6046 = vrcp.pop %v4813
    %v6047 = vmul.f32 1.0, %v6046
    %v6048 = vrcp.pop %v4814
    %v6049 = vmul.f32 1.0, %v6048
    %v6050 = vrcp.pop %v4815
    %v6051 = vmul.f32 1.0, %v6050
    %v6052 = vrcp.pop %v4816
    %v6053 = vmul.f32 1.0, %v6052
    %v6054 = vrcp.pop %v4817
    %v6055 = vmul.f32 1.0, %v6054
    %v6056 = vrcp.pop %v4818
    %v6057 = vmul.f32 1.0, %v6056
    %v6058 = vrcp.pop %v4819
    %v6059 = vmul.f32 1.0, %v6058
    %v6060 = vrcp.pop %v4820
    %v6061 = vmul.f32 1.0, %v6060
    %v6062 = vrcp.pop %v4821
    %v6063 = vmul.f32 1.0, %v6062
    %v6064 = vrcp.pop %v4822
    %v6065 = vmul.f32 1.0, %v6064
    %v6066 = vrcp.pop %v4823
    %v6067 = vmul.f32 1.0, %v6066
    %v6068 = vrcp.pop %v4824
    %v6069 = vmul.f32 1.0, %v6068
    %v6070 = vrcp.pop %v4825
    %v6071 = vmul.f32 1.0, %v6070
    %v6072 = vrcp.pop %v4826
    %v6073 = vmul.f32 1.0, %v6072
    %v6074 = vrcp.pop %v4827
    %v6075 = vmul.f32 1.0, %v6074
    %v6076 = vrcp.pop %v4828
    %v6077 = vmul.f32 1.0, %v6076
    %v6078 = vrcp.pop %v4829
    %v6079 = vmul.f32 1.0, %v6078
    %v6080 = vrcp.pop %v4830
    %v6081 = vmul.f32 1.0, %v6080
    %v6082 = vrcp.pop %v4831
    %v6083 = vmul.f32 1.0, %v6082
    %v6084 = vrcp.pop %v4832
    %v6085 = vmul.f32 1.0, %v6084
    %v6086 = vrcp.pop %v4833
    %v6087 = vmul.f32 1.0, %v6086
    %v6088 = vrcp.pop %v4834
    %v6089 = vmul.f32 1.0, %v6088
    %v6090 = vrcp.pop %v4835
    %v6091 = vmul.f32 1.0, %v6090
    %v6092 = vrcp.pop %v4836
    %v6093 = vmul.f32 1.0, %v6092
    %v6094 = vrcp.pop %v4837
    %v6095 = vmul.f32 1.0, %v6094
    %v6096 = vrcp.pop %v4838
    %v6097 = vmul.f32 1.0, %v6096
    %v6098 = vrcp.pop %v4839
    %v6099 = vmul.f32 1.0, %v6098
    %v6100 = vrcp.pop %v4840
    %v6101 = vmul.f32 1.0, %v6100
    %v6102 = vrcp.pop %v4841
    %v6103 = vmul.f32 1.0, %v6102
    %v6104 = vrcp.pop %v4842
    %v6105 = vmul.f32 1.0, %v6104
    %v6106 = vrcp.pop %v4843
    %v6107 = vmul.f32 1.0, %v6106
    %v6108 = vrcp.pop %v4844
    %v6109 = vmul.f32 1.0, %v6108
    %v6110 = vrcp.pop %v4845
    %v6111 = vmul.f32 1.0, %v6110
    %v6112 = vrcp.pop %v4846
    %v6113 = vmul.f32 1.0, %v6112
    %v6114 = vrcp.pop %v4847
    %v6115 = vmul.f32 1.0, %v6114
    %v6116 = vrcp.pop %v4848
    %v6117 = vmul.f32 1.0, %v6116
    %v6118 = vrcp.pop %v4849
    %v6119 = vmul.f32 1.0, %v6118
    %v6120 = vrcp.pop %v4850
    %v6121 = vmul.f32 1.0, %v6120
    %v6122 = vrcp.pop %v4851
    %v6123 = vmul.f32 1.0, %v6122
    %v6124 = vrcp.pop %v4852
    %v6125 = vmul.f32 1.0, %v6124
    %v6126 = vrcp.pop %v4853
    %v6127 = vmul.f32 1.0, %v6126
    %v6128 = vrcp.pop %v4854
    %v6129 = vmul.f32 1.0, %v6128
    %v6130 = vrcp.pop %v4855
    %v6131 = vmul.f32 1.0, %v6130
    %v6132 = vrcp.pop %v4856
    %v6133 = vmul.f32 1.0, %v6132
    %v6134 = vrcp.pop %v4857
    %v6135 = vmul.f32 1.0, %v6134
    %v6136 = vrcp.pop %v4858
    %v6137 = vmul.f32 1.0, %v6136
    %v6138 = vrcp.pop %v4859
    %v6139 = vmul.f32 1.0, %v6138
    %v6140 = vmul.f32 %v570, %v4861
    %v6141 = vmul.f32 %v572, %v4863
    %v6142 = vmul.f32 %v923, %v4865
    %v6143 = vmul.f32 %v925, %v4867
    %v6144 = vmul.f32 %v1276, %v4869
    %v6145 = vmul.f32 %v1278, %v4871
    %v6146 = vmul.f32 %v1629, %v4873
    %v6147 = vmul.f32 %v1631, %v4875
    %v6148 = vmul.f32 %v1982, %v4877
    %v6149 = vmul.f32 %v1984, %v4879
    %v6150 = vmul.f32 %v574, %v4881
    %v6151 = vmul.f32 %v576, %v4883
    %v6152 = vmul.f32 %v927, %v4885
    %v6153 = vmul.f32 %v929, %v4887
    %v6154 = vmul.f32 %v1280, %v4889
    %v6155 = vmul.f32 %v1282, %v4891
    %v6156 = vmul.f32 %v1633, %v4893
    %v6157 = vmul.f32 %v1635, %v4895
    %v6158 = vmul.f32 %v1986, %v4897
    %v6159 = vmul.f32 %v1988, %v4899
    %v6160 = vmul.f32 %v580, %v4901
    %v6161 = vmul.f32 %v582, %v4903
    %v6162 = vmul.f32 %v933, %v4905
    %v6163 = vmul.f32 %v935, %v4907
    %v6164 = vmul.f32 %v1286, %v4909
    %v6165 = vmul.f32 %v1288, %v4911
    %v6166 = vmul.f32 %v1639, %v4913
    %v6167 = vmul.f32 %v1641, %v4915
    %v6168 = vmul.f32 %v1992, %v4917
    %v6169 = vmul.f32 %v1994, %v4919
    %v6170 = vmul.f32 %v584, %v4921
    %v6171 = vmul.f32 %v586, %v4923
    %v6172 = vmul.f32 %v937, %v4925
    %v6173 = vmul.f32 %v939, %v4927
    %v6174 = vmul.f32 %v1290, %v4929
    %v6175 = vmul.f32 %v1292, %v4931
    %v6176 = vmul.f32 %v1643, %v4933
    %v6177 = vmul.f32 %v1645, %v4935
    %v6178 = vmul.f32 %v1996, %v4937
    %v6179 = vmul.f32 %v1998, %v4939
    %v6180 = vmul.f32 %v590, %v4941
    %v6181 = vmul.f32 %v592, %v4943
    %v6182 = vmul.f32 %v943, %v4945
    %v6183 = vmul.f32 %v945, %v4947
    %v6184 = vmul.f32 %v1296, %v4949
    %v6185 = vmul.f32 %v1298, %v4951
    %v6186 = vmul.f32 %v1649, %v4953
    %v6187 = vmul.f32 %v1651, %v4955
    %v6188 = vmul.f32 %v2002, %v4957
    %v6189 = vmul.f32 %v2004, %v4959
    %v6190 = vmul.f32 %v594, %v4961
    %v6191 = vmul.f32 %v596, %v4963
    %v6192 = vmul.f32 %v947, %v4965
    %v6193 = vmul.f32 %v949, %v4967
    %v6194 = vmul.f32 %v1300, %v4969
    %v6195 = vmul.f32 %v1302, %v4971
    %v6196 = vmul.f32 %v1653, %v4973
    %v6197 = vmul.f32 %v1655, %v4975
    %v6198 = vmul.f32 %v2006, %v4977
    %v6199 = vmul.f32 %v2008, %v4979
    %v6200 = vmul.f32 %v600, %v4981
    %v6201 = vmul.f32 %v602, %v4983
    %v6202 = vmul.f32 %v953, %v4985
    %v6203 = vmul.f32 %v955, %v4987
    %v6204 = vmul.f32 %v1306, %v4989
    %v6205 = vmul.f32 %v1308, %v4991
    %v6206 = vmul.f32 %v1659, %v4993
    %v6207 = vmul.f32 %v1661, %v4995
    %v6208 = vmul.f32 %v2012, %v4997
    %v6209 = vmul.f32 %v2014, %v4999
    %v6210 = vmul.f32 %v604, %v5001
    %v6211 = vmul.f32 %v606, %v5003
    %v6212 = vmul.f32 %v957, %v5005
    %v6213 = vmul.f32 %v959, %v5007
    %v6214 = vmul.f32 %v1310, %v5009
    %v6215 = vmul.f32 %v1312, %v5011
    %v6216 = vmul.f32 %v1663, %v5013
    %v6217 = vmul.f32 %v1665, %v5015
    %v6218 = vmul.f32 %v2016, %v5017
    %v6219 = vmul.f32 %v2018, %v5019
    %v6220 = vmul.f32 %v610, %v5021
    %v6221 = vmul.f32 %v612, %v5023
    %v6222 = vmul.f32 %v963, %v5025
    %v6223 = vmul.f32 %v965, %v5027
    %v6224 = vmul.f32 %v1316, %v5029
    %v6225 = vmul.f32 %v1318, %v5031
    %v6226 = vmul.f32 %v1669, %v5033
    %v6227 = vmul.f32 %v1671, %v5035
    %v6228 = vmul.f32 %v2022, %v5037
    %v6229 = vmul.f32 %v2024, %v5039
    %v6230 = vmul.f32 %v614, %v5041
    %v6231 = vmul.f32 %v616, %v5043
    %v6232 = vmul.f32 %v967, %v5045
    %v6233 = vmul.f32 %v969, %v5047
    %v6234 = vmul.f32 %v1320, %v5049
    %v6235 = vmul.f32 %v1322, %v5051
    %v6236 = vmul.f32 %v1673, %v5053
    %v6237 = vmul.f32 %v1675, %v5055
    %v6238 = vmul.f32 %v2026, %v5057
    %v6239 = vmul.f32 %v2028, %v5059
    %v6240 = vmul.f32 %v620, %v5061
    %v6241 = vmul.f32 %v622, %v5063
    %v6242 = vmul.f32 %v973, %v5065
    %v6243 = vmul.f32 %v975, %v5067
    %v6244 = vmul.f32 %v1326, %v5069
    %v6245 = vmul.f32 %v1328, %v5071
    %v6246 = vmul.f32 %v1679, %v5073
    %v6247 = vmul.f32 %v1681, %v5075
    %v6248 = vmul.f32 %v2032, %v5077
    %v6249 = vmul.f32 %v2034, %v5079
    %v6250 = vmul.f32 %v624, %v5081
    %v6251 = vmul.f32 %v626, %v5083
    %v6252 = vmul.f32 %v977, %v5085
    %v6253 = vmul.f32 %v979, %v5087
    %v6254 = vmul.f32 %v1330, %v5089
    %v6255 = vmul.f32 %v1332, %v5091
    %v6256 = vmul.f32 %v1683, %v5093
    %v6257 = vmul.f32 %v1685, %v5095
    %v6258 = vmul.f32 %v2036, %v5097
    %v6259 = vmul.f32 %v2038, %v5099
    %v6260 = vmul.f32 %v630, %v5101
    %v6261 = vmul.f32 %v632, %v5103
    %v6262 = vmul.f32 %v983, %v5105
    %v6263 = vmul.f32 %v985, %v5107
    %v6264 = vmul.f32 %v1336, %v5109
    %v6265 = vmul.f32 %v1338, %v5111
    %v6266 = vmul.f32 %v1689, %v5113
    %v6267 = vmul.f32 %v1691, %v5115
    %v6268 = vmul.f32 %v2042, %v5117
    %v6269 = vmul.f32 %v2044, %v5119
    %v6270 = vmul.f32 %v634, %v5121
    %v6271 = vmul.f32 %v636, %v5123
    %v6272 = vmul.f32 %v987, %v5125
    %v6273 = vmul.f32 %v989, %v5127
    %v6274 = vmul.f32 %v1340, %v5129
    %v6275 = vmul.f32 %v1342, %v5131
    %v6276 = vmul.f32 %v1693, %v5133
    %v6277 = vmul.f32 %v1695, %v5135
    %v6278 = vmul.f32 %v2046, %v5137
    %v6279 = vmul.f32 %v2048, %v5139
    %v6280 = vmul.f32 %v640, %v5141
    %v6281 = vmul.f32 %v642, %v5143
    %v6282 = vmul.f32 %v993, %v5145
    %v6283 = vmul.f32 %v995, %v5147
    %v6284 = vmul.f32 %v1346, %v5149
    %v6285 = vmul.f32 %v1348, %v5151
    %v6286 = vmul.f32 %v1699, %v5153
    %v6287 = vmul.f32 %v1701, %v5155
    %v6288 = vmul.f32 %v2052, %v5157
    %v6289 = vmul.f32 %v2054, %v5159
    %v6290 = vmul.f32 %v644, %v5161
    %v6291 = vmul.f32 %v646, %v5163
    %v6292 = vmul.f32 %v997, %v5165
    %v6293 = vmul.f32 %v999, %v5167
    %v6294 = vmul.f32 %v1350, %v5169
    %v6295 = vmul.f32 %v1352, %v5171
    %v6296 = vmul.f32 %v1703, %v5173
    %v6297 = vmul.f32 %v1705, %v5175
    %v6298 = vmul.f32 %v2056, %v5177
    %v6299 = vmul.f32 %v2058, %v5179
    %v6300 = vmul.f32 %v650, %v5181
    %v6301 = vmul.f32 %v652, %v5183
    %v6302 = vmul.f32 %v1003, %v5185
    %v6303 = vmul.f32 %v1005, %v5187
    %v6304 = vmul.f32 %v1356, %v5189
    %v6305 = vmul.f32 %v1358, %v5191
    %v6306 = vmul.f32 %v1709, %v5193
    %v6307 = vmul.f32 %v1711, %v5195
    %v6308 = vmul.f32 %v2062, %v5197
    %v6309 = vmul.f32 %v2064, %v5199
    %v6310 = vmul.f32 %v654, %v5201
    %v6311 = vmul.f32 %v656, %v5203
    %v6312 = vmul.f32 %v1007, %v5205
    %v6313 = vmul.f32 %v1009, %v5207
    %v6314 = vmul.f32 %v1360, %v5209
    %v6315 = vmul.f32 %v1362, %v5211
    %v6316 = vmul.f32 %v1713, %v5213
    %v6317 = vmul.f32 %v1715, %v5215
    %v6318 = vmul.f32 %v2066, %v5217
    %v6319 = vmul.f32 %v2068, %v5219
    %v6320 = vmul.f32 %v660, %v5221
    %v6321 = vmul.f32 %v662, %v5223
    %v6322 = vmul.f32 %v1013, %v5225
    %v6323 = vmul.f32 %v1015, %v5227
    %v6324 = vmul.f32 %v1366, %v5229
    %v6325 = vmul.f32 %v1368, %v5231
    %v6326 = vmul.f32 %v1719, %v5233
    %v6327 = vmul.f32 %v1721, %v5235
    %v6328 = vmul.f32 %v2072, %v5237
    %v6329 = vmul.f32 %v2074, %v5239
    %v6330 = vmul.f32 %v664, %v5241
    %v6331 = vmul.f32 %v666, %v5243
    %v6332 = vmul.f32 %v1017, %v5245
    %v6333 = vmul.f32 %v1019, %v5247
    %v6334 = vmul.f32 %v1370, %v5249
    %v6335 = vmul.f32 %v1372, %v5251
    %v6336 = vmul.f32 %v1723, %v5253
    %v6337 = vmul.f32 %v1725, %v5255
    %v6338 = vmul.f32 %v2076, %v5257
    %v6339 = vmul.f32 %v2078, %v5259
    %v6340 = vmul.f32 %v670, %v5261
    %v6341 = vmul.f32 %v672, %v5263
    %v6342 = vmul.f32 %v1023, %v5265
    %v6343 = vmul.f32 %v1025, %v5267
    %v6344 = vmul.f32 %v1376, %v5269
    %v6345 = vmul.f32 %v1378, %v5271
    %v6346 = vmul.f32 %v1729, %v5273
    %v6347 = vmul.f32 %v1731, %v5275
    %v6348 = vmul.f32 %v2082, %v5277
    %v6349 = vmul.f32 %v2084, %v5279
    %v6350 = vmul.f32 %v674, %v5281
    %v6351 = vmul.f32 %v676, %v5283
    %v6352 = vmul.f32 %v1027, %v5285
    %v6353 = vmul.f32 %v1029, %v5287
    %v6354 = vmul.f32 %v1380, %v5289
    %v6355 = vmul.f32 %v1382, %v5291
    %v6356 = vmul.f32 %v1733, %v5293
    %v6357 = vmul.f32 %v1735, %v5295
    %v6358 = vmul.f32 %v2086, %v5297
    %v6359 = vmul.f32 %v2088, %v5299
    %v6360 = vmul.f32 %v680, %v5301
    %v6361 = vmul.f32 %v682, %v5303
    %v6362 = vmul.f32 %v1033, %v5305
    %v6363 = vmul.f32 %v1035, %v5307
    %v6364 = vmul.f32 %v1386, %v5309
    %v6365 = vmul.f32 %v1388, %v5311
    %v6366 = vmul.f32 %v1739, %v5313
    %v6367 = vmul.f32 %v1741, %v5315
    %v6368 = vmul.f32 %v2092, %v5317
    %v6369 = vmul.f32 %v2094, %v5319
    %v6370 = vmul.f32 %v684, %v5321
    %v6371 = vmul.f32 %v686, %v5323
    %v6372 = vmul.f32 %v1037, %v5325
    %v6373 = vmul.f32 %v1039, %v5327
    %v6374 = vmul.f32 %v1390, %v5329
    %v6375 = vmul.f32 %v1392, %v5331
    %v6376 = vmul.f32 %v1743, %v5333
    %v6377 = vmul.f32 %v1745, %v5335
    %v6378 = vmul.f32 %v2096, %v5337
    %v6379 = vmul.f32 %v2098, %v5339
    %v6380 = vmul.f32 %v690, %v5341
    %v6381 = vmul.f32 %v692, %v5343
    %v6382 = vmul.f32 %v1043, %v5345
    %v6383 = vmul.f32 %v1045, %v5347
    %v6384 = vmul.f32 %v1396, %v5349
    %v6385 = vmul.f32 %v1398, %v5351
    %v6386 = vmul.f32 %v1749, %v5353
    %v6387 = vmul.f32 %v1751, %v5355
    %v6388 = vmul.f32 %v2102, %v5357
    %v6389 = vmul.f32 %v2104, %v5359
    %v6390 = vmul.f32 %v694, %v5361
    %v6391 = vmul.f32 %v696, %v5363
    %v6392 = vmul.f32 %v1047, %v5365
    %v6393 = vmul.f32 %v1049, %v5367
    %v6394 = vmul.f32 %v1400, %v5369
    %v6395 = vmul.f32 %v1402, %v5371
    %v6396 = vmul.f32 %v1753, %v5373
    %v6397 = vmul.f32 %v1755, %v5375
    %v6398 = vmul.f32 %v2106, %v5377
    %v6399 = vmul.f32 %v2108, %v5379
    %v6400 = vmul.f32 %v700, %v5381
    %v6401 = vmul.f32 %v702, %v5383
    %v6402 = vmul.f32 %v1053, %v5385
    %v6403 = vmul.f32 %v1055, %v5387
    %v6404 = vmul.f32 %v1406, %v5389
    %v6405 = vmul.f32 %v1408, %v5391
    %v6406 = vmul.f32 %v1759, %v5393
    %v6407 = vmul.f32 %v1761, %v5395
    %v6408 = vmul.f32 %v2112, %v5397
    %v6409 = vmul.f32 %v2114, %v5399
    %v6410 = vmul.f32 %v704, %v5401
    %v6411 = vmul.f32 %v706, %v5403
    %v6412 = vmul.f32 %v1057, %v5405
    %v6413 = vmul.f32 %v1059, %v5407
    %v6414 = vmul.f32 %v1410, %v5409
    %v6415 = vmul.f32 %v1412, %v5411
    %v6416 = vmul.f32 %v1763, %v5413
    %v6417 = vmul.f32 %v1765, %v5415
    %v6418 = vmul.f32 %v2116, %v5417
    %v6419 = vmul.f32 %v2118, %v5419
    %v6420 = vmul.f32 %v710, %v5421
    %v6421 = vmul.f32 %v712, %v5423
    %v6422 = vmul.f32 %v1063, %v5425
    %v6423 = vmul.f32 %v1065, %v5427
    %v6424 = vmul.f32 %v1416, %v5429
    %v6425 = vmul.f32 %v1418, %v5431
    %v6426 = vmul.f32 %v1769, %v5433
    %v6427 = vmul.f32 %v1771, %v5435
    %v6428 = vmul.f32 %v2122, %v5437
    %v6429 = vmul.f32 %v2124, %v5439
    %v6430 = vmul.f32 %v714, %v5441
    %v6431 = vmul.f32 %v716, %v5443
    %v6432 = vmul.f32 %v1067, %v5445
    %v6433 = vmul.f32 %v1069, %v5447
    %v6434 = vmul.f32 %v1420, %v5449
    %v6435 = vmul.f32 %v1422, %v5451
    %v6436 = vmul.f32 %v1773, %v5453
    %v6437 = vmul.f32 %v1775, %v5455
    %v6438 = vmul.f32 %v2126, %v5457
    %v6439 = vmul.f32 %v2128, %v5459
    %v6440 = vmul.f32 %v720, %v5461
    %v6441 = vmul.f32 %v722, %v5463
    %v6442 = vmul.f32 %v1073, %v5465
    %v6443 = vmul.f32 %v1075, %v5467
    %v6444 = vmul.f32 %v1426, %v5469
    %v6445 = vmul.f32 %v1428, %v5471
    %v6446 = vmul.f32 %v1779, %v5473
    %v6447 = vmul.f32 %v1781, %v5475
    %v6448 = vmul.f32 %v2132, %v5477
    %v6449 = vmul.f32 %v2134, %v5479
    %v6450 = vmul.f32 %v724, %v5481
    %v6451 = vmul.f32 %v726, %v5483
    %v6452 = vmul.f32 %v1077, %v5485
    %v6453 = vmul.f32 %v1079, %v5487
    %v6454 = vmul.f32 %v1430, %v5489
    %v6455 = vmul.f32 %v1432, %v5491
    %v6456 = vmul.f32 %v1783, %v5493
    %v6457 = vmul.f32 %v1785, %v5495
    %v6458 = vmul.f32 %v2136, %v5497
    %v6459 = vmul.f32 %v2138, %v5499
    %v6460 = vmul.f32 %v730, %v5501
    %v6461 = vmul.f32 %v732, %v5503
    %v6462 = vmul.f32 %v1083, %v5505
    %v6463 = vmul.f32 %v1085, %v5507
    %v6464 = vmul.f32 %v1436, %v5509
    %v6465 = vmul.f32 %v1438, %v5511
    %v6466 = vmul.f32 %v1789, %v5513
    %v6467 = vmul.f32 %v1791, %v5515
    %v6468 = vmul.f32 %v2142, %v5517
    %v6469 = vmul.f32 %v2144, %v5519
    %v6470 = vmul.f32 %v734, %v5521
    %v6471 = vmul.f32 %v736, %v5523
    %v6472 = vmul.f32 %v1087, %v5525
    %v6473 = vmul.f32 %v1089, %v5527
    %v6474 = vmul.f32 %v1440, %v5529
    %v6475 = vmul.f32 %v1442, %v5531
    %v6476 = vmul.f32 %v1793, %v5533
    %v6477 = vmul.f32 %v1795, %v5535
    %v6478 = vmul.f32 %v2146, %v5537
    %v6479 = vmul.f32 %v2148, %v5539
    %v6480 = vmul.f32 %v740, %v5541
    %v6481 = vmul.f32 %v742, %v5543
    %v6482 = vmul.f32 %v1093, %v5545
    %v6483 = vmul.f32 %v1095, %v5547
    %v6484 = vmul.f32 %v1446, %v5549
    %v6485 = vmul.f32 %v1448, %v5551
    %v6486 = vmul.f32 %v1799, %v5553
    %v6487 = vmul.f32 %v1801, %v5555
    %v6488 = vmul.f32 %v2152, %v5557
    %v6489 = vmul.f32 %v2154, %v5559
    %v6490 = vmul.f32 %v744, %v5561
    %v6491 = vmul.f32 %v746, %v5563
    %v6492 = vmul.f32 %v1097, %v5565
    %v6493 = vmul.f32 %v1099, %v5567
    %v6494 = vmul.f32 %v1450, %v5569
    %v6495 = vmul.f32 %v1452, %v5571
    %v6496 = vmul.f32 %v1803, %v5573
    %v6497 = vmul.f32 %v1805, %v5575
    %v6498 = vmul.f32 %v2156, %v5577
    %v6499 = vmul.f32 %v2158, %v5579
    %v6500 = vmul.f32 %v750, %v5581
    %v6501 = vmul.f32 %v752, %v5583
    %v6502 = vmul.f32 %v1103, %v5585
    %v6503 = vmul.f32 %v1105, %v5587
    %v6504 = vmul.f32 %v1456, %v5589
    %v6505 = vmul.f32 %v1458, %v5591
    %v6506 = vmul.f32 %v1809, %v5593
    %v6507 = vmul.f32 %v1811, %v5595
    %v6508 = vmul.f32 %v2162, %v5597
    %v6509 = vmul.f32 %v2164, %v5599
    %v6510 = vmul.f32 %v754, %v5601
    %v6511 = vmul.f32 %v756, %v5603
    %v6512 = vmul.f32 %v1107, %v5605
    %v6513 = vmul.f32 %v1109, %v5607
    %v6514 = vmul.f32 %v1460, %v5609
    %v6515 = vmul.f32 %v1462, %v5611
    %v6516 = vmul.f32 %v1813, %v5613
    %v6517 = vmul.f32 %v1815, %v5615
    %v6518 = vmul.f32 %v2166, %v5617
    %v6519 = vmul.f32 %v2168, %v5619
    %v6520 = vmul.f32 %v760, %v5621
    %v6521 = vmul.f32 %v762, %v5623
    %v6522 = vmul.f32 %v1113, %v5625
    %v6523 = vmul.f32 %v1115, %v5627
    %v6524 = vmul.f32 %v1466, %v5629
    %v6525 = vmul.f32 %v1468, %v5631
    %v6526 = vmul.f32 %v1819, %v5633
    %v6527 = vmul.f32 %v1821, %v5635
    %v6528 = vmul.f32 %v2172, %v5637
    %v6529 = vmul.f32 %v2174, %v5639
    %v6530 = vmul.f32 %v764, %v5641
    %v6531 = vmul.f32 %v766, %v5643
    %v6532 = vmul.f32 %v1117, %v5645
    %v6533 = vmul.f32 %v1119, %v5647
    %v6534 = vmul.f32 %v1470, %v5649
    %v6535 = vmul.f32 %v1472, %v5651
    %v6536 = vmul.f32 %v1823, %v5653
    %v6537 = vmul.f32 %v1825, %v5655
    %v6538 = vmul.f32 %v2176, %v5657
    %v6539 = vmul.f32 %v2178, %v5659
    %v6540 = vmul.f32 %v770, %v5661
    %v6541 = vmul.f32 %v772, %v5663
    %v6542 = vmul.f32 %v1123, %v5665
    %v6543 = vmul.f32 %v1125, %v5667
    %v6544 = vmul.f32 %v1476, %v5669
    %v6545 = vmul.f32 %v1478, %v5671
    %v6546 = vmul.f32 %v1829, %v5673
    %v6547 = vmul.f32 %v1831, %v5675
    %v6548 = vmul.f32 %v2182, %v5677
    %v6549 = vmul.f32 %v2184, %v5679
    %v6550 = vmul.f32 %v774, %v5681
    %v6551 = vmul.f32 %v776, %v5683
    %v6552 = vmul.f32 %v1127, %v5685
    %v6553 = vmul.f32 %v1129, %v5687
    %v6554 = vmul.f32 %v1480, %v5689
    %v6555 = vmul.f32 %v1482, %v5691
    %v6556 = vmul.f32 %v1833, %v5693
    %v6557 = vmul.f32 %v1835, %v5695
    %v6558 = vmul.f32 %v2186, %v5697
    %v6559 = vmul.f32 %v2188, %v5699
    %v6560 = vmul.f32 %v780, %v5701
    %v6561 = vmul.f32 %v782, %v5703
    %v6562 = vmul.f32 %v1133, %v5705
    %v6563 = vmul.f32 %v1135, %v5707
    %v6564 = vmul.f32 %v1486, %v5709
    %v6565 = vmul.f32 %v1488, %v5711
    %v6566 = vmul.f32 %v1839, %v5713
    %v6567 = vmul.f32 %v1841, %v5715
    %v6568 = vmul.f32 %v2192, %v5717
    %v6569 = vmul.f32 %v2194, %v5719
    %v6570 = vmul.f32 %v784, %v5721
    %v6571 = vmul.f32 %v786, %v5723
    %v6572 = vmul.f32 %v1137, %v5725
    %v6573 = vmul.f32 %v1139, %v5727
    %v6574 = vmul.f32 %v1490, %v5729
    %v6575 = vmul.f32 %v1492, %v5731
    %v6576 = vmul.f32 %v1843, %v5733
    %v6577 = vmul.f32 %v1845, %v5735
    %v6578 = vmul.f32 %v2196, %v5737
    %v6579 = vmul.f32 %v2198, %v5739
    %v6580 = vmul.f32 %v790, %v5741
    %v6581 = vmul.f32 %v792, %v5743
    %v6582 = vmul.f32 %v1143, %v5745
    %v6583 = vmul.f32 %v1145, %v5747
    %v6584 = vmul.f32 %v1496, %v5749
    %v6585 = vmul.f32 %v1498, %v5751
    %v6586 = vmul.f32 %v1849, %v5753
    %v6587 = vmul.f32 %v1851, %v5755
    %v6588 = vmul.f32 %v2202, %v5757
    %v6589 = vmul.f32 %v2204, %v5759
    %v6590 = vmul.f32 %v794, %v5761
    %v6591 = vmul.f32 %v796, %v5763
    %v6592 = vmul.f32 %v1147, %v5765
    %v6593 = vmul.f32 %v1149, %v5767
    %v6594 = vmul.f32 %v1500, %v5769
    %v6595 = vmul.f32 %v1502, %v5771
    %v6596 = vmul.f32 %v1853, %v5773
    %v6597 = vmul.f32 %v1855, %v5775
    %v6598 = vmul.f32 %v2206, %v5777
    %v6599 = vmul.f32 %v2208, %v5779
    %v6600 = vmul.f32 %v800, %v5781
    %v6601 = vmul.f32 %v802, %v5783
    %v6602 = vmul.f32 %v1153, %v5785
    %v6603 = vmul.f32 %v1155, %v5787
    %v6604 = vmul.f32 %v1506, %v5789
    %v6605 = vmul.f32 %v1508, %v5791
    %v6606 = vmul.f32 %v1859, %v5793
    %v6607 = vmul.f32 %v1861, %v5795
    %v6608 = vmul.f32 %v2212, %v5797
    %v6609 = vmul.f32 %v2214, %v5799
    %v6610 = vmul.f32 %v804, %v5801
    %v6611 = vmul.f32 %v806, %v5803
    %v6612 = vmul.f32 %v1157, %v5805
    %v6613 = vmul.f32 %v1159, %v5807
    %v6614 = vmul.f32 %v1510, %v5809
    %v6615 = vmul.f32 %v1512, %v5811
    %v6616 = vmul.f32 %v1863, %v5813
    %v6617 = vmul.f32 %v1865, %v5815
    %v6618 = vmul.f32 %v2216, %v5817
    %v6619 = vmul.f32 %v2218, %v5819
    %v6620 = vmul.f32 %v810, %v5821
    %v6621 = vmul.f32 %v812, %v5823
    %v6622 = vmul.f32 %v1163, %v5825
    %v6623 = vmul.f32 %v1165, %v5827
    %v6624 = vmul.f32 %v1516, %v5829
    %v6625 = vmul.f32 %v1518, %v5831
    %v6626 = vmul.f32 %v1869, %v5833
    %v6627 = vmul.f32 %v1871, %v5835
    %v6628 = vmul.f32 %v2222, %v5837
    %v6629 = vmul.f32 %v2224, %v5839
    %v6630 = vmul.f32 %v814, %v5841
    %v6631 = vmul.f32 %v816, %v5843
    %v6632 = vmul.f32 %v1167, %v5845
    %v6633 = vmul.f32 %v1169, %v5847
    %v6634 = vmul.f32 %v1520, %v5849
    %v6635 = vmul.f32 %v1522, %v5851
    %v6636 = vmul.f32 %v1873, %v5853
    %v6637 = vmul.f32 %v1875, %v5855
    %v6638 = vmul.f32 %v2226, %v5857
    %v6639 = vmul.f32 %v2228, %v5859
    %v6640 = vmul.f32 %v820, %v5861
    %v6641 = vmul.f32 %v822, %v5863
    %v6642 = vmul.f32 %v1173, %v5865
    %v6643 = vmul.f32 %v1175, %v5867
    %v6644 = vmul.f32 %v1526, %v5869
    %v6645 = vmul.f32 %v1528, %v5871
    %v6646 = vmul.f32 %v1879, %v5873
    %v6647 = vmul.f32 %v1881, %v5875
    %v6648 = vmul.f32 %v2232, %v5877
    %v6649 = vmul.f32 %v2234, %v5879
    %v6650 = vmul.f32 %v824, %v5881
    %v6651 = vmul.f32 %v826, %v5883
    %v6652 = vmul.f32 %v1177, %v5885
    %v6653 = vmul.f32 %v1179, %v5887
    %v6654 = vmul.f32 %v1530, %v5889
    %v6655 = vmul.f32 %v1532, %v5891
    %v6656 = vmul.f32 %v1883, %v5893
    %v6657 = vmul.f32 %v1885, %v5895
    %v6658 = vmul.f32 %v2236, %v5897
    %v6659 = vmul.f32 %v2238, %v5899
    %v6660 = vmul.f32 %v830, %v5901
    %v6661 = vmul.f32 %v832, %v5903
    %v6662 = vmul.f32 %v1183, %v5905
    %v6663 = vmul.f32 %v1185, %v5907
    %v6664 = vmul.f32 %v1536, %v5909
    %v6665 = vmul.f32 %v1538, %v5911
    %v6666 = vmul.f32 %v1889, %v5913
    %v6667 = vmul.f32 %v1891, %v5915
    %v6668 = vmul.f32 %v2242, %v5917
    %v6669 = vmul.f32 %v2244, %v5919
    %v6670 = vmul.f32 %v834, %v5921
    %v6671 = vmul.f32 %v836, %v5923
    %v6672 = vmul.f32 %v1187, %v5925
    %v6673 = vmul.f32 %v1189, %v5927
    %v6674 = vmul.f32 %v1540, %v5929
    %v6675 = vmul.f32 %v1542, %v5931
    %v6676 = vmul.f32 %v1893, %v5933
    %v6677 = vmul.f32 %v1895, %v5935
    %v6678 = vmul.f32 %v2246, %v5937
    %v6679 = vmul.f32 %v2248, %v5939
    %v6680 = vmul.f32 %v840, %v5941
    %v6681 = vmul.f32 %v842, %v5943
    %v6682 = vmul.f32 %v1193, %v5945
    %v6683 = vmul.f32 %v1195, %v5947
    %v6684 = vmul.f32 %v1546, %v5949
    %v6685 = vmul.f32 %v1548, %v5951
    %v6686 = vmul.f32 %v1899, %v5953
    %v6687 = vmul.f32 %v1901, %v5955
    %v6688 = vmul.f32 %v2252, %v5957
    %v6689 = vmul.f32 %v2254, %v5959
    %v6690 = vmul.f32 %v844, %v5961
    %v6691 = vmul.f32 %v846, %v5963
    %v6692 = vmul.f32 %v1197, %v5965
    %v6693 = vmul.f32 %v1199, %v5967
    %v6694 = vmul.f32 %v1550, %v5969
    %v6695 = vmul.f32 %v1552, %v5971
    %v6696 = vmul.f32 %v1903, %v5973
    %v6697 = vmul.f32 %v1905, %v5975
    %v6698 = vmul.f32 %v2256, %v5977
    %v6699 = vmul.f32 %v2258, %v5979
    %v6700 = vmul.f32 %v850, %v5981
    %v6701 = vmul.f32 %v852, %v5983
    %v6702 = vmul.f32 %v1203, %v5985
    %v6703 = vmul.f32 %v1205, %v5987
    %v6704 = vmul.f32 %v1556, %v5989
    %v6705 = vmul.f32 %v1558, %v5991
    %v6706 = vmul.f32 %v1909, %v5993
    %v6707 = vmul.f32 %v1911, %v5995
    %v6708 = vmul.f32 %v2262, %v5997
    %v6709 = vmul.f32 %v2264, %v5999
    %v6710 = vmul.f32 %v854, %v6001
    %v6711 = vmul.f32 %v856, %v6003
    %v6712 = vmul.f32 %v1207, %v6005
    %v6713 = vmul.f32 %v1209, %v6007
    %v6714 = vmul.f32 %v1560, %v6009
    %v6715 = vmul.f32 %v1562, %v6011
    %v6716 = vmul.f32 %v1913, %v6013
    %v6717 = vmul.f32 %v1915, %v6015
    %v6718 = vmul.f32 %v2266, %v6017
    %v6719 = vmul.f32 %v2268, %v6019
    %v6720 = vmul.f32 %v860, %v6021
    %v6721 = vmul.f32 %v862, %v6023
    %v6722 = vmul.f32 %v1213, %v6025
    %v6723 = vmul.f32 %v1215, %v6027
    %v6724 = vmul.f32 %v1566, %v6029
    %v6725 = vmul.f32 %v1568, %v6031
    %v6726 = vmul.f32 %v1919, %v6033
    %v6727 = vmul.f32 %v1921, %v6035
    %v6728 = vmul.f32 %v2272, %v6037
    %v6729 = vmul.f32 %v2274, %v6039
    %v6730 = vmul.f32 %v864, %v6041
    %v6731 = vmul.f32 %v866, %v6043
    %v6732 = vmul.f32 %v1217, %v6045
    %v6733 = vmul.f32 %v1219, %v6047
    %v6734 = vmul.f32 %v1570, %v6049
    %v6735 = vmul.f32 %v1572, %v6051
    %v6736 = vmul.f32 %v1923, %v6053
    %v6737 = vmul.f32 %v1925, %v6055
    %v6738 = vmul.f32 %v2276, %v6057
    %v6739 = vmul.f32 %v2278, %v6059
    %v6740 = vmul.f32 %v870, %v6061
    %v6741 = vmul.f32 %v872, %v6063
    %v6742 = vmul.f32 %v1223, %v6065
    %v6743 = vmul.f32 %v1225, %v6067
    %v6744 = vmul.f32 %v1576, %v6069
    %v6745 = vmul.f32 %v1578, %v6071
    %v6746 = vmul.f32 %v1929, %v6073
    %v6747 = vmul.f32 %v1931, %v6075
    %v6748 = vmul.f32 %v2282, %v6077
    %v6749 = vmul.f32 %v2284, %v6079
    %v6750 = vmul.f32 %v874, %v6081
    %v6751 = vmul.f32 %v876, %v6083
    %v6752 = vmul.f32 %v1227, %v6085
    %v6753 = vmul.f32 %v1229, %v6087
    %v6754 = vmul.f32 %v1580, %v6089
    %v6755 = vmul.f32 %v1582, %v6091
    %v6756 = vmul.f32 %v1933, %v6093
    %v6757 = vmul.f32 %v1935, %v6095
    %v6758 = vmul.f32 %v2286, %v6097
    %v6759 = vmul.f32 %v2288, %v6099
    %v6760 = vmul.f32 %v880, %v6101
    %v6761 = vmul.f32 %v882, %v6103
    %v6762 = vmul.f32 %v1233, %v6105
    %v6763 = vmul.f32 %v1235, %v6107
    %v6764 = vmul.f32 %v1586, %v6109
    %v6765 = vmul.f32 %v1588, %v6111
    %v6766 = vmul.f32 %v1939, %v6113
    %v6767 = vmul.f32 %v1941, %v6115
    %v6768 = vmul.f32 %v2292, %v6117
    %v6769 = vmul.f32 %v2294, %v6119
    %v6770 = vmul.f32 %v884, %v6121
    %v6771 = vmul.f32 %v886, %v6123
    %v6772 = vmul.f32 %v1237, %v6125
    %v6773 = vmul.f32 %v1239, %v6127
    %v6774 = vmul.f32 %v1590, %v6129
    %v6775 = vmul.f32 %v1592, %v6131
    %v6776 = vmul.f32 %v1943, %v6133
    %v6777 = vmul.f32 %v1945, %v6135
    %v6778 = vmul.f32 %v2296, %v6137
    %v6779 = vmul.f32 %v2298, %v6139
    %v6780 = vld [vmem:[#allocation2] sm:$0xff]
    %v6781 = vld [vmem:[#allocation2 + $0x8] sm:$0xff]
    %v6782 = vld [vmem:[#allocation2 + $0x10] sm:$0xff]
    %v6783 = vld [vmem:[#allocation2 + $0x18] sm:$0xff]
    %v6784 = vld [vmem:[#allocation2 + $0x20] sm:$0xff]
    %v6785 = vld [vmem:[#allocation2 + $0x28] sm:$0xff]
    %v6786 = vld [vmem:[#allocation2 + $0x30] sm:$0xff]
    %v6787 = vld [vmem:[#allocation2 + $0x38] sm:$0xff]
    %v6788 = vld [vmem:[#allocation2 + $0x40] sm:$0xff]
    %v6789 = vld [vmem:[#allocation2 + $0x48] sm:$0xff]
    %v6790 = vadd.f32 %v6140, %v6150
    %v6791 = vadd.f32 %v6790, %v6160
    %v6792 = vadd.f32 %v6791, %v6170
    %v6793 = vadd.f32 %v6792, %v6180
    %v6794 = vadd.f32 %v6793, %v6190
    %v6795 = vadd.f32 %v6794, %v6200
    %v6796 = vadd.f32 %v6795, %v6210
    %v6797 = vrot.slane %v6796, 4
    %v6798 = vadd.f32 %v6796, %v6797
    %v6799 = vrot.slane %v6798, 2
    %v6800 = vadd.f32 %v6798, %v6799
    %v6801 = vrot.slane %v6800, 1
    %v6802 = vadd.f32 %v6800, %v6801
    %v6803 = vadd.f32 %v6141, %v6151
    %v6804 = vadd.f32 %v6803, %v6161
    %v6805 = vadd.f32 %v6804, %v6171
    %v6806 = vadd.f32 %v6805, %v6181
    %v6807 = vadd.f32 %v6806, %v6191
    %v6808 = vadd.f32 %v6807, %v6201
    %v6809 = vadd.f32 %v6808, %v6211
    %v6810 = vrot.slane %v6809, 4
    %v6811 = vadd.f32 %v6809, %v6810
    %v6812 = vrot.slane %v6811, 2
    %v6813 = vadd.f32 %v6811, %v6812
    %v6814 = vrot.slane %v6813, 1
    %v6815 = vadd.f32 %v6813, %v6814
    %v6816 = vadd.f32 %v6142, %v6152
    %v6817 = vadd.f32 %v6816, %v6162
    %v6818 = vadd.f32 %v6817, %v6172
    %v6819 = vadd.f32 %v6818, %v6182
    %v6820 = vadd.f32 %v6819, %v6192
    %v6821 = vadd.f32 %v6820, %v6202
    %v6822 = vadd.f32 %v6821, %v6212
    %v6823 = vrot.slane %v6822, 4
    %v6824 = vadd.f32 %v6822, %v6823
    %v6825 = vrot.slane %v6824, 2
    %v6826 = vadd.f32 %v6824, %v6825
    %v6827 = vrot.slane %v6826, 1
    %v6828 = vadd.f32 %v6826, %v6827
    %v6829 = vadd.f32 %v6143, %v6153
    %v6830 = vadd.f32 %v6829, %v6163
    %v6831 = vadd.f32 %v6830, %v6173
    %v6832 = vadd.f32 %v6831, %v6183
    %v6833 = vadd.f32 %v6832, %v6193
    %v6834 = vadd.f32 %v6833, %v6203
    %v6835 = vadd.f32 %v6834, %v6213
    %v6836 = vrot.slane %v6835, 4
    %v6837 = vadd.f32 %v6835, %v6836
    %v6838 = vrot.slane %v6837, 2
    %v6839 = vadd.f32 %v6837, %v6838
    %v6840 = vrot.slane %v6839, 1
    %v6841 = vadd.f32 %v6839, %v6840
    %v6842 = vadd.f32 %v6144, %v6154
    %v6843 = vadd.f32 %v6842, %v6164
    %v6844 = vadd.f32 %v6843, %v6174
    %v6845 = vadd.f32 %v6844, %v6184
    %v6846 = vadd.f32 %v6845, %v6194
    %v6847 = vadd.f32 %v6846, %v6204
    %v6848 = vadd.f32 %v6847, %v6214
    %v6849 = vrot.slane %v6848, 4
    %v6850 = vadd.f32 %v6848, %v6849
    %v6851 = vrot.slane %v6850, 2
    %v6852 = vadd.f32 %v6850, %v6851
    %v6853 = vrot.slane %v6852, 1
    %v6854 = vadd.f32 %v6852, %v6853
    %v6855 = vadd.f32 %v6145, %v6155
    %v6856 = vadd.f32 %v6855, %v6165
    %v6857 = vadd.f32 %v6856, %v6175
    %v6858 = vadd.f32 %v6857, %v6185
    %v6859 = vadd.f32 %v6858, %v6195
    %v6860 = vadd.f32 %v6859, %v6205
    %v6861 = vadd.f32 %v6860, %v6215
    %v6862 = vrot.slane %v6861, 4
    %v6863 = vadd.f32 %v6861, %v6862
    %v6864 = vrot.slane %v6863, 2
    %v6865 = vadd.f32 %v6863, %v6864
    %v6866 = vrot.slane %v6865, 1
    %v6867 = vadd.f32 %v6865, %v6866
    %v6868 = vadd.f32 %v6146, %v6156
    %v6869 = vadd.f32 %v6868, %v6166
    %v6870 = vadd.f32 %v6869, %v6176
    %v6871 = vadd.f32 %v6870, %v6186
    %v6872 = vadd.f32 %v6871, %v6196
    %v6873 = vadd.f32 %v6872, %v6206
    %v6874 = vadd.f32 %v6873, %v6216
    %v6875 = vrot.slane %v6874, 4
    %v6876 = vadd.f32 %v6874, %v6875
    %v6877 = vrot.slane %v6876, 2
    %v6878 = vadd.f32 %v6876, %v6877
    %v6879 = vrot.slane %v6878, 1
    %v6880 = vadd.f32 %v6878, %v6879
    %v6881 = vadd.f32 %v6147, %v6157
    %v6882 = vadd.f32 %v6881, %v6167
    %v6883 = vadd.f32 %v6882, %v6177
    %v6884 = vadd.f32 %v6883, %v6187
    %v6885 = vadd.f32 %v6884, %v6197
    %v6886 = vadd.f32 %v6885, %v6207
    %v6887 = vadd.f32 %v6886, %v6217
    %v6888 = vrot.slane %v6887, 4
    %v6889 = vadd.f32 %v6887, %v6888
    %v6890 = vrot.slane %v6889, 2
    %v6891 = vadd.f32 %v6889, %v6890
    %v6892 = vrot.slane %v6891, 1
    %v6893 = vadd.f32 %v6891, %v6892
    %v6894 = vadd.f32 %v6148, %v6158
    %v6895 = vadd.f32 %v6894, %v6168
    %v6896 = vadd.f32 %v6895, %v6178
    %v6897 = vadd.f32 %v6896, %v6188
    %v6898 = vadd.f32 %v6897, %v6198
    %v6899 = vadd.f32 %v6898, %v6208
    %v6900 = vadd.f32 %v6899, %v6218
    %v6901 = vrot.slane %v6900, 4
    %v6902 = vadd.f32 %v6900, %v6901
    %v6903 = vrot.slane %v6902, 2
    %v6904 = vadd.f32 %v6902, %v6903
    %v6905 = vrot.slane %v6904, 1
    %v6906 = vadd.f32 %v6904, %v6905
    %v6907 = vadd.f32 %v6149, %v6159
    %v6908 = vadd.f32 %v6907, %v6169
    %v6909 = vadd.f32 %v6908, %v6179
    %v6910 = vadd.f32 %v6909, %v6189
    %v6911 = vadd.f32 %v6910, %v6199
    %v6912 = vadd.f32 %v6911, %v6209
    %v6913 = vadd.f32 %v6912, %v6219
    %v6914 = vrot.slane %v6913, 4
    %v6915 = vadd.f32 %v6913, %v6914
    %v6916 = vrot.slane %v6915, 2
    %v6917 = vadd.f32 %v6915, %v6916
    %v6918 = vrot.slane %v6917, 1
    %v6919 = vadd.f32 %v6917, %v6918
    %v6920 = vadd.f32 %v6220, %v6230
    %v6921 = vadd.f32 %v6920, %v6240
    %v6922 = vadd.f32 %v6921, %v6250
    %v6923 = vadd.f32 %v6922, %v6260
    %v6924 = vadd.f32 %v6923, %v6270
    %v6925 = vadd.f32 %v6924, %v6280
    %v6926 = vadd.f32 %v6925, %v6290
    %v6927 = vrot.slane %v6926, 4
    %v6928 = vadd.f32 %v6926, %v6927
    %v6929 = vrot.slane %v6928, 2
    %v6930 = vadd.f32 %v6928, %v6929
    %v6931 = vrot.slane %v6930, 1
    %v6932 = vadd.f32 %v6930, %v6931
    %v6933 = vadd.f32 %v6221, %v6231
    %v6934 = vadd.f32 %v6933, %v6241
    %v6935 = vadd.f32 %v6934, %v6251
    %v6936 = vadd.f32 %v6935, %v6261
    %v6937 = vadd.f32 %v6936, %v6271
    %v6938 = vadd.f32 %v6937, %v6281
    %v6939 = vadd.f32 %v6938, %v6291
    %v6940 = vrot.slane %v6939, 4
    %v6941 = vadd.f32 %v6939, %v6940
    %v6942 = vrot.slane %v6941, 2
    %v6943 = vadd.f32 %v6941, %v6942
    %v6944 = vrot.slane %v6943, 1
    %v6945 = vadd.f32 %v6943, %v6944
    %v6946 = vadd.f32 %v6222, %v6232
    %v6947 = vadd.f32 %v6946, %v6242
    %v6948 = vadd.f32 %v6947, %v6252
    %v6949 = vadd.f32 %v6948, %v6262
    %v6950 = vadd.f32 %v6949, %v6272
    %v6951 = vadd.f32 %v6950, %v6282
    %v6952 = vadd.f32 %v6951, %v6292
    %v6953 = vrot.slane %v6952, 4
    %v6954 = vadd.f32 %v6952, %v6953
    %v6955 = vrot.slane %v6954, 2
    %v6956 = vadd.f32 %v6954, %v6955
    %v6957 = vrot.slane %v6956, 1
    %v6958 = vadd.f32 %v6956, %v6957
    %v6959 = vadd.f32 %v6223, %v6233
    %v6960 = vadd.f32 %v6959, %v6243
    %v6961 = vadd.f32 %v6960, %v6253
    %v6962 = vadd.f32 %v6961, %v6263
    %v6963 = vadd.f32 %v6962, %v6273
    %v6964 = vadd.f32 %v6963, %v6283
    %v6965 = vadd.f32 %v6964, %v6293
    %v6966 = vrot.slane %v6965, 4
    %v6967 = vadd.f32 %v6965, %v6966
    %v6968 = vrot.slane %v6967, 2
    %v6969 = vadd.f32 %v6967, %v6968
    %v6970 = vrot.slane %v6969, 1
    %v6971 = vadd.f32 %v6969, %v6970
    %v6972 = vadd.f32 %v6224, %v6234
    %v6973 = vadd.f32 %v6972, %v6244
    %v6974 = vadd.f32 %v6973, %v6254
    %v6975 = vadd.f32 %v6974, %v6264
    %v6976 = vadd.f32 %v6975, %v6274
    %v6977 = vadd.f32 %v6976, %v6284
    %v6978 = vadd.f32 %v6977, %v6294
    %v6979 = vrot.slane %v6978, 4
    %v6980 = vadd.f32 %v6978, %v6979
    %v6981 = vrot.slane %v6980, 2
    %v6982 = vadd.f32 %v6980, %v6981
    %v6983 = vrot.slane %v6982, 1
    %v6984 = vadd.f32 %v6982, %v6983
    %v6985 = vadd.f32 %v6225, %v6235
    %v6986 = vadd.f32 %v6985, %v6245
    %v6987 = vadd.f32 %v6986, %v6255
    %v6988 = vadd.f32 %v6987, %v6265
    %v6989 = vadd.f32 %v6988, %v6275
    %v6990 = vadd.f32 %v6989, %v6285
    %v6991 = vadd.f32 %v6990, %v6295
    %v6992 = vrot.slane %v6991, 4
    %v6993 = vadd.f32 %v6991, %v6992
    %v6994 = vrot.slane %v6993, 2
    %v6995 = vadd.f32 %v6993, %v6994
    %v6996 = vrot.slane %v6995, 1
    %v6997 = vadd.f32 %v6995, %v6996
    %v6998 = vadd.f32 %v6226, %v6236
    %v6999 = vadd.f32 %v6998, %v6246
    %v7000 = vadd.f32 %v6999, %v6256
    %v7001 = vadd.f32 %v7000, %v6266
    %v7002 = vadd.f32 %v7001, %v6276
    %v7003 = vadd.f32 %v7002, %v6286
    %v7004 = vadd.f32 %v7003, %v6296
    %v7005 = vrot.slane %v7004, 4
    %v7006 = vadd.f32 %v7004, %v7005
    %v7007 = vrot.slane %v7006, 2
    %v7008 = vadd.f32 %v7006, %v7007
    %v7009 = vrot.slane %v7008, 1
    %v7010 = vadd.f32 %v7008, %v7009
    %v7011 = vadd.f32 %v6227, %v6237
    %v7012 = vadd.f32 %v7011, %v6247
    %v7013 = vadd.f32 %v7012, %v6257
    %v7014 = vadd.f32 %v7013, %v6267
    %v7015 = vadd.f32 %v7014, %v6277
    %v7016 = vadd.f32 %v7015, %v6287
    %v7017 = vadd.f32 %v7016, %v6297
    %v7018 = vrot.slane %v7017, 4
    %v7019 = vadd.f32 %v7017, %v7018
    %v7020 = vrot.slane %v7019, 2
    %v7021 = vadd.f32 %v7019, %v7020
    %v7022 = vrot.slane %v7021, 1
    %v7023 = vadd.f32 %v7021, %v7022
    %v7024 = vadd.f32 %v6228, %v6238
    %v7025 = vadd.f32 %v7024, %v6248
    %v7026 = vadd.f32 %v7025, %v6258
    %v7027 = vadd.f32 %v7026, %v6268
    %v7028 = vadd.f32 %v7027, %v6278
    %v7029 = vadd.f32 %v7028, %v6288
    %v7030 = vadd.f32 %v7029, %v6298
    %v7031 = vrot.slane %v7030, 4
    %v7032 = vadd.f32 %v7030, %v7031
    %v7033 = vrot.slane %v7032, 2
    %v7034 = vadd.f32 %v7032, %v7033
    %v7035 = vrot.slane %v7034, 1
    %v7036 = vadd.f32 %v7034, %v7035
    %v7037 = vadd.f32 %v6229, %v6239
    %v7038 = vadd.f32 %v7037, %v6249
    %v7039 = vadd.f32 %v7038, %v6259
    %v7040 = vadd.f32 %v7039, %v6269
    %v7041 = vadd.f32 %v7040, %v6279
    %v7042 = vadd.f32 %v7041, %v6289
    %v7043 = vadd.f32 %v7042, %v6299
    %v7044 = vrot.slane %v7043, 4
    %v7045 = vadd.f32 %v7043, %v7044
    %v7046 = vrot.slane %v7045, 2
    %v7047 = vadd.f32 %v7045, %v7046
    %v7048 = vrot.slane %v7047, 1
    %v7049 = vadd.f32 %v7047, %v7048
    %v7050 = vadd.f32 %v6300, %v6310
    %v7051 = vadd.f32 %v7050, %v6320
    %v7052 = vadd.f32 %v7051, %v6330
    %v7053 = vadd.f32 %v7052, %v6340
    %v7054 = vadd.f32 %v7053, %v6350
    %v7055 = vadd.f32 %v7054, %v6360
    %v7056 = vadd.f32 %v7055, %v6370
    %v7057 = vrot.slane %v7056, 4
    %v7058 = vadd.f32 %v7056, %v7057
    %v7059 = vrot.slane %v7058, 2
    %v7060 = vadd.f32 %v7058, %v7059
    %v7061 = vrot.slane %v7060, 1
    %v7062 = vadd.f32 %v7060, %v7061
    %v7063 = vadd.f32 %v6301, %v6311
    %v7064 = vadd.f32 %v7063, %v6321
    %v7065 = vadd.f32 %v7064, %v6331
    %v7066 = vadd.f32 %v7065, %v6341
    %v7067 = vadd.f32 %v7066, %v6351
    %v7068 = vadd.f32 %v7067, %v6361
    %v7069 = vadd.f32 %v7068, %v6371
    %v7070 = vrot.slane %v7069, 4
    %v7071 = vadd.f32 %v7069, %v7070
    %v7072 = vrot.slane %v7071, 2
    %v7073 = vadd.f32 %v7071, %v7072
    %v7074 = vrot.slane %v7073, 1
    %v7075 = vadd.f32 %v7073, %v7074
    %v7076 = vadd.f32 %v6302, %v6312
    %v7077 = vadd.f32 %v7076, %v6322
    %v7078 = vadd.f32 %v7077, %v6332
    %v7079 = vadd.f32 %v7078, %v6342
    %v7080 = vadd.f32 %v7079, %v6352
    %v7081 = vadd.f32 %v7080, %v6362
    %v7082 = vadd.f32 %v7081, %v6372
    %v7083 = vrot.slane %v7082, 4
    %v7084 = vadd.f32 %v7082, %v7083
    %v7085 = vrot.slane %v7084, 2
    %v7086 = vadd.f32 %v7084, %v7085
    %v7087 = vrot.slane %v7086, 1
    %v7088 = vadd.f32 %v7086, %v7087
    %v7089 = vadd.f32 %v6303, %v6313
    %v7090 = vadd.f32 %v7089, %v6323
    %v7091 = vadd.f32 %v7090, %v6333
    %v7092 = vadd.f32 %v7091, %v6343
    %v7093 = vadd.f32 %v7092, %v6353
    %v7094 = vadd.f32 %v7093, %v6363
    %v7095 = vadd.f32 %v7094, %v6373
    %v7096 = vrot.slane %v7095, 4
    %v7097 = vadd.f32 %v7095, %v7096
    %v7098 = vrot.slane %v7097, 2
    %v7099 = vadd.f32 %v7097, %v7098
    %v7100 = vrot.slane %v7099, 1
    %v7101 = vadd.f32 %v7099, %v7100
    %v7102 = vadd.f32 %v6304, %v6314
    %v7103 = vadd.f32 %v7102, %v6324
    %v7104 = vadd.f32 %v7103, %v6334
    %v7105 = vadd.f32 %v7104, %v6344
    %v7106 = vadd.f32 %v7105, %v6354
    %v7107 = vadd.f32 %v7106, %v6364
    %v7108 = vadd.f32 %v7107, %v6374
    %v7109 = vrot.slane %v7108, 4
    %v7110 = vadd.f32 %v7108, %v7109
    %v7111 = vrot.slane %v7110, 2
    %v7112 = vadd.f32 %v7110, %v7111
    %v7113 = vrot.slane %v7112, 1
    %v7114 = vadd.f32 %v7112, %v7113
    %v7115 = vadd.f32 %v6305, %v6315
    %v7116 = vadd.f32 %v7115, %v6325
    %v7117 = vadd.f32 %v7116, %v6335
    %v7118 = vadd.f32 %v7117, %v6345
    %v7119 = vadd.f32 %v7118, %v6355
    %v7120 = vadd.f32 %v7119, %v6365
    %v7121 = vadd.f32 %v7120, %v6375
    %v7122 = vrot.slane %v7121, 4
    %v7123 = vadd.f32 %v7121, %v7122
    %v7124 = vrot.slane %v7123, 2
    %v7125 = vadd.f32 %v7123, %v7124
    %v7126 = vrot.slane %v7125, 1
    %v7127 = vadd.f32 %v7125, %v7126
    %v7128 = vadd.f32 %v6306, %v6316
    %v7129 = vadd.f32 %v7128, %v6326
    %v7130 = vadd.f32 %v7129, %v6336
    %v7131 = vadd.f32 %v7130, %v6346
    %v7132 = vadd.f32 %v7131, %v6356
    %v7133 = vadd.f32 %v7132, %v6366
    %v7134 = vadd.f32 %v7133, %v6376
    %v7135 = vrot.slane %v7134, 4
    %v7136 = vadd.f32 %v7134, %v7135
    %v7137 = vrot.slane %v7136, 2
    %v7138 = vadd.f32 %v7136, %v7137
    %v7139 = vrot.slane %v7138, 1
    %v7140 = vadd.f32 %v7138, %v7139
    %v7141 = vadd.f32 %v6307, %v6317
    %v7142 = vadd.f32 %v7141, %v6327
    %v7143 = vadd.f32 %v7142, %v6337
    %v7144 = vadd.f32 %v7143, %v6347
    %v7145 = vadd.f32 %v7144, %v6357
    %v7146 = vadd.f32 %v7145, %v6367
    %v7147 = vadd.f32 %v7146, %v6377
    %v7148 = vrot.slane %v7147, 4
    %v7149 = vadd.f32 %v7147, %v7148
    %v7150 = vrot.slane %v7149, 2
    %v7151 = vadd.f32 %v7149, %v7150
    %v7152 = vrot.slane %v7151, 1
    %v7153 = vadd.f32 %v7151, %v7152
    %v7154 = vadd.f32 %v6308, %v6318
    %v7155 = vadd.f32 %v7154, %v6328
    %v7156 = vadd.f32 %v7155, %v6338
    %v7157 = vadd.f32 %v7156, %v6348
    %v7158 = vadd.f32 %v7157, %v6358
    %v7159 = vadd.f32 %v7158, %v6368
    %v7160 = vadd.f32 %v7159, %v6378
    %v7161 = vrot.slane %v7160, 4
    %v7162 = vadd.f32 %v7160, %v7161
    %v7163 = vrot.slane %v7162, 2
    %v7164 = vadd.f32 %v7162, %v7163
    %v7165 = vrot.slane %v7164, 1
    %v7166 = vadd.f32 %v7164, %v7165
    %v7167 = vadd.f32 %v6309, %v6319
    %v7168 = vadd.f32 %v7167, %v6329
    %v7169 = vadd.f32 %v7168, %v6339
    %v7170 = vadd.f32 %v7169, %v6349
    %v7171 = vadd.f32 %v7170, %v6359
    %v7172 = vadd.f32 %v7171, %v6369
    %v7173 = vadd.f32 %v7172, %v6379
    %v7174 = vrot.slane %v7173, 4
    %v7175 = vadd.f32 %v7173, %v7174
    %v7176 = vrot.slane %v7175, 2
    %v7177 = vadd.f32 %v7175, %v7176
    %v7178 = vrot.slane %v7177, 1
    %v7179 = vadd.f32 %v7177, %v7178
    %v7180 = vadd.f32 %v6380, %v6390
    %v7181 = vadd.f32 %v7180, %v6400
    %v7182 = vadd.f32 %v7181, %v6410
    %v7183 = vadd.f32 %v7182, %v6420
    %v7184 = vadd.f32 %v7183, %v6430
    %v7185 = vadd.f32 %v7184, %v6440
    %v7186 = vadd.f32 %v7185, %v6450
    %v7187 = vrot.slane %v7186, 4
    %v7188 = vadd.f32 %v7186, %v7187
    %v7189 = vrot.slane %v7188, 2
    %v7190 = vadd.f32 %v7188, %v7189
    %v7191 = vrot.slane %v7190, 1
    %v7192 = vadd.f32 %v7190, %v7191
    %v7193 = vadd.f32 %v6381, %v6391
    %v7194 = vadd.f32 %v7193, %v6401
    %v7195 = vadd.f32 %v7194, %v6411
    %v7196 = vadd.f32 %v7195, %v6421
    %v7197 = vadd.f32 %v7196, %v6431
    %v7198 = vadd.f32 %v7197, %v6441
    %v7199 = vadd.f32 %v7198, %v6451
    %v7200 = vrot.slane %v7199, 4
    %v7201 = vadd.f32 %v7199, %v7200
    %v7202 = vrot.slane %v7201, 2
    %v7203 = vadd.f32 %v7201, %v7202
    %v7204 = vrot.slane %v7203, 1
    %v7205 = vadd.f32 %v7203, %v7204
    %v7206 = vadd.f32 %v6382, %v6392
    %v7207 = vadd.f32 %v7206, %v6402
    %v7208 = vadd.f32 %v7207, %v6412
    %v7209 = vadd.f32 %v7208, %v6422
    %v7210 = vadd.f32 %v7209, %v6432
    %v7211 = vadd.f32 %v7210, %v6442
    %v7212 = vadd.f32 %v7211, %v6452
    %v7213 = vrot.slane %v7212, 4
    %v7214 = vadd.f32 %v7212, %v7213
    %v7215 = vrot.slane %v7214, 2
    %v7216 = vadd.f32 %v7214, %v7215
    %v7217 = vrot.slane %v7216, 1
    %v7218 = vadd.f32 %v7216, %v7217
    %v7219 = vadd.f32 %v6383, %v6393
    %v7220 = vadd.f32 %v7219, %v6403
    %v7221 = vadd.f32 %v7220, %v6413
    %v7222 = vadd.f32 %v7221, %v6423
    %v7223 = vadd.f32 %v7222, %v6433
    %v7224 = vadd.f32 %v7223, %v6443
    %v7225 = vadd.f32 %v7224, %v6453
    %v7226 = vrot.slane %v7225, 4
    %v7227 = vadd.f32 %v7225, %v7226
    %v7228 = vrot.slane %v7227, 2
    %v7229 = vadd.f32 %v7227, %v7228
    %v7230 = vrot.slane %v7229, 1
    %v7231 = vadd.f32 %v7229, %v7230
    %v7232 = vadd.f32 %v6384, %v6394
    %v7233 = vadd.f32 %v7232, %v6404
    %v7234 = vadd.f32 %v7233, %v6414
    %v7235 = vadd.f32 %v7234, %v6424
    %v7236 = vadd.f32 %v7235, %v6434
    %v7237 = vadd.f32 %v7236, %v6444
    %v7238 = vadd.f32 %v7237, %v6454
    %v7239 = vrot.slane %v7238, 4
    %v7240 = vadd.f32 %v7238, %v7239
    %v7241 = vrot.slane %v7240, 2
    %v7242 = vadd.f32 %v7240, %v7241
    %v7243 = vrot.slane %v7242, 1
    %v7244 = vadd.f32 %v7242, %v7243
    %v7245 = vadd.f32 %v6385, %v6395
    %v7246 = vadd.f32 %v7245, %v6405
    %v7247 = vadd.f32 %v7246, %v6415
    %v7248 = vadd.f32 %v7247, %v6425
    %v7249 = vadd.f32 %v7248, %v6435
    %v7250 = vadd.f32 %v7249, %v6445
    %v7251 = vadd.f32 %v7250, %v6455
    %v7252 = vrot.slane %v7251, 4
    %v7253 = vadd.f32 %v7251, %v7252
    %v7254 = vrot.slane %v7253, 2
    %v7255 = vadd.f32 %v7253, %v7254
    %v7256 = vrot.slane %v7255, 1
    %v7257 = vadd.f32 %v7255, %v7256
    %v7258 = vadd.f32 %v6386, %v6396
    %v7259 = vadd.f32 %v7258, %v6406
    %v7260 = vadd.f32 %v7259, %v6416
    %v7261 = vadd.f32 %v7260, %v6426
    %v7262 = vadd.f32 %v7261, %v6436
    %v7263 = vadd.f32 %v7262, %v6446
    %v7264 = vadd.f32 %v7263, %v6456
    %v7265 = vrot.slane %v7264, 4
    %v7266 = vadd.f32 %v7264, %v7265
    %v7267 = vrot.slane %v7266, 2
    %v7268 = vadd.f32 %v7266, %v7267
    %v7269 = vrot.slane %v7268, 1
    %v7270 = vadd.f32 %v7268, %v7269
    %v7271 = vadd.f32 %v6387, %v6397
    %v7272 = vadd.f32 %v7271, %v6407
    %v7273 = vadd.f32 %v7272, %v6417
    %v7274 = vadd.f32 %v7273, %v6427
    %v7275 = vadd.f32 %v7274, %v6437
    %v7276 = vadd.f32 %v7275, %v6447
    %v7277 = vadd.f32 %v7276, %v6457
    %v7278 = vrot.slane %v7277, 4
    %v7279 = vadd.f32 %v7277, %v7278
    %v7280 = vrot.slane %v7279, 2
    %v7281 = vadd.f32 %v7279, %v7280
    %v7282 = vrot.slane %v7281, 1
    %v7283 = vadd.f32 %v7281, %v7282
    %v7284 = vadd.f32 %v6388, %v6398
    %v7285 = vadd.f32 %v7284, %v6408
    %v7286 = vadd.f32 %v7285, %v6418
    %v7287 = vadd.f32 %v7286, %v6428
    %v7288 = vadd.f32 %v7287, %v6438
    %v7289 = vadd.f32 %v7288, %v6448
    %v7290 = vadd.f32 %v7289, %v6458
    %v7291 = vrot.slane %v7290, 4
    %v7292 = vadd.f32 %v7290, %v7291
    %v7293 = vrot.slane %v7292, 2
    %v7294 = vadd.f32 %v7292, %v7293
    %v7295 = vrot.slane %v7294, 1
    %v7296 = vadd.f32 %v7294, %v7295
    %v7297 = vadd.f32 %v6389, %v6399
    %v7298 = vadd.f32 %v7297, %v6409
    %v7299 = vadd.f32 %v7298, %v6419
    %v7300 = vadd.f32 %v7299, %v6429
    %v7301 = vadd.f32 %v7300, %v6439
    %v7302 = vadd.f32 %v7301, %v6449
    %v7303 = vadd.f32 %v7302, %v6459
    %v7304 = vrot.slane %v7303, 4
    %v7305 = vadd.f32 %v7303, %v7304
    %v7306 = vrot.slane %v7305, 2
    %v7307 = vadd.f32 %v7305, %v7306
    %v7308 = vrot.slane %v7307, 1
    %v7309 = vadd.f32 %v7307, %v7308
    %v7310 = vadd.f32 %v6460, %v6470
    %v7311 = vadd.f32 %v7310, %v6480
    %v7312 = vadd.f32 %v7311, %v6490
    %v7313 = vadd.f32 %v7312, %v6500
    %v7314 = vadd.f32 %v7313, %v6510
    %v7315 = vadd.f32 %v7314, %v6520
    %v7316 = vadd.f32 %v7315, %v6530
    %v7317 = vrot.slane %v7316, 4
    %v7318 = vadd.f32 %v7316, %v7317
    %v7319 = vrot.slane %v7318, 2
    %v7320 = vadd.f32 %v7318, %v7319
    %v7321 = vrot.slane %v7320, 1
    %v7322 = vadd.f32 %v7320, %v7321
    %v7323 = vadd.f32 %v6461, %v6471
    %v7324 = vadd.f32 %v7323, %v6481
    %v7325 = vadd.f32 %v7324, %v6491
    %v7326 = vadd.f32 %v7325, %v6501
    %v7327 = vadd.f32 %v7326, %v6511
    %v7328 = vadd.f32 %v7327, %v6521
    %v7329 = vadd.f32 %v7328, %v6531
    %v7330 = vrot.slane %v7329, 4
    %v7331 = vadd.f32 %v7329, %v7330
    %v7332 = vrot.slane %v7331, 2
    %v7333 = vadd.f32 %v7331, %v7332
    %v7334 = vrot.slane %v7333, 1
    %v7335 = vadd.f32 %v7333, %v7334
    %v7336 = vadd.f32 %v6462, %v6472
    %v7337 = vadd.f32 %v7336, %v6482
    %v7338 = vadd.f32 %v7337, %v6492
    %v7339 = vadd.f32 %v7338, %v6502
    %v7340 = vadd.f32 %v7339, %v6512
    %v7341 = vadd.f32 %v7340, %v6522
    %v7342 = vadd.f32 %v7341, %v6532
    %v7343 = vrot.slane %v7342, 4
    %v7344 = vadd.f32 %v7342, %v7343
    %v7345 = vrot.slane %v7344, 2
    %v7346 = vadd.f32 %v7344, %v7345
    %v7347 = vrot.slane %v7346, 1
    %v7348 = vadd.f32 %v7346, %v7347
    %v7349 = vadd.f32 %v6463, %v6473
    %v7350 = vadd.f32 %v7349, %v6483
    %v7351 = vadd.f32 %v7350, %v6493
    %v7352 = vadd.f32 %v7351, %v6503
    %v7353 = vadd.f32 %v7352, %v6513
    %v7354 = vadd.f32 %v7353, %v6523
    %v7355 = vadd.f32 %v7354, %v6533
    %v7356 = vrot.slane %v7355, 4
    %v7357 = vadd.f32 %v7355, %v7356
    %v7358 = vrot.slane %v7357, 2
    %v7359 = vadd.f32 %v7357, %v7358
    %v7360 = vrot.slane %v7359, 1
    %v7361 = vadd.f32 %v7359, %v7360
    %v7362 = vadd.f32 %v6464, %v6474
    %v7363 = vadd.f32 %v7362, %v6484
    %v7364 = vadd.f32 %v7363, %v6494
    %v7365 = vadd.f32 %v7364, %v6504
    %v7366 = vadd.f32 %v7365, %v6514
    %v7367 = vadd.f32 %v7366, %v6524
    %v7368 = vadd.f32 %v7367, %v6534
    %v7369 = vrot.slane %v7368, 4
    %v7370 = vadd.f32 %v7368, %v7369
    %v7371 = vrot.slane %v7370, 2
    %v7372 = vadd.f32 %v7370, %v7371
    %v7373 = vrot.slane %v7372, 1
    %v7374 = vadd.f32 %v7372, %v7373
    %v7375 = vadd.f32 %v6465, %v6475
    %v7376 = vadd.f32 %v7375, %v6485
    %v7377 = vadd.f32 %v7376, %v6495
    %v7378 = vadd.f32 %v7377, %v6505
    %v7379 = vadd.f32 %v7378, %v6515
    %v7380 = vadd.f32 %v7379, %v6525
    %v7381 = vadd.f32 %v7380, %v6535
    %v7382 = vrot.slane %v7381, 4
    %v7383 = vadd.f32 %v7381, %v7382
    %v7384 = vrot.slane %v7383, 2
    %v7385 = vadd.f32 %v7383, %v7384
    %v7386 = vrot.slane %v7385, 1
    %v7387 = vadd.f32 %v7385, %v7386
    %v7388 = vadd.f32 %v6466, %v6476
    %v7389 = vadd.f32 %v7388, %v6486
    %v7390 = vadd.f32 %v7389, %v6496
    %v7391 = vadd.f32 %v7390, %v6506
    %v7392 = vadd.f32 %v7391, %v6516
    %v7393 = vadd.f32 %v7392, %v6526
    %v7394 = vadd.f32 %v7393, %v6536
    %v7395 = vrot.slane %v7394, 4
    %v7396 = vadd.f32 %v7394, %v7395
    %v7397 = vrot.slane %v7396, 2
    %v7398 = vadd.f32 %v7396, %v7397
    %v7399 = vrot.slane %v7398, 1
    %v7400 = vadd.f32 %v7398, %v7399
    %v7401 = vadd.f32 %v6467, %v6477
    %v7402 = vadd.f32 %v7401, %v6487
    %v7403 = vadd.f32 %v7402, %v6497
    %v7404 = vadd.f32 %v7403, %v6507
    %v7405 = vadd.f32 %v7404, %v6517
    %v7406 = vadd.f32 %v7405, %v6527
    %v7407 = vadd.f32 %v7406, %v6537
    %v7408 = vrot.slane %v7407, 4
    %v7409 = vadd.f32 %v7407, %v7408
    %v7410 = vrot.slane %v7409, 2
    %v7411 = vadd.f32 %v7409, %v7410
    %v7412 = vrot.slane %v7411, 1
    %v7413 = vadd.f32 %v7411, %v7412
    %v7414 = vadd.f32 %v6468, %v6478
    %v7415 = vadd.f32 %v7414, %v6488
    %v7416 = vadd.f32 %v7415, %v6498
    %v7417 = vadd.f32 %v7416, %v6508
    %v7418 = vadd.f32 %v7417, %v6518
    %v7419 = vadd.f32 %v7418, %v6528
    %v7420 = vadd.f32 %v7419, %v6538
    %v7421 = vrot.slane %v7420, 4
    %v7422 = vadd.f32 %v7420, %v7421
    %v7423 = vrot.slane %v7422, 2
    %v7424 = vadd.f32 %v7422, %v7423
    %v7425 = vrot.slane %v7424, 1
    %v7426 = vadd.f32 %v7424, %v7425
    %v7427 = vadd.f32 %v6469, %v6479
    %v7428 = vadd.f32 %v7427, %v6489
    %v7429 = vadd.f32 %v7428, %v6499
    %v7430 = vadd.f32 %v7429, %v6509
    %v7431 = vadd.f32 %v7430, %v6519
    %v7432 = vadd.f32 %v7431, %v6529
    %v7433 = vadd.f32 %v7432, %v6539
    %v7434 = vrot.slane %v7433, 4
    %v7435 = vadd.f32 %v7433, %v7434
    %v7436 = vrot.slane %v7435, 2
    %v7437 = vadd.f32 %v7435, %v7436
    %v7438 = vrot.slane %v7437, 1
    %v7439 = vadd.f32 %v7437, %v7438
    %v7440 = vadd.f32 %v6540, %v6550
    %v7441 = vadd.f32 %v7440, %v6560
    %v7442 = vadd.f32 %v7441, %v6570
    %v7443 = vadd.f32 %v7442, %v6580
    %v7444 = vadd.f32 %v7443, %v6590
    %v7445 = vadd.f32 %v7444, %v6600
    %v7446 = vadd.f32 %v7445, %v6610
    %v7447 = vrot.slane %v7446, 4
    %v7448 = vadd.f32 %v7446, %v7447
    %v7449 = vrot.slane %v7448, 2
    %v7450 = vadd.f32 %v7448, %v7449
    %v7451 = vrot.slane %v7450, 1
    %v7452 = vadd.f32 %v7450, %v7451
    %v7453 = vadd.f32 %v6541, %v6551
    %v7454 = vadd.f32 %v7453, %v6561
    %v7455 = vadd.f32 %v7454, %v6571
    %v7456 = vadd.f32 %v7455, %v6581
    %v7457 = vadd.f32 %v7456, %v6591
    %v7458 = vadd.f32 %v7457, %v6601
    %v7459 = vadd.f32 %v7458, %v6611
    %v7460 = vrot.slane %v7459, 4
    %v7461 = vadd.f32 %v7459, %v7460
    %v7462 = vrot.slane %v7461, 2
    %v7463 = vadd.f32 %v7461, %v7462
    %v7464 = vrot.slane %v7463, 1
    %v7465 = vadd.f32 %v7463, %v7464
    %v7466 = vadd.f32 %v6542, %v6552
    %v7467 = vadd.f32 %v7466, %v6562
    %v7468 = vadd.f32 %v7467, %v6572
    %v7469 = vadd.f32 %v7468, %v6582
    %v7470 = vadd.f32 %v7469, %v6592
    %v7471 = vadd.f32 %v7470, %v6602
    %v7472 = vadd.f32 %v7471, %v6612
    %v7473 = vrot.slane %v7472, 4
    %v7474 = vadd.f32 %v7472, %v7473
    %v7475 = vrot.slane %v7474, 2
    %v7476 = vadd.f32 %v7474, %v7475
    %v7477 = vrot.slane %v7476, 1
    %v7478 = vadd.f32 %v7476, %v7477
    %v7479 = vadd.f32 %v6543, %v6553
    %v7480 = vadd.f32 %v7479, %v6563
    %v7481 = vadd.f32 %v7480, %v6573
    %v7482 = vadd.f32 %v7481, %v6583
    %v7483 = vadd.f32 %v7482, %v6593
    %v7484 = vadd.f32 %v7483, %v6603
    %v7485 = vadd.f32 %v7484, %v6613
    %v7486 = vrot.slane %v7485, 4
    %v7487 = vadd.f32 %v7485, %v7486
    %v7488 = vrot.slane %v7487, 2
    %v7489 = vadd.f32 %v7487, %v7488
    %v7490 = vrot.slane %v7489, 1
    %v7491 = vadd.f32 %v7489, %v7490
    %v7492 = vadd.f32 %v6544, %v6554
    %v7493 = vadd.f32 %v7492, %v6564
    %v7494 = vadd.f32 %v7493, %v6574
    %v7495 = vadd.f32 %v7494, %v6584
    %v7496 = vadd.f32 %v7495, %v6594
    %v7497 = vadd.f32 %v7496, %v6604
    %v7498 = vadd.f32 %v7497, %v6614
    %v7499 = vrot.slane %v7498, 4
    %v7500 = vadd.f32 %v7498, %v7499
    %v7501 = vrot.slane %v7500, 2
    %v7502 = vadd.f32 %v7500, %v7501
    %v7503 = vrot.slane %v7502, 1
    %v7504 = vadd.f32 %v7502, %v7503
    %v7505 = vadd.f32 %v6545, %v6555
    %v7506 = vadd.f32 %v7505, %v6565
    %v7507 = vadd.f32 %v7506, %v6575
    %v7508 = vadd.f32 %v7507, %v6585
    %v7509 = vadd.f32 %v7508, %v6595
    %v7510 = vadd.f32 %v7509, %v6605
    %v7511 = vadd.f32 %v7510, %v6615
    %v7512 = vrot.slane %v7511, 4
    %v7513 = vadd.f32 %v7511, %v7512
    %v7514 = vrot.slane %v7513, 2
    %v7515 = vadd.f32 %v7513, %v7514
    %v7516 = vrot.slane %v7515, 1
    %v7517 = vadd.f32 %v7515, %v7516
    %v7518 = vadd.f32 %v6546, %v6556
    %v7519 = vadd.f32 %v7518, %v6566
    %v7520 = vadd.f32 %v7519, %v6576
    %v7521 = vadd.f32 %v7520, %v6586
    %v7522 = vadd.f32 %v7521, %v6596
    %v7523 = vadd.f32 %v7522, %v6606
    %v7524 = vadd.f32 %v7523, %v6616
    %v7525 = vrot.slane %v7524, 4
    %v7526 = vadd.f32 %v7524, %v7525
    %v7527 = vrot.slane %v7526, 2
    %v7528 = vadd.f32 %v7526, %v7527
    %v7529 = vrot.slane %v7528, 1
    %v7530 = vadd.f32 %v7528, %v7529
    %v7531 = vadd.f32 %v6547, %v6557
    %v7532 = vadd.f32 %v7531, %v6567
    %v7533 = vadd.f32 %v7532, %v6577
    %v7534 = vadd.f32 %v7533, %v6587
    %v7535 = vadd.f32 %v7534, %v6597
    %v7536 = vadd.f32 %v7535, %v6607
    %v7537 = vadd.f32 %v7536, %v6617
    %v7538 = vrot.slane %v7537, 4
    %v7539 = vadd.f32 %v7537, %v7538
    %v7540 = vrot.slane %v7539, 2
    %v7541 = vadd.f32 %v7539, %v7540
    %v7542 = vrot.slane %v7541, 1
    %v7543 = vadd.f32 %v7541, %v7542
    %v7544 = vadd.f32 %v6548, %v6558
    %v7545 = vadd.f32 %v7544, %v6568
    %v7546 = vadd.f32 %v7545, %v6578
    %v7547 = vadd.f32 %v7546, %v6588
    %v7548 = vadd.f32 %v7547, %v6598
    %v7549 = vadd.f32 %v7548, %v6608
    %v7550 = vadd.f32 %v7549, %v6618
    %v7551 = vrot.slane %v7550, 4
    %v7552 = vadd.f32 %v7550, %v7551
    %v7553 = vrot.slane %v7552, 2
    %v7554 = vadd.f32 %v7552, %v7553
    %v7555 = vrot.slane %v7554, 1
    %v7556 = vadd.f32 %v7554, %v7555
    %v7557 = vadd.f32 %v6549, %v6559
    %v7558 = vadd.f32 %v7557, %v6569
    %v7559 = vadd.f32 %v7558, %v6579
    %v7560 = vadd.f32 %v7559, %v6589
    %v7561 = vadd.f32 %v7560, %v6599
    %v7562 = vadd.f32 %v7561, %v6609
    %v7563 = vadd.f32 %v7562, %v6619
    %v7564 = vrot.slane %v7563, 4
    %v7565 = vadd.f32 %v7563, %v7564
    %v7566 = vrot.slane %v7565, 2
    %v7567 = vadd.f32 %v7565, %v7566
    %v7568 = vrot.slane %v7567, 1
    %v7569 = vadd.f32 %v7567, %v7568
    %v7570 = vadd.f32 %v6620, %v6630
    %v7571 = vadd.f32 %v7570, %v6640
    %v7572 = vadd.f32 %v7571, %v6650
    %v7573 = vadd.f32 %v7572, %v6660
    %v7574 = vadd.f32 %v7573, %v6670
    %v7575 = vadd.f32 %v7574, %v6680
    %v7576 = vadd.f32 %v7575, %v6690
    %v7577 = vrot.slane %v7576, 4
    %v7578 = vadd.f32 %v7576, %v7577
    %v7579 = vrot.slane %v7578, 2
    %v7580 = vadd.f32 %v7578, %v7579
    %v7581 = vrot.slane %v7580, 1
    %v7582 = vadd.f32 %v7580, %v7581
    %v7583 = vadd.f32 %v6621, %v6631
    %v7584 = vadd.f32 %v7583, %v6641
    %v7585 = vadd.f32 %v7584, %v6651
    %v7586 = vadd.f32 %v7585, %v6661
    %v7587 = vadd.f32 %v7586, %v6671
    %v7588 = vadd.f32 %v7587, %v6681
    %v7589 = vadd.f32 %v7588, %v6691
    %v7590 = vrot.slane %v7589, 4
    %v7591 = vadd.f32 %v7589, %v7590
    %v7592 = vrot.slane %v7591, 2
    %v7593 = vadd.f32 %v7591, %v7592
    %v7594 = vrot.slane %v7593, 1
    %v7595 = vadd.f32 %v7593, %v7594
    %v7596 = vadd.f32 %v6622, %v6632
    %v7597 = vadd.f32 %v7596, %v6642
    %v7598 = vadd.f32 %v7597, %v6652
    %v7599 = vadd.f32 %v7598, %v6662
    %v7600 = vadd.f32 %v7599, %v6672
    %v7601 = vadd.f32 %v7600, %v6682
    %v7602 = vadd.f32 %v7601, %v6692
    %v7603 = vrot.slane %v7602, 4
    %v7604 = vadd.f32 %v7602, %v7603
    %v7605 = vrot.slane %v7604, 2
    %v7606 = vadd.f32 %v7604, %v7605
    %v7607 = vrot.slane %v7606, 1
    %v7608 = vadd.f32 %v7606, %v7607
    %v7609 = vadd.f32 %v6623, %v6633
    %v7610 = vadd.f32 %v7609, %v6643
    %v7611 = vadd.f32 %v7610, %v6653
    %v7612 = vadd.f32 %v7611, %v6663
    %v7613 = vadd.f32 %v7612, %v6673
    %v7614 = vadd.f32 %v7613, %v6683
    %v7615 = vadd.f32 %v7614, %v6693
    %v7616 = vrot.slane %v7615, 4
    %v7617 = vadd.f32 %v7615, %v7616
    %v7618 = vrot.slane %v7617, 2
    %v7619 = vadd.f32 %v7617, %v7618
    %v7620 = vrot.slane %v7619, 1
    %v7621 = vadd.f32 %v7619, %v7620
    %v7622 = vadd.f32 %v6624, %v6634
    %v7623 = vadd.f32 %v7622, %v6644
    %v7624 = vadd.f32 %v7623, %v6654
    %v7625 = vadd.f32 %v7624, %v6664
    %v7626 = vadd.f32 %v7625, %v6674
    %v7627 = vadd.f32 %v7626, %v6684
    %v7628 = vadd.f32 %v7627, %v6694
    %v7629 = vrot.slane %v7628, 4
    %v7630 = vadd.f32 %v7628, %v7629
    %v7631 = vrot.slane %v7630, 2
    %v7632 = vadd.f32 %v7630, %v7631
    %v7633 = vrot.slane %v7632, 1
    %v7634 = vadd.f32 %v7632, %v7633
    %v7635 = vadd.f32 %v6625, %v6635
    %v7636 = vadd.f32 %v7635, %v6645
    %v7637 = vadd.f32 %v7636, %v6655
    %v7638 = vadd.f32 %v7637, %v6665
    %v7639 = vadd.f32 %v7638, %v6675
    %v7640 = vadd.f32 %v7639, %v6685
    %v7641 = vadd.f32 %v7640, %v6695
    %v7642 = vrot.slane %v7641, 4
    %v7643 = vadd.f32 %v7641, %v7642
    %v7644 = vrot.slane %v7643, 2
    %v7645 = vadd.f32 %v7643, %v7644
    %v7646 = vrot.slane %v7645, 1
    %v7647 = vadd.f32 %v7645, %v7646
    %v7648 = vadd.f32 %v6626, %v6636
    %v7649 = vadd.f32 %v7648, %v6646
    %v7650 = vadd.f32 %v7649, %v6656
    %v7651 = vadd.f32 %v7650, %v6666
    %v7652 = vadd.f32 %v7651, %v6676
    %v7653 = vadd.f32 %v7652, %v6686
    %v7654 = vadd.f32 %v7653, %v6696
    %v7655 = vrot.slane %v7654, 4
    %v7656 = vadd.f32 %v7654, %v7655
    %v7657 = vrot.slane %v7656, 2
    %v7658 = vadd.f32 %v7656, %v7657
    %v7659 = vrot.slane %v7658, 1
    %v7660 = vadd.f32 %v7658, %v7659
    %v7661 = vadd.f32 %v6627, %v6637
    %v7662 = vadd.f32 %v7661, %v6647
    %v7663 = vadd.f32 %v7662, %v6657
    %v7664 = vadd.f32 %v7663, %v6667
    %v7665 = vadd.f32 %v7664, %v6677
    %v7666 = vadd.f32 %v7665, %v6687
    %v7667 = vadd.f32 %v7666, %v6697
    %v7668 = vrot.slane %v7667, 4
    %v7669 = vadd.f32 %v7667, %v7668
    %v7670 = vrot.slane %v7669, 2
    %v7671 = vadd.f32 %v7669, %v7670
    %v7672 = vrot.slane %v7671, 1
    %v7673 = vadd.f32 %v7671, %v7672
    %v7674 = vadd.f32 %v6628, %v6638
    %v7675 = vadd.f32 %v7674, %v6648
    %v7676 = vadd.f32 %v7675, %v6658
    %v7677 = vadd.f32 %v7676, %v6668
    %v7678 = vadd.f32 %v7677, %v6678
    %v7679 = vadd.f32 %v7678, %v6688
    %v7680 = vadd.f32 %v7679, %v6698
    %v7681 = vrot.slane %v7680, 4
    %v7682 = vadd.f32 %v7680, %v7681
    %v7683 = vrot.slane %v7682, 2
    %v7684 = vadd.f32 %v7682, %v7683
    %v7685 = vrot.slane %v7684, 1
    %v7686 = vadd.f32 %v7684, %v7685
    %v7687 = vadd.f32 %v6629, %v6639
    %v7688 = vadd.f32 %v7687, %v6649
    %v7689 = vadd.f32 %v7688, %v6659
    %v7690 = vadd.f32 %v7689, %v6669
    %v7691 = vadd.f32 %v7690, %v6679
    %v7692 = vadd.f32 %v7691, %v6689
    %v7693 = vadd.f32 %v7692, %v6699
    %v7694 = vrot.slane %v7693, 4
    %v7695 = vadd.f32 %v7693, %v7694
    %v7696 = vrot.slane %v7695, 2
    %v7697 = vadd.f32 %v7695, %v7696
    %v7698 = vrot.slane %v7697, 1
    %v7699 = vadd.f32 %v7697, %v7698
    %v7700 = vadd.f32 %v6700, %v6710
    %v7701 = vadd.f32 %v7700, %v6720
    %v7702 = vadd.f32 %v7701, %v6730
    %v7703 = vadd.f32 %v7702, %v6740
    %v7704 = vadd.f32 %v7703, %v6750
    %v7705 = vadd.f32 %v7704, %v6760
    %v7706 = vadd.f32 %v7705, %v6770
    %v7707 = vrot.slane %v7706, 4
    %v7708 = vadd.f32 %v7706, %v7707
    %v7709 = vrot.slane %v7708, 2
    %v7710 = vadd.f32 %v7708, %v7709
    %v7711 = vrot.slane %v7710, 1
    %v7712 = vadd.f32 %v7710, %v7711
    %v7713 = vadd.f32 %v6701, %v6711
    %v7714 = vadd.f32 %v7713, %v6721
    %v7715 = vadd.f32 %v7714, %v6731
    %v7716 = vadd.f32 %v7715, %v6741
    %v7717 = vadd.f32 %v7716, %v6751
    %v7718 = vadd.f32 %v7717, %v6761
    %v7719 = vadd.f32 %v7718, %v6771
    %v7720 = vrot.slane %v7719, 4
    %v7721 = vadd.f32 %v7719, %v7720
    %v7722 = vrot.slane %v7721, 2
    %v7723 = vadd.f32 %v7721, %v7722
    %v7724 = vrot.slane %v7723, 1
    %v7725 = vadd.f32 %v7723, %v7724
    %v7726 = vadd.f32 %v6702, %v6712
    %v7727 = vadd.f32 %v7726, %v6722
    %v7728 = vadd.f32 %v7727, %v6732
    %v7729 = vadd.f32 %v7728, %v6742
    %v7730 = vadd.f32 %v7729, %v6752
    %v7731 = vadd.f32 %v7730, %v6762
    %v7732 = vadd.f32 %v7731, %v6772
    %v7733 = vrot.slane %v7732, 4
    %v7734 = vadd.f32 %v7732, %v7733
    %v7735 = vrot.slane %v7734, 2
    %v7736 = vadd.f32 %v7734, %v7735
    %v7737 = vrot.slane %v7736, 1
    %v7738 = vadd.f32 %v7736, %v7737
    %v7739 = vadd.f32 %v6703, %v6713
    %v7740 = vadd.f32 %v7739, %v6723
    %v7741 = vadd.f32 %v7740, %v6733
    %v7742 = vadd.f32 %v7741, %v6743
    %v7743 = vadd.f32 %v7742, %v6753
    %v7744 = vadd.f32 %v7743, %v6763
    %v7745 = vadd.f32 %v7744, %v6773
    %v7746 = vrot.slane %v7745, 4
    %v7747 = vadd.f32 %v7745, %v7746
    %v7748 = vrot.slane %v7747, 2
    %v7749 = vadd.f32 %v7747, %v7748
    %v7750 = vrot.slane %v7749, 1
    %v7751 = vadd.f32 %v7749, %v7750
    %v7752 = vadd.f32 %v6704, %v6714
    %v7753 = vadd.f32 %v7752, %v6724
    %v7754 = vadd.f32 %v7753, %v6734
    %v7755 = vadd.f32 %v7754, %v6744
    %v7756 = vadd.f32 %v7755, %v6754
    %v7757 = vadd.f32 %v7756, %v6764
    %v7758 = vadd.f32 %v7757, %v6774
    %v7759 = vrot.slane %v7758, 4
    %v7760 = vadd.f32 %v7758, %v7759
    %v7761 = vrot.slane %v7760, 2
    %v7762 = vadd.f32 %v7760, %v7761
    %v7763 = vrot.slane %v7762, 1
    %v7764 = vadd.f32 %v7762, %v7763
    %v7765 = vadd.f32 %v6705, %v6715
    %v7766 = vadd.f32 %v7765, %v6725
    %v7767 = vadd.f32 %v7766, %v6735
    %v7768 = vadd.f32 %v7767, %v6745
    %v7769 = vadd.f32 %v7768, %v6755
    %v7770 = vadd.f32 %v7769, %v6765
    %v7771 = vadd.f32 %v7770, %v6775
    %v7772 = vrot.slane %v7771, 4
    %v7773 = vadd.f32 %v7771, %v7772
    %v7774 = vrot.slane %v7773, 2
    %v7775 = vadd.f32 %v7773, %v7774
    %v7776 = vrot.slane %v7775, 1
    %v7777 = vadd.f32 %v7775, %v7776
    %v7778 = vadd.f32 %v6706, %v6716
    %v7779 = vadd.f32 %v7778, %v6726
    %v7780 = vadd.f32 %v7779, %v6736
    %v7781 = vadd.f32 %v7780, %v6746
    %v7782 = vadd.f32 %v7781, %v6756
    %v7783 = vadd.f32 %v7782, %v6766
    %v7784 = vadd.f32 %v7783, %v6776
    %v7785 = vrot.slane %v7784, 4
    %v7786 = vadd.f32 %v7784, %v7785
    %v7787 = vrot.slane %v7786, 2
    %v7788 = vadd.f32 %v7786, %v7787
    %v7789 = vrot.slane %v7788, 1
    %v7790 = vadd.f32 %v7788, %v7789
    %v7791 = vadd.f32 %v6707, %v6717
    %v7792 = vadd.f32 %v7791, %v6727
    %v7793 = vadd.f32 %v7792, %v6737
    %v7794 = vadd.f32 %v7793, %v6747
    %v7795 = vadd.f32 %v7794, %v6757
    %v7796 = vadd.f32 %v7795, %v6767
    %v7797 = vadd.f32 %v7796, %v6777
    %v7798 = vrot.slane %v7797, 4
    %v7799 = vadd.f32 %v7797, %v7798
    %v7800 = vrot.slane %v7799, 2
    %v7801 = vadd.f32 %v7799, %v7800
    %v7802 = vrot.slane %v7801, 1
    %v7803 = vadd.f32 %v7801, %v7802
    %v7804 = vadd.f32 %v6708, %v6718
    %v7805 = vadd.f32 %v7804, %v6728
    %v7806 = vadd.f32 %v7805, %v6738
    %v7807 = vadd.f32 %v7806, %v6748
    %v7808 = vadd.f32 %v7807, %v6758
    %v7809 = vadd.f32 %v7808, %v6768
    %v7810 = vadd.f32 %v7809, %v6778
    %v7811 = vrot.slane %v7810, 4
    %v7812 = vadd.f32 %v7810, %v7811
    %v7813 = vrot.slane %v7812, 2
    %v7814 = vadd.f32 %v7812, %v7813
    %v7815 = vrot.slane %v7814, 1
    %v7816 = vadd.f32 %v7814, %v7815
    %v7817 = vadd.f32 %v6709, %v6719
    %v7818 = vadd.f32 %v7817, %v6729
    %v7819 = vadd.f32 %v7818, %v6739
    %v7820 = vadd.f32 %v7819, %v6749
    %v7821 = vadd.f32 %v7820, %v6759
    %v7822 = vadd.f32 %v7821, %v6769
    %v7823 = vadd.f32 %v7822, %v6779
    %v7824 = vrot.slane %v7823, 4
    %v7825 = vadd.f32 %v7823, %v7824
    %v7826 = vrot.slane %v7825, 2
    %v7827 = vadd.f32 %v7825, %v7826
    %v7828 = vrot.slane %v7827, 1
    %v7829 = vadd.f32 %v7827, %v7828
    %vm7910 = vcmask 1041409
    %v7911 = vsel %vm7910, %v6932, %v6802
    %vm7912 = vcmask 1042434
    %v7913 = vsel %vm7912, %v7062, %v7911
    %vm7914 = vcmask 1043459
    %v7915 = vsel %vm7914, %v7192, %v7913
    %vm7916 = vcmask 1044484
    %v7917 = vsel %vm7916, %v7322, %v7915
    %vm7918 = vcmask 1045509
    %v7919 = vsel %vm7918, %v7452, %v7917
    %vm7920 = vcmask 1046534
    %v7921 = vsel %vm7920, %v7582, %v7919
    %vm7922 = vcmask 1047559
    %v7923 = vsel %vm7922, %v7712, %v7921
    %v7924 = vsel %vm7910, %v6945, %v6815
    %v7925 = vsel %vm7912, %v7075, %v7924
    %v7926 = vsel %vm7914, %v7205, %v7925
    %v7927 = vsel %vm7916, %v7335, %v7926
    %v7928 = vsel %vm7918, %v7465, %v7927
    %v7929 = vsel %vm7920, %v7595, %v7928
    %v7930 = vsel %vm7922, %v7725, %v7929
    %v7931 = vsel %vm7910, %v6958, %v6828
    %v7932 = vsel %vm7912, %v7088, %v7931
    %v7933 = vsel %vm7914, %v7218, %v7932
    %v7934 = vsel %vm7916, %v7348, %v7933
    %v7935 = vsel %vm7918, %v7478, %v7934
    %v7936 = vsel %vm7920, %v7608, %v7935
    %v7937 = vsel %vm7922, %v7738, %v7936
    %v7938 = vsel %vm7910, %v6971, %v6841
    %v7939 = vsel %vm7912, %v7101, %v7938
    %v7940 = vsel %vm7914, %v7231, %v7939
    %v7941 = vsel %vm7916, %v7361, %v7940
    %v7942 = vsel %vm7918, %v7491, %v7941
    %v7943 = vsel %vm7920, %v7621, %v7942
    %v7944 = vsel %vm7922, %v7751, %v7943
    %v7945 = vsel %vm7910, %v6984, %v6854
    %v7946 = vsel %vm7912, %v7114, %v7945
    %v7947 = vsel %vm7914, %v7244, %v7946
    %v7948 = vsel %vm7916, %v7374, %v7947
    %v7949 = vsel %vm7918, %v7504, %v7948
    %v7950 = vsel %vm7920, %v7634, %v7949
    %v7951 = vsel %vm7922, %v7764, %v7950
    %v7952 = vsel %vm7910, %v6997, %v6867
    %v7953 = vsel %vm7912, %v7127, %v7952
    %v7954 = vsel %vm7914, %v7257, %v7953
    %v7955 = vsel %vm7916, %v7387, %v7954
    %v7956 = vsel %vm7918, %v7517, %v7955
    %v7957 = vsel %vm7920, %v7647, %v7956
    %v7958 = vsel %vm7922, %v7777, %v7957
    %v7959 = vsel %vm7910, %v7010, %v6880
    %v7960 = vsel %vm7912, %v7140, %v7959
    %v7961 = vsel %vm7914, %v7270, %v7960
    %v7962 = vsel %vm7916, %v7400, %v7961
    %v7963 = vsel %vm7918, %v7530, %v7962
    %v7964 = vsel %vm7920, %v7660, %v7963
    %v7965 = vsel %vm7922, %v7790, %v7964
    %v7966 = vsel %vm7910, %v7023, %v6893
    %v7967 = vsel %vm7912, %v7153, %v7966
    %v7968 = vsel %vm7914, %v7283, %v7967
    %v7969 = vsel %vm7916, %v7413, %v7968
    %v7970 = vsel %vm7918, %v7543, %v7969
    %v7971 = vsel %vm7920, %v7673, %v7970
    %v7972 = vsel %vm7922, %v7803, %v7971
    %v7973 = vsel %vm7910, %v7036, %v6906
    %v7974 = vsel %vm7912, %v7166, %v7973
    %v7975 = vsel %vm7914, %v7296, %v7974
    %v7976 = vsel %vm7916, %v7426, %v7975
    %v7977 = vsel %vm7918, %v7556, %v7976
    %v7978 = vsel %vm7920, %v7686, %v7977
    %v7979 = vsel %vm7922, %v7816, %v7978
    %v7980 = vsel %vm7910, %v7049, %v6919
    %v7981 = vsel %vm7912, %v7179, %v7980
    %v7982 = vsel %vm7914, %v7309, %v7981
    %v7983 = vsel %vm7916, %v7439, %v7982
    %v7984 = vsel %vm7918, %v7569, %v7983
    %v7985 = vsel %vm7920, %v7699, %v7984
    %v7986 = vsel %vm7922, %v7829, %v7985
    %v7997 = vadd.f32 %v6780, %v7923
    %v7998 = vadd.f32 %v6781, %v7930
    %v7999 = vadd.f32 %v6782, %v7937
    %v8000 = vadd.f32 %v6783, %v7944
    %v8001 = vadd.f32 %v6784, %v7951
    %v8002 = vadd.f32 %v6785, %v7958
    %v8003 = vadd.f32 %v6786, %v7965
    %v8004 = vadd.f32 %v6787, %v7972
    %v8005 = vadd.f32 %v6788, %v7979
    %v8006 = vadd.f32 %v6789, %v7986
    %8007 = vst [vmem:[#allocation2] sm:$0xff] %v7997
    %8008 = vst [vmem:[#allocation2 + $0x8] sm:$0xff] %v7998
    %8009 = vst [vmem:[#allocation2 + $0x10] sm:$0xff] %v7999
    %8010 = vst [vmem:[#allocation2 + $0x18] sm:$0xff] %v8000
    %8011 = vst [vmem:[#allocation2 + $0x20] sm:$0xff] %v8001
    %8012 = vst [vmem:[#allocation2 + $0x28] sm:$0xff] %v8002
    %8013 = vst [vmem:[#allocation2 + $0x30] sm:$0xff] %v8003
    %8014 = vst [vmem:[#allocation2 + $0x38] sm:$0xff] %v8004
    %8015 = vst [vmem:[#allocation2 + $0x40] sm:$0xff] %v8005
    %8016 = vst [vmem:[#allocation2 + $0x48] sm:$0xff] %v8006
    // Predicated region
    $region46: #{tpu_custom_call.1} parent=1 // pred_check
      %p8017 = pneg %p88
    $region47: #{tpu_custom_call.1} parent=1 // pred_check_branch
      %8019 = sbr.rel (%p8017) target = $region49
    $region48: #{tpu_custom_call.1} parent=1 // pred_region
      %v8020 = vld [vmem:[#allocation2] sm:$0xff]
      %v8021 = vld [vmem:[#allocation2 + $0x8] sm:$0xff]
      %v8022 = vld [vmem:[#allocation2 + $0x10] sm:$0xff]
      %v8023 = vld [vmem:[#allocation2 + $0x18] sm:$0xff]
      %v8024 = vld [vmem:[#allocation2 + $0x20] sm:$0xff]
      %v8025 = vld [vmem:[#allocation2 + $0x28] sm:$0xff]
      %v8026 = vld [vmem:[#allocation2 + $0x30] sm:$0xff]
      %v8027 = vld [vmem:[#allocation2 + $0x38] sm:$0xff]
      %v8028 = vld [vmem:[#allocation2 + $0x40] sm:$0xff]
      %v8029 = vld [vmem:[#allocation2 + $0x48] sm:$0xff]
      %v8030 = vmul.f32 %v8020, 0.015625
      %v8031 = vmul.f32 %v8021, 0.015625
      %v8032 = vmul.f32 %v8022, 0.015625
      %v8033 = vmul.f32 %v8023, 0.015625
      %v8034 = vmul.f32 %v8024, 0.015625
      %v8035 = vmul.f32 %v8025, 0.015625
      %v8036 = vmul.f32 %v8026, 0.015625
      %v8037 = vmul.f32 %v8027, 0.015625
      %v8038 = vmul.f32 %v8028, 0.015625
      %v8039 = vmul.f32 %v8029, 0.015625
      %v8040 = vpack.c.bf16 %v8030, %v8030
      %v8041 = vpack.c.bf16 %v8031, %v8031
      %v8042 = vpack.c.bf16 %v8032, %v8032
      %v8043 = vpack.c.bf16 %v8033, %v8033
      %v8044 = vpack.c.bf16 %v8034, %v8034
      %v8045 = vpack.c.bf16 %v8035, %v8035
      %v8046 = vpack.c.bf16 %v8036, %v8036
      %v8047 = vpack.c.bf16 %v8037, %v8037
      %v8048 = vpack.c.bf16 %v8038, %v8038
      %v8049 = vpack.c.bf16 %v8039, %v8039
      %v8050 = vld [vmem:[#allocation9] sm:$0xf]
      %v8051 = vld [vmem:[#allocation9 + $0x4] sm:$0xf]
      %v8052 = vld [vmem:[#allocation9 + $0x8] sm:$0xf]
      %v8053 = vld [vmem:[#allocation9 + $0xc] sm:$0xf]
      %v8054 = vld [vmem:[#allocation9 + $0x10] sm:$0xf]
      %v8055 = vld [vmem:[#allocation9 + $0x14] sm:$0xf]
      %v8056 = vld [vmem:[#allocation9 + $0x18] sm:$0xf]
      %v8057 = vld [vmem:[#allocation9 + $0x1c] sm:$0xf]
      %v8058 = vld [vmem:[#allocation9 + $0x20] sm:$0xf]
      %v8059 = vld [vmem:[#allocation9 + $0x24] sm:$0xf]
      %v8060 = vld [vmem:[#allocation9 + $0x28] sm:$0xf]
      %v8061 = vld [vmem:[#allocation9 + $0x2c] sm:$0xf]
      %v8062 = vld [vmem:[#allocation9 + $0x30] sm:$0xf]
      %v8063 = vld [vmem:[#allocation9 + $0x34] sm:$0xf]
      %v8064 = vld [vmem:[#allocation9 + $0x38] sm:$0xf]
      %v8065 = vld [vmem:[#allocation9 + $0x3c] sm:$0xf]
      %v8066 = vld [vmem:[#allocation9 + $0x40] sm:$0xf]
      %v8067 = vld [vmem:[#allocation9 + $0x44] sm:$0xf]
      %v8068 = vld [vmem:[#allocation9 + $0x48] sm:$0xf]
      %v8069 = vld [vmem:[#allocation9 + $0x4c] sm:$0xf]
      %v8070 = vld [vmem:[#allocation9 + $0x50] sm:$0xf]
      %v8071 = vld [vmem:[#allocation9 + $0x54] sm:$0xf]
      %v8072 = vld [vmem:[#allocation9 + $0x58] sm:$0xf]
      %v8073 = vld [vmem:[#allocation9 + $0x5c] sm:$0xf]
      %v8074 = vld [vmem:[#allocation9 + $0x60] sm:$0xf]
      %v8075 = vld [vmem:[#allocation9 + $0x64] sm:$0xf]
      %v8076 = vld [vmem:[#allocation9 + $0x68] sm:$0xf]
      %v8077 = vld [vmem:[#allocation9 + $0x6c] sm:$0xf]
      %v8078 = vld [vmem:[#allocation9 + $0x70] sm:$0xf]
      %v8079 = vld [vmem:[#allocation9 + $0x74] sm:$0xf]
      %v8080 = vld [vmem:[#allocation9 + $0x78] sm:$0xf]
      %v8081 = vld [vmem:[#allocation9 + $0x7c] sm:$0xf]
      %v8082 = vld [vmem:[#allocation9 + $0x80] sm:$0xf]
      %v8083 = vld [vmem:[#allocation9 + $0x84] sm:$0xf]
      %v8084 = vld [vmem:[#allocation9 + $0x88] sm:$0xf]
      %v8085 = vld [vmem:[#allocation9 + $0x8c] sm:$0xf]
      %v8086 = vld [vmem:[#allocation9 + $0x90] sm:$0xf]
      %v8087 = vld [vmem:[#allocation9 + $0x94] sm:$0xf]
      %v8088 = vld [vmem:[#allocation9 + $0x98] sm:$0xf]
      %v8089 = vld [vmem:[#allocation9 + $0x9c] sm:$0xf]
      %v8090 = vld [vmem:[#allocation9 + $0xa0] sm:$0xf]
      %v8091 = vld [vmem:[#allocation9 + $0xa4] sm:$0xf]
      %v8092 = vld [vmem:[#allocation9 + $0xa8] sm:$0xf]
      %v8093 = vld [vmem:[#allocation9 + $0xac] sm:$0xf]
      %v8094 = vld [vmem:[#allocation9 + $0xb0] sm:$0xf]
      %v8095 = vld [vmem:[#allocation9 + $0xb4] sm:$0xf]
      %v8096 = vld [vmem:[#allocation9 + $0xb8] sm:$0xf]
      %v8097 = vld [vmem:[#allocation9 + $0xbc] sm:$0xf]
      %v8098 = vld [vmem:[#allocation9 + $0xc0] sm:$0xf]
      %v8099 = vld [vmem:[#allocation9 + $0xc4] sm:$0xf]
      %v8100 = vld [vmem:[#allocation9 + $0xc8] sm:$0xf]
      %v8101 = vld [vmem:[#allocation9 + $0xcc] sm:$0xf]
      %v8102 = vld [vmem:[#allocation9 + $0xd0] sm:$0xf]
      %v8103 = vld [vmem:[#allocation9 + $0xd4] sm:$0xf]
      %v8104 = vld [vmem:[#allocation9 + $0xd8] sm:$0xf]
      %v8105 = vld [vmem:[#allocation9 + $0xdc] sm:$0xf]
      %v8106 = vld [vmem:[#allocation9 + $0xe0] sm:$0xf]
      %v8107 = vld [vmem:[#allocation9 + $0xe4] sm:$0xf]
      %v8108 = vld [vmem:[#allocation9 + $0xe8] sm:$0xf]
      %v8109 = vld [vmem:[#allocation9 + $0xec] sm:$0xf]
      %v8110 = vld [vmem:[#allocation9 + $0xf0] sm:$0xf]
      %v8111 = vld [vmem:[#allocation9 + $0xf4] sm:$0xf]
      %v8112 = vld [vmem:[#allocation9 + $0xf8] sm:$0xf]
      %v8113 = vld [vmem:[#allocation9 + $0xfc] sm:$0xf]
      %v8114 = vld [vmem:[#allocation9 + $0x100] sm:$0xf]
      %v8115 = vld [vmem:[#allocation9 + $0x104] sm:$0xf]
      %v8116 = vld [vmem:[#allocation9 + $0x108] sm:$0xf]
      %v8117 = vld [vmem:[#allocation9 + $0x10c] sm:$0xf]
      %v8118 = vld [vmem:[#allocation9 + $0x110] sm:$0xf]
      %v8119 = vld [vmem:[#allocation9 + $0x114] sm:$0xf]
      %v8120 = vld [vmem:[#allocation9 + $0x118] sm:$0xf]
      %v8121 = vld [vmem:[#allocation9 + $0x11c] sm:$0xf]
      %v8122 = vld [vmem:[#allocation9 + $0x120] sm:$0xf]
      %v8123 = vld [vmem:[#allocation9 + $0x124] sm:$0xf]
      %v8124 = vld [vmem:[#allocation9 + $0x128] sm:$0xf]
      %v8125 = vld [vmem:[#allocation9 + $0x12c] sm:$0xf]
      %v8126 = vld [vmem:[#allocation9 + $0x130] sm:$0xf]
      %v8127 = vld [vmem:[#allocation9 + $0x134] sm:$0xf]
      %v8128 = vld [vmem:[#allocation9 + $0x138] sm:$0xf]
      %v8129 = vld [vmem:[#allocation9 + $0x13c] sm:$0xf]
      %v8130 = vld [vmem:[#allocation9 + $0x140] sm:$0xf]
      %v8131 = vld [vmem:[#allocation9 + $0x144] sm:$0xf]
      %v8132 = vld [vmem:[#allocation9 + $0x148] sm:$0xf]
      %v8133 = vld [vmem:[#allocation9 + $0x14c] sm:$0xf]
      %v8134 = vld [vmem:[#allocation9 + $0x150] sm:$0xf]
      %v8135 = vld [vmem:[#allocation9 + $0x154] sm:$0xf]
      %v8136 = vld [vmem:[#allocation9 + $0x158] sm:$0xf]
      %v8137 = vld [vmem:[#allocation9 + $0x15c] sm:$0xf]
      %v8138 = vld [vmem:[#allocation9 + $0x160] sm:$0xf]
      %v8139 = vld [vmem:[#allocation9 + $0x164] sm:$0xf]
      %v8140 = vld [vmem:[#allocation9 + $0x168] sm:$0xf]
      %v8141 = vld [vmem:[#allocation9 + $0x16c] sm:$0xf]
      %v8142 = vld [vmem:[#allocation9 + $0x170] sm:$0xf]
      %v8143 = vld [vmem:[#allocation9 + $0x174] sm:$0xf]
      %v8144 = vld [vmem:[#allocation9 + $0x178] sm:$0xf]
      %v8145 = vld [vmem:[#allocation9 + $0x17c] sm:$0xf]
      %v8146 = vld [vmem:[#allocation9 + $0x180] sm:$0xf]
      %v8147 = vld [vmem:[#allocation9 + $0x184] sm:$0xf]
      %v8148 = vld [vmem:[#allocation9 + $0x188] sm:$0xf]
      %v8149 = vld [vmem:[#allocation9 + $0x18c] sm:$0xf]
      %v8150 = vld [vmem:[#allocation9 + $0x190] sm:$0xf]
      %v8151 = vld [vmem:[#allocation9 + $0x194] sm:$0xf]
      %v8152 = vld [vmem:[#allocation9 + $0x198] sm:$0xf]
      %v8153 = vld [vmem:[#allocation9 + $0x19c] sm:$0xf]
      %v8154 = vld [vmem:[#allocation9 + $0x1a0] sm:$0xf]
      %v8155 = vld [vmem:[#allocation9 + $0x1a4] sm:$0xf]
      %v8156 = vld [vmem:[#allocation9 + $0x1a8] sm:$0xf]
      %v8157 = vld [vmem:[#allocation9 + $0x1ac] sm:$0xf]
      %v8158 = vld [vmem:[#allocation9 + $0x1b0] sm:$0xf]
      %v8159 = vld [vmem:[#allocation9 + $0x1b4] sm:$0xf]
      %v8160 = vld [vmem:[#allocation9 + $0x1b8] sm:$0xf]
      %v8161 = vld [vmem:[#allocation9 + $0x1bc] sm:$0xf]
      %v8162 = vld [vmem:[#allocation9 + $0x1c0] sm:$0xf]
      %v8163 = vld [vmem:[#allocation9 + $0x1c4] sm:$0xf]
      %v8164 = vld [vmem:[#allocation9 + $0x1c8] sm:$0xf]
      %v8165 = vld [vmem:[#allocation9 + $0x1cc] sm:$0xf]
      %v8166 = vld [vmem:[#allocation9 + $0x1d0] sm:$0xf]
      %v8167 = vld [vmem:[#allocation9 + $0x1d4] sm:$0xf]
      %v8168 = vld [vmem:[#allocation9 + $0x1d8] sm:$0xf]
      %v8169 = vld [vmem:[#allocation9 + $0x1dc] sm:$0xf]
      %v8170 = vld [vmem:[#allocation9 + $0x1e0] sm:$0xf]
      %v8171 = vld [vmem:[#allocation9 + $0x1e4] sm:$0xf]
      %v8172 = vld [vmem:[#allocation9 + $0x1e8] sm:$0xf]
      %v8173 = vld [vmem:[#allocation9 + $0x1ec] sm:$0xf]
      %v8174 = vld [vmem:[#allocation9 + $0x1f0] sm:$0xf]
      %v8175 = vld [vmem:[#allocation9 + $0x1f4] sm:$0xf]
      %v8176 = vld [vmem:[#allocation9 + $0x1f8] sm:$0xf]
      %v8177 = vld [vmem:[#allocation9 + $0x1fc] sm:$0xf]
      %v8178 = vld [vmem:[#allocation9 + $0x200] sm:$0xf]
      %v8179 = vld [vmem:[#allocation9 + $0x204] sm:$0xf]
      %v8180 = vld [vmem:[#allocation9 + $0x208] sm:$0xf]
      %v8181 = vld [vmem:[#allocation9 + $0x20c] sm:$0xf]
      %v8182 = vld [vmem:[#allocation9 + $0x210] sm:$0xf]
      %v8183 = vld [vmem:[#allocation9 + $0x214] sm:$0xf]
      %v8184 = vld [vmem:[#allocation9 + $0x218] sm:$0xf]
      %v8185 = vld [vmem:[#allocation9 + $0x21c] sm:$0xf]
      %v8186 = vld [vmem:[#allocation9 + $0x220] sm:$0xf]
      %v8187 = vld [vmem:[#allocation9 + $0x224] sm:$0xf]
      %v8188 = vld [vmem:[#allocation9 + $0x228] sm:$0xf]
      %v8189 = vld [vmem:[#allocation9 + $0x22c] sm:$0xf]
      %v8190 = vld [vmem:[#allocation9 + $0x230] sm:$0xf]
      %v8191 = vld [vmem:[#allocation9 + $0x234] sm:$0xf]
      %v8192 = vld [vmem:[#allocation9 + $0x238] sm:$0xf]
      %v8193 = vld [vmem:[#allocation9 + $0x23c] sm:$0xf]
      %v8194 = vld [vmem:[#allocation9 + $0x240] sm:$0xf]
      %v8195 = vld [vmem:[#allocation9 + $0x244] sm:$0xf]
      %v8196 = vld [vmem:[#allocation9 + $0x248] sm:$0xf]
      %v8197 = vld [vmem:[#allocation9 + $0x24c] sm:$0xf]
      %v8198 = vld [vmem:[#allocation9 + $0x250] sm:$0xf]
      %v8199 = vld [vmem:[#allocation9 + $0x254] sm:$0xf]
      %v8200 = vld [vmem:[#allocation9 + $0x258] sm:$0xf]
      %v8201 = vld [vmem:[#allocation9 + $0x25c] sm:$0xf]
      %v8202 = vld [vmem:[#allocation9 + $0x260] sm:$0xf]
      %v8203 = vld [vmem:[#allocation9 + $0x264] sm:$0xf]
      %v8204 = vld [vmem:[#allocation9 + $0x268] sm:$0xf]
      %v8205 = vld [vmem:[#allocation9 + $0x26c] sm:$0xf]
      %v8206 = vld [vmem:[#allocation9 + $0x270] sm:$0xf]
      %v8207 = vld [vmem:[#allocation9 + $0x274] sm:$0xf]
      %v8208 = vld [vmem:[#allocation9 + $0x278] sm:$0xf]
      %v8209 = vld [vmem:[#allocation9 + $0x27c] sm:$0xf]
      %v8210 = vld [vmem:[#allocation11] sm:$0x1]
      %v8212 = vlaneseq
      %v8213 = vshrl.u32 %v8212, 7
      %v8214 = vsub.s32 0, %v8213
      %v8215 = vrot.slane %v8210, %v8214
      %v8377 = vunpack.c.l.b16 %v8050
      %v8378 = vunpack.c.l.b16 %v8051
      %v8379 = vunpack.c.l.b16 %v8052
      %v8380 = vunpack.c.l.b16 %v8053
      %v8381 = vunpack.c.l.b16 %v8054
      %v8382 = vunpack.c.l.b16 %v8055
      %v8383 = vunpack.c.l.b16 %v8056
      %v8384 = vunpack.c.l.b16 %v8057
      %v8385 = vunpack.c.l.b16 %v8058
      %v8386 = vunpack.c.l.b16 %v8059
      %v8387 = vunpack.c.l.b16 %v8060
      %v8388 = vunpack.c.l.b16 %v8061
      %v8389 = vunpack.c.l.b16 %v8062
      %v8390 = vunpack.c.l.b16 %v8063
      %v8391 = vunpack.c.l.b16 %v8064
      %v8392 = vunpack.c.l.b16 %v8065
      %v8393 = vunpack.c.l.b16 %v8066
      %v8394 = vunpack.c.l.b16 %v8067
      %v8395 = vunpack.c.l.b16 %v8068
      %v8396 = vunpack.c.l.b16 %v8069
      %v8397 = vunpack.c.l.b16 %v8070
      %v8398 = vunpack.c.l.b16 %v8071
      %v8399 = vunpack.c.l.b16 %v8072
      %v8400 = vunpack.c.l.b16 %v8073
      %v8401 = vunpack.c.l.b16 %v8074
      %v8402 = vunpack.c.l.b16 %v8075
      %v8403 = vunpack.c.l.b16 %v8076
      %v8404 = vunpack.c.l.b16 %v8077
      %v8405 = vunpack.c.l.b16 %v8078
      %v8406 = vunpack.c.l.b16 %v8079
      %v8407 = vunpack.c.l.b16 %v8080
      %v8408 = vunpack.c.l.b16 %v8081
      %v8409 = vunpack.c.l.b16 %v8082
      %v8410 = vunpack.c.l.b16 %v8083
      %v8411 = vunpack.c.l.b16 %v8084
      %v8412 = vunpack.c.l.b16 %v8085
      %v8413 = vunpack.c.l.b16 %v8086
      %v8414 = vunpack.c.l.b16 %v8087
      %v8415 = vunpack.c.l.b16 %v8088
      %v8416 = vunpack.c.l.b16 %v8089
      %v8417 = vunpack.c.l.b16 %v8090
      %v8418 = vunpack.c.l.b16 %v8091
      %v8419 = vunpack.c.l.b16 %v8092
      %v8420 = vunpack.c.l.b16 %v8093
      %v8421 = vunpack.c.l.b16 %v8094
      %v8422 = vunpack.c.l.b16 %v8095
      %v8423 = vunpack.c.l.b16 %v8096
      %v8424 = vunpack.c.l.b16 %v8097
      %v8425 = vunpack.c.l.b16 %v8098
      %v8426 = vunpack.c.l.b16 %v8099
      %v8427 = vunpack.c.l.b16 %v8100
      %v8428 = vunpack.c.l.b16 %v8101
      %v8429 = vunpack.c.l.b16 %v8102
      %v8430 = vunpack.c.l.b16 %v8103
      %v8431 = vunpack.c.l.b16 %v8104
      %v8432 = vunpack.c.l.b16 %v8105
      %v8433 = vunpack.c.l.b16 %v8106
      %v8434 = vunpack.c.l.b16 %v8107
      %v8435 = vunpack.c.l.b16 %v8108
      %v8436 = vunpack.c.l.b16 %v8109
      %v8437 = vunpack.c.l.b16 %v8110
      %v8438 = vunpack.c.l.b16 %v8111
      %v8439 = vunpack.c.l.b16 %v8112
      %v8440 = vunpack.c.l.b16 %v8113
      %v8441 = vunpack.c.l.b16 %v8114
      %v8442 = vunpack.c.l.b16 %v8115
      %v8443 = vunpack.c.l.b16 %v8116
      %v8444 = vunpack.c.l.b16 %v8117
      %v8445 = vunpack.c.l.b16 %v8118
      %v8446 = vunpack.c.l.b16 %v8119
      %v8447 = vunpack.c.l.b16 %v8120
      %v8448 = vunpack.c.l.b16 %v8121
      %v8449 = vunpack.c.l.b16 %v8122
      %v8450 = vunpack.c.l.b16 %v8123
      %v8451 = vunpack.c.l.b16 %v8124
      %v8452 = vunpack.c.l.b16 %v8125
      %v8453 = vunpack.c.l.b16 %v8126
      %v8454 = vunpack.c.l.b16 %v8127
      %v8455 = vunpack.c.l.b16 %v8128
      %v8456 = vunpack.c.l.b16 %v8129
      %v8457 = vunpack.c.l.b16 %v8130
      %v8458 = vunpack.c.l.b16 %v8131
      %v8459 = vunpack.c.l.b16 %v8132
      %v8460 = vunpack.c.l.b16 %v8133
      %v8461 = vunpack.c.l.b16 %v8134
      %v8462 = vunpack.c.l.b16 %v8135
      %v8463 = vunpack.c.l.b16 %v8136
      %v8464 = vunpack.c.l.b16 %v8137
      %v8465 = vunpack.c.l.b16 %v8138
      %v8466 = vunpack.c.l.b16 %v8139
      %v8467 = vunpack.c.l.b16 %v8140
      %v8468 = vunpack.c.l.b16 %v8141
      %v8469 = vunpack.c.l.b16 %v8142
      %v8470 = vunpack.c.l.b16 %v8143
      %v8471 = vunpack.c.l.b16 %v8144
      %v8472 = vunpack.c.l.b16 %v8145
      %v8473 = vunpack.c.l.b16 %v8146
      %v8474 = vunpack.c.l.b16 %v8147
      %v8475 = vunpack.c.l.b16 %v8148
      %v8476 = vunpack.c.l.b16 %v8149
      %v8477 = vunpack.c.l.b16 %v8150
      %v8478 = vunpack.c.l.b16 %v8151
      %v8479 = vunpack.c.l.b16 %v8152
      %v8480 = vunpack.c.l.b16 %v8153
      %v8481 = vunpack.c.l.b16 %v8154
      %v8482 = vunpack.c.l.b16 %v8155
      %v8483 = vunpack.c.l.b16 %v8156
      %v8484 = vunpack.c.l.b16 %v8157
      %v8485 = vunpack.c.l.b16 %v8158
      %v8486 = vunpack.c.l.b16 %v8159
      %v8487 = vunpack.c.l.b16 %v8160
      %v8488 = vunpack.c.l.b16 %v8161
      %v8489 = vunpack.c.l.b16 %v8162
      %v8490 = vunpack.c.l.b16 %v8163
      %v8491 = vunpack.c.l.b16 %v8164
      %v8492 = vunpack.c.l.b16 %v8165
      %v8493 = vunpack.c.l.b16 %v8166
      %v8494 = vunpack.c.l.b16 %v8167
      %v8495 = vunpack.c.l.b16 %v8168
      %v8496 = vunpack.c.l.b16 %v8169
      %v8497 = vunpack.c.l.b16 %v8170
      %v8498 = vunpack.c.l.b16 %v8171
      %v8499 = vunpack.c.l.b16 %v8172
      %v8500 = vunpack.c.l.b16 %v8173
      %v8501 = vunpack.c.l.b16 %v8174
      %v8502 = vunpack.c.l.b16 %v8175
      %v8503 = vunpack.c.l.b16 %v8176
      %v8504 = vunpack.c.l.b16 %v8177
      %v8505 = vunpack.c.l.b16 %v8178
      %v8506 = vunpack.c.l.b16 %v8179
      %v8507 = vunpack.c.l.b16 %v8180
      %v8508 = vunpack.c.l.b16 %v8181
      %v8509 = vunpack.c.l.b16 %v8182
      %v8510 = vunpack.c.l.b16 %v8183
      %v8511 = vunpack.c.l.b16 %v8184
      %v8512 = vunpack.c.l.b16 %v8185
      %v8513 = vunpack.c.l.b16 %v8186
      %v8514 = vunpack.c.l.b16 %v8187
      %v8515 = vunpack.c.l.b16 %v8188
      %v8516 = vunpack.c.l.b16 %v8189
      %v8517 = vunpack.c.l.b16 %v8190
      %v8518 = vunpack.c.l.b16 %v8191
      %v8519 = vunpack.c.l.b16 %v8192
      %v8520 = vunpack.c.l.b16 %v8193
      %v8521 = vunpack.c.l.b16 %v8194
      %v8522 = vunpack.c.l.b16 %v8195
      %v8523 = vunpack.c.l.b16 %v8196
      %v8524 = vunpack.c.l.b16 %v8197
      %v8525 = vunpack.c.l.b16 %v8198
      %v8526 = vunpack.c.l.b16 %v8199
      %v8527 = vunpack.c.l.b16 %v8200
      %v8528 = vunpack.c.l.b16 %v8201
      %v8529 = vunpack.c.l.b16 %v8202
      %v8530 = vunpack.c.l.b16 %v8203
      %v8531 = vunpack.c.l.b16 %v8204
      %v8532 = vunpack.c.l.b16 %v8205
      %v8533 = vunpack.c.l.b16 %v8206
      %v8534 = vunpack.c.l.b16 %v8207
      %v8535 = vunpack.c.l.b16 %v8208
      %v8536 = vunpack.c.l.b16 %v8209
      %v8537 = vpack.c.b16 %v8378, %v8377
      %v8538 = vpack.c.b16 %v8380, %v8379
      %v8539 = vpack.c.b16 %v8382, %v8381
      %v8540 = vpack.c.b16 %v8384, %v8383
      %v8541 = vpack.c.b16 %v8386, %v8385
      %v8542 = vpack.c.b16 %v8388, %v8387
      %v8543 = vpack.c.b16 %v8390, %v8389
      %v8544 = vpack.c.b16 %v8392, %v8391
      %v8545 = vpack.c.b16 %v8394, %v8393
      %v8546 = vpack.c.b16 %v8396, %v8395
      %v8547 = vpack.c.b16 %v8398, %v8397
      %v8548 = vpack.c.b16 %v8400, %v8399
      %v8549 = vpack.c.b16 %v8402, %v8401
      %v8550 = vpack.c.b16 %v8404, %v8403
      %v8551 = vpack.c.b16 %v8406, %v8405
      %v8552 = vpack.c.b16 %v8408, %v8407
      %v8553 = vpack.c.b16 %v8410, %v8409
      %v8554 = vpack.c.b16 %v8412, %v8411
      %v8555 = vpack.c.b16 %v8414, %v8413
      %v8556 = vpack.c.b16 %v8416, %v8415
      %v8557 = vpack.c.b16 %v8418, %v8417
      %v8558 = vpack.c.b16 %v8420, %v8419
      %v8559 = vpack.c.b16 %v8422, %v8421
      %v8560 = vpack.c.b16 %v8424, %v8423
      %v8561 = vpack.c.b16 %v8426, %v8425
      %v8562 = vpack.c.b16 %v8428, %v8427
      %v8563 = vpack.c.b16 %v8430, %v8429
      %v8564 = vpack.c.b16 %v8432, %v8431
      %v8565 = vpack.c.b16 %v8434, %v8433
      %v8566 = vpack.c.b16 %v8436, %v8435
      %v8567 = vpack.c.b16 %v8438, %v8437
      %v8568 = vpack.c.b16 %v8440, %v8439
      %v8569 = vpack.c.b16 %v8442, %v8441
      %v8570 = vpack.c.b16 %v8444, %v8443
      %v8571 = vpack.c.b16 %v8446, %v8445
      %v8572 = vpack.c.b16 %v8448, %v8447
      %v8573 = vpack.c.b16 %v8450, %v8449
      %v8574 = vpack.c.b16 %v8452, %v8451
      %v8575 = vpack.c.b16 %v8454, %v8453
      %v8576 = vpack.c.b16 %v8456, %v8455
      %v8577 = vpack.c.b16 %v8458, %v8457
      %v8578 = vpack.c.b16 %v8460, %v8459
      %v8579 = vpack.c.b16 %v8462, %v8461
      %v8580 = vpack.c.b16 %v8464, %v8463
      %v8581 = vpack.c.b16 %v8466, %v8465
      %v8582 = vpack.c.b16 %v8468, %v8467
      %v8583 = vpack.c.b16 %v8470, %v8469
      %v8584 = vpack.c.b16 %v8472, %v8471
      %v8585 = vpack.c.b16 %v8474, %v8473
      %v8586 = vpack.c.b16 %v8476, %v8475
      %v8587 = vpack.c.b16 %v8478, %v8477
      %v8588 = vpack.c.b16 %v8480, %v8479
      %v8589 = vpack.c.b16 %v8482, %v8481
      %v8590 = vpack.c.b16 %v8484, %v8483
      %v8591 = vpack.c.b16 %v8486, %v8485
      %v8592 = vpack.c.b16 %v8488, %v8487
      %v8593 = vpack.c.b16 %v8490, %v8489
      %v8594 = vpack.c.b16 %v8492, %v8491
      %v8595 = vpack.c.b16 %v8494, %v8493
      %v8596 = vpack.c.b16 %v8496, %v8495
      %v8597 = vpack.c.b16 %v8498, %v8497
      %v8598 = vpack.c.b16 %v8500, %v8499
      %v8599 = vpack.c.b16 %v8502, %v8501
      %v8600 = vpack.c.b16 %v8504, %v8503
      %v8601 = vpack.c.b16 %v8506, %v8505
      %v8602 = vpack.c.b16 %v8508, %v8507
      %v8603 = vpack.c.b16 %v8510, %v8509
      %v8604 = vpack.c.b16 %v8512, %v8511
      %v8605 = vpack.c.b16 %v8514, %v8513
      %v8606 = vpack.c.b16 %v8516, %v8515
      %v8607 = vpack.c.b16 %v8518, %v8517
      %v8608 = vpack.c.b16 %v8520, %v8519
      %v8609 = vpack.c.b16 %v8522, %v8521
      %v8610 = vpack.c.b16 %v8524, %v8523
      %v8611 = vpack.c.b16 %v8526, %v8525
      %v8612 = vpack.c.b16 %v8528, %v8527
      %v8613 = vpack.c.b16 %v8530, %v8529
      %v8614 = vpack.c.b16 %v8532, %v8531
      %v8615 = vpack.c.b16 %v8534, %v8533
      %v8616 = vpack.c.b16 %v8536, %v8535
      %8697 = vmatprep.subr.bf16.mxu0 0
      %8698 = vmatpush1.bf16.msra.mxu0 %v8537
      %8699 = vmatprep.subr.bf16.mxu0 0
      %8700 = vmatpush1.bf16.msra.mxu0 %v8538
      %8701 = vmatprep.subr.bf16.mxu0 0
      %8702 = vmatpush1.bf16.msra.mxu0 %v8539
      %8703 = vmatprep.subr.bf16.mxu0 0
      %8704 = vmatpush1.bf16.msra.mxu0 %v8540
      %8705 = vmatprep.subr.bf16.mxu0 0
      %8706 = vmatpush1.bf16.msra.mxu0 %v8541
      %8707 = vmatprep.subr.bf16.mxu0 0
      %8708 = vmatpush1.bf16.msra.mxu0 %v8542
      %8709 = vmatprep.subr.bf16.mxu0 0
      %8710 = vmatpush1.bf16.msra.mxu0 %v8543
      %8711 = vmatprep.subr.bf16.mxu0 0
      %8712 = vmatpush1.bf16.msra.mxu0 %v8544
      %8713 = vmatprep.subr.bf16.mxu0 0
      %8714 = vmatpush1.bf16.msra.mxu0 %v8545
      %8715 = vmatprep.subr.bf16.mxu0 0
      %8716 = vmatpush1.bf16.msra.mxu0 %v8546
      %8717 = vmatprep.subr.bf16.mxu0 0
      %8718 = vmatpush1.bf16.msra.mxu0 %v8547
      %8719 = vmatprep.subr.bf16.mxu0 0
      %8720 = vmatpush1.bf16.msra.mxu0 %v8548
      %8721 = vmatprep.subr.bf16.mxu0 0
      %8722 = vmatpush1.bf16.msra.mxu0 %v8549
      %8723 = vmatprep.subr.bf16.mxu0 0
      %8724 = vmatpush1.bf16.msra.mxu0 %v8550
      %8725 = vmatprep.subr.bf16.mxu0 0
      %8726 = vmatpush1.bf16.msra.mxu0 %v8551
      %8727 = vmatprep.subr.bf16.mxu0 0
      %8728 = vmatpush1.bf16.msra.mxu0 %v8552
      %8729 = vmatprep.mubr.bf16.mxu0 %v8041
      %8730 = vmatmul.mubr.bf16.gmra.mrb[0].mxu0 %v8040
      %v8731 = vpop.f32.mrb[0].mxu0
      %v8732 = vadd.f32 %v8215, %v8731
      %v8733 = vpop.f32.mrb[0].mxu0
      %v8734 = vpop.f32.mrb[0].mxu0
      %v8735 = vpop.f32.mrb[0].mxu0
      %8736 = vdwg.mxu0
      %8737 = vmatprep.subr.bf16.mxu0 0
      %8738 = vmatpush1.bf16.msra.mxu0 %v8553
      %8739 = vmatprep.subr.bf16.mxu0 0
      %8740 = vmatpush1.bf16.msra.mxu0 %v8554
      %8741 = vmatprep.subr.bf16.mxu0 0
      %8742 = vmatpush1.bf16.msra.mxu0 %v8555
      %8743 = vmatprep.subr.bf16.mxu0 0
      %8744 = vmatpush1.bf16.msra.mxu0 %v8556
      %8745 = vmatprep.subr.bf16.mxu0 0
      %8746 = vmatpush1.bf16.msra.mxu0 %v8557
      %8747 = vmatprep.subr.bf16.mxu0 0
      %8748 = vmatpush1.bf16.msra.mxu0 %v8558
      %8749 = vmatprep.subr.bf16.mxu0 0
      %8750 = vmatpush1.bf16.msra.mxu0 %v8559
      %8751 = vmatprep.subr.bf16.mxu0 0
      %8752 = vmatpush1.bf16.msra.mxu0 %v8560
      %8753 = vmatprep.subr.bf16.mxu0 0
      %8754 = vmatpush1.bf16.msra.mxu0 %v8561
      %8755 = vmatprep.subr.bf16.mxu0 0
      %8756 = vmatpush1.bf16.msra.mxu0 %v8562
      %8757 = vmatprep.subr.bf16.mxu0 0
      %8758 = vmatpush1.bf16.msra.mxu0 %v8563
      %8759 = vmatprep.subr.bf16.mxu0 0
      %8760 = vmatpush1.bf16.msra.mxu0 %v8564
      %8761 = vmatprep.subr.bf16.mxu0 0
      %8762 = vmatpush1.bf16.msra.mxu0 %v8565
      %8763 = vmatprep.subr.bf16.mxu0 0
      %8764 = vmatpush1.bf16.msra.mxu0 %v8566
      %8765 = vmatprep.subr.bf16.mxu0 0
      %8766 = vmatpush1.bf16.msra.mxu0 %v8567
      %8767 = vmatprep.subr.bf16.mxu0 0
      %8768 = vmatpush1.bf16.msra.mxu0 %v8568
      %8769 = vmatprep.mubr.bf16.mxu0 %v8043
      %8770 = vmatmul.mubr.bf16.gmra.mrb[0].mxu0 %v8042
      %v8771 = vpop.f32.mrb[0].mxu0
      %v8772 = vadd.f32 %v8732, %v8771
      %v8773 = vpop.f32.mrb[0].mxu0
      %v8774 = vpop.f32.mrb[0].mxu0
      %v8775 = vpop.f32.mrb[0].mxu0
      %8776 = vdwg.mxu0
      %8777 = vmatprep.subr.bf16.mxu0 0
      %8778 = vmatpush1.bf16.msra.mxu0 %v8569
      %8779 = vmatprep.subr.bf16.mxu0 0
      %8780 = vmatpush1.bf16.msra.mxu0 %v8570
      %8781 = vmatprep.subr.bf16.mxu0 0
      %8782 = vmatpush1.bf16.msra.mxu0 %v8571
      %8783 = vmatprep.subr.bf16.mxu0 0
      %8784 = vmatpush1.bf16.msra.mxu0 %v8572
      %8785 = vmatprep.subr.bf16.mxu0 0
      %8786 = vmatpush1.bf16.msra.mxu0 %v8573
      %8787 = vmatprep.subr.bf16.mxu0 0
      %8788 = vmatpush1.bf16.msra.mxu0 %v8574
      %8789 = vmatprep.subr.bf16.mxu0 0
      %8790 = vmatpush1.bf16.msra.mxu0 %v8575
      %8791 = vmatprep.subr.bf16.mxu0 0
      %8792 = vmatpush1.bf16.msra.mxu0 %v8576
      %8793 = vmatprep.subr.bf16.mxu0 0
      %8794 = vmatpush1.bf16.msra.mxu0 %v8577
      %8795 = vmatprep.subr.bf16.mxu0 0
      %8796 = vmatpush1.bf16.msra.mxu0 %v8578
      %8797 = vmatprep.subr.bf16.mxu0 0
      %8798 = vmatpush1.bf16.msra.mxu0 %v8579
      %8799 = vmatprep.subr.bf16.mxu0 0
      %8800 = vmatpush1.bf16.msra.mxu0 %v8580
      %8801 = vmatprep.subr.bf16.mxu0 0
      %8802 = vmatpush1.bf16.msra.mxu0 %v8581
      %8803 = vmatprep.subr.bf16.mxu0 0
      %8804 = vmatpush1.bf16.msra.mxu0 %v8582
      %8805 = vmatprep.subr.bf16.mxu0 0
      %8806 = vmatpush1.bf16.msra.mxu0 %v8583
      %8807 = vmatprep.subr.bf16.mxu0 0
      %8808 = vmatpush1.bf16.msra.mxu0 %v8584
      %8809 = vmatprep.mubr.bf16.mxu0 %v8045
      %8810 = vmatmul.mubr.bf16.gmra.mrb[0].mxu0 %v8044
      %v8811 = vpop.f32.mrb[0].mxu0
      %v8812 = vadd.f32 %v8772, %v8811
      %v8813 = vpop.f32.mrb[0].mxu0
      %v8814 = vpop.f32.mrb[0].mxu0
      %v8815 = vpop.f32.mrb[0].mxu0
      %8816 = vdwg.mxu0
      %8817 = vmatprep.subr.bf16.mxu0 0
      %8818 = vmatpush1.bf16.msra.mxu0 %v8585
      %8819 = vmatprep.subr.bf16.mxu0 0
      %8820 = vmatpush1.bf16.msra.mxu0 %v8586
      %8821 = vmatprep.subr.bf16.mxu0 0
      %8822 = vmatpush1.bf16.msra.mxu0 %v8587
      %8823 = vmatprep.subr.bf16.mxu0 0
      %8824 = vmatpush1.bf16.msra.mxu0 %v8588
      %8825 = vmatprep.subr.bf16.mxu0 0
      %8826 = vmatpush1.bf16.msra.mxu0 %v8589
      %8827 = vmatprep.subr.bf16.mxu0 0
      %8828 = vmatpush1.bf16.msra.mxu0 %v8590
      %8829 = vmatprep.subr.bf16.mxu0 0
      %8830 = vmatpush1.bf16.msra.mxu0 %v8591
      %8831 = vmatprep.subr.bf16.mxu0 0
      %8832 = vmatpush1.bf16.msra.mxu0 %v8592
      %8833 = vmatprep.subr.bf16.mxu0 0
      %8834 = vmatpush1.bf16.msra.mxu0 %v8593
      %8835 = vmatprep.subr.bf16.mxu0 0
      %8836 = vmatpush1.bf16.msra.mxu0 %v8594
      %8837 = vmatprep.subr.bf16.mxu0 0
      %8838 = vmatpush1.bf16.msra.mxu0 %v8595
      %8839 = vmatprep.subr.bf16.mxu0 0
      %8840 = vmatpush1.bf16.msra.mxu0 %v8596
      %8841 = vmatprep.subr.bf16.mxu0 0
      %8842 = vmatpush1.bf16.msra.mxu0 %v8597
      %8843 = vmatprep.subr.bf16.mxu0 0
      %8844 = vmatpush1.bf16.msra.mxu0 %v8598
      %8845 = vmatprep.subr.bf16.mxu0 0
      %8846 = vmatpush1.bf16.msra.mxu0 %v8599
      %8847 = vmatprep.subr.bf16.mxu0 0
      %8848 = vmatpush1.bf16.msra.mxu0 %v8600
      %8849 = vmatprep.mubr.bf16.mxu0 %v8047
      %8850 = vmatmul.mubr.bf16.gmra.mrb[0].mxu0 %v8046
      %v8851 = vpop.f32.mrb[0].mxu0
      %v8852 = vadd.f32 %v8812, %v8851
      %v8853 = vpop.f32.mrb[0].mxu0
      %v8854 = vpop.f32.mrb[0].mxu0
      %v8855 = vpop.f32.mrb[0].mxu0
      %8856 = vdwg.mxu0
      %8857 = vmatprep.subr.bf16.mxu0 0
      %8858 = vmatpush1.bf16.msra.mxu0 %v8601
      %8859 = vmatprep.subr.bf16.mxu0 0
      %8860 = vmatpush1.bf16.msra.mxu0 %v8602
      %8861 = vmatprep.subr.bf16.mxu0 0
      %8862 = vmatpush1.bf16.msra.mxu0 %v8603
      %8863 = vmatprep.subr.bf16.mxu0 0
      %8864 = vmatpush1.bf16.msra.mxu0 %v8604
      %8865 = vmatprep.subr.bf16.mxu0 0
      %8866 = vmatpush1.bf16.msra.mxu0 %v8605
      %8867 = vmatprep.subr.bf16.mxu0 0
      %8868 = vmatpush1.bf16.msra.mxu0 %v8606
      %8869 = vmatprep.subr.bf16.mxu0 0
      %8870 = vmatpush1.bf16.msra.mxu0 %v8607
      %8871 = vmatprep.subr.bf16.mxu0 0
      %8872 = vmatpush1.bf16.msra.mxu0 %v8608
      %8873 = vmatprep.subr.bf16.mxu0 0
      %8874 = vmatpush1.bf16.msra.mxu0 %v8609
      %8875 = vmatprep.subr.bf16.mxu0 0
      %8876 = vmatpush1.bf16.msra.mxu0 %v8610
      %8877 = vmatprep.subr.bf16.mxu0 0
      %8878 = vmatpush1.bf16.msra.mxu0 %v8611
      %8879 = vmatprep.subr.bf16.mxu0 0
      %8880 = vmatpush1.bf16.msra.mxu0 %v8612
      %8881 = vmatprep.subr.bf16.mxu0 0
      %8882 = vmatpush1.bf16.msra.mxu0 %v8613
      %8883 = vmatprep.subr.bf16.mxu0 0
      %8884 = vmatpush1.bf16.msra.mxu0 %v8614
      %8885 = vmatprep.subr.bf16.mxu0 0
      %8886 = vmatpush1.bf16.msra.mxu0 %v8615
      %8887 = vmatprep.subr.bf16.mxu0 0
      %8888 = vmatpush1.bf16.msra.mxu0 %v8616
      %8889 = vmatprep.mubr.bf16.mxu0 %v8049
      %8890 = vmatmul.mubr.bf16.gmra.mrb[0].mxu0 %v8048
      %v8891 = vpop.f32.mrb[0].mxu0
      %v8892 = vadd.f32 %v8852, %v8891
      %v8893 = vpop.f32.mrb[0].mxu0
      %v8894 = vpop.f32.mrb[0].mxu0
      %v8895 = vpop.f32.mrb[0].mxu0
      %8896 = vdwg.mxu0
      %8897 = vmax.xlane.f32.xlu0 %v8892
      %v8898 = vpop.xlane.xlu0 %8897
      %v8899 = vsub.f32 %v8892, %v8898
      %v8900 = vmul.f32 %v8899, 1.442695
      %v8901 = vpow.pop %v8900
      %8902 = vadd.xlane.f32.xlu0 %v8901
      %v8903 = vpop.xlane.xlu0 %8902
      %v8904 = vrcp.pop %v8903
      %v8905 = vmul.f32 %v8901, %v8904
      %8906 = vst [vmem:[#allocation12] sm:$0xff] %v8905
    $region49: #{tpu_custom_call.1} parent=1 // pred_fallthru
      _
    // Predicated region
    $region50: #{tpu_custom_call.1} parent=1 // pred_check
      _
    $region51: #{tpu_custom_call.1} parent=1 // pred_check_branch
      %8908 = sbr.rel (0) target = $region53
    $region52: #{tpu_custom_call.1} parent=1 // pred_region
      %s8910 = ssub.s32 128, 128
      %8911 = vsyncadd [#allocation5], %s8910
      %s8913 = sshll.u32 [#allocation12], 4
      %s8914 = int_to_ptr.vmem [resolvable:$true] %s8913
      %8916 = dma.vmem_to_hbm [thread:$0]  %s8914, 128, %s5, [#allocation5]
    $region53: #{tpu_custom_call.1} parent=1 // pred_fallthru
      _
    // Predicated region
    $region54: #{tpu_custom_call.1} parent=1 // pred_check
      _
    $region55: #{tpu_custom_call.1} parent=1 // pred_check_branch
      %8918 = sbr.rel (0) target = $region57
    $region56: #{tpu_custom_call.1} parent=1 // pred_region
      %8919 = dma.done [#allocation5], 128
    $region57: #{tpu_custom_call.1} parent=1 // pred_fallthru
      _
    %8920 = vsyncpa [#allocation4], 1
    %8921 = vsyncpa [#allocation7], 1
    %8922 = vsyncpa [#allocation10], 1
    %8923 = vsyncpa [#allocation5], 1

</llo_original>
